<compile_context>
chip_gen: v7x
topology: tpu7x:2x2x1
jax: 0.10.0
libtpu: 0.0.40
codegen_flags: <defaults>
</compile_context>

<pallas_src>
import functools

import jax
import jax.numpy as jnp
from jax.experimental import pallas as pl
from jax.experimental.pallas import tpu as pltpu


# ---------------------------------------------------------------------------
# Generation-aware VMEM budget / compiler params
# ---------------------------------------------------------------------------

@functools.lru_cache(maxsize=None)
def _vmem_limit_bytes():
    """~100 MiB on v5e/v6e (128 MiB physical), ~48 MiB on v7x (64 MiB physical)."""
    try:
        cap = int(pltpu.get_tpu_info().vmem_capacity_bytes)
    except Exception:
        cap = 64 * 1024 * 1024                      # conservative fallback (v7x)
    return int(max(min(cap - 16 * 1024 * 1024, 100 * 1024 * 1024),
                   32 * 1024 * 1024))


def _compiler_params():
    return pltpu.CompilerParams(
        dimension_semantics=("parallel",),          # every grid step independent
        vmem_limit_bytes=_vmem_limit_bytes(),
    )


def _pick_row_tile(m, k, cout, in_bytes=2, out_bytes=2):
    """VMEM-aware row tile (multiple of 8): double-buffered x/out tiles plus the
    resident weights must fit the budget; keep >= 2 grid steps (2 TCs on v7x)."""
    budget = _vmem_limit_bytes() - 8 * 1024 * 1024
    fixed = 2 * (k * cout * in_bytes + cout * cout * in_bytes) + 4 * 2 * cout
    per_row = 2 * (k * in_bytes + cout * out_bytes) + 2 * cout * 4   # + f32 acc
    tm = max(8, (budget - fixed) // max(per_row, 1))
    tm = min(tm, 1024)
    if m >= 16:
        tm = min(tm, pl.cdiv(m, 2))                 # keep the grid >= 2 steps
    tm = max(8, (tm // 8) * 8)
    return int(min(tm, ((m + 7) // 8) * 8))


# ---------------------------------------------------------------------------
# Pallas kernels
# ---------------------------------------------------------------------------

def _conv3x3_s1_kernel(*refs, n_inputs, ho, wo, relu):
    """Direct 3x3 stride-1 conv on one padded NHWC image.

    refs = (x_pad_0, [x_pad_1], w(9,Cin,Cout), b(1,Cout) f32, out(1,ho,wo,Cout)).
    Multiple x inputs are summed in the prologue (fused FPN add).  Nine shifted
    unit-stride slices are dotted on the MXU into an f32 accumulator; bias/ReLU
    run in f32; no im2col tensor ever exists in HBM.
    """
    x_refs = refs[:n_inputs]
    w_ref, b_ref, o_ref = refs[n_inputs:]
    xv = x_refs[0][0]
    for r in x_refs[1:]:
        xv = xv + r[0]                              # fused merge (l1 + up(l2))
    cin = xv.shape[-1]
    cout = o_ref.shape[-1]
    acc = jnp.zeros((ho * wo, cout), jnp.float32)
    for ki in range(3):
        for kj in range(3):
            xs = xv[ki:ki + ho, kj:kj + wo, :]      # unit-stride window
            acc = acc + jnp.dot(xs.reshape(ho * wo, cin), w_ref[ki * 3 + kj],
                                preferred_element_type=jnp.float32)
    acc = acc + b_ref[...]                          # f32 epilogue
    if relu:
        acc = jnp.maximum(acc, 0.0)
    o_ref[...] = acc.reshape(1, ho, wo, cout).astype(o_ref.dtype)


def _conv3x3_s2_lat_kernel(x00_ref, x01_ref, x10_ref, x11_ref,
                           w_ref, b_ref, wl_ref, bl_ref,
                           f_ref, l_ref, *, ho, wo):
    """Direct 3x3 stride-2 conv (+ReLU) with a fused 1x1 lateral conv.

    The stride-2 input is pre-split into its four phases (wrapper layout op),
    so every tap is a contiguous unit-stride slice.  Emits both the backbone
    feature f and the lateral output l from the same in-VMEM f32 tile.
    """
    ph = (x00_ref[0], x01_ref[0], x10_ref[0], x11_ref[0])
    cin = ph[0].shape[-1]
    cout = b_ref.shape[-1]
    coutl = bl_ref.shape[-1]
    acc = jnp.zeros((ho * wo, cout), jnp.float32)
    for ki in range(3):
        for kj in range(3):
            p = ph[2 * (ki % 2) + (kj % 2)]
            ai, aj = ki // 2, kj // 2
            xs = p[ai:ai + ho, aj:aj + wo, :]
            acc = acc + jnp.dot(xs.reshape(ho * wo, cin), w_ref[ki * 3 + kj],
                                preferred_element_type=jnp.float32)
    f = jnp.maximum(acc + b_ref[...], 0.0)          # conv + ReLU (f32)
    l = jnp.dot(f.astype(wl_ref.dtype), wl_ref[...],
                preferred_element_type=jnp.float32) + bl_ref[...]
    f_ref[...] = f.reshape(1, ho, wo, cout).astype(f_ref.dtype)
    l_ref[...] = l.reshape(1, ho, wo, coutl).astype(l_ref.dtype)


def _gemm_lat_kernel(x_ref, w_ref, b_ref, wl_ref, bl_ref, o_ref):
    """Row-tiled GEMM (+bias+ReLU) with the 1x1 lateral conv fused in the
    epilogue; only the lateral (128-lane, lane-dense) output is stored."""
    f = jnp.dot(x_ref[...], w_ref[...], preferred_element_type=jnp.float32)
    f = jnp.maximum(f + b_ref[...], 0.0)            # f32 epilogue
    l = jnp.dot(f.astype(wl_ref.dtype), wl_ref[...],
                preferred_element_type=jnp.float32) + bl_ref[...]
    o_ref[...] = l.astype(o_ref.dtype)


# ---------------------------------------------------------------------------
# pallas_call wrappers
# ---------------------------------------------------------------------------

def _conv3x3_s1(xs_list, w, b, *, relu, out_dtype):
    """Direct 3x3 stride-1 conv over (BN,Hp,Wp,Cin) padded bf16 inputs.

    Grid is one image per step ("parallel").
    TODO(synk): for realistic image sizes the image should additionally be
    tiled over rows with a 1-row halo; whole-image blocks are used here.
    """
    bn, hp, wp, cin = xs_list[0].shape
    kh, kw, _, cout = w.shape
    ho, wo = hp - 2, wp - 2
    n_in = len(xs_list)
    out_bytes = 4 if out_dtype == jnp.float32 else 2
    cost = pl.CostEstimate(
        flops=2 * bn * ho * wo * 9 * cin * cout,
        transcendentals=0,
        bytes_accessed=2 * (n_in * bn * hp * wp * cin + 9 * cin * cout)
                       + 4 * cout + bn * ho * wo * cout * out_bytes)
    kernel = functools.partial(_conv3x3_s1_kernel,
                               n_inputs=n_in, ho=ho, wo=wo, relu=relu)
    in_specs = ([pl.BlockSpec((1, hp, wp, cin), lambda n: (n, 0, 0, 0))] * n_in
                + [pl.BlockSpec((kh * kw, cin, cout), lambda n: (0, 0, 0)),
                   pl.BlockSpec((1, cout), lambda n: (0, 0))])
    return pl.pallas_call(
        kernel,
        out_shape=jax.ShapeDtypeStruct((bn, ho, wo, cout), out_dtype),
        grid=(bn,),
        in_specs=in_specs,
        out_specs=pl.BlockSpec((1, ho, wo, cout), lambda n: (n, 0, 0, 0)),
        compiler_params=_compiler_params(),
        cost_estimate=cost,
    )(*xs_list, w.reshape(kh * kw, cin, cout).astype(jnp.bfloat16),
      b.reshape(1, cout))


def _conv3x3_s2_direct_lat(x_bf16, w, b, wl, bl):
    """Stride-2 3x3 conv (+ReLU) with fused 1x1 lateral; input phase-split in the
    wrapper (no im2col blow-up).  Returns (f, lateral) both in bf16."""
    bn, h, wd, cin = x_bf16.shape
    kh, kw, _, cout = w.shape
    coutl = wl.shape[-1]
    xp = jnp.pad(x_bf16, ((0, 0), (1, 1), (1, 1), (0, 0)))
    hp, wp = xp.shape[1], xp.shape[2]
    xp = jnp.pad(xp, ((0, 0), (0, hp % 2), (0, wp % 2), (0, 0)))   # even dims
    ph = [xp[:, d::2, e::2, :] for d in (0, 1) for e in (0, 1)]
    ho = (h + 2 - 3) // 2 + 1
    wo = (wd + 2 - 3) // 2 + 1
    hh, wh = ph[0].shape[1], ph[0].shape[2]
    cost = pl.CostEstimate(
        flops=2 * bn * ho * wo * (9 * cin * cout + cout * coutl),
        transcendentals=0,
        bytes_accessed=2 * (bn * hp * wp * cin + 9 * cin * cout + cout * coutl
                            + bn * ho * wo * (cout + coutl)) + 4 * (cout + coutl))
    kernel = functools.partial(_conv3x3_s2_lat_kernel, ho=ho, wo=wo)
    in_specs = ([pl.BlockSpec((1, hh, wh, cin), lambda n: (n, 0, 0, 0))] * 4
                + [pl.BlockSpec((9, cin, cout), lambda n: (0, 0, 0)),
                   pl.BlockSpec((1, cout), lambda n: (0, 0)),
                   pl.BlockSpec((cout, coutl), lambda n: (0, 0)),
                   pl.BlockSpec((1, coutl), lambda n: (0, 0))])
    # NOTE: f is only cout(=64)-lane wide -> masked store; it is a small tensor
    # and is consumed once by stage2.  l is 128-lane dense.
    f, lat = pl.pallas_call(
        kernel,
        out_shape=(jax.ShapeDtypeStruct((bn, ho, wo, cout), jnp.bfloat16),
                   jax.ShapeDtypeStruct((bn, ho, wo, coutl), jnp.bfloat16)),
        grid=(bn,),
        in_specs=in_specs,
        out_specs=(pl.BlockSpec((1, ho, wo, cout), lambda n: (n, 0, 0, 0)),
                   pl.BlockSpec((1, ho, wo, coutl), lambda n: (n, 0, 0, 0))),
        compiler_params=_compiler_params(),
        cost_estimate=cost,
    )(*ph, w.reshape(9, cin, cout).astype(jnp.bfloat16), b.reshape(1, cout),
      wl.reshape(cout, coutl).astype(jnp.bfloat16), bl.reshape(1, coutl))
    return f, lat


def _im2col(x_nhwc, kh, kw, stride, padding):
    bn, h, w, cin = x_nhwc.shape
    if padding:
        x_nhwc = jnp.pad(
            x_nhwc, ((0, 0), (padding, padding), (padding, padding), (0, 0)))
    ho = (h + 2 * padding - kh) // stride + 1
    wo = (w + 2 * padding - kw) // stride + 1
    cols = []
    for i in range(kh):
        for j in range(kw):
            cols.append(
                x_nhwc[:, i:i + (ho - 1) * stride + 1:stride,
                       j:j + (wo - 1) * stride + 1:stride, :])
    patches = jnp.concatenate(cols, axis=-1)        # (bn, ho, wo, kh*kw*cin)
    return patches.reshape(bn * ho * wo, kh * kw * cin), (bn, ho, wo)


def _conv3x3_s2_gemm_lat(x_bf16, w, b, wl, bl):
    """Stride-2 3x3 conv (+ReLU) with the 1x1 lateral fused; im2col + row-tiled
    GEMM (stride-2 patches are only ~2.25x the input and the spatial map is the
    smallest in the net).  Only the 128-lane lateral output ever hits HBM."""
    kh, kw, cin, cout = w.shape
    coutl = wl.shape[-1]
    patches, (bn, ho, wo) = _im2col(x_bf16, kh, kw, stride=2, padding=1)
    m, k = patches.shape
    tm = _pick_row_tile(m, k, max(cout, coutl))
    mp = pl.cdiv(m, tm) * tm
    if mp != m:
        patches = jnp.pad(patches, ((0, mp - m), (0, 0)))
    cost = pl.CostEstimate(
        flops=2 * mp * (k * cout + cout * coutl),
        transcendentals=0,
        bytes_accessed=2 * (mp * k + k * cout + cout * coutl + mp * coutl)
                       + 4 * (cout + coutl))
    out = pl.pallas_call(
        _gemm_lat_kernel,
        out_shape=jax.ShapeDtypeStruct((mp, coutl), jnp.bfloat16),
        grid=(mp // tm,),
        in_specs=[pl.BlockSpec((tm, k), lambda i: (i, 0)),
                  pl.BlockSpec((k, cout), lambda i: (0, 0)),
                  pl.BlockSpec((1, cout), lambda i: (0, 0)),
                  pl.BlockSpec((cout, coutl), lambda i: (0, 0)),
                  pl.BlockSpec((1, coutl), lambda i: (0, 0))],
        out_specs=pl.BlockSpec((tm, coutl), lambda i: (i, 0)),
        compiler_params=_compiler_params(),
        cost_estimate=cost,
    )(patches, w.reshape(kh * kw * cin, cout).astype(jnp.bfloat16),
      b.reshape(1, cout), wl.reshape(cout, coutl).astype(jnp.bfloat16),
      bl.reshape(1, coutl))
    return out[:m].reshape(bn, ho, wo, coutl)


# ---------------------------------------------------------------------------
# Representative backbone + FPN neck (ImgBackboneModel.forward contract)
# ---------------------------------------------------------------------------

def _init_params(key):
    def conv_p(k, kh, kw, cin, cout):
        kw_, kb_ = jax.random.split(k)
        scale = 1.0 / float(kh * kw * cin) ** 0.5
        return {"w": jax.random.normal(kw_, (kh, kw, cin, cout), jnp.float32) * scale,
                "b": jax.random.normal(kb_, (cout,), jnp.float32) * 0.01}

    keys = jax.random.split(key, 6)
    return {
        "stem":   conv_p(keys[0], 3, 3, 3, 32),     # H x W
        "stage1": conv_p(keys[1], 3, 3, 32, 64),    # /2
        "stage2": conv_p(keys[2], 3, 3, 64, 128),   # /4
        "lat1":   conv_p(keys[3], 1, 1, 64, 128),   # FPN lateral
        "lat2":   conv_p(keys[4], 1, 1, 128, 128),  # FPN lateral
        "fpn":    conv_p(keys[5], 3, 3, 128, 128),  # FPN fuse conv
    }


def img_backbone_forward(img, params):
    """img: (B, N, C, H, W) float32 -> (B, N, C2, H2, W2) float32."""
    B, N, C, H, W = img.shape
    # One layout change to channels-last (lane-dense) + bf16 MXU operands.
    x = img.reshape(B * N, C, H, W).transpose(0, 2, 3, 1).astype(jnp.bfloat16)

    # --- stem: 3x3 s1 conv + ReLU (direct conv; cin padded 3 -> 8 for K align)
    cin_pad = 8
    x_pad = jnp.pad(x, ((0, 0), (1, 1), (1, 1), (0, cin_pad - C)))
    w_stem = jnp.pad(params["stem"]["w"],
                     ((0, 0), (0, 0), (0, cin_pad - C), (0, 0)))
    s = _conv3x3_s1([x_pad], w_stem, params["stem"]["b"],
                    relu=True, out_dtype=jnp.bfloat16)          # (BN, H, W, 32)

    # --- stage1: 3x3 s2 conv + ReLU with lat1 (1x1) fused -------------------
    f1, l1 = _conv3x3_s2_direct_lat(
        s, params["stage1"]["w"], params["stage1"]["b"],
        params["lat1"]["w"], params["lat1"]["b"])               # f1: 64ch, l1: 128ch

    # --- stage2: 3x3 s2 conv + ReLU with lat2 fused; f2 never leaves VMEM ---
    l2 = _conv3x3_s2_gemm_lat(
        f1, params["stage2"]["w"], params["stage2"]["b"],
        params["lat2"]["w"], params["lat2"]["b"])               # (BN, H/4, W/4, 128)

    # --- FPN merge + 3x3 fuse conv: the add runs in the conv kernel prologue
    # TODO(synk): the nearest-2x upsample is still materialized by XLA; an
    # in-kernel (i//2)-style gather from l2 would also remove this tensor.
    up = jnp.repeat(jnp.repeat(l2, 2, axis=1), 2, axis=2)
    l1_pad = jnp.pad(l1, ((0, 0), (1, 1), (1, 1), (0, 0)))
    up_pad = jnp.pad(up, ((0, 0), (1, 1), (1, 1), (0, 0)))
    out = _conv3x3_s1([l1_pad, up_pad], params["fpn"]["w"], params["fpn"]["b"],
                      relu=False, out_dtype=jnp.float32)        # (BN, H/2, W/2, 128)

    # NHWC -> NCHW and split (B*N) back into (B, N, ...), matching PyTorch.
    # TODO(synk): drop this lane-scrambling transpose if the consumer takes NHWC.
    bn, h2, w2, c2 = out.shape
    return out.transpose(0, 3, 1, 2).reshape(B, N, c2, h2, w2)


# ---------------------------------------------------------------------------
# Pure-JAX f32 reference (lax.conv) for correctness
# ---------------------------------------------------------------------------

def _ref_conv(x, w, b, *, stride, padding, relu):
    out = jax.lax.conv_general_dilated(
        x, w, window_strides=(stride, stride),
        padding=[(padding, padding), (padding, padding)],
        dimension_numbers=("NHWC", "HWIO", "NHWC"))
    out = out + b.reshape(1, 1, 1, -1)
    return jnp.maximum(out, 0.0) if relu else out


def _ref_forward(img, params):
    B, N, C, H, W = img.shape
    x = img.reshape(B * N, C, H, W).transpose(0, 2, 3, 1)
    x = _ref_conv(x, params["stem"]["w"], params["stem"]["b"],
                  stride=1, padding=1, relu=True)
    f1 = _ref_conv(x, params["stage1"]["w"], params["stage1"]["b"],
                   stride=2, padding=1, relu=True)
    f2 = _ref_conv(f1, params["stage2"]["w"], params["stage2"]["b"],
                   stride=2, padding=1, relu=True)
    l1 = _ref_conv(f1, params["lat1"]["w"], params["lat1"]["b"],
                   stride=1, padding=0, relu=False)
    l2 = _ref_conv(f2, params["lat2"]["w"], params["lat2"]["b"],
                   stride=1, padding=0, relu=False)
    up = jnp.repeat(jnp.repeat(l2, 2, axis=1), 2, axis=2)
    merged = l1 + up
    out = _ref_conv(merged, params["fpn"]["w"], params["fpn"]["b"],
                    stride=1, padding=1, relu=False)
    bn, h2, w2, c2 = out.shape
    return out.transpose(0, 3, 1, 2).reshape(B, N, c2, h2, w2)


if __name__ == "__main__":
    key = jax.random.PRNGKey(0)
    k_img, k_par = jax.random.split(key)

    B, N, C, H, W = 2, 2, 3, 16, 16
    img = jax.random.normal(k_img, (B, N, C, H, W), dtype=jnp.float32)
    params = _init_params(k_par)

    out = jax.jit(img_backbone_forward)(img, params)
    out = jax.block_until_ready(out)
    assert out.shape == (B, N, 128, 8, 8), out.shape

    ref = _ref_forward(img, params)
    err = float(jnp.max(jnp.abs(out - ref)))
    scale = float(jnp.max(jnp.abs(ref))) + 1e-6
    # bf16 MXU operands with f32 accumulation -> compare relative to max |ref|.
    assert err / scale < 0.08, (err, scale)

    print("KERNEL_OK")
</pallas_src>

<mosaic_0001>
module attributes {stable_mosaic.version = 11 : i64} {
  func.func @_conv3x3_s1_kernel(%arg0: i32, %arg1: memref<1x18x18x8xbf16, #tpu.memory_space<vmem>>, %arg2: memref<9x8x32xbf16, #tpu.memory_space<vmem>>, %arg3: memref<1x32xf32, #tpu.memory_space<vmem>>, %arg4: memref<1x16x16x32xbf16, #tpu.memory_space<vmem>>) attributes {dimension_semantics = [#tpu.dimension_semantics<parallel>], iteration_bounds = array<i64: 4>, scalar_prefetch = 0 : i64, scratch_operands = 0 : i64, tpu.core_type = #tpu.core_type<tc>, window_params = [{transform_indices = @transform_0, window_bounds = array<i64: 1, 18, 18, 8>}, {pipeline_mode = #tpu.pipeline_mode<synchronous>, transform_indices = @transform_1, window_bounds = array<i64: 9, 8, 32>}, {pipeline_mode = #tpu.pipeline_mode<synchronous>, transform_indices = @transform_2, window_bounds = array<i64: 1, 32>}, {transform_indices = @transform_3, window_bounds = array<i64: 1, 16, 16, 32>}]} {
    %c0 = arith.constant 0 : index
    %c0_0 = arith.constant 0 : index
    %c0_1 = arith.constant 0 : index
    %c0_2 = arith.constant 0 : index
    %0 = vector.load %arg1[%c0, %c0_0, %c0_1, %c0_2] : memref<1x18x18x8xbf16, #tpu.memory_space<vmem>>, vector<1x18x18x8xbf16>
    %1 = vector.shape_cast %0 : vector<1x18x18x8xbf16> to vector<18x18x8xbf16>
    %cst = arith.constant 0.000000e+00 : f32
    %2 = vector.broadcast %cst : f32 to vector<256x32xf32>
    %3 = vector.extract_strided_slice %1 {offsets = [0, 0, 0], sizes = [16, 16, 8], strides = [1, 1, 1]} : vector<18x18x8xbf16> to vector<16x16x8xbf16>
    %4 = vector.shape_cast %3 : vector<16x16x8xbf16> to vector<256x8xbf16>
    %c0_3 = arith.constant 0 : index
    %c0_4 = arith.constant 0 : index
    %c0_5 = arith.constant 0 : index
    %5 = vector.load %arg2[%c0_3, %c0_4, %c0_5] : memref<9x8x32xbf16, #tpu.memory_space<vmem>>, vector<1x8x32xbf16>
    %6 = vector.shape_cast %5 : vector<1x8x32xbf16> to vector<8x32xbf16>
    %cst_6 = arith.constant dense<0.000000e+00> : vector<256x32xf32>
    %7 = tpu.matmul %4, %6, %cst_6 {dimension_numbers = #tpu.dot_dimension_numbers<[1], [0], [0], [1], [0, 0, 1, 1], [], []>} : vector<256x8xbf16>, vector<8x32xbf16>, vector<256x32xf32> -> vector<256x32xf32>
    %8 = arith.addf %2, %7 : vector<256x32xf32>
    %9 = vector.extract_strided_slice %1 {offsets = [0, 1, 0], sizes = [16, 16, 8], strides = [1, 1, 1]} : vector<18x18x8xbf16> to vector<16x16x8xbf16>
    %10 = vector.shape_cast %9 : vector<16x16x8xbf16> to vector<256x8xbf16>
    %c1 = arith.constant 1 : index
    %c0_7 = arith.constant 0 : index
    %c0_8 = arith.constant 0 : index
    %11 = vector.load %arg2[%c1, %c0_7, %c0_8] : memref<9x8x32xbf16, #tpu.memory_space<vmem>>, vector<1x8x32xbf16>
    %12 = vector.shape_cast %11 : vector<1x8x32xbf16> to vector<8x32xbf16>
    %cst_9 = arith.constant dense<0.000000e+00> : vector<256x32xf32>
    %13 = tpu.matmul %10, %12, %cst_9 {dimension_numbers = #tpu.dot_dimension_numbers<[1], [0], [0], [1], [0, 0, 1, 1], [], []>} : vector<256x8xbf16>, vector<8x32xbf16>, vector<256x32xf32> -> vector<256x32xf32>
    %14 = arith.addf %8, %13 : vector<256x32xf32>
    %15 = vector.extract_strided_slice %1 {offsets = [0, 2, 0], sizes = [16, 16, 8], strides = [1, 1, 1]} : vector<18x18x8xbf16> to vector<16x16x8xbf16>
    %16 = vector.shape_cast %15 : vector<16x16x8xbf16> to vector<256x8xbf16>
    %c2 = arith.constant 2 : index
    %c0_10 = arith.constant 0 : index
    %c0_11 = arith.constant 0 : index
    %17 = vector.load %arg2[%c2, %c0_10, %c0_11] : memref<9x8x32xbf16, #tpu.memory_space<vmem>>, vector<1x8x32xbf16>
    %18 = vector.shape_cast %17 : vector<1x8x32xbf16> to vector<8x32xbf16>
    %cst_12 = arith.constant dense<0.000000e+00> : vector<256x32xf32>
    %19 = tpu.matmul %16, %18, %cst_12 {dimension_numbers = #tpu.dot_dimension_numbers<[1], [0], [0], [1], [0, 0, 1, 1], [], []>} : vector<256x8xbf16>, vector<8x32xbf16>, vector<256x32xf32> -> vector<256x32xf32>
    %20 = arith.addf %14, %19 : vector<256x32xf32>
    %21 = vector.extract_strided_slice %1 {offsets = [1, 0, 0], sizes = [16, 16, 8], strides = [1, 1, 1]} : vector<18x18x8xbf16> to vector<16x16x8xbf16>
    %22 = vector.shape_cast %21 : vector<16x16x8xbf16> to vector<256x8xbf16>
    %c3 = arith.constant 3 : index
    %c0_13 = arith.constant 0 : index
    %c0_14 = arith.constant 0 : index
    %23 = vector.load %arg2[%c3, %c0_13, %c0_14] : memref<9x8x32xbf16, #tpu.memory_space<vmem>>, vector<1x8x32xbf16>
    %24 = vector.shape_cast %23 : vector<1x8x32xbf16> to vector<8x32xbf16>
    %cst_15 = arith.constant dense<0.000000e+00> : vector<256x32xf32>
    %25 = tpu.matmul %22, %24, %cst_15 {dimension_numbers = #tpu.dot_dimension_numbers<[1], [0], [0], [1], [0, 0, 1, 1], [], []>} : vector<256x8xbf16>, vector<8x32xbf16>, vector<256x32xf32> -> vector<256x32xf32>
    %26 = arith.addf %20, %25 : vector<256x32xf32>
    %27 = vector.extract_strided_slice %1 {offsets = [1, 1, 0], sizes = [16, 16, 8], strides = [1, 1, 1]} : vector<18x18x8xbf16> to vector<16x16x8xbf16>
    %28 = vector.shape_cast %27 : vector<16x16x8xbf16> to vector<256x8xbf16>
    %c4 = arith.constant 4 : index
    %c0_16 = arith.constant 0 : index
    %c0_17 = arith.constant 0 : index
    %29 = vector.load %arg2[%c4, %c0_16, %c0_17] : memref<9x8x32xbf16, #tpu.memory_space<vmem>>, vector<1x8x32xbf16>
    %30 = vector.shape_cast %29 : vector<1x8x32xbf16> to vector<8x32xbf16>
    %cst_18 = arith.constant dense<0.000000e+00> : vector<256x32xf32>
    %31 = tpu.matmul %28, %30, %cst_18 {dimension_numbers = #tpu.dot_dimension_numbers<[1], [0], [0], [1], [0, 0, 1, 1], [], []>} : vector<256x8xbf16>, vector<8x32xbf16>, vector<256x32xf32> -> vector<256x32xf32>
    %32 = arith.addf %26, %31 : vector<256x32xf32>
    %33 = vector.extract_strided_slice %1 {offsets = [1, 2, 0], sizes = [16, 16, 8], strides = [1, 1, 1]} : vector<18x18x8xbf16> to vector<16x16x8xbf16>
    %34 = vector.shape_cast %33 : vector<16x16x8xbf16> to vector<256x8xbf16>
    %c5 = arith.constant 5 : index
    %c0_19 = arith.constant 0 : index
    %c0_20 = arith.constant 0 : index
    %35 = vector.load %arg2[%c5, %c0_19, %c0_20] : memref<9x8x32xbf16, #tpu.memory_space<vmem>>, vector<1x8x32xbf16>
    %36 = vector.shape_cast %35 : vector<1x8x32xbf16> to vector<8x32xbf16>
    %cst_21 = arith.constant dense<0.000000e+00> : vector<256x32xf32>
    %37 = tpu.matmul %34, %36, %cst_21 {dimension_numbers = #tpu.dot_dimension_numbers<[1], [0], [0], [1], [0, 0, 1, 1], [], []>} : vector<256x8xbf16>, vector<8x32xbf16>, vector<256x32xf32> -> vector<256x32xf32>
    %38 = arith.addf %32, %37 : vector<256x32xf32>
    %39 = vector.extract_strided_slice %1 {offsets = [2, 0, 0], sizes = [16, 16, 8], strides = [1, 1, 1]} : vector<18x18x8xbf16> to vector<16x16x8xbf16>
    %40 = vector.shape_cast %39 : vector<16x16x8xbf16> to vector<256x8xbf16>
    %c6 = arith.constant 6 : index
    %c0_22 = arith.constant 0 : index
    %c0_23 = arith.constant 0 : index
    %41 = vector.load %arg2[%c6, %c0_22, %c0_23] : memref<9x8x32xbf16, #tpu.memory_space<vmem>>, vector<1x8x32xbf16>
    %42 = vector.shape_cast %41 : vector<1x8x32xbf16> to vector<8x32xbf16>
    %cst_24 = arith.constant dense<0.000000e+00> : vector<256x32xf32>
    %43 = tpu.matmul %40, %42, %cst_24 {dimension_numbers = #tpu.dot_dimension_numbers<[1], [0], [0], [1], [0, 0, 1, 1], [], []>} : vector<256x8xbf16>, vector<8x32xbf16>, vector<256x32xf32> -> vector<256x32xf32>
    %44 = arith.addf %38, %43 : vector<256x32xf32>
    %45 = vector.extract_strided_slice %1 {offsets = [2, 1, 0], sizes = [16, 16, 8], strides = [1, 1, 1]} : vector<18x18x8xbf16> to vector<16x16x8xbf16>
    %46 = vector.shape_cast %45 : vector<16x16x8xbf16> to vector<256x8xbf16>
    %c7 = arith.constant 7 : index
    %c0_25 = arith.constant 0 : index
    %c0_26 = arith.constant 0 : index
    %47 = vector.load %arg2[%c7, %c0_25, %c0_26] : memref<9x8x32xbf16, #tpu.memory_space<vmem>>, vector<1x8x32xbf16>
    %48 = vector.shape_cast %47 : vector<1x8x32xbf16> to vector<8x32xbf16>
    %cst_27 = arith.constant dense<0.000000e+00> : vector<256x32xf32>
    %49 = tpu.matmul %46, %48, %cst_27 {dimension_numbers = #tpu.dot_dimension_numbers<[1], [0], [0], [1], [0, 0, 1, 1], [], []>} : vector<256x8xbf16>, vector<8x32xbf16>, vector<256x32xf32> -> vector<256x32xf32>
    %50 = arith.addf %44, %49 : vector<256x32xf32>
    %51 = vector.extract_strided_slice %1 {offsets = [2, 2, 0], sizes = [16, 16, 8], strides = [1, 1, 1]} : vector<18x18x8xbf16> to vector<16x16x8xbf16>
    %52 = vector.shape_cast %51 : vector<16x16x8xbf16> to vector<256x8xbf16>
    %c8 = arith.constant 8 : index
    %c0_28 = arith.constant 0 : index
    %c0_29 = arith.constant 0 : index
    %53 = vector.load %arg2[%c8, %c0_28, %c0_29] : memref<9x8x32xbf16, #tpu.memory_space<vmem>>, vector<1x8x32xbf16>
    %54 = vector.shape_cast %53 : vector<1x8x32xbf16> to vector<8x32xbf16>
    %cst_30 = arith.constant dense<0.000000e+00> : vector<256x32xf32>
    %55 = tpu.matmul %52, %54, %cst_30 {dimension_numbers = #tpu.dot_dimension_numbers<[1], [0], [0], [1], [0, 0, 1, 1], [], []>} : vector<256x8xbf16>, vector<8x32xbf16>, vector<256x32xf32> -> vector<256x32xf32>
    %56 = arith.addf %50, %55 : vector<256x32xf32>
    %c0_31 = arith.constant 0 : index
    %c0_32 = arith.constant 0 : index
    %57 = vector.load %arg3[%c0_31, %c0_32] : memref<1x32xf32, #tpu.memory_space<vmem>>, vector<1x32xf32>
    %58 = vector.broadcast %57 : vector<1x32xf32> to vector<256x32xf32>
    %59 = arith.addf %56, %58 : vector<256x32xf32>
    %cst_33 = arith.constant 0.000000e+00 : f32
    %60 = vector.broadcast %cst_33 : f32 to vector<256x32xf32>
    %61 = arith.maximumf %59, %60 : vector<256x32xf32>
    %62 = vector.shape_cast %61 : vector<256x32xf32> to vector<1x16x16x32xf32>
    %63 = arith.truncf %62 : vector<1x16x16x32xf32> to vector<1x16x16x32xbf16>
    %c0_34 = arith.constant 0 : index
    %c0_35 = arith.constant 0 : index
    %c0_36 = arith.constant 0 : index
    %c0_37 = arith.constant 0 : index
    %64 = vector.load %arg4[%c0_34, %c0_35, %c0_36, %c0_37] : memref<1x16x16x32xbf16, #tpu.memory_space<vmem>>, vector<1x16x16x32xbf16>
    tpu.vector_store %arg4[%c0_34, %c0_35, %c0_36, %c0_37], %63 {strides = array<i32>} : memref<1x16x16x32xbf16, #tpu.memory_space<vmem>>, vector<1x16x16x32xbf16>,
    return
  }
  func.func @transform_0(%arg0: i32) -> (i32, i32, i32, i32) {
    %c0_i32 = arith.constant 0 : i32
    %c0_i32_0 = arith.constant 0 : i32
    %c0_i32_1 = arith.constant 0 : i32
    %c0_i32_2 = arith.constant 0 : i32
    return %arg0, %c0_i32, %c0_i32_0, %c0_i32_1 : i32, i32, i32, i32
  }
  func.func @transform_1(%arg0: i32) -> (i32, i32, i32) {
    %c0_i32 = arith.constant 0 : i32
    %c0_i32_0 = arith.constant 0 : i32
    %c0_i32_1 = arith.constant 0 : i32
    %c0_i32_2 = arith.constant 0 : i32
    return %c0_i32, %c0_i32_0, %c0_i32_1 : i32, i32, i32
  }
  func.func @transform_2(%arg0: i32) -> (i32, i32) {
    %c0_i32 = arith.constant 0 : i32
    %c0_i32_0 = arith.constant 0 : i32
    %c0_i32_1 = arith.constant 0 : i32
    return %c0_i32, %c0_i32_0 : i32, i32
  }
  func.func @transform_3(%arg0: i32) -> (i32, i32, i32, i32) {
    %c0_i32 = arith.constant 0 : i32
    %c0_i32_0 = arith.constant 0 : i32
    %c0_i32_1 = arith.constant 0 : i32
    %c0_i32_2 = arith.constant 0 : i32
    return %arg0, %c0_i32, %c0_i32_0, %c0_i32_1 : i32, i32, i32, i32
  }
}

module attributes {stable_mosaic.version = 11 : i64} {
  func.func @_conv3x3_s2_lat_kernel(%arg0: i32, %arg1: memref<1x9x9x32xbf16, #tpu.memory_space<vmem>>, %arg2: memref<1x9x9x32xbf16, #tpu.memory_space<vmem>>, %arg3: memref<1x9x9x32xbf16, #tpu.memory_space<vmem>>, %arg4: memref<1x9x9x32xbf16, #tpu.memory_space<vmem>>, %arg5: memref<9x32x64xbf16, #tpu.memory_space<vmem>>, %arg6: memref<1x64xf32, #tpu.memory_space<vmem>>, %arg7: memref<64x128xbf16, #tpu.memory_space<vmem>>, %arg8: memref<1x128xf32, #tpu.memory_space<vmem>>, %arg9: memref<1x8x8x64xbf16, #tpu.memory_space<vmem>>, %arg10: memref<1x8x8x128xbf16, #tpu.memory_space<vmem>>) attributes {dimension_semantics = [#tpu.dimension_semantics<parallel>], iteration_bounds = array<i64: 4>, scalar_prefetch = 0 : i64, scratch_operands = 0 : i64, tpu.core_type = #tpu.core_type<tc>, window_params = [{transform_indices = @transform_0, window_bounds = array<i64: 1, 9, 9, 32>}, {transform_indices = @transform_1, window_bounds = array<i64: 1, 9, 9, 32>}, {transform_indices = @transform_2, window_bounds = array<i64: 1, 9, 9, 32>}, {transform_indices = @transform_3, window_bounds = array<i64: 1, 9, 9, 32>}, {pipeline_mode = #tpu.pipeline_mode<synchronous>, transform_indices = @transform_4, window_bounds = array<i64: 9, 32, 64>}, {pipeline_mode = #tpu.pipeline_mode<synchronous>, transform_indices = @transform_5, window_bounds = array<i64: 1, 64>}, {pipeline_mode = #tpu.pipeline_mode<synchronous>, transform_indices = @transform_6, window_bounds = array<i64: 64, 128>}, {pipeline_mode = #tpu.pipeline_mode<synchronous>, transform_indices = @transform_7, window_bounds = array<i64: 1, 128>}, {transform_indices = @transform_8, window_bounds = array<i64: 1, 8, 8, 64>}, {transform_indices = @transform_9, window_bounds = array<i64: 1, 8, 8, 128>}]} {
    %c0 = arith.constant 0 : index
    %c0_0 = arith.constant 0 : index
    %c0_1 = arith.constant 0 : index
    %c0_2 = arith.constant 0 : index
    %0 = vector.load %arg1[%c0, %c0_0, %c0_1, %c0_2] : memref<1x9x9x32xbf16, #tpu.memory_space<vmem>>, vector<1x9x9x32xbf16>
    %1 = vector.shape_cast %0 : vector<1x9x9x32xbf16> to vector<9x9x32xbf16>
    %c0_3 = arith.constant 0 : index
    %c0_4 = arith.constant 0 : index
    %c0_5 = arith.constant 0 : index
    %c0_6 = arith.constant 0 : index
    %2 = vector.load %arg2[%c0_3, %c0_4, %c0_5, %c0_6] : memref<1x9x9x32xbf16, #tpu.memory_space<vmem>>, vector<1x9x9x32xbf16>
    %3 = vector.shape_cast %2 : vector<1x9x9x32xbf16> to vector<9x9x32xbf16>
    %c0_7 = arith.constant 0 : index
    %c0_8 = arith.constant 0 : index
    %c0_9 = arith.constant 0 : index
    %c0_10 = arith.constant 0 : index
    %4 = vector.load %arg3[%c0_7, %c0_8, %c0_9, %c0_10] : memref<1x9x9x32xbf16, #tpu.memory_space<vmem>>, vector<1x9x9x32xbf16>
    %5 = vector.shape_cast %4 : vector<1x9x9x32xbf16> to vector<9x9x32xbf16>
    %c0_11 = arith.constant 0 : index
    %c0_12 = arith.constant 0 : index
    %c0_13 = arith.constant 0 : index
    %c0_14 = arith.constant 0 : index
    %6 = vector.load %arg4[%c0_11, %c0_12, %c0_13, %c0_14] : memref<1x9x9x32xbf16, #tpu.memory_space<vmem>>, vector<1x9x9x32xbf16>
    %7 = vector.shape_cast %6 : vector<1x9x9x32xbf16> to vector<9x9x32xbf16>
    %cst = arith.constant 0.000000e+00 : f32
    %8 = vector.broadcast %cst : f32 to vector<64x64xf32>
    %9 = vector.extract_strided_slice %1 {offsets = [0, 0, 0], sizes = [8, 8, 32], strides = [1, 1, 1]} : vector<9x9x32xbf16> to vector<8x8x32xbf16>
    %10 = vector.shape_cast %9 : vector<8x8x32xbf16> to vector<64x32xbf16>
    %c0_15 = arith.constant 0 : index
    %c0_16 = arith.constant 0 : index
    %c0_17 = arith.constant 0 : index
    %11 = vector.load %arg5[%c0_15, %c0_16, %c0_17] : memref<9x32x64xbf16, #tpu.memory_space<vmem>>, vector<1x32x64xbf16>
    %12 = vector.shape_cast %11 : vector<1x32x64xbf16> to vector<32x64xbf16>
    %cst_18 = arith.constant dense<0.000000e+00> : vector<64x64xf32>
    %13 = tpu.matmul %10, %12, %cst_18 {dimension_numbers = #tpu.dot_dimension_numbers<[1], [0], [0], [1], [0, 0, 1, 1], [], []>} : vector<64x32xbf16>, vector<32x64xbf16>, vector<64x64xf32> -> vector<64x64xf32>
    %14 = arith.addf %8, %13 : vector<64x64xf32>
    %15 = vector.extract_strided_slice %3 {offsets = [0, 0, 0], sizes = [8, 8, 32], strides = [1, 1, 1]} : vector<9x9x32xbf16> to vector<8x8x32xbf16>
    %16 = vector.shape_cast %15 : vector<8x8x32xbf16> to vector<64x32xbf16>
    %c1 = arith.constant 1 : index
    %c0_19 = arith.constant 0 : index
    %c0_20 = arith.constant 0 : index
    %17 = vector.load %arg5[%c1, %c0_19, %c0_20] : memref<9x32x64xbf16, #tpu.memory_space<vmem>>, vector<1x32x64xbf16>
    %18 = vector.shape_cast %17 : vector<1x32x64xbf16> to vector<32x64xbf16>
    %cst_21 = arith.constant dense<0.000000e+00> : vector<64x64xf32>
    %19 = tpu.matmul %16, %18, %cst_21 {dimension_numbers = #tpu.dot_dimension_numbers<[1], [0], [0], [1], [0, 0, 1, 1], [], []>} : vector<64x32xbf16>, vector<32x64xbf16>, vector<64x64xf32> -> vector<64x64xf32>
    %20 = arith.addf %14, %19 : vector<64x64xf32>
    %21 = vector.extract_strided_slice %1 {offsets = [0, 1, 0], sizes = [8, 8, 32], strides = [1, 1, 1]} : vector<9x9x32xbf16> to vector<8x8x32xbf16>
    %22 = vector.shape_cast %21 : vector<8x8x32xbf16> to vector<64x32xbf16>
    %c2 = arith.constant 2 : index
    %c0_22 = arith.constant 0 : index
    %c0_23 = arith.constant 0 : index
    %23 = vector.load %arg5[%c2, %c0_22, %c0_23] : memref<9x32x64xbf16, #tpu.memory_space<vmem>>, vector<1x32x64xbf16>
    %24 = vector.shape_cast %23 : vector<1x32x64xbf16> to vector<32x64xbf16>
    %cst_24 = arith.constant dense<0.000000e+00> : vector<64x64xf32>
    %25 = tpu.matmul %22, %24, %cst_24 {dimension_numbers = #tpu.dot_dimension_numbers<[1], [0], [0], [1], [0, 0, 1, 1], [], []>} : vector<64x32xbf16>, vector<32x64xbf16>, vector<64x64xf32> -> vector<64x64xf32>
    %26 = arith.addf %20, %25 : vector<64x64xf32>
    %27 = vector.extract_strided_slice %5 {offsets = [0, 0, 0], sizes = [8, 8, 32], strides = [1, 1, 1]} : vector<9x9x32xbf16> to vector<8x8x32xbf16>
    %28 = vector.shape_cast %27 : vector<8x8x32xbf16> to vector<64x32xbf16>
    %c3 = arith.constant 3 : index
    %c0_25 = arith.constant 0 : index
    %c0_26 = arith.constant 0 : index
    %29 = vector.load %arg5[%c3, %c0_25, %c0_26] : memref<9x32x64xbf16, #tpu.memory_space<vmem>>, vector<1x32x64xbf16>
    %30 = vector.shape_cast %29 : vector<1x32x64xbf16> to vector<32x64xbf16>
    %cst_27 = arith.constant dense<0.000000e+00> : vector<64x64xf32>
    %31 = tpu.matmul %28, %30, %cst_27 {dimension_numbers = #tpu.dot_dimension_numbers<[1], [0], [0], [1], [0, 0, 1, 1], [], []>} : vector<64x32xbf16>, vector<32x64xbf16>, vector<64x64xf32> -> vector<64x64xf32>
    %32 = arith.addf %26, %31 : vector<64x64xf32>
    %33 = vector.extract_strided_slice %7 {offsets = [0, 0, 0], sizes = [8, 8, 32], strides = [1, 1, 1]} : vector<9x9x32xbf16> to vector<8x8x32xbf16>
    %34 = vector.shape_cast %33 : vector<8x8x32xbf16> to vector<64x32xbf16>
    %c4 = arith.constant 4 : index
    %c0_28 = arith.constant 0 : index
    %c0_29 = arith.constant 0 : index
    %35 = vector.load %arg5[%c4, %c0_28, %c0_29] : memref<9x32x64xbf16, #tpu.memory_space<vmem>>, vector<1x32x64xbf16>
    %36 = vector.shape_cast %35 : vector<1x32x64xbf16> to vector<32x64xbf16>
    %cst_30 = arith.constant dense<0.000000e+00> : vector<64x64xf32>
    %37 = tpu.matmul %34, %36, %cst_30 {dimension_numbers = #tpu.dot_dimension_numbers<[1], [0], [0], [1], [0, 0, 1, 1], [], []>} : vector<64x32xbf16>, vector<32x64xbf16>, vector<64x64xf32> -> vector<64x64xf32>
    %38 = arith.addf %32, %37 : vector<64x64xf32>
    %39 = vector.extract_strided_slice %5 {offsets = [0, 1, 0], sizes = [8, 8, 32], strides = [1, 1, 1]} : vector<9x9x32xbf16> to vector<8x8x32xbf16>
    %40 = vector.shape_cast %39 : vector<8x8x32xbf16> to vector<64x32xbf16>
    %c5 = arith.constant 5 : index
    %c0_31 = arith.constant 0 : index
    %c0_32 = arith.constant 0 : index
    %41 = vector.load %arg5[%c5, %c0_31, %c0_32] : memref<9x32x64xbf16, #tpu.memory_space<vmem>>, vector<1x32x64xbf16>
    %42 = vector.shape_cast %41 : vector<1x32x64xbf16> to vector<32x64xbf16>
    %cst_33 = arith.constant dense<0.000000e+00> : vector<64x64xf32>
    %43 = tpu.matmul %40, %42, %cst_33 {dimension_numbers = #tpu.dot_dimension_numbers<[1], [0], [0], [1], [0, 0, 1, 1], [], []>} : vector<64x32xbf16>, vector<32x64xbf16>, vector<64x64xf32> -> vector<64x64xf32>
    %44 = arith.addf %38, %43 : vector<64x64xf32>
    %45 = vector.extract_strided_slice %1 {offsets = [1, 0, 0], sizes = [8, 8, 32], strides = [1, 1, 1]} : vector<9x9x32xbf16> to vector<8x8x32xbf16>
    %46 = vector.shape_cast %45 : vector<8x8x32xbf16> to vector<64x32xbf16>
    %c6 = arith.constant 6 : index
    %c0_34 = arith.constant 0 : index
    %c0_35 = arith.constant 0 : index
    %47 = vector.load %arg5[%c6, %c0_34, %c0_35] : memref<9x32x64xbf16, #tpu.memory_space<vmem>>, vector<1x32x64xbf16>
    %48 = vector.shape_cast %47 : vector<1x32x64xbf16> to vector<32x64xbf16>
    %cst_36 = arith.constant dense<0.000000e+00> : vector<64x64xf32>
    %49 = tpu.matmul %46, %48, %cst_36 {dimension_numbers = #tpu.dot_dimension_numbers<[1], [0], [0], [1], [0, 0, 1, 1], [], []>} : vector<64x32xbf16>, vector<32x64xbf16>, vector<64x64xf32> -> vector<64x64xf32>
    %50 = arith.addf %44, %49 : vector<64x64xf32>
    %51 = vector.extract_strided_slice %3 {offsets = [1, 0, 0], sizes = [8, 8, 32], strides = [1, 1, 1]} : vector<9x9x32xbf16> to vector<8x8x32xbf16>
    %52 = vector.shape_cast %51 : vector<8x8x32xbf16> to vector<64x32xbf16>
    %c7 = arith.constant 7 : index
    %c0_37 = arith.constant 0 : index
    %c0_38 = arith.constant 0 : index
    %53 = vector.load %arg5[%c7, %c0_37, %c0_38] : memref<9x32x64xbf16, #tpu.memory_space<vmem>>, vector<1x32x64xbf16>
    %54 = vector.shape_cast %53 : vector<1x32x64xbf16> to vector<32x64xbf16>
    %cst_39 = arith.constant dense<0.000000e+00> : vector<64x64xf32>
    %55 = tpu.matmul %52, %54, %cst_39 {dimension_numbers = #tpu.dot_dimension_numbers<[1], [0], [0], [1], [0, 0, 1, 1], [], []>} : vector<64x32xbf16>, vector<32x64xbf16>, vector<64x64xf32> -> vector<64x64xf32>
    %56 = arith.addf %50, %55 : vector<64x64xf32>
    %57 = vector.extract_strided_slice %1 {offsets = [1, 1, 0], sizes = [8, 8, 32], strides = [1, 1, 1]} : vector<9x9x32xbf16> to vector<8x8x32xbf16>
    %58 = vector.shape_cast %57 : vector<8x8x32xbf16> to vector<64x32xbf16>
    %c8 = arith.constant 8 : index
    %c0_40 = arith.constant 0 : index
    %c0_41 = arith.constant 0 : index
    %59 = vector.load %arg5[%c8, %c0_40, %c0_41] : memref<9x32x64xbf16, #tpu.memory_space<vmem>>, vector<1x32x64xbf16>
    %60 = vector.shape_cast %59 : vector<1x32x64xbf16> to vector<32x64xbf16>
    %cst_42 = arith.constant dense<0.000000e+00> : vector<64x64xf32>
    %61 = tpu.matmul %58, %60, %cst_42 {dimension_numbers = #tpu.dot_dimension_numbers<[1], [0], [0], [1], [0, 0, 1, 1], [], []>} : vector<64x32xbf16>, vector<32x64xbf16>, vector<64x64xf32> -> vector<64x64xf32>
    %62 = arith.addf %56, %61 : vector<64x64xf32>
    %c0_43 = arith.constant 0 : index
    %c0_44 = arith.constant 0 : index
    %63 = vector.load %arg6[%c0_43, %c0_44] : memref<1x64xf32, #tpu.memory_space<vmem>>, vector<1x64xf32>
    %64 = vector.broadcast %63 : vector<1x64xf32> to vector<64x64xf32>
    %65 = arith.addf %62, %64 : vector<64x64xf32>
    %cst_45 = arith.constant 0.000000e+00 : f32
    %66 = vector.broadcast %cst_45 : f32 to vector<64x64xf32>
    %67 = arith.maximumf %65, %66 : vector<64x64xf32>
    %68 = arith.truncf %67 : vector<64x64xf32> to vector<64x64xbf16>
    %c0_46 = arith.constant 0 : index
    %c0_47 = arith.constant 0 : index
    %69 = vector.load %arg7[%c0_46, %c0_47] : memref<64x128xbf16, #tpu.memory_space<vmem>>, vector<64x128xbf16>
    %cst_48 = arith.constant dense<0.000000e+00> : vector<64x128xf32>
    %70 = tpu.matmul %68, %69, %cst_48 {dimension_numbers = #tpu.dot_dimension_numbers<[1], [0], [0], [1], [0, 0, 1, 1], [], []>} : vector<64x64xbf16>, vector<64x128xbf16>, vector<64x128xf32> -> vector<64x128xf32>
    %c0_49 = arith.constant 0 : index
    %c0_50 = arith.constant 0 : index
    %71 = vector.load %arg8[%c0_49, %c0_50] : memref<1x128xf32, #tpu.memory_space<vmem>>, vector<1x128xf32>
    %72 = vector.broadcast %71 : vector<1x128xf32> to vector<64x128xf32>
    %73 = arith.addf %70, %72 : vector<64x128xf32>
    %74 = vector.shape_cast %67 : vector<64x64xf32> to vector<1x8x8x64xf32>
    %75 = arith.truncf %74 : vector<1x8x8x64xf32> to vector<1x8x8x64xbf16>
    %c0_51 = arith.constant 0 : index
    %c0_52 = arith.constant 0 : index
    %c0_53 = arith.constant 0 : index
    %c0_54 = arith.constant 0 : index
    %76 = vector.load %arg9[%c0_51, %c0_52, %c0_53, %c0_54] : memref<1x8x8x64xbf16, #tpu.memory_space<vmem>>, vector<1x8x8x64xbf16>
    tpu.vector_store %arg9[%c0_51, %c0_52, %c0_53, %c0_54], %75 {strides = array<i32>} : memref<1x8x8x64xbf16, #tpu.memory_space<vmem>>, vector<1x8x8x64xbf16>,
    %77 = vector.shape_cast %73 : vector<64x128xf32> to vector<1x8x8x128xf32>
    %78 = arith.truncf %77 : vector<1x8x8x128xf32> to vector<1x8x8x128xbf16>
    %c0_55 = arith.constant 0 : index
    %c0_56 = arith.constant 0 : index
    %c0_57 = arith.constant 0 : index
    %c0_58 = arith.constant 0 : index
    %79 = vector.load %arg10[%c0_55, %c0_56, %c0_57, %c0_58] : memref<1x8x8x128xbf16, #tpu.memory_space<vmem>>, vector<1x8x8x128xbf16>
    tpu.vector_store %arg10[%c0_55, %c0_56, %c0_57, %c0_58], %78 {strides = array<i32>} : memref<1x8x8x128xbf16, #tpu.memory_space<vmem>>, vector<1x8x8x128xbf16>,
    return
  }
  func.func @transform_0(%arg0: i32) -> (i32, i32, i32, i32) {
    %c0_i32 = arith.constant 0 : i32
    %c0_i32_0 = arith.constant 0 : i32
    %c0_i32_1 = arith.constant 0 : i32
    %c0_i32_2 = arith.constant 0 : i32
    return %arg0, %c0_i32, %c0_i32_0, %c0_i32_1 : i32, i32, i32, i32
  }
  func.func @transform_1(%arg0: i32) -> (i32, i32, i32, i32) {
    %c0_i32 = arith.constant 0 : i32
    %c0_i32_0 = arith.constant 0 : i32
    %c0_i32_1 = arith.constant 0 : i32
    %c0_i32_2 = arith.constant 0 : i32
    return %arg0, %c0_i32, %c0_i32_0, %c0_i32_1 : i32, i32, i32, i32
  }
  func.func @transform_2(%arg0: i32) -> (i32, i32, i32, i32) {
    %c0_i32 = arith.constant 0 : i32
    %c0_i32_0 = arith.constant 0 : i32
    %c0_i32_1 = arith.constant 0 : i32
    %c0_i32_2 = arith.constant 0 : i32
    return %arg0, %c0_i32, %c0_i32_0, %c0_i32_1 : i32, i32, i32, i32
  }
  func.func @transform_3(%arg0: i32) -> (i32, i32, i32, i32) {
    %c0_i32 = arith.constant 0 : i32
    %c0_i32_0 = arith.constant 0 : i32
    %c0_i32_1 = arith.constant 0 : i32
    %c0_i32_2 = arith.constant 0 : i32
    return %arg0, %c0_i32, %c0_i32_0, %c0_i32_1 : i32, i32, i32, i32
  }
  func.func @transform_4(%arg0: i32) -> (i32, i32, i32) {
    %c0_i32 = arith.constant 0 : i32
    %c0_i32_0 = arith.constant 0 : i32
    %c0_i32_1 = arith.constant 0 : i32
    %c0_i32_2 = arith.constant 0 : i32
    return %c0_i32, %c0_i32_0, %c0_i32_1 : i32, i32, i32
  }
  func.func @transform_5(%arg0: i32) -> (i32, i32) {
    %c0_i32 = arith.constant 0 : i32
    %c0_i32_0 = arith.constant 0 : i32
    %c0_i32_1 = arith.constant 0 : i32
    return %c0_i32, %c0_i32_0 : i32, i32
  }
  func.func @transform_6(%arg0: i32) -> (i32, i32) {
    %c0_i32 = arith.constant 0 : i32
    %c0_i32_0 = arith.constant 0 : i32
    %c0_i32_1 = arith.constant 0 : i32
    return %c0_i32, %c0_i32_0 : i32, i32
  }
  func.func @transform_7(%arg0: i32) -> (i32, i32) {
    %c0_i32 = arith.constant 0 : i32
    %c0_i32_0 = arith.constant 0 : i32
    %c0_i32_1 = arith.constant 0 : i32
    return %c0_i32, %c0_i32_0 : i32, i32
  }
  func.func @transform_8(%arg0: i32) -> (i32, i32, i32, i32) {
    %c0_i32 = arith.constant 0 : i32
    %c0_i32_0 = arith.constant 0 : i32
    %c0_i32_1 = arith.constant 0 : i32
    %c0_i32_2 = arith.constant 0 : i32
    return %arg0, %c0_i32, %c0_i32_0, %c0_i32_1 : i32, i32, i32, i32
  }
  func.func @transform_9(%arg0: i32) -> (i32, i32, i32, i32) {
    %c0_i32 = arith.constant 0 : i32
    %c0_i32_0 = arith.constant 0 : i32
    %c0_i32_1 = arith.constant 0 : i32
    %c0_i32_2 = arith.constant 0 : i32
    return %arg0, %c0_i32, %c0_i32_0, %c0_i32_1 : i32, i32, i32, i32
  }
}

module attributes {stable_mosaic.version = 11 : i64} {
  func.func @_gemm_lat_kernel(%arg0: i32, %arg1: memref<32x576xbf16, #tpu.memory_space<vmem>>, %arg2: memref<576x128xbf16, #tpu.memory_space<vmem>>, %arg3: memref<1x128xf32, #tpu.memory_space<vmem>>, %arg4: memref<128x128xbf16, #tpu.memory_space<vmem>>, %arg5: memref<1x128xf32, #tpu.memory_space<vmem>>, %arg6: memref<32x128xbf16, #tpu.memory_space<vmem>>) attributes {dimension_semantics = [#tpu.dimension_semantics<parallel>], iteration_bounds = array<i64: 2>, scalar_prefetch = 0 : i64, scratch_operands = 0 : i64, tpu.core_type = #tpu.core_type<tc>, window_params = [{transform_indices = @transform_0, window_bounds = array<i64: 32, 576>}, {pipeline_mode = #tpu.pipeline_mode<synchronous>, transform_indices = @transform_1, window_bounds = array<i64: 576, 128>}, {pipeline_mode = #tpu.pipeline_mode<synchronous>, transform_indices = @transform_2, window_bounds = array<i64: 1, 128>}, {pipeline_mode = #tpu.pipeline_mode<synchronous>, transform_indices = @transform_3, window_bounds = array<i64: 128, 128>}, {pipeline_mode = #tpu.pipeline_mode<synchronous>, transform_indices = @transform_4, window_bounds = array<i64: 1, 128>}, {transform_indices = @transform_5, window_bounds = array<i64: 32, 128>}]} {
    %c0 = arith.constant 0 : index
    %c0_0 = arith.constant 0 : index
    %0 = vector.load %arg1[%c0, %c0_0] : memref<32x576xbf16, #tpu.memory_space<vmem>>, vector<32x576xbf16>
    %c0_1 = arith.constant 0 : index
    %c0_2 = arith.constant 0 : index
    %1 = vector.load %arg2[%c0_1, %c0_2] : memref<576x128xbf16, #tpu.memory_space<vmem>>, vector<576x128xbf16>
    %cst = arith.constant dense<0.000000e+00> : vector<32x128xf32>
    %2 = tpu.matmul %0, %1, %cst {dimension_numbers = #tpu.dot_dimension_numbers<[1], [0], [0], [1], [0, 0, 1, 1], [], []>} : vector<32x576xbf16>, vector<576x128xbf16>, vector<32x128xf32> -> vector<32x128xf32>
    %c0_3 = arith.constant 0 : index
    %c0_4 = arith.constant 0 : index
    %3 = vector.load %arg3[%c0_3, %c0_4] : memref<1x128xf32, #tpu.memory_space<vmem>>, vector<1x128xf32>
    %4 = vector.broadcast %3 : vector<1x128xf32> to vector<32x128xf32>
    %5 = arith.addf %2, %4 : vector<32x128xf32>
    %cst_5 = arith.constant 0.000000e+00 : f32
    %6 = vector.broadcast %cst_5 : f32 to vector<32x128xf32>
    %7 = arith.maximumf %5, %6 : vector<32x128xf32>
    %8 = arith.truncf %7 : vector<32x128xf32> to vector<32x128xbf16>
    %c0_6 = arith.constant 0 : index
    %c0_7 = arith.constant 0 : index
    %9 = vector.load %arg4[%c0_6, %c0_7] : memref<128x128xbf16, #tpu.memory_space<vmem>>, vector<128x128xbf16>
    %cst_8 = arith.constant dense<0.000000e+00> : vector<32x128xf32>
    %10 = tpu.matmul %8, %9, %cst_8 {dimension_numbers = #tpu.dot_dimension_numbers<[1], [0], [0], [1], [0, 0, 1, 1], [], []>} : vector<32x128xbf16>, vector<128x128xbf16>, vector<32x128xf32> -> vector<32x128xf32>
    %c0_9 = arith.constant 0 : index
    %c0_10 = arith.constant 0 : index
    %11 = vector.load %arg5[%c0_9, %c0_10] : memref<1x128xf32, #tpu.memory_space<vmem>>, vector<1x128xf32>
    %12 = vector.broadcast %11 : vector<1x128xf32> to vector<32x128xf32>
    %13 = arith.addf %10, %12 : vector<32x128xf32>
    %14 = arith.truncf %13 : vector<32x128xf32> to vector<32x128xbf16>
    %c0_11 = arith.constant 0 : index
    %c0_12 = arith.constant 0 : index
    %15 = vector.load %arg6[%c0_11, %c0_12] : memref<32x128xbf16, #tpu.memory_space<vmem>>, vector<32x128xbf16>
    tpu.vector_store %arg6[%c0_11, %c0_12], %14 {strides = array<i32>} : memref<32x128xbf16, #tpu.memory_space<vmem>>, vector<32x128xbf16>,
    return
  }
  func.func @transform_0(%arg0: i32) -> (i32, i32) {
    %c0_i32 = arith.constant 0 : i32
    %c0_i32_0 = arith.constant 0 : i32
    return %arg0, %c0_i32 : i32, i32
  }
  func.func @transform_1(%arg0: i32) -> (i32, i32) {
    %c0_i32 = arith.constant 0 : i32
    %c0_i32_0 = arith.constant 0 : i32
    %c0_i32_1 = arith.constant 0 : i32
    return %c0_i32, %c0_i32_0 : i32, i32
  }
  func.func @transform_2(%arg0: i32) -> (i32, i32) {
    %c0_i32 = arith.constant 0 : i32
    %c0_i32_0 = arith.constant 0 : i32
    %c0_i32_1 = arith.constant 0 : i32
    return %c0_i32, %c0_i32_0 : i32, i32
  }
  func.func @transform_3(%arg0: i32) -> (i32, i32) {
    %c0_i32 = arith.constant 0 : i32
    %c0_i32_0 = arith.constant 0 : i32
    %c0_i32_1 = arith.constant 0 : i32
    return %c0_i32, %c0_i32_0 : i32, i32
  }
  func.func @transform_4(%arg0: i32) -> (i32, i32) {
    %c0_i32 = arith.constant 0 : i32
    %c0_i32_0 = arith.constant 0 : i32
    %c0_i32_1 = arith.constant 0 : i32
    return %c0_i32, %c0_i32_0 : i32, i32
  }
  func.func @transform_5(%arg0: i32) -> (i32, i32) {
    %c0_i32 = arith.constant 0 : i32
    %c0_i32_0 = arith.constant 0 : i32
    return %arg0, %c0_i32 : i32, i32
  }
}

module attributes {stable_mosaic.version = 11 : i64} {
  func.func @_conv3x3_s1_kernel(%arg0: i32, %arg1: memref<1x10x10x128xbf16, #tpu.memory_space<vmem>>, %arg2: memref<1x10x10x128xbf16, #tpu.memory_space<vmem>>, %arg3: memref<9x128x128xbf16, #tpu.memory_space<vmem>>, %arg4: memref<1x128xf32, #tpu.memory_space<vmem>>, %arg5: memref<1x8x8x128xf32, #tpu.memory_space<vmem>>) attributes {dimension_semantics = [#tpu.dimension_semantics<parallel>], iteration_bounds = array<i64: 4>, scalar_prefetch = 0 : i64, scratch_operands = 0 : i64, tpu.core_type = #tpu.core_type<tc>, window_params = [{transform_indices = @transform_0, window_bounds = array<i64: 1, 10, 10, 128>}, {transform_indices = @transform_1, window_bounds = array<i64: 1, 10, 10, 128>}, {pipeline_mode = #tpu.pipeline_mode<synchronous>, transform_indices = @transform_2, window_bounds = array<i64: 9, 128, 128>}, {pipeline_mode = #tpu.pipeline_mode<synchronous>, transform_indices = @transform_3, window_bounds = array<i64: 1, 128>}, {transform_indices = @transform_4, window_bounds = array<i64: 1, 8, 8, 128>}]} {
    %c0 = arith.constant 0 : index
    %c0_0 = arith.constant 0 : index
    %c0_1 = arith.constant 0 : index
    %c0_2 = arith.constant 0 : index
    %0 = vector.load %arg1[%c0, %c0_0, %c0_1, %c0_2] : memref<1x10x10x128xbf16, #tpu.memory_space<vmem>>, vector<1x10x10x128xbf16>
    %1 = vector.shape_cast %0 : vector<1x10x10x128xbf16> to vector<10x10x128xbf16>
    %c0_3 = arith.constant 0 : index
    %c0_4 = arith.constant 0 : index
    %c0_5 = arith.constant 0 : index
    %c0_6 = arith.constant 0 : index
    %2 = vector.load %arg2[%c0_3, %c0_4, %c0_5, %c0_6] : memref<1x10x10x128xbf16, #tpu.memory_space<vmem>>, vector<1x10x10x128xbf16>
    %3 = vector.shape_cast %2 : vector<1x10x10x128xbf16> to vector<10x10x128xbf16>
    %4 = arith.addf %1, %3 : vector<10x10x128xbf16>
    %cst = arith.constant 0.000000e+00 : f32
    %5 = vector.broadcast %cst : f32 to vector<64x128xf32>
    %6 = vector.extract_strided_slice %4 {offsets = [0, 0, 0], sizes = [8, 8, 128], strides = [1, 1, 1]} : vector<10x10x128xbf16> to vector<8x8x128xbf16>
    %7 = vector.shape_cast %6 : vector<8x8x128xbf16> to vector<64x128xbf16>
    %c0_7 = arith.constant 0 : index
    %c0_8 = arith.constant 0 : index
    %c0_9 = arith.constant 0 : index
    %8 = vector.load %arg3[%c0_7, %c0_8, %c0_9] : memref<9x128x128xbf16, #tpu.memory_space<vmem>>, vector<1x128x128xbf16>
    %9 = vector.shape_cast %8 : vector<1x128x128xbf16> to vector<128x128xbf16>
    %cst_10 = arith.constant dense<0.000000e+00> : vector<64x128xf32>
    %10 = tpu.matmul %7, %9, %cst_10 {dimension_numbers = #tpu.dot_dimension_numbers<[1], [0], [0], [1], [0, 0, 1, 1], [], []>} : vector<64x128xbf16>, vector<128x128xbf16>, vector<64x128xf32> -> vector<64x128xf32>
    %11 = arith.addf %5, %10 : vector<64x128xf32>
    %12 = vector.extract_strided_slice %4 {offsets = [0, 1, 0], sizes = [8, 8, 128], strides = [1, 1, 1]} : vector<10x10x128xbf16> to vector<8x8x128xbf16>
    %13 = vector.shape_cast %12 : vector<8x8x128xbf16> to vector<64x128xbf16>
    %c1 = arith.constant 1 : index
    %c0_11 = arith.constant 0 : index
    %c0_12 = arith.constant 0 : index
    %14 = vector.load %arg3[%c1, %c0_11, %c0_12] : memref<9x128x128xbf16, #tpu.memory_space<vmem>>, vector<1x128x128xbf16>
    %15 = vector.shape_cast %14 : vector<1x128x128xbf16> to vector<128x128xbf16>
    %cst_13 = arith.constant dense<0.000000e+00> : vector<64x128xf32>
    %16 = tpu.matmul %13, %15, %cst_13 {dimension_numbers = #tpu.dot_dimension_numbers<[1], [0], [0], [1], [0, 0, 1, 1], [], []>} : vector<64x128xbf16>, vector<128x128xbf16>, vector<64x128xf32> -> vector<64x128xf32>
    %17 = arith.addf %11, %16 : vector<64x128xf32>
    %18 = vector.extract_strided_slice %4 {offsets = [0, 2, 0], sizes = [8, 8, 128], strides = [1, 1, 1]} : vector<10x10x128xbf16> to vector<8x8x128xbf16>
    %19 = vector.shape_cast %18 : vector<8x8x128xbf16> to vector<64x128xbf16>
    %c2 = arith.constant 2 : index
    %c0_14 = arith.constant 0 : index
    %c0_15 = arith.constant 0 : index
    %20 = vector.load %arg3[%c2, %c0_14, %c0_15] : memref<9x128x128xbf16, #tpu.memory_space<vmem>>, vector<1x128x128xbf16>
    %21 = vector.shape_cast %20 : vector<1x128x128xbf16> to vector<128x128xbf16>
    %cst_16 = arith.constant dense<0.000000e+00> : vector<64x128xf32>
    %22 = tpu.matmul %19, %21, %cst_16 {dimension_numbers = #tpu.dot_dimension_numbers<[1], [0], [0], [1], [0, 0, 1, 1], [], []>} : vector<64x128xbf16>, vector<128x128xbf16>, vector<64x128xf32> -> vector<64x128xf32>
    %23 = arith.addf %17, %22 : vector<64x128xf32>
    %24 = vector.extract_strided_slice %4 {offsets = [1, 0, 0], sizes = [8, 8, 128], strides = [1, 1, 1]} : vector<10x10x128xbf16> to vector<8x8x128xbf16>
    %25 = vector.shape_cast %24 : vector<8x8x128xbf16> to vector<64x128xbf16>
    %c3 = arith.constant 3 : index
    %c0_17 = arith.constant 0 : index
    %c0_18 = arith.constant 0 : index
    %26 = vector.load %arg3[%c3, %c0_17, %c0_18] : memref<9x128x128xbf16, #tpu.memory_space<vmem>>, vector<1x128x128xbf16>
    %27 = vector.shape_cast %26 : vector<1x128x128xbf16> to vector<128x128xbf16>
    %cst_19 = arith.constant dense<0.000000e+00> : vector<64x128xf32>
    %28 = tpu.matmul %25, %27, %cst_19 {dimension_numbers = #tpu.dot_dimension_numbers<[1], [0], [0], [1], [0, 0, 1, 1], [], []>} : vector<64x128xbf16>, vector<128x128xbf16>, vector<64x128xf32> -> vector<64x128xf32>
    %29 = arith.addf %23, %28 : vector<64x128xf32>
    %30 = vector.extract_strided_slice %4 {offsets = [1, 1, 0], sizes = [8, 8, 128], strides = [1, 1, 1]} : vector<10x10x128xbf16> to vector<8x8x128xbf16>
    %31 = vector.shape_cast %30 : vector<8x8x128xbf16> to vector<64x128xbf16>
    %c4 = arith.constant 4 : index
    %c0_20 = arith.constant 0 : index
    %c0_21 = arith.constant 0 : index
    %32 = vector.load %arg3[%c4, %c0_20, %c0_21] : memref<9x128x128xbf16, #tpu.memory_space<vmem>>, vector<1x128x128xbf16>
    %33 = vector.shape_cast %32 : vector<1x128x128xbf16> to vector<128x128xbf16>
    %cst_22 = arith.constant dense<0.000000e+00> : vector<64x128xf32>
    %34 = tpu.matmul %31, %33, %cst_22 {dimension_numbers = #tpu.dot_dimension_numbers<[1], [0], [0], [1], [0, 0, 1, 1], [], []>} : vector<64x128xbf16>, vector<128x128xbf16>, vector<64x128xf32> -> vector<64x128xf32>
    %35 = arith.addf %29, %34 : vector<64x128xf32>
    %36 = vector.extract_strided_slice %4 {offsets = [1, 2, 0], sizes = [8, 8, 128], strides = [1, 1, 1]} : vector<10x10x128xbf16> to vector<8x8x128xbf16>
    %37 = vector.shape_cast %36 : vector<8x8x128xbf16> to vector<64x128xbf16>
    %c5 = arith.constant 5 : index
    %c0_23 = arith.constant 0 : index
    %c0_24 = arith.constant 0 : index
    %38 = vector.load %arg3[%c5, %c0_23, %c0_24] : memref<9x128x128xbf16, #tpu.memory_space<vmem>>, vector<1x128x128xbf16>
    %39 = vector.shape_cast %38 : vector<1x128x128xbf16> to vector<128x128xbf16>
    %cst_25 = arith.constant dense<0.000000e+00> : vector<64x128xf32>
    %40 = tpu.matmul %37, %39, %cst_25 {dimension_numbers = #tpu.dot_dimension_numbers<[1], [0], [0], [1], [0, 0, 1, 1], [], []>} : vector<64x128xbf16>, vector<128x128xbf16>, vector<64x128xf32> -> vector<64x128xf32>
    %41 = arith.addf %35, %40 : vector<64x128xf32>
    %42 = vector.extract_strided_slice %4 {offsets = [2, 0, 0], sizes = [8, 8, 128], strides = [1, 1, 1]} : vector<10x10x128xbf16> to vector<8x8x128xbf16>
    %43 = vector.shape_cast %42 : vector<8x8x128xbf16> to vector<64x128xbf16>
    %c6 = arith.constant 6 : index
    %c0_26 = arith.constant 0 : index
    %c0_27 = arith.constant 0 : index
    %44 = vector.load %arg3[%c6, %c0_26, %c0_27] : memref<9x128x128xbf16, #tpu.memory_space<vmem>>, vector<1x128x128xbf16>
    %45 = vector.shape_cast %44 : vector<1x128x128xbf16> to vector<128x128xbf16>
    %cst_28 = arith.constant dense<0.000000e+00> : vector<64x128xf32>
    %46 = tpu.matmul %43, %45, %cst_28 {dimension_numbers = #tpu.dot_dimension_numbers<[1], [0], [0], [1], [0, 0, 1, 1], [], []>} : vector<64x128xbf16>, vector<128x128xbf16>, vector<64x128xf32> -> vector<64x128xf32>
    %47 = arith.addf %41, %46 : vector<64x128xf32>
    %48 = vector.extract_strided_slice %4 {offsets = [2, 1, 0], sizes = [8, 8, 128], strides = [1, 1, 1]} : vector<10x10x128xbf16> to vector<8x8x128xbf16>
    %49 = vector.shape_cast %48 : vector<8x8x128xbf16> to vector<64x128xbf16>
    %c7 = arith.constant 7 : index
    %c0_29 = arith.constant 0 : index
    %c0_30 = arith.constant 0 : index
    %50 = vector.load %arg3[%c7, %c0_29, %c0_30] : memref<9x128x128xbf16, #tpu.memory_space<vmem>>, vector<1x128x128xbf16>
    %51 = vector.shape_cast %50 : vector<1x128x128xbf16> to vector<128x128xbf16>
    %cst_31 = arith.constant dense<0.000000e+00> : vector<64x128xf32>
    %52 = tpu.matmul %49, %51, %cst_31 {dimension_numbers = #tpu.dot_dimension_numbers<[1], [0], [0], [1], [0, 0, 1, 1], [], []>} : vector<64x128xbf16>, vector<128x128xbf16>, vector<64x128xf32> -> vector<64x128xf32>
    %53 = arith.addf %47, %52 : vector<64x128xf32>
    %54 = vector.extract_strided_slice %4 {offsets = [2, 2, 0], sizes = [8, 8, 128], strides = [1, 1, 1]} : vector<10x10x128xbf16> to vector<8x8x128xbf16>
    %55 = vector.shape_cast %54 : vector<8x8x128xbf16> to vector<64x128xbf16>
    %c8 = arith.constant 8 : index
    %c0_32 = arith.constant 0 : index
    %c0_33 = arith.constant 0 : index
    %56 = vector.load %arg3[%c8, %c0_32, %c0_33] : memref<9x128x128xbf16, #tpu.memory_space<vmem>>, vector<1x128x128xbf16>
    %57 = vector.shape_cast %56 : vector<1x128x128xbf16> to vector<128x128xbf16>
    %cst_34 = arith.constant dense<0.000000e+00> : vector<64x128xf32>
    %58 = tpu.matmul %55, %57, %cst_34 {dimension_numbers = #tpu.dot_dimension_numbers<[1], [0], [0], [1], [0, 0, 1, 1], [], []>} : vector<64x128xbf16>, vector<128x128xbf16>, vector<64x128xf32> -> vector<64x128xf32>
    %59 = arith.addf %53, %58 : vector<64x128xf32>
    %c0_35 = arith.constant 0 : index
    %c0_36 = arith.constant 0 : index
    %60 = vector.load %arg4[%c0_35, %c0_36] : memref<1x128xf32, #tpu.memory_space<vmem>>, vector<1x128xf32>
    %61 = vector.broadcast %60 : vector<1x128xf32> to vector<64x128xf32>
    %62 = arith.addf %59, %61 : vector<64x128xf32>
    %63 = vector.shape_cast %62 : vector<64x128xf32> to vector<1x8x8x128xf32>
    %c0_37 = arith.constant 0 : index
    %c0_38 = arith.constant 0 : index
    %c0_39 = arith.constant 0 : index
    %c0_40 = arith.constant 0 : index
    %64 = vector.load %arg5[%c0_37, %c0_38, %c0_39, %c0_40] : memref<1x8x8x128xf32, #tpu.memory_space<vmem>>, vector<1x8x8x128xf32>
    tpu.vector_store %arg5[%c0_37, %c0_38, %c0_39, %c0_40], %63 {strides = array<i32>} : memref<1x8x8x128xf32, #tpu.memory_space<vmem>>, vector<1x8x8x128xf32>,
    return
  }
  func.func @transform_0(%arg0: i32) -> (i32, i32, i32, i32) {
    %c0_i32 = arith.constant 0 : i32
    %c0_i32_0 = arith.constant 0 : i32
    %c0_i32_1 = arith.constant 0 : i32
    %c0_i32_2 = arith.constant 0 : i32
    return %arg0, %c0_i32, %c0_i32_0, %c0_i32_1 : i32, i32, i32, i32
  }
  func.func @transform_1(%arg0: i32) -> (i32, i32, i32, i32) {
    %c0_i32 = arith.constant 0 : i32
    %c0_i32_0 = arith.constant 0 : i32
    %c0_i32_1 = arith.constant 0 : i32
    %c0_i32_2 = arith.constant 0 : i32
    return %arg0, %c0_i32, %c0_i32_0, %c0_i32_1 : i32, i32, i32, i32
  }
  func.func @transform_2(%arg0: i32) -> (i32, i32, i32) {
    %c0_i32 = arith.constant 0 : i32
    %c0_i32_0 = arith.constant 0 : i32
    %c0_i32_1 = arith.constant 0 : i32
    %c0_i32_2 = arith.constant 0 : i32
    return %c0_i32, %c0_i32_0, %c0_i32_1 : i32, i32, i32
  }
  func.func @transform_3(%arg0: i32) -> (i32, i32) {
    %c0_i32 = arith.constant 0 : i32
    %c0_i32_0 = arith.constant 0 : i32
    %c0_i32_1 = arith.constant 0 : i32
    return %c0_i32, %c0_i32_0 : i32, i32
  }
  func.func @transform_4(%arg0: i32) -> (i32, i32, i32, i32) {
    %c0_i32 = arith.constant 0 : i32
    %c0_i32_0 = arith.constant 0 : i32
    %c0_i32_1 = arith.constant 0 : i32
    %c0_i32_2 = arith.constant 0 : i32
    return %arg0, %c0_i32, %c0_i32_0, %c0_i32_1 : i32, i32, i32, i32
  }
}

</mosaic_0001>

<llo_original>
// kernel: img_backbone_forward.5
$region0: #{img_backbone_forward.5}
  #allocation0 [shape = 'u32[]', space=smem, size = 0x4, offset = 0x4, fixed_abs, tag = 'smem constant byte address 0x4 - core index']
  #allocation1 [shape = 'u32[144,128]{1,0:T(1,128)}', space=vmem, size = 0x12000, scoped, tag = 'internal scratch']
  %s0 = inlined_call_operand.vmem [shape: bf16[4,9,9,32], index: 0, kind: input, shape index: {}]
  %s1 = inlined_call_operand.vmem [shape: bf16[4,9,9,32], index: 1, kind: input, shape index: {}]
  %s2 = inlined_call_operand.vmem [shape: bf16[4,9,9,32], index: 2, kind: input, shape index: {}]
  %s3 = inlined_call_operand.vmem [shape: bf16[4,9,9,32], index: 3, kind: input, shape index: {}]
  %s4 = inlined_call_operand.vmem [shape: bf16[9,32,64], index: 4, kind: input, shape index: {}]
  %s5 = inlined_call_operand.vmem [shape: f32[1,64], index: 5, kind: input, shape index: {}]
  %s6 = inlined_call_operand.vmem [shape: bf16[64,128], index: 6, kind: input, shape index: {}]
  %s7 = inlined_call_operand.vmem [shape: f32[1,128], index: 7, kind: input, shape index: {}]
  %s8 = inlined_call_operand.vmem [shape: bf16[4,8,8,64], index: 8, kind: output, shape index: {0}]
  %s9 = inlined_call_operand.vmem [shape: bf16[4,8,8,128], index: 9, kind: output, shape index: {1}]
  %10 = xla_tuple %s8, %s9
  %s11 = sld [smem:[#allocation0]]
  $region73: #{img_backbone_forward.5} parent=0
    _
  %s13 = ssub.s32 1, %s11
  %s14 = scalar_select 0, %s13, %s11
  loop: start=0, step=1, limit=6
  $region2: #{img_backbone_forward.5} parent=0 // loop_pre_header
    _
  $region3: #{img_backbone_forward.5} parent=0 // loop_header
    %s16 = sphi 0, %s20
    %p17 = scmp.ge.s32.totalorder %s16, 6
    %s26 = sphi 0, %s28
    %s29 = sphi 0, %s26
    %s30 = sphi 0, %s29
    %s46 = sphi 0, %s30
    %s52 = sphi 0, %s54
    %s55 = sphi 0, %s52
    %s56 = sphi 0, %s55
    %s72 = sphi 0, %s56
    %s78 = sphi 0, %s80
    %s81 = sphi 0, %s78
    %s82 = sphi 0, %s81
    %s98 = sphi 0, %s82
    %s104 = sphi 0, %s106
    %s107 = sphi 0, %s104
    %s108 = sphi 0, %s107
    %s124 = sphi 0, %s108
    %s128 = sphi 0, %s128
    %s130 = sphi 0, %s128
    %s131 = sphi 0, %s130
    %s145 = sphi 0, %s131
    %s149 = sphi 0, %s149
    %s151 = sphi 0, %s149
    %s152 = sphi 0, %s151
    %s166 = sphi 0, %s152
    %s170 = sphi 0, %s170
    %s172 = sphi 0, %s170
    %s173 = sphi 0, %s172
    %s187 = sphi 0, %s173
    %s191 = sphi 0, %s191
    %s193 = sphi 0, %s191
    %s194 = sphi 0, %s193
    %s208 = sphi 0, %s194
    %s214 = sphi 0, %s216
    %s217 = sphi 0, %s214
    %s218 = sphi 0, %s217
    %s234 = sphi 0, %s218
    %s240 = sphi 0, %s242
    %s243 = sphi 0, %s240
    %s244 = sphi 0, %s243
    %s260 = sphi 0, %s244
  $region4: #{img_backbone_forward.5} parent=0 // loop_header_branch
    %19 = sbr.rel (%p17) target = $region8
  $region5: #{img_backbone_forward.5} parent=0 // loop_body
    %s21 = ssub.s32 %s16, 1
    %s22 = ssub.s32 %s16, 2
    %s23 = sadd.s32 %s16, 1
    %s24 = ssub.s32 %s16, %s23
    %p25 = scmp.eq.s32.totalorder %s24, 0
    %s27 = sadd.s32 %s26, 1
    %s28 = scalar_select %p25, %s26, %s27
    %p31 = pneg %p25
    %p32 = scmp.eq.s32.totalorder %s16, 3
    %p33 = por %p31, %p32
    %p34 = scmp.ne.s32.totalorder %s26, %s29
    %p35 = scmp.eq.s32.totalorder %s16, 0
    %p36 = por %p34, %p35
    %p37 = scmp.ne.s32.totalorder %s26, %s29
    %p38 = scmp.eq.s32.totalorder %s21, 3
    %p39 = por %p37, %p38
    %p40 = scmp.ne.s32.totalorder %s29, %s30
    %p41 = scmp.eq.s32.totalorder %s21, 0
    %p42 = por %p40, %p41
    %p43 = scmp.ne.s32.totalorder %s29, %s30
    %p44 = scmp.eq.s32.totalorder %s22, 3
    %p45 = por %p43, %p44
    %p47 = scmp.ne.s32.totalorder %s30, %s46
    %p48 = scmp.eq.s32.totalorder %s22, 0
    %p49 = por %p47, %p48
    %s50 = ssub.s32 %s16, %s23
    %p51 = scmp.eq.s32.totalorder %s50, 0
    %s53 = sadd.s32 %s52, 1
    %s54 = scalar_select %p51, %s52, %s53
    %p57 = pneg %p51
    %p58 = scmp.eq.s32.totalorder %s16, 3
    %p59 = por %p57, %p58
    %p60 = scmp.ne.s32.totalorder %s52, %s55
    %p61 = scmp.eq.s32.totalorder %s16, 0
    %p62 = por %p60, %p61
    %p63 = scmp.ne.s32.totalorder %s52, %s55
    %p64 = scmp.eq.s32.totalorder %s21, 3
    %p65 = por %p63, %p64
    %p66 = scmp.ne.s32.totalorder %s55, %s56
    %p67 = scmp.eq.s32.totalorder %s21, 0
    %p68 = por %p66, %p67
    %p69 = scmp.ne.s32.totalorder %s55, %s56
    %p70 = scmp.eq.s32.totalorder %s22, 3
    %p71 = por %p69, %p70
    %p73 = scmp.ne.s32.totalorder %s56, %s72
    %p74 = scmp.eq.s32.totalorder %s22, 0
    %p75 = por %p73, %p74
    %s76 = ssub.s32 %s16, %s23
    %p77 = scmp.eq.s32.totalorder %s76, 0
    %s79 = sadd.s32 %s78, 1
    %s80 = scalar_select %p77, %s78, %s79
    %p83 = pneg %p77
    %p84 = scmp.eq.s32.totalorder %s16, 3
    %p85 = por %p83, %p84
    %p86 = scmp.ne.s32.totalorder %s78, %s81
    %p87 = scmp.eq.s32.totalorder %s16, 0
    %p88 = por %p86, %p87
    %p89 = scmp.ne.s32.totalorder %s78, %s81
    %p90 = scmp.eq.s32.totalorder %s21, 3
    %p91 = por %p89, %p90
    %p92 = scmp.ne.s32.totalorder %s81, %s82
    %p93 = scmp.eq.s32.totalorder %s21, 0
    %p94 = por %p92, %p93
    %p95 = scmp.ne.s32.totalorder %s81, %s82
    %p96 = scmp.eq.s32.totalorder %s22, 3
    %p97 = por %p95, %p96
    %p99 = scmp.ne.s32.totalorder %s82, %s98
    %p100 = scmp.eq.s32.totalorder %s22, 0
    %p101 = por %p99, %p100
    %s102 = ssub.s32 %s16, %s23
    %p103 = scmp.eq.s32.totalorder %s102, 0
    %s105 = sadd.s32 %s104, 1
    %s106 = scalar_select %p103, %s104, %s105
    %p109 = pneg %p103
    %p110 = scmp.eq.s32.totalorder %s16, 3
    %p111 = por %p109, %p110
    %p112 = scmp.ne.s32.totalorder %s104, %s107
    %p113 = scmp.eq.s32.totalorder %s16, 0
    %p114 = por %p112, %p113
    %p115 = scmp.ne.s32.totalorder %s104, %s107
    %p116 = scmp.eq.s32.totalorder %s21, 3
    %p117 = por %p115, %p116
    %p118 = scmp.ne.s32.totalorder %s107, %s108
    %p119 = scmp.eq.s32.totalorder %s21, 0
    %p120 = por %p118, %p119
    %p121 = scmp.ne.s32.totalorder %s107, %s108
    %p122 = scmp.eq.s32.totalorder %s22, 3
    %p123 = por %p121, %p122
    %p125 = scmp.ne.s32.totalorder %s108, %s124
    %p126 = scmp.eq.s32.totalorder %s22, 0
    %p127 = por %p125, %p126
    %s129 = sadd.s32 %s128, 1
    %p132 = scmp.eq.s32.totalorder %s16, 3
    %p133 = scmp.ne.s32.totalorder %s128, %s130
    %p134 = scmp.eq.s32.totalorder %s16, 0
    %p135 = por %p133, %p134
    %p136 = scmp.ne.s32.totalorder %s128, %s130
    %p137 = scmp.eq.s32.totalorder %s21, 3
    %p138 = por %p136, %p137
    %p139 = scmp.ne.s32.totalorder %s130, %s131
    %p140 = scmp.eq.s32.totalorder %s21, 0
    %p141 = por %p139, %p140
    %p142 = scmp.ne.s32.totalorder %s130, %s131
    %p143 = scmp.eq.s32.totalorder %s22, 3
    %p144 = por %p142, %p143
    %p146 = scmp.ne.s32.totalorder %s131, %s145
    %p147 = scmp.eq.s32.totalorder %s22, 0
    %p148 = por %p146, %p147
    %s150 = sadd.s32 %s149, 1
    %p153 = scmp.eq.s32.totalorder %s16, 3
    %p154 = scmp.ne.s32.totalorder %s149, %s151
    %p155 = scmp.eq.s32.totalorder %s16, 0
    %p156 = por %p154, %p155
    %p157 = scmp.ne.s32.totalorder %s149, %s151
    %p158 = scmp.eq.s32.totalorder %s21, 3
    %p159 = por %p157, %p158
    %p160 = scmp.ne.s32.totalorder %s151, %s152
    %p161 = scmp.eq.s32.totalorder %s21, 0
    %p162 = por %p160, %p161
    %p163 = scmp.ne.s32.totalorder %s151, %s152
    %p164 = scmp.eq.s32.totalorder %s22, 3
    %p165 = por %p163, %p164
    %p167 = scmp.ne.s32.totalorder %s152, %s166
    %p168 = scmp.eq.s32.totalorder %s22, 0
    %p169 = por %p167, %p168
    %s171 = sadd.s32 %s170, 1
    %p174 = scmp.eq.s32.totalorder %s16, 3
    %p175 = scmp.ne.s32.totalorder %s170, %s172
    %p176 = scmp.eq.s32.totalorder %s16, 0
    %p177 = por %p175, %p176
    %p178 = scmp.ne.s32.totalorder %s170, %s172
    %p179 = scmp.eq.s32.totalorder %s21, 3
    %p180 = por %p178, %p179
    %p181 = scmp.ne.s32.totalorder %s172, %s173
    %p182 = scmp.eq.s32.totalorder %s21, 0
    %p183 = por %p181, %p182
    %p184 = scmp.ne.s32.totalorder %s172, %s173
    %p185 = scmp.eq.s32.totalorder %s22, 3
    %p186 = por %p184, %p185
    %p188 = scmp.ne.s32.totalorder %s173, %s187
    %p189 = scmp.eq.s32.totalorder %s22, 0
    %p190 = por %p188, %p189
    %s192 = sadd.s32 %s191, 1
    %p195 = scmp.eq.s32.totalorder %s16, 3
    %p196 = scmp.ne.s32.totalorder %s191, %s193
    %p197 = scmp.eq.s32.totalorder %s16, 0
    %p198 = por %p196, %p197
    %p199 = scmp.ne.s32.totalorder %s191, %s193
    %p200 = scmp.eq.s32.totalorder %s21, 3
    %p201 = por %p199, %p200
    %p202 = scmp.ne.s32.totalorder %s193, %s194
    %p203 = scmp.eq.s32.totalorder %s21, 0
    %p204 = por %p202, %p203
    %p205 = scmp.ne.s32.totalorder %s193, %s194
    %p206 = scmp.eq.s32.totalorder %s22, 3
    %p207 = por %p205, %p206
    %p209 = scmp.ne.s32.totalorder %s194, %s208
    %p210 = scmp.eq.s32.totalorder %s22, 0
    %p211 = por %p209, %p210
    %s212 = ssub.s32 %s16, %s23
    %p213 = scmp.eq.s32.totalorder %s212, 0
    %s215 = sadd.s32 %s214, 1
    %s216 = scalar_select %p213, %s214, %s215
    %p219 = pneg %p213
    %p220 = scmp.eq.s32.totalorder %s16, 3
    %p221 = por %p219, %p220
    %p222 = scmp.ne.s32.totalorder %s214, %s217
    %p223 = scmp.eq.s32.totalorder %s16, 0
    %p224 = por %p222, %p223
    %p225 = scmp.ne.s32.totalorder %s214, %s217
    %p226 = scmp.eq.s32.totalorder %s21, 3
    %p227 = por %p225, %p226
    %p228 = scmp.ne.s32.totalorder %s217, %s218
    %p229 = scmp.eq.s32.totalorder %s21, 0
    %p230 = por %p228, %p229
    %p231 = scmp.ne.s32.totalorder %s217, %s218
    %p232 = scmp.eq.s32.totalorder %s22, 3
    %p233 = por %p231, %p232
    %p235 = scmp.ne.s32.totalorder %s218, %s234
    %p236 = scmp.eq.s32.totalorder %s22, 0
    %p237 = por %p235, %p236
    %s238 = ssub.s32 %s16, %s23
    %p239 = scmp.eq.s32.totalorder %s238, 0
    %s241 = sadd.s32 %s240, 1
    %s242 = scalar_select %p239, %s240, %s241
    %p245 = pneg %p239
    %p246 = scmp.eq.s32.totalorder %s16, 3
    %p247 = por %p245, %p246
    %p248 = scmp.ne.s32.totalorder %s240, %s243
    %p249 = scmp.eq.s32.totalorder %s16, 0
    %p250 = por %p248, %p249
    %p251 = scmp.ne.s32.totalorder %s240, %s243
    %p252 = scmp.eq.s32.totalorder %s21, 3
    %p253 = por %p251, %p252
    %p254 = scmp.ne.s32.totalorder %s243, %s244
    %p255 = scmp.eq.s32.totalorder %s21, 0
    %p256 = por %p254, %p255
    %p257 = scmp.ne.s32.totalorder %s243, %s244
    %p258 = scmp.eq.s32.totalorder %s22, 3
    %p259 = por %p257, %p258
    %p261 = scmp.ne.s32.totalorder %s244, %s260
    %p262 = scmp.eq.s32.totalorder %s22, 0
    %p263 = por %p261, %p262
    %p264 = scmp.le.s32.totalorder 1, %s16
    %p265 = scmp.lt.s32.totalorder %s16, 5
    %p266 = pnand %p264, %p265
    %p267 = pneg %p266
    // Predicated region
    $region9: #{img_backbone_forward.5} parent=5 // pred_check
      _
    $region10: #{img_backbone_forward.5} parent=5 // pred_check_branch
      %269 = sbr.rel (%p266) target = $region12
    $region11: #{img_backbone_forward.5} parent=5 // pred_region
      %s270 = ssub.s32 %s16, 1
      // Predicated region
      $region13: #{img_backbone_forward.5} parent=11 // pred_check
        %p271 = pneg %p141
      $region14: #{img_backbone_forward.5} parent=11 // pred_check_branch
        %273 = sbr.rel (%p271) target = $region16
      $region15: #{img_backbone_forward.5} parent=11 // pred_region
        _
      $region16: #{img_backbone_forward.5} parent=11 // pred_fallthru
        _
      // Predicated region
      $region17: #{img_backbone_forward.5} parent=11 // pred_check
        %p274 = pneg %p162
      $region18: #{img_backbone_forward.5} parent=11 // pred_check_branch
        %276 = sbr.rel (%p274) target = $region20
      $region19: #{img_backbone_forward.5} parent=11 // pred_region
        _
      $region20: #{img_backbone_forward.5} parent=11 // pred_fallthru
        _
      // Predicated region
      $region21: #{img_backbone_forward.5} parent=11 // pred_check
        %p277 = pneg %p183
      $region22: #{img_backbone_forward.5} parent=11 // pred_check_branch
        %279 = sbr.rel (%p277) target = $region24
      $region23: #{img_backbone_forward.5} parent=11 // pred_region
        _
      $region24: #{img_backbone_forward.5} parent=11 // pred_fallthru
        _
      // Predicated region
      $region25: #{img_backbone_forward.5} parent=11 // pred_check
        %p280 = pneg %p204
      $region26: #{img_backbone_forward.5} parent=11 // pred_check_branch
        %282 = sbr.rel (%p280) target = $region28
      $region27: #{img_backbone_forward.5} parent=11 // pred_region
        _
      $region28: #{img_backbone_forward.5} parent=11 // pred_fallthru
        _
    $region12: #{img_backbone_forward.5} parent=5 // pred_fallthru
      _
    %p283 = scmp.lt.s32.totalorder %s16, 4
    // Predicated region
    $region29: #{img_backbone_forward.5} parent=5 // pred_check
      %p284 = pneg %p283
    $region30: #{img_backbone_forward.5} parent=5 // pred_check_branch
      %286 = sbr.rel (%p284) target = $region32
    $region31: #{img_backbone_forward.5} parent=5 // pred_region
      // Predicated region
      $region33: #{img_backbone_forward.5} parent=31 // pred_check
        %p287 = pneg %p36
      $region34: #{img_backbone_forward.5} parent=31 // pred_check_branch
        %289 = sbr.rel (%p287) target = $region36
      $region35: #{img_backbone_forward.5} parent=31 // pred_region
        %p290 = scmp.lt.s32.totalorder %s16, 3
        %s291 = scalar_select %p290, %s16, 3
        %s292 = smul.addr %s291, 18
        %s293 = smul.addr %s292, 4
        %s294 = scalar_lea.vmem %s0, %s293
      $region36: #{img_backbone_forward.5} parent=31 // pred_fallthru
        _
      // Predicated region
      $region37: #{img_backbone_forward.5} parent=31 // pred_check
        %p295 = pneg %p62
      $region38: #{img_backbone_forward.5} parent=31 // pred_check_branch
        %297 = sbr.rel (%p295) target = $region40
      $region39: #{img_backbone_forward.5} parent=31 // pred_region
        %p298 = scmp.lt.s32.totalorder %s16, 3
        %s299 = scalar_select %p298, %s16, 3
        %s300 = smul.addr %s299, 18
        %s301 = smul.addr %s300, 4
        %s302 = scalar_lea.vmem %s1, %s301
      $region40: #{img_backbone_forward.5} parent=31 // pred_fallthru
        _
      // Predicated region
      $region41: #{img_backbone_forward.5} parent=31 // pred_check
        %p303 = pneg %p88
      $region42: #{img_backbone_forward.5} parent=31 // pred_check_branch
        %305 = sbr.rel (%p303) target = $region44
      $region43: #{img_backbone_forward.5} parent=31 // pred_region
        %p306 = scmp.lt.s32.totalorder %s16, 3
        %s307 = scalar_select %p306, %s16, 3
        %s308 = smul.addr %s307, 18
        %s309 = smul.addr %s308, 4
        %s310 = scalar_lea.vmem %s2, %s309
      $region44: #{img_backbone_forward.5} parent=31 // pred_fallthru
        _
      // Predicated region
      $region45: #{img_backbone_forward.5} parent=31 // pred_check
        %p311 = pneg %p114
      $region46: #{img_backbone_forward.5} parent=31 // pred_check_branch
        %313 = sbr.rel (%p311) target = $region48
      $region47: #{img_backbone_forward.5} parent=31 // pred_region
        %p314 = scmp.lt.s32.totalorder %s16, 3
        %s315 = scalar_select %p314, %s16, 3
        %s316 = smul.addr %s315, 18
        %s317 = smul.addr %s316, 4
        %s318 = scalar_lea.vmem %s3, %s317
      $region48: #{img_backbone_forward.5} parent=31 // pred_fallthru
        _
    $region32: #{img_backbone_forward.5} parent=5 // pred_fallthru
      _
    %p319 = scmp.le.s32.totalorder 1, %s16
    %p320 = scmp.lt.s32.totalorder %s16, 5
    %p321 = pnand %p319, %p320
    %p322 = pneg %p321
    // Predicated region
    $region49: #{img_backbone_forward.5} parent=5 // pred_check
      _
    $region50: #{img_backbone_forward.5} parent=5 // pred_check_branch
      %324 = sbr.rel (%p321) target = $region52
    $region51: #{img_backbone_forward.5} parent=5 // pred_region
      %s325 = ssub.s32 %s16, 1
      %p326 = scmp.lt.s32.totalorder %s21, 3
      %s327 = scalar_select %p326, %s21, 3
      %s328 = smul.addr %s327, 18
      %s329 = smul.addr %s328, 4
      %s330 = scalar_lea.vmem %s0, %s329
      %p331 = pneg %p42
      %p332 = pneg %p39
      %p333 = scmp.lt.s32.totalorder %s21, 3
      %s334 = scalar_select %p333, %s21, 3
      %s335 = smul.addr %s334, 18
      %s336 = smul.addr %s335, 4
      %s337 = scalar_lea.vmem %s1, %s336
      %p338 = pneg %p68
      %p339 = pneg %p65
      %p340 = scmp.lt.s32.totalorder %s21, 3
      %s341 = scalar_select %p340, %s21, 3
      %s342 = smul.addr %s341, 18
      %s343 = smul.addr %s342, 4
      %s344 = scalar_lea.vmem %s2, %s343
      %p345 = pneg %p94
      %p346 = pneg %p91
      %p347 = scmp.lt.s32.totalorder %s21, 3
      %s348 = scalar_select %p347, %s21, 3
      %s349 = smul.addr %s348, 18
      %s350 = smul.addr %s349, 4
      %s351 = scalar_lea.vmem %s3, %s350
      %p352 = pneg %p120
      %p353 = pneg %p117
      %p354 = pneg %p141
      %p355 = pneg %p138
      %p356 = pneg %p162
      %p357 = pneg %p159
      %p358 = pneg %p183
      %p359 = pneg %p180
      %p360 = pneg %p204
      %p361 = pneg %p201
      %p362 = pneg %p230
      %p363 = pneg %p227
      %p364 = scmp.lt.s32.totalorder %s21, 3
      %s365 = scalar_select %p364, %s21, 3
      %s366 = smul.addr %s365, 8
      %s367 = smul.addr %s366, 4
      %s368 = scalar_lea.vmem %s8, %s367
      %p369 = pneg %p256
      %p370 = pneg %p253
      %p371 = scmp.lt.s32.totalorder %s21, 3
      %s372 = scalar_select %p371, %s21, 3
      %s373 = smul.addr %s372, 8
      %s374 = smul.addr %s373, 4
      %s375 = scalar_lea.vmem %s9, %s374
      %p376 = scmp.lt.s32.totalorder %s21, 3
      %s377 = scalar_select %p376, %s21, 3
      %s378 = smul.addr %s377, 18
      %s379 = smul.addr %s378, 4
      %s380 = scalar_lea.vmem %s0, %s379
      %p381 = scmp.lt.s32.totalorder %s21, 3
      %s382 = scalar_select %p381, %s21, 3
      %s383 = smul.addr %s382, 18
      %s384 = smul.addr %s383, 4
      %s385 = scalar_lea.vmem %s1, %s384
      %p386 = scmp.lt.s32.totalorder %s21, 3
      %s387 = scalar_select %p386, %s21, 3
      %s388 = smul.addr %s387, 18
      %s389 = smul.addr %s388, 4
      %s390 = scalar_lea.vmem %s2, %s389
      %p391 = scmp.lt.s32.totalorder %s21, 3
      %s392 = scalar_select %p391, %s21, 3
      %s393 = smul.addr %s392, 18
      %s394 = smul.addr %s393, 4
      %s395 = scalar_lea.vmem %s3, %s394
      %p396 = scmp.lt.s32.totalorder %s21, 3
      %s397 = scalar_select %p396, %s21, 3
      %s398 = smul.addr %s397, 8
      %s399 = smul.addr %s398, 4
      %s400 = scalar_lea.vmem %s8, %s399
      %p401 = scmp.lt.s32.totalorder %s21, 3
      %s402 = scalar_select %p401, %s21, 3
      %s403 = smul.addr %s402, 8
      %s404 = smul.addr %s403, 4
      %s405 = scalar_lea.vmem %s9, %s404
      %v407 = vld [vmem:[%s380] sm:$0xf]
      %v408 = vld [vmem:[%s380 + $0x4] sm:$0x1]
      %v409 = vld [vmem:[%s380 + $0x8] sm:$0xf]
      %v410 = vld [vmem:[%s380 + $0xc] sm:$0x1]
      %v411 = vld [vmem:[%s380 + $0x10] sm:$0xf]
      %v412 = vld [vmem:[%s380 + $0x14] sm:$0x1]
      %v413 = vld [vmem:[%s380 + $0x18] sm:$0xf]
      %v414 = vld [vmem:[%s380 + $0x1c] sm:$0x1]
      %v415 = vld [vmem:[%s380 + $0x20] sm:$0xf]
      %v416 = vld [vmem:[%s380 + $0x24] sm:$0x1]
      %v417 = vld [vmem:[%s380 + $0x28] sm:$0xf]
      %v418 = vld [vmem:[%s380 + $0x2c] sm:$0x1]
      %v419 = vld [vmem:[%s380 + $0x30] sm:$0xf]
      %v420 = vld [vmem:[%s380 + $0x34] sm:$0x1]
      %v421 = vld [vmem:[%s380 + $0x38] sm:$0xf]
      %v422 = vld [vmem:[%s380 + $0x3c] sm:$0x1]
      %v423 = vld [vmem:[%s380 + $0x40] sm:$0xf]
      %v424 = vld [vmem:[%s380 + $0x44] sm:$0x1]
      %v425 = vld [vmem:[%s385] sm:$0xf]
      %v426 = vld [vmem:[%s385 + $0x8] sm:$0xf]
      %v427 = vld [vmem:[%s385 + $0x10] sm:$0xf]
      %v428 = vld [vmem:[%s385 + $0x18] sm:$0xf]
      %v429 = vld [vmem:[%s385 + $0x20] sm:$0xf]
      %v430 = vld [vmem:[%s385 + $0x28] sm:$0xf]
      %v431 = vld [vmem:[%s385 + $0x30] sm:$0xf]
      %v432 = vld [vmem:[%s385 + $0x38] sm:$0xf]
      %v433 = vld [vmem:[%s385 + $0x40] sm:$0xf]
      %v434 = vld [vmem:[%s390] sm:$0xf]
      %v435 = vld [vmem:[%s390 + $0x4] sm:$0x1]
      %v436 = vld [vmem:[%s390 + $0x8] sm:$0xf]
      %v437 = vld [vmem:[%s390 + $0xc] sm:$0x1]
      %v438 = vld [vmem:[%s390 + $0x10] sm:$0xf]
      %v439 = vld [vmem:[%s390 + $0x14] sm:$0x1]
      %v440 = vld [vmem:[%s390 + $0x18] sm:$0xf]
      %v441 = vld [vmem:[%s390 + $0x1c] sm:$0x1]
      %v442 = vld [vmem:[%s390 + $0x20] sm:$0xf]
      %v443 = vld [vmem:[%s390 + $0x24] sm:$0x1]
      %v444 = vld [vmem:[%s390 + $0x28] sm:$0xf]
      %v445 = vld [vmem:[%s390 + $0x2c] sm:$0x1]
      %v446 = vld [vmem:[%s390 + $0x30] sm:$0xf]
      %v447 = vld [vmem:[%s390 + $0x34] sm:$0x1]
      %v448 = vld [vmem:[%s390 + $0x38] sm:$0xf]
      %v449 = vld [vmem:[%s390 + $0x3c] sm:$0x1]
      %v450 = vld [vmem:[%s395] sm:$0xf]
      %v451 = vld [vmem:[%s395 + $0x8] sm:$0xf]
      %v452 = vld [vmem:[%s395 + $0x10] sm:$0xf]
      %v453 = vld [vmem:[%s395 + $0x18] sm:$0xf]
      %v454 = vld [vmem:[%s395 + $0x20] sm:$0xf]
      %v455 = vld [vmem:[%s395 + $0x28] sm:$0xf]
      %v456 = vld [vmem:[%s395 + $0x30] sm:$0xf]
      %v457 = vld [vmem:[%s395 + $0x38] sm:$0xf]
      %v458 = vld [vmem:[%s4] sm:$0xf]
      %v459 = vld [vmem:[%s4 + $0x4] sm:$0xf]
      %v460 = vld [vmem:[%s4 + $0x8] sm:$0xf]
      %v461 = vld [vmem:[%s4 + $0xc] sm:$0xf]
      %s462 = scalar_lea.vmem %s4, 16
      %v463 = vld [vmem:[%s462] sm:$0xf]
      %v464 = vld [vmem:[%s462 + $0x4] sm:$0xf]
      %v465 = vld [vmem:[%s462 + $0x8] sm:$0xf]
      %v466 = vld [vmem:[%s462 + $0xc] sm:$0xf]
      %v475 = vunpack.c.l.b16 %v425
      %v476 = vunpack.c.l.b16 %v426
      %v477 = vunpack.c.l.b16 %v427
      %v478 = vunpack.c.l.b16 %v428
      %v479 = vunpack.c.l.b16 %v429
      %v480 = vunpack.c.l.b16 %v430
      %v481 = vunpack.c.l.b16 %v431
      %v482 = vunpack.c.l.b16 %v432
      %v483 = vpack.c.b16 %v476, %v475
      %v484 = vpack.c.b16 %v478, %v477
      %v485 = vpack.c.b16 %v480, %v479
      %v486 = vpack.c.b16 %v482, %v481
      %v491 = vunpack.c.l.b16 %v463
      %v492 = vunpack.c.l.b16 %v464
      %v493 = vunpack.c.l.b16 %v465
      %v494 = vunpack.c.l.b16 %v466
      %v495 = vpack.c.b16 %v492, %v491
      %v496 = vpack.c.b16 %v494, %v493
      %vm499 = vcmask 261120
      %v501 = vsel %vm499, %v483, 0
      %v504 = vsel %vm499, %v484, 0
      %v507 = vsel %vm499, %v485, 0
      %v510 = vsel %vm499, %v486, 0
      %512 = vmatprep.subr.bf16.mxu0 0
      %513 = vmatpush1.bf16.msra.mxu0 %v495
      %514 = vmatprep.subr.bf16.mxu0 0
      %515 = vmatpush1.bf16.msra.mxu0 %v496
      %516 = vmatprep.subr.bf16.mxu0 0
      %517 = vmatpush1.bf16.msra.mxu0 0
      %518 = vmatprep.subr.bf16.mxu0 0
      %519 = vmatpush1.bf16.msra.mxu0 0
      %520 = vmatprep.subr.bf16.mxu0 0
      %521 = vmatpush1.bf16.msra.mxu0 0
      %522 = vmatprep.subr.bf16.mxu0 0
      %523 = vmatpush1.bf16.msra.mxu0 0
      %524 = vmatprep.subr.bf16.mxu0 0
      %525 = vmatpush1.bf16.msra.mxu0 0
      %526 = vmatprep.subr.bf16.mxu0 0
      %527 = vmatpush1.bf16.msra.mxu0 0
      %528 = vmatprep.subr.bf16.mxu0 0
      %529 = vmatpush1.bf16.msra.mxu0 0
      %530 = vmatprep.subr.bf16.mxu0 0
      %531 = vmatpush1.bf16.msra.mxu0 0
      %532 = vmatprep.subr.bf16.mxu0 0
      %533 = vmatpush1.bf16.msra.mxu0 0
      %534 = vmatprep.subr.bf16.mxu0 0
      %535 = vmatpush1.bf16.msra.mxu0 0
      %536 = vmatprep.subr.bf16.mxu0 0
      %537 = vmatpush1.bf16.msra.mxu0 0
      %538 = vmatprep.subr.bf16.mxu0 0
      %539 = vmatpush1.bf16.msra.mxu0 0
      %540 = vmatprep.subr.bf16.mxu0 0
      %541 = vmatpush1.bf16.msra.mxu0 0
      %542 = vmatprep.subr.bf16.mxu0 0
      %543 = vmatpush1.bf16.msra.mxu0 0
      %544 = vmatprep.mubr.bf16.mxu0 0
      %545 = vmatmul.mubr.bf16.gmra.mrb[0].mxu0 %v501
      %v546 = vpop.f32.mrb[0].mxu0
      %v547 = vadd.f32 0.0, %v546
      %v548 = vpop.f32.mrb[0].mxu0
      %v549 = vpop.f32.mrb[0].mxu0
      %v550 = vadd.f32 0.0, %v549
      %v551 = vpop.f32.mrb[0].mxu0
      %552 = vmatprep.mubr.bf16.mxu0 0
      %553 = vmatmul.mubr.bf16.gmra.mrb[0].mxu0 %v504
      %v554 = vpop.f32.mrb[0].mxu0
      %v555 = vadd.f32 0.0, %v554
      %v556 = vpop.f32.mrb[0].mxu0
      %v557 = vpop.f32.mrb[0].mxu0
      %v558 = vadd.f32 0.0, %v557
      %v559 = vpop.f32.mrb[0].mxu0
      %560 = vmatprep.mubr.bf16.mxu0 0
      %561 = vmatmul.mubr.bf16.gmra.mrb[0].mxu0 %v507
      %v562 = vpop.f32.mrb[0].mxu0
      %v563 = vadd.f32 0.0, %v562
      %v564 = vpop.f32.mrb[0].mxu0
      %v565 = vpop.f32.mrb[0].mxu0
      %v566 = vadd.f32 0.0, %v565
      %v567 = vpop.f32.mrb[0].mxu0
      %568 = vmatprep.mubr.bf16.mxu0 0
      %569 = vmatmul.mubr.bf16.gmra.mrb[0].mxu0 %v510
      %v570 = vpop.f32.mrb[0].mxu0
      %v571 = vadd.f32 0.0, %v570
      %v572 = vpop.f32.mrb[0].mxu0
      %v573 = vpop.f32.mrb[0].mxu0
      %v574 = vadd.f32 0.0, %v573
      %v575 = vpop.f32.mrb[0].mxu0
      %576 = vdwg.mxu0
      %v585 = vunpack.c.l.b16 %v407
      %v586 = vunpack.c.l.b16 %v409
      %v587 = vunpack.c.l.b16 %v411
      %v588 = vunpack.c.l.b16 %v413
      %v589 = vunpack.c.l.b16 %v415
      %v590 = vunpack.c.l.b16 %v417
      %v591 = vunpack.c.l.b16 %v419
      %v592 = vunpack.c.l.b16 %v421
      %v593 = vpack.c.b16 %v586, %v585
      %v594 = vpack.c.b16 %v588, %v587
      %v595 = vpack.c.b16 %v590, %v589
      %v596 = vpack.c.b16 %v592, %v591
      %v601 = vunpack.c.l.b16 %v458
      %v602 = vunpack.c.l.b16 %v459
      %v603 = vunpack.c.l.b16 %v460
      %v604 = vunpack.c.l.b16 %v461
      %v605 = vpack.c.b16 %v602, %v601
      %v606 = vpack.c.b16 %v604, %v603
      %v610 = vsel %vm499, %v593, 0
      %v613 = vsel %vm499, %v594, 0
      %v616 = vsel %vm499, %v595, 0
      %v619 = vsel %vm499, %v596, 0
      %621 = vmatprep.subr.bf16.mxu0 0
      %622 = vmatpush1.bf16.msra.mxu0 %v605
      %623 = vmatprep.subr.bf16.mxu0 0
      %624 = vmatpush1.bf16.msra.mxu0 %v606
      %625 = vmatprep.subr.bf16.mxu0 0
      %626 = vmatpush1.bf16.msra.mxu0 0
      %627 = vmatprep.subr.bf16.mxu0 0
      %628 = vmatpush1.bf16.msra.mxu0 0
      %629 = vmatprep.subr.bf16.mxu0 0
      %630 = vmatpush1.bf16.msra.mxu0 0
      %631 = vmatprep.subr.bf16.mxu0 0
      %632 = vmatpush1.bf16.msra.mxu0 0
      %633 = vmatprep.subr.bf16.mxu0 0
      %634 = vmatpush1.bf16.msra.mxu0 0
      %635 = vmatprep.subr.bf16.mxu0 0
      %636 = vmatpush1.bf16.msra.mxu0 0
      %637 = vmatprep.subr.bf16.mxu0 0
      %638 = vmatpush1.bf16.msra.mxu0 0
      %639 = vmatprep.subr.bf16.mxu0 0
      %640 = vmatpush1.bf16.msra.mxu0 0
      %641 = vmatprep.subr.bf16.mxu0 0
      %642 = vmatpush1.bf16.msra.mxu0 0
      %643 = vmatprep.subr.bf16.mxu0 0
      %644 = vmatpush1.bf16.msra.mxu0 0
      %645 = vmatprep.subr.bf16.mxu0 0
      %646 = vmatpush1.bf16.msra.mxu0 0
      %647 = vmatprep.subr.bf16.mxu0 0
      %648 = vmatpush1.bf16.msra.mxu0 0
      %649 = vmatprep.subr.bf16.mxu0 0
      %650 = vmatpush1.bf16.msra.mxu0 0
      %651 = vmatprep.subr.bf16.mxu0 0
      %652 = vmatpush1.bf16.msra.mxu0 0
      %653 = vmatprep.mubr.bf16.mxu0 0
      %654 = vmatmul.mubr.bf16.gmra.mrb[0].mxu0 %v610
      %v655 = vpop.f32.mrb[0].mxu0
      %v656 = vadd.f32 %v547, %v655
      %v657 = vpop.f32.mrb[0].mxu0
      %v658 = vpop.f32.mrb[0].mxu0
      %v659 = vadd.f32 %v550, %v658
      %v660 = vpop.f32.mrb[0].mxu0
      %661 = vmatprep.mubr.bf16.mxu0 0
      %662 = vmatmul.mubr.bf16.gmra.mrb[0].mxu0 %v613
      %v663 = vpop.f32.mrb[0].mxu0
      %v664 = vadd.f32 %v555, %v663
      %v665 = vpop.f32.mrb[0].mxu0
      %v666 = vpop.f32.mrb[0].mxu0
      %v667 = vadd.f32 %v558, %v666
      %v668 = vpop.f32.mrb[0].mxu0
      %669 = vmatprep.mubr.bf16.mxu0 0
      %670 = vmatmul.mubr.bf16.gmra.mrb[0].mxu0 %v616
      %v671 = vpop.f32.mrb[0].mxu0
      %v672 = vadd.f32 %v563, %v671
      %v673 = vpop.f32.mrb[0].mxu0
      %v674 = vpop.f32.mrb[0].mxu0
      %v675 = vadd.f32 %v566, %v674
      %v676 = vpop.f32.mrb[0].mxu0
      %677 = vmatprep.mubr.bf16.mxu0 0
      %678 = vmatmul.mubr.bf16.gmra.mrb[0].mxu0 %v619
      %v679 = vpop.f32.mrb[0].mxu0
      %v680 = vadd.f32 %v571, %v679
      %v681 = vpop.f32.mrb[0].mxu0
      %v682 = vpop.f32.mrb[0].mxu0
      %v683 = vadd.f32 %v574, %v682
      %v684 = vpop.f32.mrb[0].mxu0
      %685 = vdwg.mxu0
      %vm686 = vsmask.f32 3328
      %vm687 = vsmask.f32 7440
      %vm688 = vmor %vm686, %vm687
      %v690 = vshrl.u32 %v407, 16
      %v692 = vrot.slane %v690, 4
      %v693 = vshll.u32 %v407, 16
      %v695 = vrot.slane %v693, 5
      %v696 = vor.u32 %v692, %v695
      %v697 = vrot.slane %v696, 4
      %v699 = vshll.u32 %v408, 16
      %v701 = vrot.slane %v699, 5
      %v702 = vsel %vm688, %v697, %v701
      %v704 = vshrl.u32 %v409, 16
      %v706 = vrot.slane %v704, 4
      %v707 = vshll.u32 %v409, 16
      %v709 = vrot.slane %v707, 5
      %v710 = vor.u32 %v706, %v709
      %v711 = vrot.slane %v710, 4
      %v713 = vshll.u32 %v410, 16
      %v715 = vrot.slane %v713, 5
      %v716 = vsel %vm688, %v711, %v715
      %v718 = vshrl.u32 %v411, 16
      %v720 = vrot.slane %v718, 4
      %v721 = vshll.u32 %v411, 16
      %v723 = vrot.slane %v721, 5
      %v724 = vor.u32 %v720, %v723
      %v725 = vrot.slane %v724, 4
      %v727 = vshll.u32 %v412, 16
      %v729 = vrot.slane %v727, 5
      %v730 = vsel %vm688, %v725, %v729
      %v732 = vshrl.u32 %v413, 16
      %v734 = vrot.slane %v732, 4
      %v735 = vshll.u32 %v413, 16
      %v737 = vrot.slane %v735, 5
      %v738 = vor.u32 %v734, %v737
      %v739 = vrot.slane %v738, 4
      %v741 = vshll.u32 %v414, 16
      %v743 = vrot.slane %v741, 5
      %v744 = vsel %vm688, %v739, %v743
      %v746 = vshrl.u32 %v415, 16
      %v748 = vrot.slane %v746, 4
      %v749 = vshll.u32 %v415, 16
      %v751 = vrot.slane %v749, 5
      %v752 = vor.u32 %v748, %v751
      %v753 = vrot.slane %v752, 4
      %v755 = vshll.u32 %v416, 16
      %v757 = vrot.slane %v755, 5
      %v758 = vsel %vm688, %v753, %v757
      %v760 = vshrl.u32 %v417, 16
      %v762 = vrot.slane %v760, 4
      %v763 = vshll.u32 %v417, 16
      %v765 = vrot.slane %v763, 5
      %v766 = vor.u32 %v762, %v765
      %v767 = vrot.slane %v766, 4
      %v769 = vshll.u32 %v418, 16
      %v771 = vrot.slane %v769, 5
      %v772 = vsel %vm688, %v767, %v771
      %v774 = vshrl.u32 %v419, 16
      %v776 = vrot.slane %v774, 4
      %v777 = vshll.u32 %v419, 16
      %v779 = vrot.slane %v777, 5
      %v780 = vor.u32 %v776, %v779
      %v781 = vrot.slane %v780, 4
      %v783 = vshll.u32 %v420, 16
      %v785 = vrot.slane %v783, 5
      %v786 = vsel %vm688, %v781, %v785
      %v788 = vshrl.u32 %v421, 16
      %v790 = vrot.slane %v788, 4
      %v791 = vshll.u32 %v421, 16
      %v793 = vrot.slane %v791, 5
      %v794 = vor.u32 %v790, %v793
      %v795 = vrot.slane %v794, 4
      %v797 = vshll.u32 %v422, 16
      %v799 = vrot.slane %v797, 5
      %v800 = vsel %vm688, %v795, %v799
      %s801 = scalar_lea.vmem %s4, 32
      %v802 = vld [vmem:[%s801] sm:$0xf]
      %v803 = vld [vmem:[%s801 + $0x4] sm:$0xf]
      %v804 = vld [vmem:[%s801 + $0x8] sm:$0xf]
      %v805 = vld [vmem:[%s801 + $0xc] sm:$0xf]
      %v806 = vunpack.c.l.b16 %v702
      %v807 = vunpack.c.l.b16 %v716
      %v808 = vunpack.c.l.b16 %v730
      %v809 = vunpack.c.l.b16 %v744
      %v810 = vunpack.c.l.b16 %v758
      %v811 = vunpack.c.l.b16 %v772
      %v812 = vunpack.c.l.b16 %v786
      %v813 = vunpack.c.l.b16 %v800
      %v814 = vpack.c.b16 %v807, %v806
      %v815 = vpack.c.b16 %v809, %v808
      %v816 = vpack.c.b16 %v811, %v810
      %v817 = vpack.c.b16 %v813, %v812
      %v822 = vunpack.c.l.b16 %v802
      %v823 = vunpack.c.l.b16 %v803
      %v824 = vunpack.c.l.b16 %v804
      %v825 = vunpack.c.l.b16 %v805
      %v826 = vpack.c.b16 %v823, %v822
      %v827 = vpack.c.b16 %v825, %v824
      %v831 = vsel %vm499, %v814, 0
      %v834 = vsel %vm499, %v815, 0
      %v837 = vsel %vm499, %v816, 0
      %v840 = vsel %vm499, %v817, 0
      %842 = vmatprep.subr.bf16.mxu0 0
      %843 = vmatpush1.bf16.msra.mxu0 %v826
      %844 = vmatprep.subr.bf16.mxu0 0
      %845 = vmatpush1.bf16.msra.mxu0 %v827
      %846 = vmatprep.subr.bf16.mxu0 0
      %847 = vmatpush1.bf16.msra.mxu0 0
      %848 = vmatprep.subr.bf16.mxu0 0
      %849 = vmatpush1.bf16.msra.mxu0 0
      %850 = vmatprep.subr.bf16.mxu0 0
      %851 = vmatpush1.bf16.msra.mxu0 0
      %852 = vmatprep.subr.bf16.mxu0 0
      %853 = vmatpush1.bf16.msra.mxu0 0
      %854 = vmatprep.subr.bf16.mxu0 0
      %855 = vmatpush1.bf16.msra.mxu0 0
      %856 = vmatprep.subr.bf16.mxu0 0
      %857 = vmatpush1.bf16.msra.mxu0 0
      %858 = vmatprep.subr.bf16.mxu0 0
      %859 = vmatpush1.bf16.msra.mxu0 0
      %860 = vmatprep.subr.bf16.mxu0 0
      %861 = vmatpush1.bf16.msra.mxu0 0
      %862 = vmatprep.subr.bf16.mxu0 0
      %863 = vmatpush1.bf16.msra.mxu0 0
      %864 = vmatprep.subr.bf16.mxu0 0
      %865 = vmatpush1.bf16.msra.mxu0 0
      %866 = vmatprep.subr.bf16.mxu0 0
      %867 = vmatpush1.bf16.msra.mxu0 0
      %868 = vmatprep.subr.bf16.mxu0 0
      %869 = vmatpush1.bf16.msra.mxu0 0
      %870 = vmatprep.subr.bf16.mxu0 0
      %871 = vmatpush1.bf16.msra.mxu0 0
      %872 = vmatprep.subr.bf16.mxu0 0
      %873 = vmatpush1.bf16.msra.mxu0 0
      %874 = vmatprep.mubr.bf16.mxu0 0
      %875 = vmatmul.mubr.bf16.gmra.mrb[0].mxu0 %v831
      %v876 = vpop.f32.mrb[0].mxu0
      %v877 = vadd.f32 0.0, %v876
      %v878 = vpop.f32.mrb[0].mxu0
      %v879 = vpop.f32.mrb[0].mxu0
      %v880 = vadd.f32 0.0, %v879
      %v881 = vpop.f32.mrb[0].mxu0
      %882 = vmatprep.mubr.bf16.mxu0 0
      %883 = vmatmul.mubr.bf16.gmra.mrb[0].mxu0 %v834
      %v884 = vpop.f32.mrb[0].mxu0
      %v885 = vadd.f32 0.0, %v884
      %v886 = vpop.f32.mrb[0].mxu0
      %v887 = vpop.f32.mrb[0].mxu0
      %v888 = vadd.f32 0.0, %v887
      %v889 = vpop.f32.mrb[0].mxu0
      %890 = vmatprep.mubr.bf16.mxu0 0
      %891 = vmatmul.mubr.bf16.gmra.mrb[0].mxu0 %v837
      %v892 = vpop.f32.mrb[0].mxu0
      %v893 = vadd.f32 0.0, %v892
      %v894 = vpop.f32.mrb[0].mxu0
      %v895 = vpop.f32.mrb[0].mxu0
      %v896 = vadd.f32 0.0, %v895
      %v897 = vpop.f32.mrb[0].mxu0
      %898 = vmatprep.mubr.bf16.mxu0 0
      %899 = vmatmul.mubr.bf16.gmra.mrb[0].mxu0 %v840
      %v900 = vpop.f32.mrb[0].mxu0
      %v901 = vadd.f32 0.0, %v900
      %v902 = vpop.f32.mrb[0].mxu0
      %v903 = vpop.f32.mrb[0].mxu0
      %v904 = vadd.f32 0.0, %v903
      %v905 = vpop.f32.mrb[0].mxu0
      %906 = vdwg.mxu0
      %v907 = vadd.f32 %v656, %v877
      %v908 = vadd.f32 %v659, %v880
      %v909 = vadd.f32 %v664, %v885
      %v910 = vadd.f32 %v667, %v888
      %v911 = vadd.f32 %v672, %v893
      %v912 = vadd.f32 %v675, %v896
      %v913 = vadd.f32 %v680, %v901
      %v914 = vadd.f32 %v683, %v904
      %s915 = scalar_lea.vmem %s4, 48
      %v916 = vld [vmem:[%s915] sm:$0xf]
      %v917 = vld [vmem:[%s915 + $0x4] sm:$0xf]
      %v918 = vld [vmem:[%s915 + $0x8] sm:$0xf]
      %v919 = vld [vmem:[%s915 + $0xc] sm:$0xf]
      %v928 = vunpack.c.l.b16 %v434
      %v929 = vunpack.c.l.b16 %v436
      %v930 = vunpack.c.l.b16 %v438
      %v931 = vunpack.c.l.b16 %v440
      %v932 = vunpack.c.l.b16 %v442
      %v933 = vunpack.c.l.b16 %v444
      %v934 = vunpack.c.l.b16 %v446
      %v935 = vunpack.c.l.b16 %v448
      %v936 = vpack.c.b16 %v929, %v928
      %v937 = vpack.c.b16 %v931, %v930
      %v938 = vpack.c.b16 %v933, %v932
      %v939 = vpack.c.b16 %v935, %v934
      %v944 = vunpack.c.l.b16 %v916
      %v945 = vunpack.c.l.b16 %v917
      %v946 = vunpack.c.l.b16 %v918
      %v947 = vunpack.c.l.b16 %v919
      %v948 = vpack.c.b16 %v945, %v944
      %v949 = vpack.c.b16 %v947, %v946
      %v953 = vsel %vm499, %v936, 0
      %v956 = vsel %vm499, %v937, 0
      %v959 = vsel %vm499, %v938, 0
      %v962 = vsel %vm499, %v939, 0
      %964 = vmatprep.subr.bf16.mxu0 0
      %965 = vmatpush1.bf16.msra.mxu0 %v948
      %966 = vmatprep.subr.bf16.mxu0 0
      %967 = vmatpush1.bf16.msra.mxu0 %v949
      %968 = vmatprep.subr.bf16.mxu0 0
      %969 = vmatpush1.bf16.msra.mxu0 0
      %970 = vmatprep.subr.bf16.mxu0 0
      %971 = vmatpush1.bf16.msra.mxu0 0
      %972 = vmatprep.subr.bf16.mxu0 0
      %973 = vmatpush1.bf16.msra.mxu0 0
      %974 = vmatprep.subr.bf16.mxu0 0
      %975 = vmatpush1.bf16.msra.mxu0 0
      %976 = vmatprep.subr.bf16.mxu0 0
      %977 = vmatpush1.bf16.msra.mxu0 0
      %978 = vmatprep.subr.bf16.mxu0 0
      %979 = vmatpush1.bf16.msra.mxu0 0
      %980 = vmatprep.subr.bf16.mxu0 0
      %981 = vmatpush1.bf16.msra.mxu0 0
      %982 = vmatprep.subr.bf16.mxu0 0
      %983 = vmatpush1.bf16.msra.mxu0 0
      %984 = vmatprep.subr.bf16.mxu0 0
      %985 = vmatpush1.bf16.msra.mxu0 0
      %986 = vmatprep.subr.bf16.mxu0 0
      %987 = vmatpush1.bf16.msra.mxu0 0
      %988 = vmatprep.subr.bf16.mxu0 0
      %989 = vmatpush1.bf16.msra.mxu0 0
      %990 = vmatprep.subr.bf16.mxu0 0
      %991 = vmatpush1.bf16.msra.mxu0 0
      %992 = vmatprep.subr.bf16.mxu0 0
      %993 = vmatpush1.bf16.msra.mxu0 0
      %994 = vmatprep.subr.bf16.mxu0 0
      %995 = vmatpush1.bf16.msra.mxu0 0
      %996 = vmatprep.mubr.bf16.mxu0 0
      %997 = vmatmul.mubr.bf16.gmra.mrb[0].mxu0 %v953
      %v998 = vpop.f32.mrb[0].mxu0
      %v999 = vadd.f32 0.0, %v998
      %v1000 = vpop.f32.mrb[0].mxu0
      %v1001 = vpop.f32.mrb[0].mxu0
      %v1002 = vadd.f32 0.0, %v1001
      %v1003 = vpop.f32.mrb[0].mxu0
      %1004 = vmatprep.mubr.bf16.mxu0 0
      %1005 = vmatmul.mubr.bf16.gmra.mrb[0].mxu0 %v956
      %v1006 = vpop.f32.mrb[0].mxu0
      %v1007 = vadd.f32 0.0, %v1006
      %v1008 = vpop.f32.mrb[0].mxu0
      %v1009 = vpop.f32.mrb[0].mxu0
      %v1010 = vadd.f32 0.0, %v1009
      %v1011 = vpop.f32.mrb[0].mxu0
      %1012 = vmatprep.mubr.bf16.mxu0 0
      %1013 = vmatmul.mubr.bf16.gmra.mrb[0].mxu0 %v959
      %v1014 = vpop.f32.mrb[0].mxu0
      %v1015 = vadd.f32 0.0, %v1014
      %v1016 = vpop.f32.mrb[0].mxu0
      %v1017 = vpop.f32.mrb[0].mxu0
      %v1018 = vadd.f32 0.0, %v1017
      %v1019 = vpop.f32.mrb[0].mxu0
      %1020 = vmatprep.mubr.bf16.mxu0 0
      %1021 = vmatmul.mubr.bf16.gmra.mrb[0].mxu0 %v962
      %v1022 = vpop.f32.mrb[0].mxu0
      %v1023 = vadd.f32 0.0, %v1022
      %v1024 = vpop.f32.mrb[0].mxu0
      %v1025 = vpop.f32.mrb[0].mxu0
      %v1026 = vadd.f32 0.0, %v1025
      %v1027 = vpop.f32.mrb[0].mxu0
      %1028 = vdwg.mxu0
      %v1029 = vadd.f32 %v907, %v999
      %v1030 = vadd.f32 %v908, %v1002
      %v1031 = vadd.f32 %v909, %v1007
      %v1032 = vadd.f32 %v910, %v1010
      %v1033 = vadd.f32 %v911, %v1015
      %v1034 = vadd.f32 %v912, %v1018
      %v1035 = vadd.f32 %v913, %v1023
      %v1036 = vadd.f32 %v914, %v1026
      %s1037 = scalar_lea.vmem %s4, 64
      %v1038 = vld [vmem:[%s1037] sm:$0xf]
      %v1039 = vld [vmem:[%s1037 + $0x4] sm:$0xf]
      %v1040 = vld [vmem:[%s1037 + $0x8] sm:$0xf]
      %v1041 = vld [vmem:[%s1037 + $0xc] sm:$0xf]
      %v1050 = vunpack.c.l.b16 %v450
      %v1051 = vunpack.c.l.b16 %v451
      %v1052 = vunpack.c.l.b16 %v452
      %v1053 = vunpack.c.l.b16 %v453
      %v1054 = vunpack.c.l.b16 %v454
      %v1055 = vunpack.c.l.b16 %v455
      %v1056 = vunpack.c.l.b16 %v456
      %v1057 = vunpack.c.l.b16 %v457
      %v1058 = vpack.c.b16 %v1051, %v1050
      %v1059 = vpack.c.b16 %v1053, %v1052
      %v1060 = vpack.c.b16 %v1055, %v1054
      %v1061 = vpack.c.b16 %v1057, %v1056
      %v1066 = vunpack.c.l.b16 %v1038
      %v1067 = vunpack.c.l.b16 %v1039
      %v1068 = vunpack.c.l.b16 %v1040
      %v1069 = vunpack.c.l.b16 %v1041
      %v1070 = vpack.c.b16 %v1067, %v1066
      %v1071 = vpack.c.b16 %v1069, %v1068
      %v1075 = vsel %vm499, %v1058, 0
      %v1078 = vsel %vm499, %v1059, 0
      %v1081 = vsel %vm499, %v1060, 0
      %v1084 = vsel %vm499, %v1061, 0
      %1086 = vmatprep.subr.bf16.mxu0 0
      %1087 = vmatpush1.bf16.msra.mxu0 %v1070
      %1088 = vmatprep.subr.bf16.mxu0 0
      %1089 = vmatpush1.bf16.msra.mxu0 %v1071
      %1090 = vmatprep.subr.bf16.mxu0 0
      %1091 = vmatpush1.bf16.msra.mxu0 0
      %1092 = vmatprep.subr.bf16.mxu0 0
      %1093 = vmatpush1.bf16.msra.mxu0 0
      %1094 = vmatprep.subr.bf16.mxu0 0
      %1095 = vmatpush1.bf16.msra.mxu0 0
      %1096 = vmatprep.subr.bf16.mxu0 0
      %1097 = vmatpush1.bf16.msra.mxu0 0
      %1098 = vmatprep.subr.bf16.mxu0 0
      %1099 = vmatpush1.bf16.msra.mxu0 0
      %1100 = vmatprep.subr.bf16.mxu0 0
      %1101 = vmatpush1.bf16.msra.mxu0 0
      %1102 = vmatprep.subr.bf16.mxu0 0
      %1103 = vmatpush1.bf16.msra.mxu0 0
      %1104 = vmatprep.subr.bf16.mxu0 0
      %1105 = vmatpush1.bf16.msra.mxu0 0
      %1106 = vmatprep.subr.bf16.mxu0 0
      %1107 = vmatpush1.bf16.msra.mxu0 0
      %1108 = vmatprep.subr.bf16.mxu0 0
      %1109 = vmatpush1.bf16.msra.mxu0 0
      %1110 = vmatprep.subr.bf16.mxu0 0
      %1111 = vmatpush1.bf16.msra.mxu0 0
      %1112 = vmatprep.subr.bf16.mxu0 0
      %1113 = vmatpush1.bf16.msra.mxu0 0
      %1114 = vmatprep.subr.bf16.mxu0 0
      %1115 = vmatpush1.bf16.msra.mxu0 0
      %1116 = vmatprep.subr.bf16.mxu0 0
      %1117 = vmatpush1.bf16.msra.mxu0 0
      %1118 = vmatprep.mubr.bf16.mxu0 0
      %1119 = vmatmul.mubr.bf16.gmra.mrb[0].mxu0 %v1075
      %v1120 = vpop.f32.mrb[0].mxu0
      %v1121 = vadd.f32 0.0, %v1120
      %v1122 = vpop.f32.mrb[0].mxu0
      %v1123 = vpop.f32.mrb[0].mxu0
      %v1124 = vadd.f32 0.0, %v1123
      %v1125 = vpop.f32.mrb[0].mxu0
      %1126 = vmatprep.mubr.bf16.mxu0 0
      %1127 = vmatmul.mubr.bf16.gmra.mrb[0].mxu0 %v1078
      %v1128 = vpop.f32.mrb[0].mxu0
      %v1129 = vadd.f32 0.0, %v1128
      %v1130 = vpop.f32.mrb[0].mxu0
      %v1131 = vpop.f32.mrb[0].mxu0
      %v1132 = vadd.f32 0.0, %v1131
      %v1133 = vpop.f32.mrb[0].mxu0
      %1134 = vmatprep.mubr.bf16.mxu0 0
      %1135 = vmatmul.mubr.bf16.gmra.mrb[0].mxu0 %v1081
      %v1136 = vpop.f32.mrb[0].mxu0
      %v1137 = vadd.f32 0.0, %v1136
      %v1138 = vpop.f32.mrb[0].mxu0
      %v1139 = vpop.f32.mrb[0].mxu0
      %v1140 = vadd.f32 0.0, %v1139
      %v1141 = vpop.f32.mrb[0].mxu0
      %1142 = vmatprep.mubr.bf16.mxu0 0
      %1143 = vmatmul.mubr.bf16.gmra.mrb[0].mxu0 %v1084
      %v1144 = vpop.f32.mrb[0].mxu0
      %v1145 = vadd.f32 0.0, %v1144
      %v1146 = vpop.f32.mrb[0].mxu0
      %v1147 = vpop.f32.mrb[0].mxu0
      %v1148 = vadd.f32 0.0, %v1147
      %v1149 = vpop.f32.mrb[0].mxu0
      %1150 = vdwg.mxu0
      %v1151 = vadd.f32 %v1029, %v1121
      %v1152 = vadd.f32 %v1030, %v1124
      %v1153 = vadd.f32 %v1031, %v1129
      %v1154 = vadd.f32 %v1032, %v1132
      %v1155 = vadd.f32 %v1033, %v1137
      %v1156 = vadd.f32 %v1034, %v1140
      %v1157 = vadd.f32 %v1035, %v1145
      %v1158 = vadd.f32 %v1036, %v1148
      %v1160 = vshrl.u32 %v434, 16
      %v1162 = vrot.slane %v1160, 4
      %v1163 = vshll.u32 %v434, 16
      %v1165 = vrot.slane %v1163, 5
      %v1166 = vor.u32 %v1162, %v1165
      %v1167 = vrot.slane %v1166, 4
      %v1169 = vshll.u32 %v435, 16
      %v1171 = vrot.slane %v1169, 5
      %v1172 = vsel %vm688, %v1167, %v1171
      %v1174 = vshrl.u32 %v436, 16
      %v1176 = vrot.slane %v1174, 4
      %v1177 = vshll.u32 %v436, 16
      %v1179 = vrot.slane %v1177, 5
      %v1180 = vor.u32 %v1176, %v1179
      %v1181 = vrot.slane %v1180, 4
      %v1183 = vshll.u32 %v437, 16
      %v1185 = vrot.slane %v1183, 5
      %v1186 = vsel %vm688, %v1181, %v1185
      %v1188 = vshrl.u32 %v438, 16
      %v1190 = vrot.slane %v1188, 4
      %v1191 = vshll.u32 %v438, 16
      %v1193 = vrot.slane %v1191, 5
      %v1194 = vor.u32 %v1190, %v1193
      %v1195 = vrot.slane %v1194, 4
      %v1197 = vshll.u32 %v439, 16
      %v1199 = vrot.slane %v1197, 5
      %v1200 = vsel %vm688, %v1195, %v1199
      %v1202 = vshrl.u32 %v440, 16
      %v1204 = vrot.slane %v1202, 4
      %v1205 = vshll.u32 %v440, 16
      %v1207 = vrot.slane %v1205, 5
      %v1208 = vor.u32 %v1204, %v1207
      %v1209 = vrot.slane %v1208, 4
      %v1211 = vshll.u32 %v441, 16
      %v1213 = vrot.slane %v1211, 5
      %v1214 = vsel %vm688, %v1209, %v1213
      %v1216 = vshrl.u32 %v442, 16
      %v1218 = vrot.slane %v1216, 4
      %v1219 = vshll.u32 %v442, 16
      %v1221 = vrot.slane %v1219, 5
      %v1222 = vor.u32 %v1218, %v1221
      %v1223 = vrot.slane %v1222, 4
      %v1225 = vshll.u32 %v443, 16
      %v1227 = vrot.slane %v1225, 5
      %v1228 = vsel %vm688, %v1223, %v1227
      %v1230 = vshrl.u32 %v444, 16
      %v1232 = vrot.slane %v1230, 4
      %v1233 = vshll.u32 %v444, 16
      %v1235 = vrot.slane %v1233, 5
      %v1236 = vor.u32 %v1232, %v1235
      %v1237 = vrot.slane %v1236, 4
      %v1239 = vshll.u32 %v445, 16
      %v1241 = vrot.slane %v1239, 5
      %v1242 = vsel %vm688, %v1237, %v1241
      %v1244 = vshrl.u32 %v446, 16
      %v1246 = vrot.slane %v1244, 4
      %v1247 = vshll.u32 %v446, 16
      %v1249 = vrot.slane %v1247, 5
      %v1250 = vor.u32 %v1246, %v1249
      %v1251 = vrot.slane %v1250, 4
      %v1253 = vshll.u32 %v447, 16
      %v1255 = vrot.slane %v1253, 5
      %v1256 = vsel %vm688, %v1251, %v1255
      %v1258 = vshrl.u32 %v448, 16
      %v1260 = vrot.slane %v1258, 4
      %v1261 = vshll.u32 %v448, 16
      %v1263 = vrot.slane %v1261, 5
      %v1264 = vor.u32 %v1260, %v1263
      %v1265 = vrot.slane %v1264, 4
      %v1267 = vshll.u32 %v449, 16
      %v1269 = vrot.slane %v1267, 5
      %v1270 = vsel %vm688, %v1265, %v1269
      %s1271 = scalar_lea.vmem %s4, 80
      %v1272 = vld [vmem:[%s1271] sm:$0xf]
      %v1273 = vld [vmem:[%s1271 + $0x4] sm:$0xf]
      %v1274 = vld [vmem:[%s1271 + $0x8] sm:$0xf]
      %v1275 = vld [vmem:[%s1271 + $0xc] sm:$0xf]
      %v1276 = vunpack.c.l.b16 %v1172
      %v1277 = vunpack.c.l.b16 %v1186
      %v1278 = vunpack.c.l.b16 %v1200
      %v1279 = vunpack.c.l.b16 %v1214
      %v1280 = vunpack.c.l.b16 %v1228
      %v1281 = vunpack.c.l.b16 %v1242
      %v1282 = vunpack.c.l.b16 %v1256
      %v1283 = vunpack.c.l.b16 %v1270
      %v1284 = vpack.c.b16 %v1277, %v1276
      %v1285 = vpack.c.b16 %v1279, %v1278
      %v1286 = vpack.c.b16 %v1281, %v1280
      %v1287 = vpack.c.b16 %v1283, %v1282
      %v1292 = vunpack.c.l.b16 %v1272
      %v1293 = vunpack.c.l.b16 %v1273
      %v1294 = vunpack.c.l.b16 %v1274
      %v1295 = vunpack.c.l.b16 %v1275
      %v1296 = vpack.c.b16 %v1293, %v1292
      %v1297 = vpack.c.b16 %v1295, %v1294
      %v1301 = vsel %vm499, %v1284, 0
      %v1304 = vsel %vm499, %v1285, 0
      %v1307 = vsel %vm499, %v1286, 0
      %v1310 = vsel %vm499, %v1287, 0
      %1312 = vmatprep.subr.bf16.mxu0 0
      %1313 = vmatpush1.bf16.msra.mxu0 %v1296
      %1314 = vmatprep.subr.bf16.mxu0 0
      %1315 = vmatpush1.bf16.msra.mxu0 %v1297
      %1316 = vmatprep.subr.bf16.mxu0 0
      %1317 = vmatpush1.bf16.msra.mxu0 0
      %1318 = vmatprep.subr.bf16.mxu0 0
      %1319 = vmatpush1.bf16.msra.mxu0 0
      %1320 = vmatprep.subr.bf16.mxu0 0
      %1321 = vmatpush1.bf16.msra.mxu0 0
      %1322 = vmatprep.subr.bf16.mxu0 0
      %1323 = vmatpush1.bf16.msra.mxu0 0
      %1324 = vmatprep.subr.bf16.mxu0 0
      %1325 = vmatpush1.bf16.msra.mxu0 0
      %1326 = vmatprep.subr.bf16.mxu0 0
      %1327 = vmatpush1.bf16.msra.mxu0 0
      %1328 = vmatprep.subr.bf16.mxu0 0
      %1329 = vmatpush1.bf16.msra.mxu0 0
      %1330 = vmatprep.subr.bf16.mxu0 0
      %1331 = vmatpush1.bf16.msra.mxu0 0
      %1332 = vmatprep.subr.bf16.mxu0 0
      %1333 = vmatpush1.bf16.msra.mxu0 0
      %1334 = vmatprep.subr.bf16.mxu0 0
      %1335 = vmatpush1.bf16.msra.mxu0 0
      %1336 = vmatprep.subr.bf16.mxu0 0
      %1337 = vmatpush1.bf16.msra.mxu0 0
      %1338 = vmatprep.subr.bf16.mxu0 0
      %1339 = vmatpush1.bf16.msra.mxu0 0
      %1340 = vmatprep.subr.bf16.mxu0 0
      %1341 = vmatpush1.bf16.msra.mxu0 0
      %1342 = vmatprep.subr.bf16.mxu0 0
      %1343 = vmatpush1.bf16.msra.mxu0 0
      %1344 = vmatprep.mubr.bf16.mxu0 0
      %1345 = vmatmul.mubr.bf16.gmra.mrb[0].mxu0 %v1301
      %v1346 = vpop.f32.mrb[0].mxu0
      %v1347 = vadd.f32 0.0, %v1346
      %v1348 = vpop.f32.mrb[0].mxu0
      %v1349 = vpop.f32.mrb[0].mxu0
      %v1350 = vadd.f32 0.0, %v1349
      %v1351 = vpop.f32.mrb[0].mxu0
      %1352 = vmatprep.mubr.bf16.mxu0 0
      %1353 = vmatmul.mubr.bf16.gmra.mrb[0].mxu0 %v1304
      %v1354 = vpop.f32.mrb[0].mxu0
      %v1355 = vadd.f32 0.0, %v1354
      %v1356 = vpop.f32.mrb[0].mxu0
      %v1357 = vpop.f32.mrb[0].mxu0
      %v1358 = vadd.f32 0.0, %v1357
      %v1359 = vpop.f32.mrb[0].mxu0
      %1360 = vmatprep.mubr.bf16.mxu0 0
      %1361 = vmatmul.mubr.bf16.gmra.mrb[0].mxu0 %v1307
      %v1362 = vpop.f32.mrb[0].mxu0
      %v1363 = vadd.f32 0.0, %v1362
      %v1364 = vpop.f32.mrb[0].mxu0
      %v1365 = vpop.f32.mrb[0].mxu0
      %v1366 = vadd.f32 0.0, %v1365
      %v1367 = vpop.f32.mrb[0].mxu0
      %1368 = vmatprep.mubr.bf16.mxu0 0
      %1369 = vmatmul.mubr.bf16.gmra.mrb[0].mxu0 %v1310
      %v1370 = vpop.f32.mrb[0].mxu0
      %v1371 = vadd.f32 0.0, %v1370
      %v1372 = vpop.f32.mrb[0].mxu0
      %v1373 = vpop.f32.mrb[0].mxu0
      %v1374 = vadd.f32 0.0, %v1373
      %v1375 = vpop.f32.mrb[0].mxu0
      %1376 = vdwg.mxu0
      %v1377 = vadd.f32 %v1151, %v1347
      %v1378 = vadd.f32 %v1152, %v1350
      %v1379 = vadd.f32 %v1153, %v1355
      %v1380 = vadd.f32 %v1154, %v1358
      %v1381 = vadd.f32 %v1155, %v1363
      %v1382 = vadd.f32 %v1156, %v1366
      %v1383 = vadd.f32 %v1157, %v1371
      %v1384 = vadd.f32 %v1158, %v1374
      %s1385 = scalar_lea.vmem %s4, 96
      %v1386 = vld [vmem:[%s1385] sm:$0xf]
      %v1387 = vld [vmem:[%s1385 + $0x4] sm:$0xf]
      %v1388 = vld [vmem:[%s1385 + $0x8] sm:$0xf]
      %v1389 = vld [vmem:[%s1385 + $0xc] sm:$0xf]
      %v1391 = vunpack.c.l.b16 %v423
      %v1392 = vpack.c.b16 %v587, %v586
      %v1393 = vpack.c.b16 %v589, %v588
      %v1394 = vpack.c.b16 %v591, %v590
      %v1395 = vpack.c.b16 %v1391, %v592
      %v1400 = vunpack.c.l.b16 %v1386
      %v1401 = vunpack.c.l.b16 %v1387
      %v1402 = vunpack.c.l.b16 %v1388
      %v1403 = vunpack.c.l.b16 %v1389
      %v1404 = vpack.c.b16 %v1401, %v1400
      %v1405 = vpack.c.b16 %v1403, %v1402
      %v1409 = vsel %vm499, %v1392, 0
      %v1412 = vsel %vm499, %v1393, 0
      %v1415 = vsel %vm499, %v1394, 0
      %v1418 = vsel %vm499, %v1395, 0
      %1420 = vmatprep.subr.bf16.mxu0 0
      %1421 = vmatpush1.bf16.msra.mxu0 %v1404
      %1422 = vmatprep.subr.bf16.mxu0 0
      %1423 = vmatpush1.bf16.msra.mxu0 %v1405
      %1424 = vmatprep.subr.bf16.mxu0 0
      %1425 = vmatpush1.bf16.msra.mxu0 0
      %1426 = vmatprep.subr.bf16.mxu0 0
      %1427 = vmatpush1.bf16.msra.mxu0 0
      %1428 = vmatprep.subr.bf16.mxu0 0
      %1429 = vmatpush1.bf16.msra.mxu0 0
      %1430 = vmatprep.subr.bf16.mxu0 0
      %1431 = vmatpush1.bf16.msra.mxu0 0
      %1432 = vmatprep.subr.bf16.mxu0 0
      %1433 = vmatpush1.bf16.msra.mxu0 0
      %1434 = vmatprep.subr.bf16.mxu0 0
      %1435 = vmatpush1.bf16.msra.mxu0 0
      %1436 = vmatprep.subr.bf16.mxu0 0
      %1437 = vmatpush1.bf16.msra.mxu0 0
      %1438 = vmatprep.subr.bf16.mxu0 0
      %1439 = vmatpush1.bf16.msra.mxu0 0
      %1440 = vmatprep.subr.bf16.mxu0 0
      %1441 = vmatpush1.bf16.msra.mxu0 0
      %1442 = vmatprep.subr.bf16.mxu0 0
      %1443 = vmatpush1.bf16.msra.mxu0 0
      %1444 = vmatprep.subr.bf16.mxu0 0
      %1445 = vmatpush1.bf16.msra.mxu0 0
      %1446 = vmatprep.subr.bf16.mxu0 0
      %1447 = vmatpush1.bf16.msra.mxu0 0
      %1448 = vmatprep.subr.bf16.mxu0 0
      %1449 = vmatpush1.bf16.msra.mxu0 0
      %1450 = vmatprep.subr.bf16.mxu0 0
      %1451 = vmatpush1.bf16.msra.mxu0 0
      %1452 = vmatprep.mubr.bf16.mxu0 0
      %1453 = vmatmul.mubr.bf16.gmra.mrb[0].mxu0 %v1409
      %v1454 = vpop.f32.mrb[0].mxu0
      %v1455 = vadd.f32 0.0, %v1454
      %v1456 = vpop.f32.mrb[0].mxu0
      %v1457 = vpop.f32.mrb[0].mxu0
      %v1458 = vadd.f32 0.0, %v1457
      %v1459 = vpop.f32.mrb[0].mxu0
      %1460 = vmatprep.mubr.bf16.mxu0 0
      %1461 = vmatmul.mubr.bf16.gmra.mrb[0].mxu0 %v1412
      %v1462 = vpop.f32.mrb[0].mxu0
      %v1463 = vadd.f32 0.0, %v1462
      %v1464 = vpop.f32.mrb[0].mxu0
      %v1465 = vpop.f32.mrb[0].mxu0
      %v1466 = vadd.f32 0.0, %v1465
      %v1467 = vpop.f32.mrb[0].mxu0
      %1468 = vmatprep.mubr.bf16.mxu0 0
      %1469 = vmatmul.mubr.bf16.gmra.mrb[0].mxu0 %v1415
      %v1470 = vpop.f32.mrb[0].mxu0
      %v1471 = vadd.f32 0.0, %v1470
      %v1472 = vpop.f32.mrb[0].mxu0
      %v1473 = vpop.f32.mrb[0].mxu0
      %v1474 = vadd.f32 0.0, %v1473
      %v1475 = vpop.f32.mrb[0].mxu0
      %1476 = vmatprep.mubr.bf16.mxu0 0
      %1477 = vmatmul.mubr.bf16.gmra.mrb[0].mxu0 %v1418
      %v1478 = vpop.f32.mrb[0].mxu0
      %v1479 = vadd.f32 0.0, %v1478
      %v1480 = vpop.f32.mrb[0].mxu0
      %v1481 = vpop.f32.mrb[0].mxu0
      %v1482 = vadd.f32 0.0, %v1481
      %v1483 = vpop.f32.mrb[0].mxu0
      %1484 = vdwg.mxu0
      %v1485 = vadd.f32 %v1377, %v1455
      %v1486 = vadd.f32 %v1378, %v1458
      %v1487 = vadd.f32 %v1379, %v1463
      %v1488 = vadd.f32 %v1380, %v1466
      %v1489 = vadd.f32 %v1381, %v1471
      %v1490 = vadd.f32 %v1382, %v1474
      %v1491 = vadd.f32 %v1383, %v1479
      %v1492 = vadd.f32 %v1384, %v1482
      %s1493 = scalar_lea.vmem %s4, 112
      %v1494 = vld [vmem:[%s1493] sm:$0xf]
      %v1495 = vld [vmem:[%s1493 + $0x4] sm:$0xf]
      %v1496 = vld [vmem:[%s1493 + $0x8] sm:$0xf]
      %v1497 = vld [vmem:[%s1493 + $0xc] sm:$0xf]
      %v1499 = vunpack.c.l.b16 %v433
      %v1500 = vpack.c.b16 %v477, %v476
      %v1501 = vpack.c.b16 %v479, %v478
      %v1502 = vpack.c.b16 %v481, %v480
      %v1503 = vpack.c.b16 %v1499, %v482
      %v1508 = vunpack.c.l.b16 %v1494
      %v1509 = vunpack.c.l.b16 %v1495
      %v1510 = vunpack.c.l.b16 %v1496
      %v1511 = vunpack.c.l.b16 %v1497
      %v1512 = vpack.c.b16 %v1509, %v1508
      %v1513 = vpack.c.b16 %v1511, %v1510
      %v1517 = vsel %vm499, %v1500, 0
      %v1520 = vsel %vm499, %v1501, 0
      %v1523 = vsel %vm499, %v1502, 0
      %v1526 = vsel %vm499, %v1503, 0
      %1528 = vmatprep.subr.bf16.mxu0 0
      %1529 = vmatpush1.bf16.msra.mxu0 %v1512
      %1530 = vmatprep.subr.bf16.mxu0 0
      %1531 = vmatpush1.bf16.msra.mxu0 %v1513
      %1532 = vmatprep.subr.bf16.mxu0 0
      %1533 = vmatpush1.bf16.msra.mxu0 0
      %1534 = vmatprep.subr.bf16.mxu0 0
      %1535 = vmatpush1.bf16.msra.mxu0 0
      %1536 = vmatprep.subr.bf16.mxu0 0
      %1537 = vmatpush1.bf16.msra.mxu0 0
      %1538 = vmatprep.subr.bf16.mxu0 0
      %1539 = vmatpush1.bf16.msra.mxu0 0
      %1540 = vmatprep.subr.bf16.mxu0 0
      %1541 = vmatpush1.bf16.msra.mxu0 0
      %1542 = vmatprep.subr.bf16.mxu0 0
      %1543 = vmatpush1.bf16.msra.mxu0 0
      %1544 = vmatprep.subr.bf16.mxu0 0
      %1545 = vmatpush1.bf16.msra.mxu0 0
      %1546 = vmatprep.subr.bf16.mxu0 0
      %1547 = vmatpush1.bf16.msra.mxu0 0
      %1548 = vmatprep.subr.bf16.mxu0 0
      %1549 = vmatpush1.bf16.msra.mxu0 0
      %1550 = vmatprep.subr.bf16.mxu0 0
      %1551 = vmatpush1.bf16.msra.mxu0 0
      %1552 = vmatprep.subr.bf16.mxu0 0
      %1553 = vmatpush1.bf16.msra.mxu0 0
      %1554 = vmatprep.subr.bf16.mxu0 0
      %1555 = vmatpush1.bf16.msra.mxu0 0
      %1556 = vmatprep.subr.bf16.mxu0 0
      %1557 = vmatpush1.bf16.msra.mxu0 0
      %1558 = vmatprep.subr.bf16.mxu0 0
      %1559 = vmatpush1.bf16.msra.mxu0 0
      %1560 = vmatprep.mubr.bf16.mxu0 0
      %1561 = vmatmul.mubr.bf16.gmra.mrb[0].mxu0 %v1517
      %v1562 = vpop.f32.mrb[0].mxu0
      %v1563 = vadd.f32 0.0, %v1562
      %v1564 = vpop.f32.mrb[0].mxu0
      %v1565 = vpop.f32.mrb[0].mxu0
      %v1566 = vadd.f32 0.0, %v1565
      %v1567 = vpop.f32.mrb[0].mxu0
      %1568 = vmatprep.mubr.bf16.mxu0 0
      %1569 = vmatmul.mubr.bf16.gmra.mrb[0].mxu0 %v1520
      %v1570 = vpop.f32.mrb[0].mxu0
      %v1571 = vadd.f32 0.0, %v1570
      %v1572 = vpop.f32.mrb[0].mxu0
      %v1573 = vpop.f32.mrb[0].mxu0
      %v1574 = vadd.f32 0.0, %v1573
      %v1575 = vpop.f32.mrb[0].mxu0
      %1576 = vmatprep.mubr.bf16.mxu0 0
      %1577 = vmatmul.mubr.bf16.gmra.mrb[0].mxu0 %v1523
      %v1578 = vpop.f32.mrb[0].mxu0
      %v1579 = vadd.f32 0.0, %v1578
      %v1580 = vpop.f32.mrb[0].mxu0
      %v1581 = vpop.f32.mrb[0].mxu0
      %v1582 = vadd.f32 0.0, %v1581
      %v1583 = vpop.f32.mrb[0].mxu0
      %1584 = vmatprep.mubr.bf16.mxu0 0
      %1585 = vmatmul.mubr.bf16.gmra.mrb[0].mxu0 %v1526
      %v1586 = vpop.f32.mrb[0].mxu0
      %v1587 = vadd.f32 0.0, %v1586
      %v1588 = vpop.f32.mrb[0].mxu0
      %v1589 = vpop.f32.mrb[0].mxu0
      %v1590 = vadd.f32 0.0, %v1589
      %v1591 = vpop.f32.mrb[0].mxu0
      %1592 = vdwg.mxu0
      %v1593 = vadd.f32 %v1485, %v1563
      %v1594 = vadd.f32 %v1486, %v1566
      %v1595 = vadd.f32 %v1487, %v1571
      %v1596 = vadd.f32 %v1488, %v1574
      %v1597 = vadd.f32 %v1489, %v1579
      %v1598 = vadd.f32 %v1490, %v1582
      %v1599 = vadd.f32 %v1491, %v1587
      %v1600 = vadd.f32 %v1492, %v1590
      %v1602 = vshrl.u32 %v423, 16
      %v1604 = vrot.slane %v1602, 4
      %v1605 = vshll.u32 %v423, 16
      %v1607 = vrot.slane %v1605, 5
      %v1608 = vor.u32 %v1604, %v1607
      %v1609 = vrot.slane %v1608, 4
      %v1611 = vshll.u32 %v424, 16
      %v1613 = vrot.slane %v1611, 5
      %v1614 = vsel %vm688, %v1609, %v1613
      %s1615 = scalar_lea.vmem %s4, 128
      %v1616 = vld [vmem:[%s1615] sm:$0xf]
      %v1617 = vld [vmem:[%s1615 + $0x4] sm:$0xf]
      %v1618 = vld [vmem:[%s1615 + $0x8] sm:$0xf]
      %v1619 = vld [vmem:[%s1615 + $0xc] sm:$0xf]
      %v1620 = vunpack.c.l.b16 %v1614
      %v1621 = vpack.c.b16 %v808, %v807
      %v1622 = vpack.c.b16 %v810, %v809
      %v1623 = vpack.c.b16 %v812, %v811
      %v1624 = vpack.c.b16 %v1620, %v813
      %v1629 = vunpack.c.l.b16 %v1616
      %v1630 = vunpack.c.l.b16 %v1617
      %v1631 = vunpack.c.l.b16 %v1618
      %v1632 = vunpack.c.l.b16 %v1619
      %v1633 = vpack.c.b16 %v1630, %v1629
      %v1634 = vpack.c.b16 %v1632, %v1631
      %v1638 = vsel %vm499, %v1621, 0
      %v1641 = vsel %vm499, %v1622, 0
      %v1644 = vsel %vm499, %v1623, 0
      %v1647 = vsel %vm499, %v1624, 0
      %1649 = vmatprep.subr.bf16.mxu0 0
      %1650 = vmatpush1.bf16.msra.mxu0 %v1633
      %1651 = vmatprep.subr.bf16.mxu0 0
      %1652 = vmatpush1.bf16.msra.mxu0 %v1634
      %1653 = vmatprep.subr.bf16.mxu0 0
      %1654 = vmatpush1.bf16.msra.mxu0 0
      %1655 = vmatprep.subr.bf16.mxu0 0
      %1656 = vmatpush1.bf16.msra.mxu0 0
      %1657 = vmatprep.subr.bf16.mxu0 0
      %1658 = vmatpush1.bf16.msra.mxu0 0
      %1659 = vmatprep.subr.bf16.mxu0 0
      %1660 = vmatpush1.bf16.msra.mxu0 0
      %1661 = vmatprep.subr.bf16.mxu0 0
      %1662 = vmatpush1.bf16.msra.mxu0 0
      %1663 = vmatprep.subr.bf16.mxu0 0
      %1664 = vmatpush1.bf16.msra.mxu0 0
      %1665 = vmatprep.subr.bf16.mxu0 0
      %1666 = vmatpush1.bf16.msra.mxu0 0
      %1667 = vmatprep.subr.bf16.mxu0 0
      %1668 = vmatpush1.bf16.msra.mxu0 0
      %1669 = vmatprep.subr.bf16.mxu0 0
      %1670 = vmatpush1.bf16.msra.mxu0 0
      %1671 = vmatprep.subr.bf16.mxu0 0
      %1672 = vmatpush1.bf16.msra.mxu0 0
      %1673 = vmatprep.subr.bf16.mxu0 0
      %1674 = vmatpush1.bf16.msra.mxu0 0
      %1675 = vmatprep.subr.bf16.mxu0 0
      %1676 = vmatpush1.bf16.msra.mxu0 0
      %1677 = vmatprep.subr.bf16.mxu0 0
      %1678 = vmatpush1.bf16.msra.mxu0 0
      %1679 = vmatprep.subr.bf16.mxu0 0
      %1680 = vmatpush1.bf16.msra.mxu0 0
      %1681 = vmatprep.mubr.bf16.mxu0 0
      %1682 = vmatmul.mubr.bf16.gmra.mrb[0].mxu0 %v1638
      %v1683 = vpop.f32.mrb[0].mxu0
      %v1684 = vadd.f32 0.0, %v1683
      %v1685 = vpop.f32.mrb[0].mxu0
      %v1686 = vpop.f32.mrb[0].mxu0
      %v1687 = vadd.f32 0.0, %v1686
      %v1688 = vpop.f32.mrb[0].mxu0
      %1689 = vmatprep.mubr.bf16.mxu0 0
      %1690 = vmatmul.mubr.bf16.gmra.mrb[0].mxu0 %v1641
      %v1691 = vpop.f32.mrb[0].mxu0
      %v1692 = vadd.f32 0.0, %v1691
      %v1693 = vpop.f32.mrb[0].mxu0
      %v1694 = vpop.f32.mrb[0].mxu0
      %v1695 = vadd.f32 0.0, %v1694
      %v1696 = vpop.f32.mrb[0].mxu0
      %1697 = vmatprep.mubr.bf16.mxu0 0
      %1698 = vmatmul.mubr.bf16.gmra.mrb[0].mxu0 %v1644
      %v1699 = vpop.f32.mrb[0].mxu0
      %v1700 = vadd.f32 0.0, %v1699
      %v1701 = vpop.f32.mrb[0].mxu0
      %v1702 = vpop.f32.mrb[0].mxu0
      %v1703 = vadd.f32 0.0, %v1702
      %v1704 = vpop.f32.mrb[0].mxu0
      %1705 = vmatprep.mubr.bf16.mxu0 0
      %1706 = vmatmul.mubr.bf16.gmra.mrb[0].mxu0 %v1647
      %v1707 = vpop.f32.mrb[0].mxu0
      %v1708 = vadd.f32 0.0, %v1707
      %v1709 = vpop.f32.mrb[0].mxu0
      %v1710 = vpop.f32.mrb[0].mxu0
      %v1711 = vadd.f32 0.0, %v1710
      %v1712 = vpop.f32.mrb[0].mxu0
      %1713 = vdwg.mxu0
      %v1714 = vadd.f32 %v1593, %v1684
      %v1715 = vadd.f32 %v1594, %v1687
      %v1716 = vadd.f32 %v1595, %v1692
      %v1717 = vadd.f32 %v1596, %v1695
      %v1718 = vadd.f32 %v1597, %v1700
      %v1719 = vadd.f32 %v1598, %v1703
      %v1720 = vadd.f32 %v1599, %v1708
      %v1721 = vadd.f32 %v1600, %v1711
      %v1722 = vld [vmem:[%s5] sm:$0x1]
      %v1724 = vlaneseq
      %v1725 = vshrl.u32 %v1724, 7
      %v1726 = vsub.s32 0, %v1725
      %v1727 = vrot.slane %v1722, %v1726
      %v1729 = vadd.f32 %v1714, %v1727
      %v1730 = vadd.f32 %v1715, %v1727
      %v1731 = vadd.f32 %v1716, %v1727
      %v1732 = vadd.f32 %v1717, %v1727
      %v1733 = vadd.f32 %v1718, %v1727
      %v1734 = vadd.f32 %v1719, %v1727
      %v1735 = vadd.f32 %v1720, %v1727
      %v1736 = vadd.f32 %v1721, %v1727
      %v1737 = vmax.f32 %v1729, 0.0
      %v1738 = vmax.f32 %v1730, 0.0
      %v1739 = vmax.f32 %v1731, 0.0
      %v1740 = vmax.f32 %v1732, 0.0
      %v1741 = vmax.f32 %v1733, 0.0
      %v1742 = vmax.f32 %v1734, 0.0
      %v1743 = vmax.f32 %v1735, 0.0
      %v1744 = vmax.f32 %v1736, 0.0
      %v1745 = vpack.c.bf16 %v1738, %v1737
      %v1746 = vpack.c.bf16 %v1740, %v1739
      %v1747 = vpack.c.bf16 %v1742, %v1741
      %v1748 = vpack.c.bf16 %v1744, %v1743
      %v1749 = vld [vmem:[%s6] sm:$0xf]
      %v1750 = vld [vmem:[%s6 + $0x4] sm:$0xf]
      %v1751 = vld [vmem:[%s6 + $0x8] sm:$0xf]
      %v1752 = vld [vmem:[%s6 + $0xc] sm:$0xf]
      %v1753 = vld [vmem:[%s6 + $0x10] sm:$0xf]
      %v1754 = vld [vmem:[%s6 + $0x14] sm:$0xf]
      %v1755 = vld [vmem:[%s6 + $0x18] sm:$0xf]
      %v1756 = vld [vmem:[%s6 + $0x1c] sm:$0xf]
      %v1757 = vld [vmem:[%s7] sm:$0x1]
      %v1759 = vlaneseq
      %v1760 = vshrl.u32 %v1759, 7
      %v1761 = vsub.s32 0, %v1760
      %v1762 = vrot.slane %v1757, %v1761
      %v1772 = vunpack.c.l.b16 %v1749
      %v1773 = vunpack.c.l.b16 %v1750
      %v1774 = vunpack.c.l.b16 %v1751
      %v1775 = vunpack.c.l.b16 %v1752
      %v1776 = vunpack.c.l.b16 %v1753
      %v1777 = vunpack.c.l.b16 %v1754
      %v1778 = vunpack.c.l.b16 %v1755
      %v1779 = vunpack.c.l.b16 %v1756
      %v1780 = vpack.c.b16 %v1773, %v1772
      %v1781 = vpack.c.b16 %v1775, %v1774
      %v1782 = vpack.c.b16 %v1777, %v1776
      %v1783 = vpack.c.b16 %v1779, %v1778
      %vm1788 = vcmask 523264
      %v1790 = vsel %vm1788, %v1745, 0
      %v1793 = vsel %vm1788, %v1746, 0
      %v1796 = vsel %vm1788, %v1747, 0
      %v1799 = vsel %vm1788, %v1748, 0
      %1801 = vmatprep.subr.bf16.mxu0 0
      %1802 = vmatpush1.bf16.msra.mxu0 %v1780
      %1803 = vmatprep.subr.bf16.mxu0 0
      %1804 = vmatpush1.bf16.msra.mxu0 %v1781
      %1805 = vmatprep.subr.bf16.mxu0 0
      %1806 = vmatpush1.bf16.msra.mxu0 %v1782
      %1807 = vmatprep.subr.bf16.mxu0 0
      %1808 = vmatpush1.bf16.msra.mxu0 %v1783
      %1809 = vmatprep.subr.bf16.mxu0 0
      %1810 = vmatpush1.bf16.msra.mxu0 0
      %1811 = vmatprep.subr.bf16.mxu0 0
      %1812 = vmatpush1.bf16.msra.mxu0 0
      %1813 = vmatprep.subr.bf16.mxu0 0
      %1814 = vmatpush1.bf16.msra.mxu0 0
      %1815 = vmatprep.subr.bf16.mxu0 0
      %1816 = vmatpush1.bf16.msra.mxu0 0
      %1817 = vmatprep.subr.bf16.mxu0 0
      %1818 = vmatpush1.bf16.msra.mxu0 0
      %1819 = vmatprep.subr.bf16.mxu0 0
      %1820 = vmatpush1.bf16.msra.mxu0 0
      %1821 = vmatprep.subr.bf16.mxu0 0
      %1822 = vmatpush1.bf16.msra.mxu0 0
      %1823 = vmatprep.subr.bf16.mxu0 0
      %1824 = vmatpush1.bf16.msra.mxu0 0
      %1825 = vmatprep.subr.bf16.mxu0 0
      %1826 = vmatpush1.bf16.msra.mxu0 0
      %1827 = vmatprep.subr.bf16.mxu0 0
      %1828 = vmatpush1.bf16.msra.mxu0 0
      %1829 = vmatprep.subr.bf16.mxu0 0
      %1830 = vmatpush1.bf16.msra.mxu0 0
      %1831 = vmatprep.subr.bf16.mxu0 0
      %1832 = vmatpush1.bf16.msra.mxu0 0
      %1833 = vmatprep.mubr.bf16.mxu0 0
      %1834 = vmatmul.mubr.bf16.gmra.mrb[0].mxu0 %v1790
      %v1835 = vpop.f32.mrb[0].mxu0
      %v1836 = vadd.f32 %v1762, %v1835
      %v1837 = vpop.f32.mrb[0].mxu0
      %v1838 = vpop.f32.mrb[0].mxu0
      %v1839 = vadd.f32 %v1762, %v1838
      %v1840 = vpop.f32.mrb[0].mxu0
      %1841 = vmatprep.mubr.bf16.mxu0 0
      %1842 = vmatmul.mubr.bf16.gmra.mrb[0].mxu0 %v1793
      %v1843 = vpop.f32.mrb[0].mxu0
      %v1844 = vadd.f32 %v1762, %v1843
      %v1845 = vpop.f32.mrb[0].mxu0
      %v1846 = vpop.f32.mrb[0].mxu0
      %v1847 = vadd.f32 %v1762, %v1846
      %v1848 = vpop.f32.mrb[0].mxu0
      %1849 = vmatprep.mubr.bf16.mxu0 0
      %1850 = vmatmul.mubr.bf16.gmra.mrb[0].mxu0 %v1796
      %v1851 = vpop.f32.mrb[0].mxu0
      %v1852 = vadd.f32 %v1762, %v1851
      %v1853 = vpop.f32.mrb[0].mxu0
      %v1854 = vpop.f32.mrb[0].mxu0
      %v1855 = vadd.f32 %v1762, %v1854
      %v1856 = vpop.f32.mrb[0].mxu0
      %1857 = vmatprep.mubr.bf16.mxu0 0
      %1858 = vmatmul.mubr.bf16.gmra.mrb[0].mxu0 %v1799
      %v1859 = vpop.f32.mrb[0].mxu0
      %v1860 = vadd.f32 %v1762, %v1859
      %v1861 = vpop.f32.mrb[0].mxu0
      %v1862 = vpop.f32.mrb[0].mxu0
      %v1863 = vadd.f32 %v1762, %v1862
      %v1864 = vpop.f32.mrb[0].mxu0
      %1865 = vdwg.mxu0
      %v1866 = vpack.c.bf16 %v1737, %v1737
      %v1867 = vpack.c.bf16 %v1738, %v1738
      %v1868 = vpack.c.bf16 %v1739, %v1739
      %v1869 = vpack.c.bf16 %v1740, %v1740
      %v1870 = vpack.c.bf16 %v1741, %v1741
      %v1871 = vpack.c.bf16 %v1742, %v1742
      %v1872 = vpack.c.bf16 %v1743, %v1743
      %v1873 = vpack.c.bf16 %v1744, %v1744
      %vm1874 = vcmask 519168
      %1875 = vst.msk [vmem:[%s400] sm:$0xf] %vm1874, %v1866
      %1876 = vst.msk [vmem:[%s400 + $0x4] sm:$0xf] %vm1874, %v1867
      %1877 = vst.msk [vmem:[%s400 + $0x8] sm:$0xf] %vm1874, %v1868
      %1878 = vst.msk [vmem:[%s400 + $0xc] sm:$0xf] %vm1874, %v1869
      %1879 = vst.msk [vmem:[%s400 + $0x10] sm:$0xf] %vm1874, %v1870
      %1880 = vst.msk [vmem:[%s400 + $0x14] sm:$0xf] %vm1874, %v1871
      %1881 = vst.msk [vmem:[%s400 + $0x18] sm:$0xf] %vm1874, %v1872
      %1882 = vst.msk [vmem:[%s400 + $0x1c] sm:$0xf] %vm1874, %v1873
      %v1883 = vpack.c.bf16 %v1836, %v1836
      %v1884 = vpack.c.bf16 %v1839, %v1839
      %v1885 = vpack.c.bf16 %v1844, %v1844
      %v1886 = vpack.c.bf16 %v1847, %v1847
      %v1887 = vpack.c.bf16 %v1852, %v1852
      %v1888 = vpack.c.bf16 %v1855, %v1855
      %v1889 = vpack.c.bf16 %v1860, %v1860
      %v1890 = vpack.c.bf16 %v1863, %v1863
      %1891 = vst [vmem:[%s405] sm:$0xf] %v1883
      %1892 = vst [vmem:[%s405 + $0x4] sm:$0xf] %v1884
      %1893 = vst [vmem:[%s405 + $0x8] sm:$0xf] %v1885
      %1894 = vst [vmem:[%s405 + $0xc] sm:$0xf] %v1886
      %1895 = vst [vmem:[%s405 + $0x10] sm:$0xf] %v1887
      %1896 = vst [vmem:[%s405 + $0x14] sm:$0xf] %v1888
      %1897 = vst [vmem:[%s405 + $0x18] sm:$0xf] %v1889
      %1898 = vst [vmem:[%s405 + $0x1c] sm:$0xf] %v1890
      %p1899 = scmp.lt.s32.totalorder %s21, 3
      %s1900 = scalar_select %p1899, %s21, 3
      %s1901 = smul.addr %s1900, 8
      %s1902 = smul.addr %s1901, 4
      %s1903 = scalar_lea.vmem %s8, %s1902
      %p1904 = scmp.lt.s32.totalorder %s21, 3
      %s1905 = scalar_select %p1904, %s21, 3
      %s1906 = smul.addr %s1905, 8
      %s1907 = smul.addr %s1906, 4
      %s1908 = scalar_lea.vmem %s9, %s1907
      // Predicated region
      $region53: #{img_backbone_forward.5} parent=51 // pred_check
        %p1909 = pneg %p227
      $region54: #{img_backbone_forward.5} parent=51 // pred_check_branch
        %1911 = sbr.rel (%p1909) target = $region56
      $region55: #{img_backbone_forward.5} parent=51 // pred_region
        _
      $region56: #{img_backbone_forward.5} parent=51 // pred_fallthru
        _
      // Predicated region
      $region57: #{img_backbone_forward.5} parent=51 // pred_check
        %p1912 = pneg %p253
      $region58: #{img_backbone_forward.5} parent=51 // pred_check_branch
        %1914 = sbr.rel (%p1912) target = $region60
      $region59: #{img_backbone_forward.5} parent=51 // pred_region
        _
      $region60: #{img_backbone_forward.5} parent=51 // pred_fallthru
        _
    $region52: #{img_backbone_forward.5} parent=5 // pred_fallthru
      _
    %p1915 = scmp.le.s32.totalorder 2, %s16
    // Predicated region
    $region61: #{img_backbone_forward.5} parent=5 // pred_check
      %p1916 = pneg %p1915
    $region62: #{img_backbone_forward.5} parent=5 // pred_check_branch
      %1918 = sbr.rel (%p1916) target = $region64
    $region63: #{img_backbone_forward.5} parent=5 // pred_region
      %s1919 = ssub.s32 %s16, 2
      // Predicated region
      $region65: #{img_backbone_forward.5} parent=63 // pred_check
        %p1920 = pneg %p233
      $region66: #{img_backbone_forward.5} parent=63 // pred_check_branch
        %1922 = sbr.rel (%p1920) target = $region68
      $region67: #{img_backbone_forward.5} parent=63 // pred_region
        %p1923 = scmp.lt.s32.totalorder %s22, 3
        %s1924 = scalar_select %p1923, %s22, 3
        %s1925 = smul.addr %s1924, 8
        %s1926 = smul.addr %s1925, 4
        %s1927 = scalar_lea.vmem %s8, %s1926
      $region68: #{img_backbone_forward.5} parent=63 // pred_fallthru
        _
      // Predicated region
      $region69: #{img_backbone_forward.5} parent=63 // pred_check
        %p1928 = pneg %p259
      $region70: #{img_backbone_forward.5} parent=63 // pred_check_branch
        %1930 = sbr.rel (%p1928) target = $region72
      $region71: #{img_backbone_forward.5} parent=63 // pred_region
        %p1931 = scmp.lt.s32.totalorder %s22, 3
        %s1932 = scalar_select %p1931, %s22, 3
        %s1933 = smul.addr %s1932, 8
        %s1934 = smul.addr %s1933, 4
        %s1935 = scalar_lea.vmem %s9, %s1934
      $region72: #{img_backbone_forward.5} parent=63 // pred_fallthru
        _
    $region64: #{img_backbone_forward.5} parent=5 // pred_fallthru
      _
  $region6: #{img_backbone_forward.5} parent=0 // loop_footer
    %s20 = sadd.s32 1, %s16
  $region7: #{img_backbone_forward.5} parent=0 // loop_footer_branch
    %15 = sbr.rel target = $region3
  $region8: #{img_backbone_forward.5} parent=0 // loop_exit
    _

// kernel: img_backbone_forward.4
$region0: #{img_backbone_forward.4}
  #allocation0 [shape = 'u32[]', space=smem, size = 0x4, offset = 0x4, fixed_abs, tag = 'smem constant byte address 0x4 - core index']
  #allocation1 [shape = 'u32[144,128]{1,0:T(1,128)}', space=vmem, size = 0x12000, scoped, tag = 'internal scratch']
  %s0 = inlined_call_operand.vmem [shape: bf16[4,18,18,8], index: 0, kind: input, shape index: {}]
  %s1 = inlined_call_operand.vmem [shape: bf16[9,8,32], index: 1, kind: input, shape index: {}]
  %s2 = inlined_call_operand.vmem [shape: f32[1,32], index: 2, kind: input, shape index: {}]
  %s3 = inlined_call_operand.vmem [shape: bf16[4,16,16,32], index: 3, kind: output, shape index: {}]
  %s4 = sld [smem:[#allocation0]]
  $region45: #{img_backbone_forward.4} parent=0
    _
  %s6 = ssub.s32 1, %s4
  %s7 = scalar_select 0, %s6, %s4
  loop: start=0, step=1, limit=6
  $region2: #{img_backbone_forward.4} parent=0 // loop_pre_header
    _
  $region3: #{img_backbone_forward.4} parent=0 // loop_header
    %s9 = sphi 0, %s13
    %p10 = scmp.ge.s32.totalorder %s9, 6
    %s19 = sphi 0, %s21
    %s22 = sphi 0, %s19
    %s23 = sphi 0, %s22
    %s39 = sphi 0, %s23
    %s43 = sphi 0, %s43
    %s45 = sphi 0, %s43
    %s46 = sphi 0, %s45
    %s60 = sphi 0, %s46
    %s64 = sphi 0, %s64
    %s66 = sphi 0, %s64
    %s67 = sphi 0, %s66
    %s81 = sphi 0, %s67
    %s87 = sphi 0, %s89
    %s90 = sphi 0, %s87
    %s91 = sphi 0, %s90
    %s107 = sphi 0, %s91
  $region4: #{img_backbone_forward.4} parent=0 // loop_header_branch
    %12 = sbr.rel (%p10) target = $region8
  $region5: #{img_backbone_forward.4} parent=0 // loop_body
    %s14 = ssub.s32 %s9, 1
    %s15 = ssub.s32 %s9, 2
    %s16 = sadd.s32 %s9, 1
    %s17 = ssub.s32 %s9, %s16
    %p18 = scmp.eq.s32.totalorder %s17, 0
    %s20 = sadd.s32 %s19, 1
    %s21 = scalar_select %p18, %s19, %s20
    %p24 = pneg %p18
    %p25 = scmp.eq.s32.totalorder %s9, 3
    %p26 = por %p24, %p25
    %p27 = scmp.ne.s32.totalorder %s19, %s22
    %p28 = scmp.eq.s32.totalorder %s9, 0
    %p29 = por %p27, %p28
    %p30 = scmp.ne.s32.totalorder %s19, %s22
    %p31 = scmp.eq.s32.totalorder %s14, 3
    %p32 = por %p30, %p31
    %p33 = scmp.ne.s32.totalorder %s22, %s23
    %p34 = scmp.eq.s32.totalorder %s14, 0
    %p35 = por %p33, %p34
    %p36 = scmp.ne.s32.totalorder %s22, %s23
    %p37 = scmp.eq.s32.totalorder %s15, 3
    %p38 = por %p36, %p37
    %p40 = scmp.ne.s32.totalorder %s23, %s39
    %p41 = scmp.eq.s32.totalorder %s15, 0
    %p42 = por %p40, %p41
    %s44 = sadd.s32 %s43, 1
    %p47 = scmp.eq.s32.totalorder %s9, 3
    %p48 = scmp.ne.s32.totalorder %s43, %s45
    %p49 = scmp.eq.s32.totalorder %s9, 0
    %p50 = por %p48, %p49
    %p51 = scmp.ne.s32.totalorder %s43, %s45
    %p52 = scmp.eq.s32.totalorder %s14, 3
    %p53 = por %p51, %p52
    %p54 = scmp.ne.s32.totalorder %s45, %s46
    %p55 = scmp.eq.s32.totalorder %s14, 0
    %p56 = por %p54, %p55
    %p57 = scmp.ne.s32.totalorder %s45, %s46
    %p58 = scmp.eq.s32.totalorder %s15, 3
    %p59 = por %p57, %p58
    %p61 = scmp.ne.s32.totalorder %s46, %s60
    %p62 = scmp.eq.s32.totalorder %s15, 0
    %p63 = por %p61, %p62
    %s65 = sadd.s32 %s64, 1
    %p68 = scmp.eq.s32.totalorder %s9, 3
    %p69 = scmp.ne.s32.totalorder %s64, %s66
    %p70 = scmp.eq.s32.totalorder %s9, 0
    %p71 = por %p69, %p70
    %p72 = scmp.ne.s32.totalorder %s64, %s66
    %p73 = scmp.eq.s32.totalorder %s14, 3
    %p74 = por %p72, %p73
    %p75 = scmp.ne.s32.totalorder %s66, %s67
    %p76 = scmp.eq.s32.totalorder %s14, 0
    %p77 = por %p75, %p76
    %p78 = scmp.ne.s32.totalorder %s66, %s67
    %p79 = scmp.eq.s32.totalorder %s15, 3
    %p80 = por %p78, %p79
    %p82 = scmp.ne.s32.totalorder %s67, %s81
    %p83 = scmp.eq.s32.totalorder %s15, 0
    %p84 = por %p82, %p83
    %s85 = ssub.s32 %s9, %s16
    %p86 = scmp.eq.s32.totalorder %s85, 0
    %s88 = sadd.s32 %s87, 1
    %s89 = scalar_select %p86, %s87, %s88
    %p92 = pneg %p86
    %p93 = scmp.eq.s32.totalorder %s9, 3
    %p94 = por %p92, %p93
    %p95 = scmp.ne.s32.totalorder %s87, %s90
    %p96 = scmp.eq.s32.totalorder %s9, 0
    %p97 = por %p95, %p96
    %p98 = scmp.ne.s32.totalorder %s87, %s90
    %p99 = scmp.eq.s32.totalorder %s14, 3
    %p100 = por %p98, %p99
    %p101 = scmp.ne.s32.totalorder %s90, %s91
    %p102 = scmp.eq.s32.totalorder %s14, 0
    %p103 = por %p101, %p102
    %p104 = scmp.ne.s32.totalorder %s90, %s91
    %p105 = scmp.eq.s32.totalorder %s15, 3
    %p106 = por %p104, %p105
    %p108 = scmp.ne.s32.totalorder %s91, %s107
    %p109 = scmp.eq.s32.totalorder %s15, 0
    %p110 = por %p108, %p109
    %p111 = scmp.le.s32.totalorder 1, %s9
    %p112 = scmp.lt.s32.totalorder %s9, 5
    %p113 = pnand %p111, %p112
    %p114 = pneg %p113
    // Predicated region
    $region9: #{img_backbone_forward.4} parent=5 // pred_check
      _
    $region10: #{img_backbone_forward.4} parent=5 // pred_check_branch
      %116 = sbr.rel (%p113) target = $region12
    $region11: #{img_backbone_forward.4} parent=5 // pred_region
      %s117 = ssub.s32 %s9, 1
      // Predicated region
      $region13: #{img_backbone_forward.4} parent=11 // pred_check
        %p118 = pneg %p56
      $region14: #{img_backbone_forward.4} parent=11 // pred_check_branch
        %120 = sbr.rel (%p118) target = $region16
      $region15: #{img_backbone_forward.4} parent=11 // pred_region
        _
      $region16: #{img_backbone_forward.4} parent=11 // pred_fallthru
        _
      // Predicated region
      $region17: #{img_backbone_forward.4} parent=11 // pred_check
        %p121 = pneg %p77
      $region18: #{img_backbone_forward.4} parent=11 // pred_check_branch
        %123 = sbr.rel (%p121) target = $region20
      $region19: #{img_backbone_forward.4} parent=11 // pred_region
        _
      $region20: #{img_backbone_forward.4} parent=11 // pred_fallthru
        _
    $region12: #{img_backbone_forward.4} parent=5 // pred_fallthru
      _
    %p124 = scmp.lt.s32.totalorder %s9, 4
    // Predicated region
    $region21: #{img_backbone_forward.4} parent=5 // pred_check
      %p125 = pneg %p124
    $region22: #{img_backbone_forward.4} parent=5 // pred_check_branch
      %127 = sbr.rel (%p125) target = $region24
    $region23: #{img_backbone_forward.4} parent=5 // pred_region
      // Predicated region
      $region25: #{img_backbone_forward.4} parent=23 // pred_check
        %p128 = pneg %p29
      $region26: #{img_backbone_forward.4} parent=23 // pred_check_branch
        %130 = sbr.rel (%p128) target = $region28
      $region27: #{img_backbone_forward.4} parent=23 // pred_region
        %p131 = scmp.lt.s32.totalorder %s9, 3
        %s132 = scalar_select %p131, %s9, 3
        %s133 = smul.addr %s132, 54
        %s134 = smul.addr %s133, 4
        %s135 = scalar_lea.vmem %s0, %s134
      $region28: #{img_backbone_forward.4} parent=23 // pred_fallthru
        _
    $region24: #{img_backbone_forward.4} parent=5 // pred_fallthru
      _
    %p136 = scmp.le.s32.totalorder 1, %s9
    %p137 = scmp.lt.s32.totalorder %s9, 5
    %p138 = pnand %p136, %p137
    %p139 = pneg %p138
    // Predicated region
    $region29: #{img_backbone_forward.4} parent=5 // pred_check
      _
    $region30: #{img_backbone_forward.4} parent=5 // pred_check_branch
      %141 = sbr.rel (%p138) target = $region32
    $region31: #{img_backbone_forward.4} parent=5 // pred_region
      %s142 = ssub.s32 %s9, 1
      %p143 = scmp.lt.s32.totalorder %s14, 3
      %s144 = scalar_select %p143, %s14, 3
      %s145 = smul.addr %s144, 54
      %s146 = smul.addr %s145, 4
      %s147 = scalar_lea.vmem %s0, %s146
      %p148 = pneg %p35
      %p149 = pneg %p32
      %p150 = pneg %p56
      %p151 = pneg %p53
      %p152 = pneg %p77
      %p153 = pneg %p74
      %p154 = pneg %p103
      %p155 = pneg %p100
      %p156 = scmp.lt.s32.totalorder %s14, 3
      %s157 = scalar_select %p156, %s14, 3
      %s158 = smul.addr %s157, 32
      %s159 = smul.addr %s158, 4
      %s160 = scalar_lea.vmem %s3, %s159
      %p161 = scmp.lt.s32.totalorder %s14, 3
      %s162 = scalar_select %p161, %s14, 3
      %s163 = smul.addr %s162, 54
      %s164 = smul.addr %s163, 4
      %s165 = scalar_lea.vmem %s0, %s164
      %p166 = scmp.lt.s32.totalorder %s14, 3
      %s167 = scalar_select %p166, %s14, 3
      %s168 = smul.addr %s167, 32
      %s169 = smul.addr %s168, 4
      %s170 = scalar_lea.vmem %s3, %s169
      %v172 = vld [vmem:[%s165] sm:$0xf]
      %v173 = vld [vmem:[%s165 + $0x4] sm:$0xf]
      %v174 = vld [vmem:[%s165 + $0x8] sm:$0x1]
      %v175 = vld [vmem:[%s165 + $0xc] sm:$0xf]
      %v176 = vld [vmem:[%s165 + $0x10] sm:$0xf]
      %v177 = vld [vmem:[%s165 + $0x14] sm:$0x1]
      %v178 = vld [vmem:[%s165 + $0x18] sm:$0xf]
      %v179 = vld [vmem:[%s165 + $0x1c] sm:$0xf]
      %v180 = vld [vmem:[%s165 + $0x20] sm:$0x1]
      %v181 = vld [vmem:[%s165 + $0x24] sm:$0xf]
      %v182 = vld [vmem:[%s165 + $0x28] sm:$0xf]
      %v183 = vld [vmem:[%s165 + $0x2c] sm:$0x1]
      %v184 = vld [vmem:[%s165 + $0x30] sm:$0xf]
      %v185 = vld [vmem:[%s165 + $0x34] sm:$0xf]
      %v186 = vld [vmem:[%s165 + $0x38] sm:$0x1]
      %v187 = vld [vmem:[%s165 + $0x3c] sm:$0xf]
      %v188 = vld [vmem:[%s165 + $0x40] sm:$0xf]
      %v189 = vld [vmem:[%s165 + $0x44] sm:$0x1]
      %v190 = vld [vmem:[%s165 + $0x48] sm:$0xf]
      %v191 = vld [vmem:[%s165 + $0x4c] sm:$0xf]
      %v192 = vld [vmem:[%s165 + $0x50] sm:$0x1]
      %v193 = vld [vmem:[%s165 + $0x54] sm:$0xf]
      %v194 = vld [vmem:[%s165 + $0x58] sm:$0xf]
      %v195 = vld [vmem:[%s165 + $0x5c] sm:$0x1]
      %v196 = vld [vmem:[%s165 + $0x60] sm:$0xf]
      %v197 = vld [vmem:[%s165 + $0x64] sm:$0xf]
      %v198 = vld [vmem:[%s165 + $0x68] sm:$0x1]
      %v199 = vld [vmem:[%s165 + $0x6c] sm:$0xf]
      %v200 = vld [vmem:[%s165 + $0x70] sm:$0xf]
      %v201 = vld [vmem:[%s165 + $0x74] sm:$0x1]
      %v202 = vld [vmem:[%s165 + $0x78] sm:$0xf]
      %v203 = vld [vmem:[%s165 + $0x7c] sm:$0xf]
      %v204 = vld [vmem:[%s165 + $0x80] sm:$0x1]
      %v205 = vld [vmem:[%s165 + $0x84] sm:$0xf]
      %v206 = vld [vmem:[%s165 + $0x88] sm:$0xf]
      %v207 = vld [vmem:[%s165 + $0x8c] sm:$0x1]
      %v208 = vld [vmem:[%s165 + $0x90] sm:$0xf]
      %v209 = vld [vmem:[%s165 + $0x94] sm:$0xf]
      %v210 = vld [vmem:[%s165 + $0x98] sm:$0x1]
      %v211 = vld [vmem:[%s165 + $0x9c] sm:$0xf]
      %v212 = vld [vmem:[%s165 + $0xa0] sm:$0xf]
      %v213 = vld [vmem:[%s165 + $0xa4] sm:$0x1]
      %v214 = vld [vmem:[%s165 + $0xa8] sm:$0xf]
      %v215 = vld [vmem:[%s165 + $0xac] sm:$0xf]
      %v216 = vld [vmem:[%s165 + $0xb0] sm:$0x1]
      %v217 = vld [vmem:[%s165 + $0xb4] sm:$0xf]
      %v218 = vld [vmem:[%s165 + $0xb8] sm:$0xf]
      %v219 = vld [vmem:[%s165 + $0xbc] sm:$0x1]
      %v220 = vld [vmem:[%s165 + $0xc0] sm:$0xf]
      %v221 = vld [vmem:[%s165 + $0xc4] sm:$0xf]
      %v222 = vld [vmem:[%s165 + $0xc8] sm:$0x1]
      %v223 = vld [vmem:[%s165 + $0xcc] sm:$0xf]
      %v224 = vld [vmem:[%s165 + $0xd0] sm:$0xf]
      %v225 = vld [vmem:[%s165 + $0xd4] sm:$0x1]
      %v226 = vld [vmem:[%s1] sm:$0xf]
      %vm227 = vsmask.f32 3328
      %vm228 = vsmask.f32 7440
      %vm229 = vmor %vm227, %vm228
      %v231 = vshrl.u32 %v172, 16
      %v233 = vrot.slane %v231, 4
      %v234 = vshll.u32 %v172, 16
      %v236 = vrot.slane %v234, 5
      %v237 = vor.u32 %v233, %v236
      %v238 = vrot.slane %v237, 4
      %v240 = vshll.u32 %v173, 16
      %v242 = vrot.slane %v240, 5
      %v243 = vsel %vm229, %v238, %v242
      %v244 = vshrl.u32 %v173, 16
      %v246 = vrot.slane %v244, 4
      %v247 = vor.u32 %v246, %v242
      %v248 = vrot.slane %v247, 4
      %v250 = vshll.u32 %v174, 16
      %v252 = vrot.slane %v250, 5
      %v253 = vsel %vm229, %v248, %v252
      %v255 = vshrl.u32 %v175, 16
      %v257 = vrot.slane %v255, 4
      %v258 = vshll.u32 %v175, 16
      %v260 = vrot.slane %v258, 5
      %v261 = vor.u32 %v257, %v260
      %v262 = vrot.slane %v261, 4
      %v264 = vshll.u32 %v176, 16
      %v266 = vrot.slane %v264, 5
      %v267 = vsel %vm229, %v262, %v266
      %v268 = vshrl.u32 %v176, 16
      %v270 = vrot.slane %v268, 4
      %v271 = vor.u32 %v270, %v266
      %v272 = vrot.slane %v271, 4
      %v274 = vshll.u32 %v177, 16
      %v276 = vrot.slane %v274, 5
      %v277 = vsel %vm229, %v272, %v276
      %v279 = vshrl.u32 %v178, 16
      %v281 = vrot.slane %v279, 4
      %v282 = vshll.u32 %v178, 16
      %v284 = vrot.slane %v282, 5
      %v285 = vor.u32 %v281, %v284
      %v286 = vrot.slane %v285, 4
      %v288 = vshll.u32 %v179, 16
      %v290 = vrot.slane %v288, 5
      %v291 = vsel %vm229, %v286, %v290
      %v292 = vshrl.u32 %v179, 16
      %v294 = vrot.slane %v292, 4
      %v295 = vor.u32 %v294, %v290
      %v296 = vrot.slane %v295, 4
      %v298 = vshll.u32 %v180, 16
      %v300 = vrot.slane %v298, 5
      %v301 = vsel %vm229, %v296, %v300
      %v303 = vshrl.u32 %v181, 16
      %v305 = vrot.slane %v303, 4
      %v306 = vshll.u32 %v181, 16
      %v308 = vrot.slane %v306, 5
      %v309 = vor.u32 %v305, %v308
      %v310 = vrot.slane %v309, 4
      %v312 = vshll.u32 %v182, 16
      %v314 = vrot.slane %v312, 5
      %v315 = vsel %vm229, %v310, %v314
      %v316 = vshrl.u32 %v182, 16
      %v318 = vrot.slane %v316, 4
      %v319 = vor.u32 %v318, %v314
      %v320 = vrot.slane %v319, 4
      %v322 = vshll.u32 %v183, 16
      %v324 = vrot.slane %v322, 5
      %v325 = vsel %vm229, %v320, %v324
      %v327 = vshrl.u32 %v184, 16
      %v329 = vrot.slane %v327, 4
      %v330 = vshll.u32 %v184, 16
      %v332 = vrot.slane %v330, 5
      %v333 = vor.u32 %v329, %v332
      %v334 = vrot.slane %v333, 4
      %v336 = vshll.u32 %v185, 16
      %v338 = vrot.slane %v336, 5
      %v339 = vsel %vm229, %v334, %v338
      %v340 = vshrl.u32 %v185, 16
      %v342 = vrot.slane %v340, 4
      %v343 = vor.u32 %v342, %v338
      %v344 = vrot.slane %v343, 4
      %v346 = vshll.u32 %v186, 16
      %v348 = vrot.slane %v346, 5
      %v349 = vsel %vm229, %v344, %v348
      %v351 = vshrl.u32 %v187, 16
      %v353 = vrot.slane %v351, 4
      %v354 = vshll.u32 %v187, 16
      %v356 = vrot.slane %v354, 5
      %v357 = vor.u32 %v353, %v356
      %v358 = vrot.slane %v357, 4
      %v360 = vshll.u32 %v188, 16
      %v362 = vrot.slane %v360, 5
      %v363 = vsel %vm229, %v358, %v362
      %v364 = vshrl.u32 %v188, 16
      %v366 = vrot.slane %v364, 4
      %v367 = vor.u32 %v366, %v362
      %v368 = vrot.slane %v367, 4
      %v370 = vshll.u32 %v189, 16
      %v372 = vrot.slane %v370, 5
      %v373 = vsel %vm229, %v368, %v372
      %v375 = vshrl.u32 %v190, 16
      %v377 = vrot.slane %v375, 4
      %v378 = vshll.u32 %v190, 16
      %v380 = vrot.slane %v378, 5
      %v381 = vor.u32 %v377, %v380
      %v382 = vrot.slane %v381, 4
      %v384 = vshll.u32 %v191, 16
      %v386 = vrot.slane %v384, 5
      %v387 = vsel %vm229, %v382, %v386
      %v388 = vshrl.u32 %v191, 16
      %v390 = vrot.slane %v388, 4
      %v391 = vor.u32 %v390, %v386
      %v392 = vrot.slane %v391, 4
      %v394 = vshll.u32 %v192, 16
      %v396 = vrot.slane %v394, 5
      %v397 = vsel %vm229, %v392, %v396
      %v399 = vshrl.u32 %v193, 16
      %v401 = vrot.slane %v399, 4
      %v402 = vshll.u32 %v193, 16
      %v404 = vrot.slane %v402, 5
      %v405 = vor.u32 %v401, %v404
      %v406 = vrot.slane %v405, 4
      %v408 = vshll.u32 %v194, 16
      %v410 = vrot.slane %v408, 5
      %v411 = vsel %vm229, %v406, %v410
      %v412 = vshrl.u32 %v194, 16
      %v414 = vrot.slane %v412, 4
      %v415 = vor.u32 %v414, %v410
      %v416 = vrot.slane %v415, 4
      %v418 = vshll.u32 %v195, 16
      %v420 = vrot.slane %v418, 5
      %v421 = vsel %vm229, %v416, %v420
      %v423 = vshrl.u32 %v196, 16
      %v425 = vrot.slane %v423, 4
      %v426 = vshll.u32 %v196, 16
      %v428 = vrot.slane %v426, 5
      %v429 = vor.u32 %v425, %v428
      %v430 = vrot.slane %v429, 4
      %v432 = vshll.u32 %v197, 16
      %v434 = vrot.slane %v432, 5
      %v435 = vsel %vm229, %v430, %v434
      %v436 = vshrl.u32 %v197, 16
      %v438 = vrot.slane %v436, 4
      %v439 = vor.u32 %v438, %v434
      %v440 = vrot.slane %v439, 4
      %v442 = vshll.u32 %v198, 16
      %v444 = vrot.slane %v442, 5
      %v445 = vsel %vm229, %v440, %v444
      %v447 = vshrl.u32 %v199, 16
      %v449 = vrot.slane %v447, 4
      %v450 = vshll.u32 %v199, 16
      %v452 = vrot.slane %v450, 5
      %v453 = vor.u32 %v449, %v452
      %v454 = vrot.slane %v453, 4
      %v456 = vshll.u32 %v200, 16
      %v458 = vrot.slane %v456, 5
      %v459 = vsel %vm229, %v454, %v458
      %v460 = vshrl.u32 %v200, 16
      %v462 = vrot.slane %v460, 4
      %v463 = vor.u32 %v462, %v458
      %v464 = vrot.slane %v463, 4
      %v466 = vshll.u32 %v201, 16
      %v468 = vrot.slane %v466, 5
      %v469 = vsel %vm229, %v464, %v468
      %v471 = vshrl.u32 %v202, 16
      %v473 = vrot.slane %v471, 4
      %v474 = vshll.u32 %v202, 16
      %v476 = vrot.slane %v474, 5
      %v477 = vor.u32 %v473, %v476
      %v478 = vrot.slane %v477, 4
      %v480 = vshll.u32 %v203, 16
      %v482 = vrot.slane %v480, 5
      %v483 = vsel %vm229, %v478, %v482
      %v484 = vshrl.u32 %v203, 16
      %v486 = vrot.slane %v484, 4
      %v487 = vor.u32 %v486, %v482
      %v488 = vrot.slane %v487, 4
      %v490 = vshll.u32 %v204, 16
      %v492 = vrot.slane %v490, 5
      %v493 = vsel %vm229, %v488, %v492
      %v495 = vshrl.u32 %v205, 16
      %v497 = vrot.slane %v495, 4
      %v498 = vshll.u32 %v205, 16
      %v500 = vrot.slane %v498, 5
      %v501 = vor.u32 %v497, %v500
      %v502 = vrot.slane %v501, 4
      %v504 = vshll.u32 %v206, 16
      %v506 = vrot.slane %v504, 5
      %v507 = vsel %vm229, %v502, %v506
      %v508 = vshrl.u32 %v206, 16
      %v510 = vrot.slane %v508, 4
      %v511 = vor.u32 %v510, %v506
      %v512 = vrot.slane %v511, 4
      %v514 = vshll.u32 %v207, 16
      %v516 = vrot.slane %v514, 5
      %v517 = vsel %vm229, %v512, %v516
      %v519 = vshrl.u32 %v208, 16
      %v521 = vrot.slane %v519, 4
      %v522 = vshll.u32 %v208, 16
      %v524 = vrot.slane %v522, 5
      %v525 = vor.u32 %v521, %v524
      %v526 = vrot.slane %v525, 4
      %v528 = vshll.u32 %v209, 16
      %v530 = vrot.slane %v528, 5
      %v531 = vsel %vm229, %v526, %v530
      %v532 = vshrl.u32 %v209, 16
      %v534 = vrot.slane %v532, 4
      %v535 = vor.u32 %v534, %v530
      %v536 = vrot.slane %v535, 4
      %v538 = vshll.u32 %v210, 16
      %v540 = vrot.slane %v538, 5
      %v541 = vsel %vm229, %v536, %v540
      %v543 = vshrl.u32 %v211, 16
      %v545 = vrot.slane %v543, 4
      %v546 = vshll.u32 %v211, 16
      %v548 = vrot.slane %v546, 5
      %v549 = vor.u32 %v545, %v548
      %v550 = vrot.slane %v549, 4
      %v552 = vshll.u32 %v212, 16
      %v554 = vrot.slane %v552, 5
      %v555 = vsel %vm229, %v550, %v554
      %v556 = vshrl.u32 %v212, 16
      %v558 = vrot.slane %v556, 4
      %v559 = vor.u32 %v558, %v554
      %v560 = vrot.slane %v559, 4
      %v562 = vshll.u32 %v213, 16
      %v564 = vrot.slane %v562, 5
      %v565 = vsel %vm229, %v560, %v564
      %v567 = vshrl.u32 %v214, 16
      %v569 = vrot.slane %v567, 4
      %v570 = vshll.u32 %v214, 16
      %v572 = vrot.slane %v570, 5
      %v573 = vor.u32 %v569, %v572
      %v574 = vrot.slane %v573, 4
      %v576 = vshll.u32 %v215, 16
      %v578 = vrot.slane %v576, 5
      %v579 = vsel %vm229, %v574, %v578
      %v580 = vshrl.u32 %v215, 16
      %v582 = vrot.slane %v580, 4
      %v583 = vor.u32 %v582, %v578
      %v584 = vrot.slane %v583, 4
      %v586 = vshll.u32 %v216, 16
      %v588 = vrot.slane %v586, 5
      %v589 = vsel %vm229, %v584, %v588
      %v591 = vshrl.u32 %v217, 16
      %v593 = vrot.slane %v591, 4
      %v594 = vshll.u32 %v217, 16
      %v596 = vrot.slane %v594, 5
      %v597 = vor.u32 %v593, %v596
      %v598 = vrot.slane %v597, 4
      %v600 = vshll.u32 %v218, 16
      %v602 = vrot.slane %v600, 5
      %v603 = vsel %vm229, %v598, %v602
      %v604 = vshrl.u32 %v218, 16
      %v606 = vrot.slane %v604, 4
      %v607 = vor.u32 %v606, %v602
      %v608 = vrot.slane %v607, 4
      %v610 = vshll.u32 %v219, 16
      %v612 = vrot.slane %v610, 5
      %v613 = vsel %vm229, %v608, %v612
      %s614 = scalar_lea.vmem %s1, 4
      %v615 = vld [vmem:[%s614] sm:$0xf]
      %v616 = vunpack.c.l.b16 %v243
      %v617 = vunpack.c.l.b16 %v253
      %v618 = vunpack.c.l.b16 %v267
      %v619 = vunpack.c.l.b16 %v277
      %v620 = vunpack.c.l.b16 %v291
      %v621 = vunpack.c.l.b16 %v301
      %v622 = vunpack.c.l.b16 %v315
      %v623 = vunpack.c.l.b16 %v325
      %v624 = vunpack.c.l.b16 %v339
      %v625 = vunpack.c.l.b16 %v349
      %v626 = vunpack.c.l.b16 %v363
      %v627 = vunpack.c.l.b16 %v373
      %v628 = vunpack.c.l.b16 %v387
      %v629 = vunpack.c.l.b16 %v397
      %v630 = vunpack.c.l.b16 %v411
      %v631 = vunpack.c.l.b16 %v421
      %v632 = vunpack.c.l.b16 %v435
      %v633 = vunpack.c.l.b16 %v445
      %v634 = vunpack.c.l.b16 %v459
      %v635 = vunpack.c.l.b16 %v469
      %v636 = vunpack.c.l.b16 %v483
      %v637 = vunpack.c.l.b16 %v493
      %v638 = vunpack.c.l.b16 %v507
      %v639 = vunpack.c.l.b16 %v517
      %v640 = vunpack.c.l.b16 %v531
      %v641 = vunpack.c.l.b16 %v541
      %v642 = vunpack.c.l.b16 %v555
      %v643 = vunpack.c.l.b16 %v565
      %v644 = vunpack.c.l.b16 %v579
      %v645 = vunpack.c.l.b16 %v589
      %v646 = vunpack.c.l.b16 %v603
      %v647 = vunpack.c.l.b16 %v613
      %v648 = vpack.c.b16 %v617, %v616
      %v649 = vpack.c.b16 %v619, %v618
      %v650 = vpack.c.b16 %v621, %v620
      %v651 = vpack.c.b16 %v623, %v622
      %v652 = vpack.c.b16 %v625, %v624
      %v653 = vpack.c.b16 %v627, %v626
      %v654 = vpack.c.b16 %v629, %v628
      %v655 = vpack.c.b16 %v631, %v630
      %v656 = vpack.c.b16 %v633, %v632
      %v657 = vpack.c.b16 %v635, %v634
      %v658 = vpack.c.b16 %v637, %v636
      %v659 = vpack.c.b16 %v639, %v638
      %v660 = vpack.c.b16 %v641, %v640
      %v661 = vpack.c.b16 %v643, %v642
      %v662 = vpack.c.b16 %v645, %v644
      %v663 = vpack.c.b16 %v647, %v646
      %vm664 = vcmask 64512
      %v666 = vsel %vm664, %v648, 0
      %v669 = vsel %vm664, %v649, 0
      %v672 = vsel %vm664, %v650, 0
      %v675 = vsel %vm664, %v651, 0
      %v678 = vsel %vm664, %v652, 0
      %v681 = vsel %vm664, %v653, 0
      %v684 = vsel %vm664, %v654, 0
      %v687 = vsel %vm664, %v655, 0
      %v690 = vsel %vm664, %v656, 0
      %v693 = vsel %vm664, %v657, 0
      %v696 = vsel %vm664, %v658, 0
      %v699 = vsel %vm664, %v659, 0
      %v702 = vsel %vm664, %v660, 0
      %v705 = vsel %vm664, %v661, 0
      %v708 = vsel %vm664, %v662, 0
      %v711 = vsel %vm664, %v663, 0
      %vm713 = vcmask 1043456
      %v715 = vsel %vm713, %v615, 0
      %717 = vmatprep.subr.bf16.mxu0 0
      %718 = vmatpush1.bf16.msra.mxu0 %v715
      %719 = vmatprep.subr.bf16.mxu0 0
      %720 = vmatpush1.bf16.msra.mxu0 0
      %721 = vmatprep.subr.bf16.mxu0 0
      %722 = vmatpush1.bf16.msra.mxu0 0
      %723 = vmatprep.subr.bf16.mxu0 0
      %724 = vmatpush1.bf16.msra.mxu0 0
      %725 = vmatprep.subr.bf16.mxu0 0
      %726 = vmatpush1.bf16.msra.mxu0 0
      %727 = vmatprep.subr.bf16.mxu0 0
      %728 = vmatpush1.bf16.msra.mxu0 0
      %729 = vmatprep.subr.bf16.mxu0 0
      %730 = vmatpush1.bf16.msra.mxu0 0
      %731 = vmatprep.subr.bf16.mxu0 0
      %732 = vmatpush1.bf16.msra.mxu0 0
      %733 = vmatprep.subr.bf16.mxu0 0
      %734 = vmatpush1.bf16.msra.mxu0 0
      %735 = vmatprep.subr.bf16.mxu0 0
      %736 = vmatpush1.bf16.msra.mxu0 0
      %737 = vmatprep.subr.bf16.mxu0 0
      %738 = vmatpush1.bf16.msra.mxu0 0
      %739 = vmatprep.subr.bf16.mxu0 0
      %740 = vmatpush1.bf16.msra.mxu0 0
      %741 = vmatprep.subr.bf16.mxu0 0
      %742 = vmatpush1.bf16.msra.mxu0 0
      %743 = vmatprep.subr.bf16.mxu0 0
      %744 = vmatpush1.bf16.msra.mxu0 0
      %745 = vmatprep.subr.bf16.mxu0 0
      %746 = vmatpush1.bf16.msra.mxu0 0
      %747 = vmatprep.subr.bf16.mxu0 0
      %748 = vmatpush1.bf16.msra.mxu0 0
      %749 = vmatprep.mubr.bf16.mxu0 0
      %750 = vmatmul.mubr.bf16.gmra.mrb[0].mxu0 %v666
      %v751 = vpop.f32.mrb[0].mxu0
      %v752 = vadd.f32 0.0, %v751
      %v753 = vpop.f32.mrb[0].mxu0
      %v754 = vpop.f32.mrb[0].mxu0
      %v755 = vadd.f32 0.0, %v754
      %v756 = vpop.f32.mrb[0].mxu0
      %757 = vmatprep.mubr.bf16.mxu0 0
      %758 = vmatmul.mubr.bf16.gmra.mrb[0].mxu0 %v669
      %v759 = vpop.f32.mrb[0].mxu0
      %v760 = vadd.f32 0.0, %v759
      %v761 = vpop.f32.mrb[0].mxu0
      %v762 = vpop.f32.mrb[0].mxu0
      %v763 = vadd.f32 0.0, %v762
      %v764 = vpop.f32.mrb[0].mxu0
      %765 = vmatprep.mubr.bf16.mxu0 0
      %766 = vmatmul.mubr.bf16.gmra.mrb[0].mxu0 %v672
      %v767 = vpop.f32.mrb[0].mxu0
      %v768 = vadd.f32 0.0, %v767
      %v769 = vpop.f32.mrb[0].mxu0
      %v770 = vpop.f32.mrb[0].mxu0
      %v771 = vadd.f32 0.0, %v770
      %v772 = vpop.f32.mrb[0].mxu0
      %773 = vmatprep.mubr.bf16.mxu0 0
      %774 = vmatmul.mubr.bf16.gmra.mrb[0].mxu0 %v675
      %v775 = vpop.f32.mrb[0].mxu0
      %v776 = vadd.f32 0.0, %v775
      %v777 = vpop.f32.mrb[0].mxu0
      %v778 = vpop.f32.mrb[0].mxu0
      %v779 = vadd.f32 0.0, %v778
      %v780 = vpop.f32.mrb[0].mxu0
      %781 = vmatprep.mubr.bf16.mxu0 0
      %782 = vmatmul.mubr.bf16.gmra.mrb[0].mxu0 %v678
      %v783 = vpop.f32.mrb[0].mxu0
      %v784 = vadd.f32 0.0, %v783
      %v785 = vpop.f32.mrb[0].mxu0
      %v786 = vpop.f32.mrb[0].mxu0
      %v787 = vadd.f32 0.0, %v786
      %v788 = vpop.f32.mrb[0].mxu0
      %789 = vmatprep.mubr.bf16.mxu0 0
      %790 = vmatmul.mubr.bf16.gmra.mrb[0].mxu0 %v681
      %v791 = vpop.f32.mrb[0].mxu0
      %v792 = vadd.f32 0.0, %v791
      %v793 = vpop.f32.mrb[0].mxu0
      %v794 = vpop.f32.mrb[0].mxu0
      %v795 = vadd.f32 0.0, %v794
      %v796 = vpop.f32.mrb[0].mxu0
      %797 = vmatprep.mubr.bf16.mxu0 0
      %798 = vmatmul.mubr.bf16.gmra.mrb[0].mxu0 %v684
      %v799 = vpop.f32.mrb[0].mxu0
      %v800 = vadd.f32 0.0, %v799
      %v801 = vpop.f32.mrb[0].mxu0
      %v802 = vpop.f32.mrb[0].mxu0
      %v803 = vadd.f32 0.0, %v802
      %v804 = vpop.f32.mrb[0].mxu0
      %805 = vmatprep.mubr.bf16.mxu0 0
      %806 = vmatmul.mubr.bf16.gmra.mrb[0].mxu0 %v687
      %v807 = vpop.f32.mrb[0].mxu0
      %v808 = vadd.f32 0.0, %v807
      %v809 = vpop.f32.mrb[0].mxu0
      %v810 = vpop.f32.mrb[0].mxu0
      %v811 = vadd.f32 0.0, %v810
      %v812 = vpop.f32.mrb[0].mxu0
      %813 = vmatprep.mubr.bf16.mxu0 0
      %814 = vmatmul.mubr.bf16.gmra.mrb[0].mxu0 %v690
      %v815 = vpop.f32.mrb[0].mxu0
      %v816 = vadd.f32 0.0, %v815
      %v817 = vpop.f32.mrb[0].mxu0
      %v818 = vpop.f32.mrb[0].mxu0
      %v819 = vadd.f32 0.0, %v818
      %v820 = vpop.f32.mrb[0].mxu0
      %821 = vmatprep.mubr.bf16.mxu0 0
      %822 = vmatmul.mubr.bf16.gmra.mrb[0].mxu0 %v693
      %v823 = vpop.f32.mrb[0].mxu0
      %v824 = vadd.f32 0.0, %v823
      %v825 = vpop.f32.mrb[0].mxu0
      %v826 = vpop.f32.mrb[0].mxu0
      %v827 = vadd.f32 0.0, %v826
      %v828 = vpop.f32.mrb[0].mxu0
      %829 = vmatprep.mubr.bf16.mxu0 0
      %830 = vmatmul.mubr.bf16.gmra.mrb[0].mxu0 %v696
      %v831 = vpop.f32.mrb[0].mxu0
      %v832 = vadd.f32 0.0, %v831
      %v833 = vpop.f32.mrb[0].mxu0
      %v834 = vpop.f32.mrb[0].mxu0
      %v835 = vadd.f32 0.0, %v834
      %v836 = vpop.f32.mrb[0].mxu0
      %837 = vmatprep.mubr.bf16.mxu0 0
      %838 = vmatmul.mubr.bf16.gmra.mrb[0].mxu0 %v699
      %v839 = vpop.f32.mrb[0].mxu0
      %v840 = vadd.f32 0.0, %v839
      %v841 = vpop.f32.mrb[0].mxu0
      %v842 = vpop.f32.mrb[0].mxu0
      %v843 = vadd.f32 0.0, %v842
      %v844 = vpop.f32.mrb[0].mxu0
      %845 = vmatprep.mubr.bf16.mxu0 0
      %846 = vmatmul.mubr.bf16.gmra.mrb[0].mxu0 %v702
      %v847 = vpop.f32.mrb[0].mxu0
      %v848 = vadd.f32 0.0, %v847
      %v849 = vpop.f32.mrb[0].mxu0
      %v850 = vpop.f32.mrb[0].mxu0
      %v851 = vadd.f32 0.0, %v850
      %v852 = vpop.f32.mrb[0].mxu0
      %853 = vmatprep.mubr.bf16.mxu0 0
      %854 = vmatmul.mubr.bf16.gmra.mrb[0].mxu0 %v705
      %v855 = vpop.f32.mrb[0].mxu0
      %v856 = vadd.f32 0.0, %v855
      %v857 = vpop.f32.mrb[0].mxu0
      %v858 = vpop.f32.mrb[0].mxu0
      %v859 = vadd.f32 0.0, %v858
      %v860 = vpop.f32.mrb[0].mxu0
      %861 = vmatprep.mubr.bf16.mxu0 0
      %862 = vmatmul.mubr.bf16.gmra.mrb[0].mxu0 %v708
      %v863 = vpop.f32.mrb[0].mxu0
      %v864 = vadd.f32 0.0, %v863
      %v865 = vpop.f32.mrb[0].mxu0
      %v866 = vpop.f32.mrb[0].mxu0
      %v867 = vadd.f32 0.0, %v866
      %v868 = vpop.f32.mrb[0].mxu0
      %869 = vmatprep.mubr.bf16.mxu0 0
      %870 = vmatmul.mubr.bf16.gmra.mrb[0].mxu0 %v711
      %v871 = vpop.f32.mrb[0].mxu0
      %v872 = vadd.f32 0.0, %v871
      %v873 = vpop.f32.mrb[0].mxu0
      %v874 = vpop.f32.mrb[0].mxu0
      %v875 = vadd.f32 0.0, %v874
      %v876 = vpop.f32.mrb[0].mxu0
      %877 = vdwg.mxu0
      %v910 = vunpack.c.l.b16 %v172
      %v911 = vunpack.c.l.b16 %v173
      %v912 = vunpack.c.l.b16 %v175
      %v913 = vunpack.c.l.b16 %v176
      %v914 = vunpack.c.l.b16 %v178
      %v915 = vunpack.c.l.b16 %v179
      %v916 = vunpack.c.l.b16 %v181
      %v917 = vunpack.c.l.b16 %v182
      %v918 = vunpack.c.l.b16 %v184
      %v919 = vunpack.c.l.b16 %v185
      %v920 = vunpack.c.l.b16 %v187
      %v921 = vunpack.c.l.b16 %v188
      %v922 = vunpack.c.l.b16 %v190
      %v923 = vunpack.c.l.b16 %v191
      %v924 = vunpack.c.l.b16 %v193
      %v925 = vunpack.c.l.b16 %v194
      %v926 = vunpack.c.l.b16 %v196
      %v927 = vunpack.c.l.b16 %v197
      %v928 = vunpack.c.l.b16 %v199
      %v929 = vunpack.c.l.b16 %v200
      %v930 = vunpack.c.l.b16 %v202
      %v931 = vunpack.c.l.b16 %v203
      %v932 = vunpack.c.l.b16 %v205
      %v933 = vunpack.c.l.b16 %v206
      %v934 = vunpack.c.l.b16 %v208
      %v935 = vunpack.c.l.b16 %v209
      %v936 = vunpack.c.l.b16 %v211
      %v937 = vunpack.c.l.b16 %v212
      %v938 = vunpack.c.l.b16 %v214
      %v939 = vunpack.c.l.b16 %v215
      %v940 = vunpack.c.l.b16 %v217
      %v941 = vunpack.c.l.b16 %v218
      %v942 = vpack.c.b16 %v911, %v910
      %v943 = vpack.c.b16 %v913, %v912
      %v944 = vpack.c.b16 %v915, %v914
      %v945 = vpack.c.b16 %v917, %v916
      %v946 = vpack.c.b16 %v919, %v918
      %v947 = vpack.c.b16 %v921, %v920
      %v948 = vpack.c.b16 %v923, %v922
      %v949 = vpack.c.b16 %v925, %v924
      %v950 = vpack.c.b16 %v927, %v926
      %v951 = vpack.c.b16 %v929, %v928
      %v952 = vpack.c.b16 %v931, %v930
      %v953 = vpack.c.b16 %v933, %v932
      %v954 = vpack.c.b16 %v935, %v934
      %v955 = vpack.c.b16 %v937, %v936
      %v956 = vpack.c.b16 %v939, %v938
      %v957 = vpack.c.b16 %v941, %v940
      %v959 = vsel %vm664, %v942, 0
      %v962 = vsel %vm664, %v943, 0
      %v965 = vsel %vm664, %v944, 0
      %v968 = vsel %vm664, %v945, 0
      %v971 = vsel %vm664, %v946, 0
      %v974 = vsel %vm664, %v947, 0
      %v977 = vsel %vm664, %v948, 0
      %v980 = vsel %vm664, %v949, 0
      %v983 = vsel %vm664, %v950, 0
      %v986 = vsel %vm664, %v951, 0
      %v989 = vsel %vm664, %v952, 0
      %v992 = vsel %vm664, %v953, 0
      %v995 = vsel %vm664, %v954, 0
      %v998 = vsel %vm664, %v955, 0
      %v1001 = vsel %vm664, %v956, 0
      %v1004 = vsel %vm664, %v957, 0
      %v1007 = vsel %vm713, %v226, 0
      %1009 = vmatprep.subr.bf16.mxu0 0
      %1010 = vmatpush1.bf16.msra.mxu0 %v1007
      %1011 = vmatprep.subr.bf16.mxu0 0
      %1012 = vmatpush1.bf16.msra.mxu0 0
      %1013 = vmatprep.subr.bf16.mxu0 0
      %1014 = vmatpush1.bf16.msra.mxu0 0
      %1015 = vmatprep.subr.bf16.mxu0 0
      %1016 = vmatpush1.bf16.msra.mxu0 0
      %1017 = vmatprep.subr.bf16.mxu0 0
      %1018 = vmatpush1.bf16.msra.mxu0 0
      %1019 = vmatprep.subr.bf16.mxu0 0
      %1020 = vmatpush1.bf16.msra.mxu0 0
      %1021 = vmatprep.subr.bf16.mxu0 0
      %1022 = vmatpush1.bf16.msra.mxu0 0
      %1023 = vmatprep.subr.bf16.mxu0 0
      %1024 = vmatpush1.bf16.msra.mxu0 0
      %1025 = vmatprep.subr.bf16.mxu0 0
      %1026 = vmatpush1.bf16.msra.mxu0 0
      %1027 = vmatprep.subr.bf16.mxu0 0
      %1028 = vmatpush1.bf16.msra.mxu0 0
      %1029 = vmatprep.subr.bf16.mxu0 0
      %1030 = vmatpush1.bf16.msra.mxu0 0
      %1031 = vmatprep.subr.bf16.mxu0 0
      %1032 = vmatpush1.bf16.msra.mxu0 0
      %1033 = vmatprep.subr.bf16.mxu0 0
      %1034 = vmatpush1.bf16.msra.mxu0 0
      %1035 = vmatprep.subr.bf16.mxu0 0
      %1036 = vmatpush1.bf16.msra.mxu0 0
      %1037 = vmatprep.subr.bf16.mxu0 0
      %1038 = vmatpush1.bf16.msra.mxu0 0
      %1039 = vmatprep.subr.bf16.mxu0 0
      %1040 = vmatpush1.bf16.msra.mxu0 0
      %1041 = vmatprep.mubr.bf16.mxu0 0
      %1042 = vmatmul.mubr.bf16.gmra.mrb[0].mxu0 %v959
      %v1043 = vpop.f32.mrb[0].mxu0
      %v1044 = vadd.f32 %v752, %v1043
      %v1045 = vpop.f32.mrb[0].mxu0
      %v1046 = vpop.f32.mrb[0].mxu0
      %v1047 = vadd.f32 %v755, %v1046
      %v1048 = vpop.f32.mrb[0].mxu0
      %1049 = vmatprep.mubr.bf16.mxu0 0
      %1050 = vmatmul.mubr.bf16.gmra.mrb[0].mxu0 %v962
      %v1051 = vpop.f32.mrb[0].mxu0
      %v1052 = vadd.f32 %v760, %v1051
      %v1053 = vpop.f32.mrb[0].mxu0
      %v1054 = vpop.f32.mrb[0].mxu0
      %v1055 = vadd.f32 %v763, %v1054
      %v1056 = vpop.f32.mrb[0].mxu0
      %1057 = vmatprep.mubr.bf16.mxu0 0
      %1058 = vmatmul.mubr.bf16.gmra.mrb[0].mxu0 %v965
      %v1059 = vpop.f32.mrb[0].mxu0
      %v1060 = vadd.f32 %v768, %v1059
      %v1061 = vpop.f32.mrb[0].mxu0
      %v1062 = vpop.f32.mrb[0].mxu0
      %v1063 = vadd.f32 %v771, %v1062
      %v1064 = vpop.f32.mrb[0].mxu0
      %1065 = vmatprep.mubr.bf16.mxu0 0
      %1066 = vmatmul.mubr.bf16.gmra.mrb[0].mxu0 %v968
      %v1067 = vpop.f32.mrb[0].mxu0
      %v1068 = vadd.f32 %v776, %v1067
      %v1069 = vpop.f32.mrb[0].mxu0
      %v1070 = vpop.f32.mrb[0].mxu0
      %v1071 = vadd.f32 %v779, %v1070
      %v1072 = vpop.f32.mrb[0].mxu0
      %1073 = vmatprep.mubr.bf16.mxu0 0
      %1074 = vmatmul.mubr.bf16.gmra.mrb[0].mxu0 %v971
      %v1075 = vpop.f32.mrb[0].mxu0
      %v1076 = vadd.f32 %v784, %v1075
      %v1077 = vpop.f32.mrb[0].mxu0
      %v1078 = vpop.f32.mrb[0].mxu0
      %v1079 = vadd.f32 %v787, %v1078
      %v1080 = vpop.f32.mrb[0].mxu0
      %1081 = vmatprep.mubr.bf16.mxu0 0
      %1082 = vmatmul.mubr.bf16.gmra.mrb[0].mxu0 %v974
      %v1083 = vpop.f32.mrb[0].mxu0
      %v1084 = vadd.f32 %v792, %v1083
      %v1085 = vpop.f32.mrb[0].mxu0
      %v1086 = vpop.f32.mrb[0].mxu0
      %v1087 = vadd.f32 %v795, %v1086
      %v1088 = vpop.f32.mrb[0].mxu0
      %1089 = vmatprep.mubr.bf16.mxu0 0
      %1090 = vmatmul.mubr.bf16.gmra.mrb[0].mxu0 %v977
      %v1091 = vpop.f32.mrb[0].mxu0
      %v1092 = vadd.f32 %v800, %v1091
      %v1093 = vpop.f32.mrb[0].mxu0
      %v1094 = vpop.f32.mrb[0].mxu0
      %v1095 = vadd.f32 %v803, %v1094
      %v1096 = vpop.f32.mrb[0].mxu0
      %1097 = vmatprep.mubr.bf16.mxu0 0
      %1098 = vmatmul.mubr.bf16.gmra.mrb[0].mxu0 %v980
      %v1099 = vpop.f32.mrb[0].mxu0
      %v1100 = vadd.f32 %v808, %v1099
      %v1101 = vpop.f32.mrb[0].mxu0
      %v1102 = vpop.f32.mrb[0].mxu0
      %v1103 = vadd.f32 %v811, %v1102
      %v1104 = vpop.f32.mrb[0].mxu0
      %1105 = vmatprep.mubr.bf16.mxu0 0
      %1106 = vmatmul.mubr.bf16.gmra.mrb[0].mxu0 %v983
      %v1107 = vpop.f32.mrb[0].mxu0
      %v1108 = vadd.f32 %v816, %v1107
      %v1109 = vpop.f32.mrb[0].mxu0
      %v1110 = vpop.f32.mrb[0].mxu0
      %v1111 = vadd.f32 %v819, %v1110
      %v1112 = vpop.f32.mrb[0].mxu0
      %1113 = vmatprep.mubr.bf16.mxu0 0
      %1114 = vmatmul.mubr.bf16.gmra.mrb[0].mxu0 %v986
      %v1115 = vpop.f32.mrb[0].mxu0
      %v1116 = vadd.f32 %v824, %v1115
      %v1117 = vpop.f32.mrb[0].mxu0
      %v1118 = vpop.f32.mrb[0].mxu0
      %v1119 = vadd.f32 %v827, %v1118
      %v1120 = vpop.f32.mrb[0].mxu0
      %1121 = vmatprep.mubr.bf16.mxu0 0
      %1122 = vmatmul.mubr.bf16.gmra.mrb[0].mxu0 %v989
      %v1123 = vpop.f32.mrb[0].mxu0
      %v1124 = vadd.f32 %v832, %v1123
      %v1125 = vpop.f32.mrb[0].mxu0
      %v1126 = vpop.f32.mrb[0].mxu0
      %v1127 = vadd.f32 %v835, %v1126
      %v1128 = vpop.f32.mrb[0].mxu0
      %1129 = vmatprep.mubr.bf16.mxu0 0
      %1130 = vmatmul.mubr.bf16.gmra.mrb[0].mxu0 %v992
      %v1131 = vpop.f32.mrb[0].mxu0
      %v1132 = vadd.f32 %v840, %v1131
      %v1133 = vpop.f32.mrb[0].mxu0
      %v1134 = vpop.f32.mrb[0].mxu0
      %v1135 = vadd.f32 %v843, %v1134
      %v1136 = vpop.f32.mrb[0].mxu0
      %1137 = vmatprep.mubr.bf16.mxu0 0
      %1138 = vmatmul.mubr.bf16.gmra.mrb[0].mxu0 %v995
      %v1139 = vpop.f32.mrb[0].mxu0
      %v1140 = vadd.f32 %v848, %v1139
      %v1141 = vpop.f32.mrb[0].mxu0
      %v1142 = vpop.f32.mrb[0].mxu0
      %v1143 = vadd.f32 %v851, %v1142
      %v1144 = vpop.f32.mrb[0].mxu0
      %1145 = vmatprep.mubr.bf16.mxu0 0
      %1146 = vmatmul.mubr.bf16.gmra.mrb[0].mxu0 %v998
      %v1147 = vpop.f32.mrb[0].mxu0
      %v1148 = vadd.f32 %v856, %v1147
      %v1149 = vpop.f32.mrb[0].mxu0
      %v1150 = vpop.f32.mrb[0].mxu0
      %v1151 = vadd.f32 %v859, %v1150
      %v1152 = vpop.f32.mrb[0].mxu0
      %1153 = vmatprep.mubr.bf16.mxu0 0
      %1154 = vmatmul.mubr.bf16.gmra.mrb[0].mxu0 %v1001
      %v1155 = vpop.f32.mrb[0].mxu0
      %v1156 = vadd.f32 %v864, %v1155
      %v1157 = vpop.f32.mrb[0].mxu0
      %v1158 = vpop.f32.mrb[0].mxu0
      %v1159 = vadd.f32 %v867, %v1158
      %v1160 = vpop.f32.mrb[0].mxu0
      %1161 = vmatprep.mubr.bf16.mxu0 0
      %1162 = vmatmul.mubr.bf16.gmra.mrb[0].mxu0 %v1004
      %v1163 = vpop.f32.mrb[0].mxu0
      %v1164 = vadd.f32 %v872, %v1163
      %v1165 = vpop.f32.mrb[0].mxu0
      %v1166 = vpop.f32.mrb[0].mxu0
      %v1167 = vadd.f32 %v875, %v1166
      %v1168 = vpop.f32.mrb[0].mxu0
      %1169 = vdwg.mxu0
      %vm1186 = vcmask 1042432
      %vm1187 = vcmask 1046532
      %vm1188 = vmor %vm1186, %vm1187
      %v1189 = vrot.slane %v172, 5
      %v1190 = vrot.slane %v1189, 4
      %v1191 = vrot.slane %v173, 5
      %v1192 = vsel %vm1188, %v1190, %v1191
      %v1193 = vrot.slane %v1191, 4
      %v1194 = vrot.slane %v174, 5
      %v1195 = vsel %vm1188, %v1193, %v1194
      %v1196 = vrot.slane %v175, 5
      %v1197 = vrot.slane %v1196, 4
      %v1198 = vrot.slane %v176, 5
      %v1199 = vsel %vm1188, %v1197, %v1198
      %v1200 = vrot.slane %v1198, 4
      %v1201 = vrot.slane %v177, 5
      %v1202 = vsel %vm1188, %v1200, %v1201
      %v1203 = vrot.slane %v178, 5
      %v1204 = vrot.slane %v1203, 4
      %v1205 = vrot.slane %v179, 5
      %v1206 = vsel %vm1188, %v1204, %v1205
      %v1207 = vrot.slane %v1205, 4
      %v1208 = vrot.slane %v180, 5
      %v1209 = vsel %vm1188, %v1207, %v1208
      %v1210 = vrot.slane %v181, 5
      %v1211 = vrot.slane %v1210, 4
      %v1212 = vrot.slane %v182, 5
      %v1213 = vsel %vm1188, %v1211, %v1212
      %v1214 = vrot.slane %v1212, 4
      %v1215 = vrot.slane %v183, 5
      %v1216 = vsel %vm1188, %v1214, %v1215
      %v1217 = vrot.slane %v184, 5
      %v1218 = vrot.slane %v1217, 4
      %v1219 = vrot.slane %v185, 5
      %v1220 = vsel %vm1188, %v1218, %v1219
      %v1221 = vrot.slane %v1219, 4
      %v1222 = vrot.slane %v186, 5
      %v1223 = vsel %vm1188, %v1221, %v1222
      %v1224 = vrot.slane %v187, 5
      %v1225 = vrot.slane %v1224, 4
      %v1226 = vrot.slane %v188, 5
      %v1227 = vsel %vm1188, %v1225, %v1226
      %v1228 = vrot.slane %v1226, 4
      %v1229 = vrot.slane %v189, 5
      %v1230 = vsel %vm1188, %v1228, %v1229
      %v1231 = vrot.slane %v190, 5
      %v1232 = vrot.slane %v1231, 4
      %v1233 = vrot.slane %v191, 5
      %v1234 = vsel %vm1188, %v1232, %v1233
      %v1235 = vrot.slane %v1233, 4
      %v1236 = vrot.slane %v192, 5
      %v1237 = vsel %vm1188, %v1235, %v1236
      %v1238 = vrot.slane %v193, 5
      %v1239 = vrot.slane %v1238, 4
      %v1240 = vrot.slane %v194, 5
      %v1241 = vsel %vm1188, %v1239, %v1240
      %v1242 = vrot.slane %v1240, 4
      %v1243 = vrot.slane %v195, 5
      %v1244 = vsel %vm1188, %v1242, %v1243
      %v1245 = vrot.slane %v196, 5
      %v1246 = vrot.slane %v1245, 4
      %v1247 = vrot.slane %v197, 5
      %v1248 = vsel %vm1188, %v1246, %v1247
      %v1249 = vrot.slane %v1247, 4
      %v1250 = vrot.slane %v198, 5
      %v1251 = vsel %vm1188, %v1249, %v1250
      %v1252 = vrot.slane %v199, 5
      %v1253 = vrot.slane %v1252, 4
      %v1254 = vrot.slane %v200, 5
      %v1255 = vsel %vm1188, %v1253, %v1254
      %v1256 = vrot.slane %v1254, 4
      %v1257 = vrot.slane %v201, 5
      %v1258 = vsel %vm1188, %v1256, %v1257
      %v1259 = vrot.slane %v202, 5
      %v1260 = vrot.slane %v1259, 4
      %v1261 = vrot.slane %v203, 5
      %v1262 = vsel %vm1188, %v1260, %v1261
      %v1263 = vrot.slane %v1261, 4
      %v1264 = vrot.slane %v204, 5
      %v1265 = vsel %vm1188, %v1263, %v1264
      %v1266 = vrot.slane %v205, 5
      %v1267 = vrot.slane %v1266, 4
      %v1268 = vrot.slane %v206, 5
      %v1269 = vsel %vm1188, %v1267, %v1268
      %v1270 = vrot.slane %v1268, 4
      %v1271 = vrot.slane %v207, 5
      %v1272 = vsel %vm1188, %v1270, %v1271
      %v1273 = vrot.slane %v208, 5
      %v1274 = vrot.slane %v1273, 4
      %v1275 = vrot.slane %v209, 5
      %v1276 = vsel %vm1188, %v1274, %v1275
      %v1277 = vrot.slane %v1275, 4
      %v1278 = vrot.slane %v210, 5
      %v1279 = vsel %vm1188, %v1277, %v1278
      %v1280 = vrot.slane %v211, 5
      %v1281 = vrot.slane %v1280, 4
      %v1282 = vrot.slane %v212, 5
      %v1283 = vsel %vm1188, %v1281, %v1282
      %v1284 = vrot.slane %v1282, 4
      %v1285 = vrot.slane %v213, 5
      %v1286 = vsel %vm1188, %v1284, %v1285
      %v1287 = vrot.slane %v214, 5
      %v1288 = vrot.slane %v1287, 4
      %v1289 = vrot.slane %v215, 5
      %v1290 = vsel %vm1188, %v1288, %v1289
      %v1291 = vrot.slane %v1289, 4
      %v1292 = vrot.slane %v216, 5
      %v1293 = vsel %vm1188, %v1291, %v1292
      %v1294 = vrot.slane %v217, 5
      %v1295 = vrot.slane %v1294, 4
      %v1296 = vrot.slane %v218, 5
      %v1297 = vsel %vm1188, %v1295, %v1296
      %v1298 = vrot.slane %v1296, 4
      %v1299 = vrot.slane %v219, 5
      %v1300 = vsel %vm1188, %v1298, %v1299
      %s1301 = scalar_lea.vmem %s1, 8
      %v1302 = vld [vmem:[%s1301] sm:$0xf]
      %v1303 = vunpack.c.l.b16 %v1192
      %v1304 = vunpack.c.l.b16 %v1195
      %v1305 = vunpack.c.l.b16 %v1199
      %v1306 = vunpack.c.l.b16 %v1202
      %v1307 = vunpack.c.l.b16 %v1206
      %v1308 = vunpack.c.l.b16 %v1209
      %v1309 = vunpack.c.l.b16 %v1213
      %v1310 = vunpack.c.l.b16 %v1216
      %v1311 = vunpack.c.l.b16 %v1220
      %v1312 = vunpack.c.l.b16 %v1223
      %v1313 = vunpack.c.l.b16 %v1227
      %v1314 = vunpack.c.l.b16 %v1230
      %v1315 = vunpack.c.l.b16 %v1234
      %v1316 = vunpack.c.l.b16 %v1237
      %v1317 = vunpack.c.l.b16 %v1241
      %v1318 = vunpack.c.l.b16 %v1244
      %v1319 = vunpack.c.l.b16 %v1248
      %v1320 = vunpack.c.l.b16 %v1251
      %v1321 = vunpack.c.l.b16 %v1255
      %v1322 = vunpack.c.l.b16 %v1258
      %v1323 = vunpack.c.l.b16 %v1262
      %v1324 = vunpack.c.l.b16 %v1265
      %v1325 = vunpack.c.l.b16 %v1269
      %v1326 = vunpack.c.l.b16 %v1272
      %v1327 = vunpack.c.l.b16 %v1276
      %v1328 = vunpack.c.l.b16 %v1279
      %v1329 = vunpack.c.l.b16 %v1283
      %v1330 = vunpack.c.l.b16 %v1286
      %v1331 = vunpack.c.l.b16 %v1290
      %v1332 = vunpack.c.l.b16 %v1293
      %v1333 = vunpack.c.l.b16 %v1297
      %v1334 = vunpack.c.l.b16 %v1300
      %v1335 = vpack.c.b16 %v1304, %v1303
      %v1336 = vpack.c.b16 %v1306, %v1305
      %v1337 = vpack.c.b16 %v1308, %v1307
      %v1338 = vpack.c.b16 %v1310, %v1309
      %v1339 = vpack.c.b16 %v1312, %v1311
      %v1340 = vpack.c.b16 %v1314, %v1313
      %v1341 = vpack.c.b16 %v1316, %v1315
      %v1342 = vpack.c.b16 %v1318, %v1317
      %v1343 = vpack.c.b16 %v1320, %v1319
      %v1344 = vpack.c.b16 %v1322, %v1321
      %v1345 = vpack.c.b16 %v1324, %v1323
      %v1346 = vpack.c.b16 %v1326, %v1325
      %v1347 = vpack.c.b16 %v1328, %v1327
      %v1348 = vpack.c.b16 %v1330, %v1329
      %v1349 = vpack.c.b16 %v1332, %v1331
      %v1350 = vpack.c.b16 %v1334, %v1333
      %v1352 = vsel %vm664, %v1335, 0
      %v1355 = vsel %vm664, %v1336, 0
      %v1358 = vsel %vm664, %v1337, 0
      %v1361 = vsel %vm664, %v1338, 0
      %v1364 = vsel %vm664, %v1339, 0
      %v1367 = vsel %vm664, %v1340, 0
      %v1370 = vsel %vm664, %v1341, 0
      %v1373 = vsel %vm664, %v1342, 0
      %v1376 = vsel %vm664, %v1343, 0
      %v1379 = vsel %vm664, %v1344, 0
      %v1382 = vsel %vm664, %v1345, 0
      %v1385 = vsel %vm664, %v1346, 0
      %v1388 = vsel %vm664, %v1347, 0
      %v1391 = vsel %vm664, %v1348, 0
      %v1394 = vsel %vm664, %v1349, 0
      %v1397 = vsel %vm664, %v1350, 0
      %v1400 = vsel %vm713, %v1302, 0
      %1402 = vmatprep.subr.bf16.mxu0 0
      %1403 = vmatpush1.bf16.msra.mxu0 %v1400
      %1404 = vmatprep.subr.bf16.mxu0 0
      %1405 = vmatpush1.bf16.msra.mxu0 0
      %1406 = vmatprep.subr.bf16.mxu0 0
      %1407 = vmatpush1.bf16.msra.mxu0 0
      %1408 = vmatprep.subr.bf16.mxu0 0
      %1409 = vmatpush1.bf16.msra.mxu0 0
      %1410 = vmatprep.subr.bf16.mxu0 0
      %1411 = vmatpush1.bf16.msra.mxu0 0
      %1412 = vmatprep.subr.bf16.mxu0 0
      %1413 = vmatpush1.bf16.msra.mxu0 0
      %1414 = vmatprep.subr.bf16.mxu0 0
      %1415 = vmatpush1.bf16.msra.mxu0 0
      %1416 = vmatprep.subr.bf16.mxu0 0
      %1417 = vmatpush1.bf16.msra.mxu0 0
      %1418 = vmatprep.subr.bf16.mxu0 0
      %1419 = vmatpush1.bf16.msra.mxu0 0
      %1420 = vmatprep.subr.bf16.mxu0 0
      %1421 = vmatpush1.bf16.msra.mxu0 0
      %1422 = vmatprep.subr.bf16.mxu0 0
      %1423 = vmatpush1.bf16.msra.mxu0 0
      %1424 = vmatprep.subr.bf16.mxu0 0
      %1425 = vmatpush1.bf16.msra.mxu0 0
      %1426 = vmatprep.subr.bf16.mxu0 0
      %1427 = vmatpush1.bf16.msra.mxu0 0
      %1428 = vmatprep.subr.bf16.mxu0 0
      %1429 = vmatpush1.bf16.msra.mxu0 0
      %1430 = vmatprep.subr.bf16.mxu0 0
      %1431 = vmatpush1.bf16.msra.mxu0 0
      %1432 = vmatprep.subr.bf16.mxu0 0
      %1433 = vmatpush1.bf16.msra.mxu0 0
      %1434 = vmatprep.mubr.bf16.mxu0 0
      %1435 = vmatmul.mubr.bf16.gmra.mrb[0].mxu0 %v1352
      %v1436 = vpop.f32.mrb[0].mxu0
      %v1437 = vadd.f32 0.0, %v1436
      %v1438 = vpop.f32.mrb[0].mxu0
      %v1439 = vpop.f32.mrb[0].mxu0
      %v1440 = vadd.f32 0.0, %v1439
      %v1441 = vpop.f32.mrb[0].mxu0
      %1442 = vmatprep.mubr.bf16.mxu0 0
      %1443 = vmatmul.mubr.bf16.gmra.mrb[0].mxu0 %v1355
      %v1444 = vpop.f32.mrb[0].mxu0
      %v1445 = vadd.f32 0.0, %v1444
      %v1446 = vpop.f32.mrb[0].mxu0
      %v1447 = vpop.f32.mrb[0].mxu0
      %v1448 = vadd.f32 0.0, %v1447
      %v1449 = vpop.f32.mrb[0].mxu0
      %1450 = vmatprep.mubr.bf16.mxu0 0
      %1451 = vmatmul.mubr.bf16.gmra.mrb[0].mxu0 %v1358
      %v1452 = vpop.f32.mrb[0].mxu0
      %v1453 = vadd.f32 0.0, %v1452
      %v1454 = vpop.f32.mrb[0].mxu0
      %v1455 = vpop.f32.mrb[0].mxu0
      %v1456 = vadd.f32 0.0, %v1455
      %v1457 = vpop.f32.mrb[0].mxu0
      %1458 = vmatprep.mubr.bf16.mxu0 0
      %1459 = vmatmul.mubr.bf16.gmra.mrb[0].mxu0 %v1361
      %v1460 = vpop.f32.mrb[0].mxu0
      %v1461 = vadd.f32 0.0, %v1460
      %v1462 = vpop.f32.mrb[0].mxu0
      %v1463 = vpop.f32.mrb[0].mxu0
      %v1464 = vadd.f32 0.0, %v1463
      %v1465 = vpop.f32.mrb[0].mxu0
      %1466 = vmatprep.mubr.bf16.mxu0 0
      %1467 = vmatmul.mubr.bf16.gmra.mrb[0].mxu0 %v1364
      %v1468 = vpop.f32.mrb[0].mxu0
      %v1469 = vadd.f32 0.0, %v1468
      %v1470 = vpop.f32.mrb[0].mxu0
      %v1471 = vpop.f32.mrb[0].mxu0
      %v1472 = vadd.f32 0.0, %v1471
      %v1473 = vpop.f32.mrb[0].mxu0
      %1474 = vmatprep.mubr.bf16.mxu0 0
      %1475 = vmatmul.mubr.bf16.gmra.mrb[0].mxu0 %v1367
      %v1476 = vpop.f32.mrb[0].mxu0
      %v1477 = vadd.f32 0.0, %v1476
      %v1478 = vpop.f32.mrb[0].mxu0
      %v1479 = vpop.f32.mrb[0].mxu0
      %v1480 = vadd.f32 0.0, %v1479
      %v1481 = vpop.f32.mrb[0].mxu0
      %1482 = vmatprep.mubr.bf16.mxu0 0
      %1483 = vmatmul.mubr.bf16.gmra.mrb[0].mxu0 %v1370
      %v1484 = vpop.f32.mrb[0].mxu0
      %v1485 = vadd.f32 0.0, %v1484
      %v1486 = vpop.f32.mrb[0].mxu0
      %v1487 = vpop.f32.mrb[0].mxu0
      %v1488 = vadd.f32 0.0, %v1487
      %v1489 = vpop.f32.mrb[0].mxu0
      %1490 = vmatprep.mubr.bf16.mxu0 0
      %1491 = vmatmul.mubr.bf16.gmra.mrb[0].mxu0 %v1373
      %v1492 = vpop.f32.mrb[0].mxu0
      %v1493 = vadd.f32 0.0, %v1492
      %v1494 = vpop.f32.mrb[0].mxu0
      %v1495 = vpop.f32.mrb[0].mxu0
      %v1496 = vadd.f32 0.0, %v1495
      %v1497 = vpop.f32.mrb[0].mxu0
      %1498 = vmatprep.mubr.bf16.mxu0 0
      %1499 = vmatmul.mubr.bf16.gmra.mrb[0].mxu0 %v1376
      %v1500 = vpop.f32.mrb[0].mxu0
      %v1501 = vadd.f32 0.0, %v1500
      %v1502 = vpop.f32.mrb[0].mxu0
      %v1503 = vpop.f32.mrb[0].mxu0
      %v1504 = vadd.f32 0.0, %v1503
      %v1505 = vpop.f32.mrb[0].mxu0
      %1506 = vmatprep.mubr.bf16.mxu0 0
      %1507 = vmatmul.mubr.bf16.gmra.mrb[0].mxu0 %v1379
      %v1508 = vpop.f32.mrb[0].mxu0
      %v1509 = vadd.f32 0.0, %v1508
      %v1510 = vpop.f32.mrb[0].mxu0
      %v1511 = vpop.f32.mrb[0].mxu0
      %v1512 = vadd.f32 0.0, %v1511
      %v1513 = vpop.f32.mrb[0].mxu0
      %1514 = vmatprep.mubr.bf16.mxu0 0
      %1515 = vmatmul.mubr.bf16.gmra.mrb[0].mxu0 %v1382
      %v1516 = vpop.f32.mrb[0].mxu0
      %v1517 = vadd.f32 0.0, %v1516
      %v1518 = vpop.f32.mrb[0].mxu0
      %v1519 = vpop.f32.mrb[0].mxu0
      %v1520 = vadd.f32 0.0, %v1519
      %v1521 = vpop.f32.mrb[0].mxu0
      %1522 = vmatprep.mubr.bf16.mxu0 0
      %1523 = vmatmul.mubr.bf16.gmra.mrb[0].mxu0 %v1385
      %v1524 = vpop.f32.mrb[0].mxu0
      %v1525 = vadd.f32 0.0, %v1524
      %v1526 = vpop.f32.mrb[0].mxu0
      %v1527 = vpop.f32.mrb[0].mxu0
      %v1528 = vadd.f32 0.0, %v1527
      %v1529 = vpop.f32.mrb[0].mxu0
      %1530 = vmatprep.mubr.bf16.mxu0 0
      %1531 = vmatmul.mubr.bf16.gmra.mrb[0].mxu0 %v1388
      %v1532 = vpop.f32.mrb[0].mxu0
      %v1533 = vadd.f32 0.0, %v1532
      %v1534 = vpop.f32.mrb[0].mxu0
      %v1535 = vpop.f32.mrb[0].mxu0
      %v1536 = vadd.f32 0.0, %v1535
      %v1537 = vpop.f32.mrb[0].mxu0
      %1538 = vmatprep.mubr.bf16.mxu0 0
      %1539 = vmatmul.mubr.bf16.gmra.mrb[0].mxu0 %v1391
      %v1540 = vpop.f32.mrb[0].mxu0
      %v1541 = vadd.f32 0.0, %v1540
      %v1542 = vpop.f32.mrb[0].mxu0
      %v1543 = vpop.f32.mrb[0].mxu0
      %v1544 = vadd.f32 0.0, %v1543
      %v1545 = vpop.f32.mrb[0].mxu0
      %1546 = vmatprep.mubr.bf16.mxu0 0
      %1547 = vmatmul.mubr.bf16.gmra.mrb[0].mxu0 %v1394
      %v1548 = vpop.f32.mrb[0].mxu0
      %v1549 = vadd.f32 0.0, %v1548
      %v1550 = vpop.f32.mrb[0].mxu0
      %v1551 = vpop.f32.mrb[0].mxu0
      %v1552 = vadd.f32 0.0, %v1551
      %v1553 = vpop.f32.mrb[0].mxu0
      %1554 = vmatprep.mubr.bf16.mxu0 0
      %1555 = vmatmul.mubr.bf16.gmra.mrb[0].mxu0 %v1397
      %v1556 = vpop.f32.mrb[0].mxu0
      %v1557 = vadd.f32 0.0, %v1556
      %v1558 = vpop.f32.mrb[0].mxu0
      %v1559 = vpop.f32.mrb[0].mxu0
      %v1560 = vadd.f32 0.0, %v1559
      %v1561 = vpop.f32.mrb[0].mxu0
      %1562 = vdwg.mxu0
      %v1563 = vadd.f32 %v1044, %v1437
      %v1564 = vadd.f32 %v1047, %v1440
      %v1565 = vadd.f32 %v1052, %v1445
      %v1566 = vadd.f32 %v1055, %v1448
      %v1567 = vadd.f32 %v1060, %v1453
      %v1568 = vadd.f32 %v1063, %v1456
      %v1569 = vadd.f32 %v1068, %v1461
      %v1570 = vadd.f32 %v1071, %v1464
      %v1571 = vadd.f32 %v1076, %v1469
      %v1572 = vadd.f32 %v1079, %v1472
      %v1573 = vadd.f32 %v1084, %v1477
      %v1574 = vadd.f32 %v1087, %v1480
      %v1575 = vadd.f32 %v1092, %v1485
      %v1576 = vadd.f32 %v1095, %v1488
      %v1577 = vadd.f32 %v1100, %v1493
      %v1578 = vadd.f32 %v1103, %v1496
      %v1579 = vadd.f32 %v1108, %v1501
      %v1580 = vadd.f32 %v1111, %v1504
      %v1581 = vadd.f32 %v1116, %v1509
      %v1582 = vadd.f32 %v1119, %v1512
      %v1583 = vadd.f32 %v1124, %v1517
      %v1584 = vadd.f32 %v1127, %v1520
      %v1585 = vadd.f32 %v1132, %v1525
      %v1586 = vadd.f32 %v1135, %v1528
      %v1587 = vadd.f32 %v1140, %v1533
      %v1588 = vadd.f32 %v1143, %v1536
      %v1589 = vadd.f32 %v1148, %v1541
      %v1590 = vadd.f32 %v1151, %v1544
      %v1591 = vadd.f32 %v1156, %v1549
      %v1592 = vadd.f32 %v1159, %v1552
      %v1593 = vadd.f32 %v1164, %v1557
      %v1594 = vadd.f32 %v1167, %v1560
      %s1595 = scalar_lea.vmem %s1, 12
      %v1596 = vld [vmem:[%s1595] sm:$0xf]
      %v1599 = vunpack.c.l.b16 %v220
      %v1600 = vunpack.c.l.b16 %v221
      %v1601 = vpack.c.b16 %v1600, %v1599
      %v1603 = vsel %vm664, %v1601, 0
      %v1606 = vsel %vm713, %v1596, 0
      %1608 = vmatprep.subr.bf16.mxu0 0
      %1609 = vmatpush1.bf16.msra.mxu0 %v1606
      %1610 = vmatprep.subr.bf16.mxu0 0
      %1611 = vmatpush1.bf16.msra.mxu0 0
      %1612 = vmatprep.subr.bf16.mxu0 0
      %1613 = vmatpush1.bf16.msra.mxu0 0
      %1614 = vmatprep.subr.bf16.mxu0 0
      %1615 = vmatpush1.bf16.msra.mxu0 0
      %1616 = vmatprep.subr.bf16.mxu0 0
      %1617 = vmatpush1.bf16.msra.mxu0 0
      %1618 = vmatprep.subr.bf16.mxu0 0
      %1619 = vmatpush1.bf16.msra.mxu0 0
      %1620 = vmatprep.subr.bf16.mxu0 0
      %1621 = vmatpush1.bf16.msra.mxu0 0
      %1622 = vmatprep.subr.bf16.mxu0 0
      %1623 = vmatpush1.bf16.msra.mxu0 0
      %1624 = vmatprep.subr.bf16.mxu0 0
      %1625 = vmatpush1.bf16.msra.mxu0 0
      %1626 = vmatprep.subr.bf16.mxu0 0
      %1627 = vmatpush1.bf16.msra.mxu0 0
      %1628 = vmatprep.subr.bf16.mxu0 0
      %1629 = vmatpush1.bf16.msra.mxu0 0
      %1630 = vmatprep.subr.bf16.mxu0 0
      %1631 = vmatpush1.bf16.msra.mxu0 0
      %1632 = vmatprep.subr.bf16.mxu0 0
      %1633 = vmatpush1.bf16.msra.mxu0 0
      %1634 = vmatprep.subr.bf16.mxu0 0
      %1635 = vmatpush1.bf16.msra.mxu0 0
      %1636 = vmatprep.subr.bf16.mxu0 0
      %1637 = vmatpush1.bf16.msra.mxu0 0
      %1638 = vmatprep.subr.bf16.mxu0 0
      %1639 = vmatpush1.bf16.msra.mxu0 0
      %1640 = vmatprep.mubr.bf16.mxu0 0
      %1641 = vmatmul.mubr.bf16.gmra.mrb[0].mxu0 %v962
      %v1642 = vpop.f32.mrb[0].mxu0
      %v1643 = vadd.f32 0.0, %v1642
      %v1644 = vpop.f32.mrb[0].mxu0
      %v1645 = vpop.f32.mrb[0].mxu0
      %v1646 = vadd.f32 0.0, %v1645
      %v1647 = vpop.f32.mrb[0].mxu0
      %1648 = vmatprep.mubr.bf16.mxu0 0
      %1649 = vmatmul.mubr.bf16.gmra.mrb[0].mxu0 %v965
      %v1650 = vpop.f32.mrb[0].mxu0
      %v1651 = vadd.f32 0.0, %v1650
      %v1652 = vpop.f32.mrb[0].mxu0
      %v1653 = vpop.f32.mrb[0].mxu0
      %v1654 = vadd.f32 0.0, %v1653
      %v1655 = vpop.f32.mrb[0].mxu0
      %1656 = vmatprep.mubr.bf16.mxu0 0
      %1657 = vmatmul.mubr.bf16.gmra.mrb[0].mxu0 %v968
      %v1658 = vpop.f32.mrb[0].mxu0
      %v1659 = vadd.f32 0.0, %v1658
      %v1660 = vpop.f32.mrb[0].mxu0
      %v1661 = vpop.f32.mrb[0].mxu0
      %v1662 = vadd.f32 0.0, %v1661
      %v1663 = vpop.f32.mrb[0].mxu0
      %1664 = vmatprep.mubr.bf16.mxu0 0
      %1665 = vmatmul.mubr.bf16.gmra.mrb[0].mxu0 %v971
      %v1666 = vpop.f32.mrb[0].mxu0
      %v1667 = vadd.f32 0.0, %v1666
      %v1668 = vpop.f32.mrb[0].mxu0
      %v1669 = vpop.f32.mrb[0].mxu0
      %v1670 = vadd.f32 0.0, %v1669
      %v1671 = vpop.f32.mrb[0].mxu0
      %1672 = vmatprep.mubr.bf16.mxu0 0
      %1673 = vmatmul.mubr.bf16.gmra.mrb[0].mxu0 %v974
      %v1674 = vpop.f32.mrb[0].mxu0
      %v1675 = vadd.f32 0.0, %v1674
      %v1676 = vpop.f32.mrb[0].mxu0
      %v1677 = vpop.f32.mrb[0].mxu0
      %v1678 = vadd.f32 0.0, %v1677
      %v1679 = vpop.f32.mrb[0].mxu0
      %1680 = vmatprep.mubr.bf16.mxu0 0
      %1681 = vmatmul.mubr.bf16.gmra.mrb[0].mxu0 %v977
      %v1682 = vpop.f32.mrb[0].mxu0
      %v1683 = vadd.f32 0.0, %v1682
      %v1684 = vpop.f32.mrb[0].mxu0
      %v1685 = vpop.f32.mrb[0].mxu0
      %v1686 = vadd.f32 0.0, %v1685
      %v1687 = vpop.f32.mrb[0].mxu0
      %1688 = vmatprep.mubr.bf16.mxu0 0
      %1689 = vmatmul.mubr.bf16.gmra.mrb[0].mxu0 %v980
      %v1690 = vpop.f32.mrb[0].mxu0
      %v1691 = vadd.f32 0.0, %v1690
      %v1692 = vpop.f32.mrb[0].mxu0
      %v1693 = vpop.f32.mrb[0].mxu0
      %v1694 = vadd.f32 0.0, %v1693
      %v1695 = vpop.f32.mrb[0].mxu0
      %1696 = vmatprep.mubr.bf16.mxu0 0
      %1697 = vmatmul.mubr.bf16.gmra.mrb[0].mxu0 %v983
      %v1698 = vpop.f32.mrb[0].mxu0
      %v1699 = vadd.f32 0.0, %v1698
      %v1700 = vpop.f32.mrb[0].mxu0
      %v1701 = vpop.f32.mrb[0].mxu0
      %v1702 = vadd.f32 0.0, %v1701
      %v1703 = vpop.f32.mrb[0].mxu0
      %1704 = vmatprep.mubr.bf16.mxu0 0
      %1705 = vmatmul.mubr.bf16.gmra.mrb[0].mxu0 %v986
      %v1706 = vpop.f32.mrb[0].mxu0
      %v1707 = vadd.f32 0.0, %v1706
      %v1708 = vpop.f32.mrb[0].mxu0
      %v1709 = vpop.f32.mrb[0].mxu0
      %v1710 = vadd.f32 0.0, %v1709
      %v1711 = vpop.f32.mrb[0].mxu0
      %1712 = vmatprep.mubr.bf16.mxu0 0
      %1713 = vmatmul.mubr.bf16.gmra.mrb[0].mxu0 %v989
      %v1714 = vpop.f32.mrb[0].mxu0
      %v1715 = vadd.f32 0.0, %v1714
      %v1716 = vpop.f32.mrb[0].mxu0
      %v1717 = vpop.f32.mrb[0].mxu0
      %v1718 = vadd.f32 0.0, %v1717
      %v1719 = vpop.f32.mrb[0].mxu0
      %1720 = vmatprep.mubr.bf16.mxu0 0
      %1721 = vmatmul.mubr.bf16.gmra.mrb[0].mxu0 %v992
      %v1722 = vpop.f32.mrb[0].mxu0
      %v1723 = vadd.f32 0.0, %v1722
      %v1724 = vpop.f32.mrb[0].mxu0
      %v1725 = vpop.f32.mrb[0].mxu0
      %v1726 = vadd.f32 0.0, %v1725
      %v1727 = vpop.f32.mrb[0].mxu0
      %1728 = vmatprep.mubr.bf16.mxu0 0
      %1729 = vmatmul.mubr.bf16.gmra.mrb[0].mxu0 %v995
      %v1730 = vpop.f32.mrb[0].mxu0
      %v1731 = vadd.f32 0.0, %v1730
      %v1732 = vpop.f32.mrb[0].mxu0
      %v1733 = vpop.f32.mrb[0].mxu0
      %v1734 = vadd.f32 0.0, %v1733
      %v1735 = vpop.f32.mrb[0].mxu0
      %1736 = vmatprep.mubr.bf16.mxu0 0
      %1737 = vmatmul.mubr.bf16.gmra.mrb[0].mxu0 %v998
      %v1738 = vpop.f32.mrb[0].mxu0
      %v1739 = vadd.f32 0.0, %v1738
      %v1740 = vpop.f32.mrb[0].mxu0
      %v1741 = vpop.f32.mrb[0].mxu0
      %v1742 = vadd.f32 0.0, %v1741
      %v1743 = vpop.f32.mrb[0].mxu0
      %1744 = vmatprep.mubr.bf16.mxu0 0
      %1745 = vmatmul.mubr.bf16.gmra.mrb[0].mxu0 %v1001
      %v1746 = vpop.f32.mrb[0].mxu0
      %v1747 = vadd.f32 0.0, %v1746
      %v1748 = vpop.f32.mrb[0].mxu0
      %v1749 = vpop.f32.mrb[0].mxu0
      %v1750 = vadd.f32 0.0, %v1749
      %v1751 = vpop.f32.mrb[0].mxu0
      %1752 = vmatprep.mubr.bf16.mxu0 0
      %1753 = vmatmul.mubr.bf16.gmra.mrb[0].mxu0 %v1004
      %v1754 = vpop.f32.mrb[0].mxu0
      %v1755 = vadd.f32 0.0, %v1754
      %v1756 = vpop.f32.mrb[0].mxu0
      %v1757 = vpop.f32.mrb[0].mxu0
      %v1758 = vadd.f32 0.0, %v1757
      %v1759 = vpop.f32.mrb[0].mxu0
      %1760 = vmatprep.mubr.bf16.mxu0 0
      %1761 = vmatmul.mubr.bf16.gmra.mrb[0].mxu0 %v1603
      %v1762 = vpop.f32.mrb[0].mxu0
      %v1763 = vadd.f32 0.0, %v1762
      %v1764 = vpop.f32.mrb[0].mxu0
      %v1765 = vpop.f32.mrb[0].mxu0
      %v1766 = vadd.f32 0.0, %v1765
      %v1767 = vpop.f32.mrb[0].mxu0
      %1768 = vdwg.mxu0
      %v1769 = vadd.f32 %v1563, %v1643
      %v1770 = vadd.f32 %v1564, %v1646
      %v1771 = vadd.f32 %v1565, %v1651
      %v1772 = vadd.f32 %v1566, %v1654
      %v1773 = vadd.f32 %v1567, %v1659
      %v1774 = vadd.f32 %v1568, %v1662
      %v1775 = vadd.f32 %v1569, %v1667
      %v1776 = vadd.f32 %v1570, %v1670
      %v1777 = vadd.f32 %v1571, %v1675
      %v1778 = vadd.f32 %v1572, %v1678
      %v1779 = vadd.f32 %v1573, %v1683
      %v1780 = vadd.f32 %v1574, %v1686
      %v1781 = vadd.f32 %v1575, %v1691
      %v1782 = vadd.f32 %v1576, %v1694
      %v1783 = vadd.f32 %v1577, %v1699
      %v1784 = vadd.f32 %v1578, %v1702
      %v1785 = vadd.f32 %v1579, %v1707
      %v1786 = vadd.f32 %v1580, %v1710
      %v1787 = vadd.f32 %v1581, %v1715
      %v1788 = vadd.f32 %v1582, %v1718
      %v1789 = vadd.f32 %v1583, %v1723
      %v1790 = vadd.f32 %v1584, %v1726
      %v1791 = vadd.f32 %v1585, %v1731
      %v1792 = vadd.f32 %v1586, %v1734
      %v1793 = vadd.f32 %v1587, %v1739
      %v1794 = vadd.f32 %v1588, %v1742
      %v1795 = vadd.f32 %v1589, %v1747
      %v1796 = vadd.f32 %v1590, %v1750
      %v1797 = vadd.f32 %v1591, %v1755
      %v1798 = vadd.f32 %v1592, %v1758
      %v1799 = vadd.f32 %v1593, %v1763
      %v1800 = vadd.f32 %v1594, %v1766
      %v1802 = vshrl.u32 %v220, 16
      %v1804 = vrot.slane %v1802, 4
      %v1805 = vshll.u32 %v220, 16
      %v1807 = vrot.slane %v1805, 5
      %v1808 = vor.u32 %v1804, %v1807
      %v1809 = vrot.slane %v1808, 4
      %v1811 = vshll.u32 %v221, 16
      %v1813 = vrot.slane %v1811, 5
      %v1814 = vsel %vm229, %v1809, %v1813
      %v1815 = vshrl.u32 %v221, 16
      %v1817 = vrot.slane %v1815, 4
      %v1818 = vor.u32 %v1817, %v1813
      %v1819 = vrot.slane %v1818, 4
      %v1821 = vshll.u32 %v222, 16
      %v1823 = vrot.slane %v1821, 5
      %v1824 = vsel %vm229, %v1819, %v1823
      %s1825 = scalar_lea.vmem %s1, 16
      %v1826 = vld [vmem:[%s1825] sm:$0xf]
      %v1827 = vunpack.c.l.b16 %v1814
      %v1828 = vunpack.c.l.b16 %v1824
      %v1829 = vpack.c.b16 %v1828, %v1827
      %v1831 = vsel %vm664, %v1829, 0
      %v1834 = vsel %vm713, %v1826, 0
      %1836 = vmatprep.subr.bf16.mxu0 0
      %1837 = vmatpush1.bf16.msra.mxu0 %v1834
      %1838 = vmatprep.subr.bf16.mxu0 0
      %1839 = vmatpush1.bf16.msra.mxu0 0
      %1840 = vmatprep.subr.bf16.mxu0 0
      %1841 = vmatpush1.bf16.msra.mxu0 0
      %1842 = vmatprep.subr.bf16.mxu0 0
      %1843 = vmatpush1.bf16.msra.mxu0 0
      %1844 = vmatprep.subr.bf16.mxu0 0
      %1845 = vmatpush1.bf16.msra.mxu0 0
      %1846 = vmatprep.subr.bf16.mxu0 0
      %1847 = vmatpush1.bf16.msra.mxu0 0
      %1848 = vmatprep.subr.bf16.mxu0 0
      %1849 = vmatpush1.bf16.msra.mxu0 0
      %1850 = vmatprep.subr.bf16.mxu0 0
      %1851 = vmatpush1.bf16.msra.mxu0 0
      %1852 = vmatprep.subr.bf16.mxu0 0
      %1853 = vmatpush1.bf16.msra.mxu0 0
      %1854 = vmatprep.subr.bf16.mxu0 0
      %1855 = vmatpush1.bf16.msra.mxu0 0
      %1856 = vmatprep.subr.bf16.mxu0 0
      %1857 = vmatpush1.bf16.msra.mxu0 0
      %1858 = vmatprep.subr.bf16.mxu0 0
      %1859 = vmatpush1.bf16.msra.mxu0 0
      %1860 = vmatprep.subr.bf16.mxu0 0
      %1861 = vmatpush1.bf16.msra.mxu0 0
      %1862 = vmatprep.subr.bf16.mxu0 0
      %1863 = vmatpush1.bf16.msra.mxu0 0
      %1864 = vmatprep.subr.bf16.mxu0 0
      %1865 = vmatpush1.bf16.msra.mxu0 0
      %1866 = vmatprep.subr.bf16.mxu0 0
      %1867 = vmatpush1.bf16.msra.mxu0 0
      %1868 = vmatprep.mubr.bf16.mxu0 0
      %1869 = vmatmul.mubr.bf16.gmra.mrb[0].mxu0 %v669
      %v1870 = vpop.f32.mrb[0].mxu0
      %v1871 = vadd.f32 0.0, %v1870
      %v1872 = vpop.f32.mrb[0].mxu0
      %v1873 = vpop.f32.mrb[0].mxu0
      %v1874 = vadd.f32 0.0, %v1873
      %v1875 = vpop.f32.mrb[0].mxu0
      %1876 = vmatprep.mubr.bf16.mxu0 0
      %1877 = vmatmul.mubr.bf16.gmra.mrb[0].mxu0 %v672
      %v1878 = vpop.f32.mrb[0].mxu0
      %v1879 = vadd.f32 0.0, %v1878
      %v1880 = vpop.f32.mrb[0].mxu0
      %v1881 = vpop.f32.mrb[0].mxu0
      %v1882 = vadd.f32 0.0, %v1881
      %v1883 = vpop.f32.mrb[0].mxu0
      %1884 = vmatprep.mubr.bf16.mxu0 0
      %1885 = vmatmul.mubr.bf16.gmra.mrb[0].mxu0 %v675
      %v1886 = vpop.f32.mrb[0].mxu0
      %v1887 = vadd.f32 0.0, %v1886
      %v1888 = vpop.f32.mrb[0].mxu0
      %v1889 = vpop.f32.mrb[0].mxu0
      %v1890 = vadd.f32 0.0, %v1889
      %v1891 = vpop.f32.mrb[0].mxu0
      %1892 = vmatprep.mubr.bf16.mxu0 0
      %1893 = vmatmul.mubr.bf16.gmra.mrb[0].mxu0 %v678
      %v1894 = vpop.f32.mrb[0].mxu0
      %v1895 = vadd.f32 0.0, %v1894
      %v1896 = vpop.f32.mrb[0].mxu0
      %v1897 = vpop.f32.mrb[0].mxu0
      %v1898 = vadd.f32 0.0, %v1897
      %v1899 = vpop.f32.mrb[0].mxu0
      %1900 = vmatprep.mubr.bf16.mxu0 0
      %1901 = vmatmul.mubr.bf16.gmra.mrb[0].mxu0 %v681
      %v1902 = vpop.f32.mrb[0].mxu0
      %v1903 = vadd.f32 0.0, %v1902
      %v1904 = vpop.f32.mrb[0].mxu0
      %v1905 = vpop.f32.mrb[0].mxu0
      %v1906 = vadd.f32 0.0, %v1905
      %v1907 = vpop.f32.mrb[0].mxu0
      %1908 = vmatprep.mubr.bf16.mxu0 0
      %1909 = vmatmul.mubr.bf16.gmra.mrb[0].mxu0 %v684
      %v1910 = vpop.f32.mrb[0].mxu0
      %v1911 = vadd.f32 0.0, %v1910
      %v1912 = vpop.f32.mrb[0].mxu0
      %v1913 = vpop.f32.mrb[0].mxu0
      %v1914 = vadd.f32 0.0, %v1913
      %v1915 = vpop.f32.mrb[0].mxu0
      %1916 = vmatprep.mubr.bf16.mxu0 0
      %1917 = vmatmul.mubr.bf16.gmra.mrb[0].mxu0 %v687
      %v1918 = vpop.f32.mrb[0].mxu0
      %v1919 = vadd.f32 0.0, %v1918
      %v1920 = vpop.f32.mrb[0].mxu0
      %v1921 = vpop.f32.mrb[0].mxu0
      %v1922 = vadd.f32 0.0, %v1921
      %v1923 = vpop.f32.mrb[0].mxu0
      %1924 = vmatprep.mubr.bf16.mxu0 0
      %1925 = vmatmul.mubr.bf16.gmra.mrb[0].mxu0 %v690
      %v1926 = vpop.f32.mrb[0].mxu0
      %v1927 = vadd.f32 0.0, %v1926
      %v1928 = vpop.f32.mrb[0].mxu0
      %v1929 = vpop.f32.mrb[0].mxu0
      %v1930 = vadd.f32 0.0, %v1929
      %v1931 = vpop.f32.mrb[0].mxu0
      %1932 = vmatprep.mubr.bf16.mxu0 0
      %1933 = vmatmul.mubr.bf16.gmra.mrb[0].mxu0 %v693
      %v1934 = vpop.f32.mrb[0].mxu0
      %v1935 = vadd.f32 0.0, %v1934
      %v1936 = vpop.f32.mrb[0].mxu0
      %v1937 = vpop.f32.mrb[0].mxu0
      %v1938 = vadd.f32 0.0, %v1937
      %v1939 = vpop.f32.mrb[0].mxu0
      %1940 = vmatprep.mubr.bf16.mxu0 0
      %1941 = vmatmul.mubr.bf16.gmra.mrb[0].mxu0 %v696
      %v1942 = vpop.f32.mrb[0].mxu0
      %v1943 = vadd.f32 0.0, %v1942
      %v1944 = vpop.f32.mrb[0].mxu0
      %v1945 = vpop.f32.mrb[0].mxu0
      %v1946 = vadd.f32 0.0, %v1945
      %v1947 = vpop.f32.mrb[0].mxu0
      %1948 = vmatprep.mubr.bf16.mxu0 0
      %1949 = vmatmul.mubr.bf16.gmra.mrb[0].mxu0 %v699
      %v1950 = vpop.f32.mrb[0].mxu0
      %v1951 = vadd.f32 0.0, %v1950
      %v1952 = vpop.f32.mrb[0].mxu0
      %v1953 = vpop.f32.mrb[0].mxu0
      %v1954 = vadd.f32 0.0, %v1953
      %v1955 = vpop.f32.mrb[0].mxu0
      %1956 = vmatprep.mubr.bf16.mxu0 0
      %1957 = vmatmul.mubr.bf16.gmra.mrb[0].mxu0 %v702
      %v1958 = vpop.f32.mrb[0].mxu0
      %v1959 = vadd.f32 0.0, %v1958
      %v1960 = vpop.f32.mrb[0].mxu0
      %v1961 = vpop.f32.mrb[0].mxu0
      %v1962 = vadd.f32 0.0, %v1961
      %v1963 = vpop.f32.mrb[0].mxu0
      %1964 = vmatprep.mubr.bf16.mxu0 0
      %1965 = vmatmul.mubr.bf16.gmra.mrb[0].mxu0 %v705
      %v1966 = vpop.f32.mrb[0].mxu0
      %v1967 = vadd.f32 0.0, %v1966
      %v1968 = vpop.f32.mrb[0].mxu0
      %v1969 = vpop.f32.mrb[0].mxu0
      %v1970 = vadd.f32 0.0, %v1969
      %v1971 = vpop.f32.mrb[0].mxu0
      %1972 = vmatprep.mubr.bf16.mxu0 0
      %1973 = vmatmul.mubr.bf16.gmra.mrb[0].mxu0 %v708
      %v1974 = vpop.f32.mrb[0].mxu0
      %v1975 = vadd.f32 0.0, %v1974
      %v1976 = vpop.f32.mrb[0].mxu0
      %v1977 = vpop.f32.mrb[0].mxu0
      %v1978 = vadd.f32 0.0, %v1977
      %v1979 = vpop.f32.mrb[0].mxu0
      %1980 = vmatprep.mubr.bf16.mxu0 0
      %1981 = vmatmul.mubr.bf16.gmra.mrb[0].mxu0 %v711
      %v1982 = vpop.f32.mrb[0].mxu0
      %v1983 = vadd.f32 0.0, %v1982
      %v1984 = vpop.f32.mrb[0].mxu0
      %v1985 = vpop.f32.mrb[0].mxu0
      %v1986 = vadd.f32 0.0, %v1985
      %v1987 = vpop.f32.mrb[0].mxu0
      %1988 = vmatprep.mubr.bf16.mxu0 0
      %1989 = vmatmul.mubr.bf16.gmra.mrb[0].mxu0 %v1831
      %v1990 = vpop.f32.mrb[0].mxu0
      %v1991 = vadd.f32 0.0, %v1990
      %v1992 = vpop.f32.mrb[0].mxu0
      %v1993 = vpop.f32.mrb[0].mxu0
      %v1994 = vadd.f32 0.0, %v1993
      %v1995 = vpop.f32.mrb[0].mxu0
      %1996 = vdwg.mxu0
      %v1997 = vadd.f32 %v1769, %v1871
      %v1998 = vadd.f32 %v1770, %v1874
      %v1999 = vadd.f32 %v1771, %v1879
      %v2000 = vadd.f32 %v1772, %v1882
      %v2001 = vadd.f32 %v1773, %v1887
      %v2002 = vadd.f32 %v1774, %v1890
      %v2003 = vadd.f32 %v1775, %v1895
      %v2004 = vadd.f32 %v1776, %v1898
      %v2005 = vadd.f32 %v1777, %v1903
      %v2006 = vadd.f32 %v1778, %v1906
      %v2007 = vadd.f32 %v1779, %v1911
      %v2008 = vadd.f32 %v1780, %v1914
      %v2009 = vadd.f32 %v1781, %v1919
      %v2010 = vadd.f32 %v1782, %v1922
      %v2011 = vadd.f32 %v1783, %v1927
      %v2012 = vadd.f32 %v1784, %v1930
      %v2013 = vadd.f32 %v1785, %v1935
      %v2014 = vadd.f32 %v1786, %v1938
      %v2015 = vadd.f32 %v1787, %v1943
      %v2016 = vadd.f32 %v1788, %v1946
      %v2017 = vadd.f32 %v1789, %v1951
      %v2018 = vadd.f32 %v1790, %v1954
      %v2019 = vadd.f32 %v1791, %v1959
      %v2020 = vadd.f32 %v1792, %v1962
      %v2021 = vadd.f32 %v1793, %v1967
      %v2022 = vadd.f32 %v1794, %v1970
      %v2023 = vadd.f32 %v1795, %v1975
      %v2024 = vadd.f32 %v1796, %v1978
      %v2025 = vadd.f32 %v1797, %v1983
      %v2026 = vadd.f32 %v1798, %v1986
      %v2027 = vadd.f32 %v1799, %v1991
      %v2028 = vadd.f32 %v1800, %v1994
      %v2030 = vrot.slane %v220, 5
      %v2031 = vrot.slane %v2030, 4
      %v2032 = vrot.slane %v221, 5
      %v2033 = vsel %vm1188, %v2031, %v2032
      %v2034 = vrot.slane %v2032, 4
      %v2035 = vrot.slane %v222, 5
      %v2036 = vsel %vm1188, %v2034, %v2035
      %s2037 = scalar_lea.vmem %s1, 20
      %v2038 = vld [vmem:[%s2037] sm:$0xf]
      %v2039 = vunpack.c.l.b16 %v2033
      %v2040 = vunpack.c.l.b16 %v2036
      %v2041 = vpack.c.b16 %v2040, %v2039
      %v2043 = vsel %vm664, %v2041, 0
      %v2046 = vsel %vm713, %v2038, 0
      %2048 = vmatprep.subr.bf16.mxu0 0
      %2049 = vmatpush1.bf16.msra.mxu0 %v2046
      %2050 = vmatprep.subr.bf16.mxu0 0
      %2051 = vmatpush1.bf16.msra.mxu0 0
      %2052 = vmatprep.subr.bf16.mxu0 0
      %2053 = vmatpush1.bf16.msra.mxu0 0
      %2054 = vmatprep.subr.bf16.mxu0 0
      %2055 = vmatpush1.bf16.msra.mxu0 0
      %2056 = vmatprep.subr.bf16.mxu0 0
      %2057 = vmatpush1.bf16.msra.mxu0 0
      %2058 = vmatprep.subr.bf16.mxu0 0
      %2059 = vmatpush1.bf16.msra.mxu0 0
      %2060 = vmatprep.subr.bf16.mxu0 0
      %2061 = vmatpush1.bf16.msra.mxu0 0
      %2062 = vmatprep.subr.bf16.mxu0 0
      %2063 = vmatpush1.bf16.msra.mxu0 0
      %2064 = vmatprep.subr.bf16.mxu0 0
      %2065 = vmatpush1.bf16.msra.mxu0 0
      %2066 = vmatprep.subr.bf16.mxu0 0
      %2067 = vmatpush1.bf16.msra.mxu0 0
      %2068 = vmatprep.subr.bf16.mxu0 0
      %2069 = vmatpush1.bf16.msra.mxu0 0
      %2070 = vmatprep.subr.bf16.mxu0 0
      %2071 = vmatpush1.bf16.msra.mxu0 0
      %2072 = vmatprep.subr.bf16.mxu0 0
      %2073 = vmatpush1.bf16.msra.mxu0 0
      %2074 = vmatprep.subr.bf16.mxu0 0
      %2075 = vmatpush1.bf16.msra.mxu0 0
      %2076 = vmatprep.subr.bf16.mxu0 0
      %2077 = vmatpush1.bf16.msra.mxu0 0
      %2078 = vmatprep.subr.bf16.mxu0 0
      %2079 = vmatpush1.bf16.msra.mxu0 0
      %2080 = vmatprep.mubr.bf16.mxu0 0
      %2081 = vmatmul.mubr.bf16.gmra.mrb[0].mxu0 %v1355
      %v2082 = vpop.f32.mrb[0].mxu0
      %v2083 = vadd.f32 0.0, %v2082
      %v2084 = vpop.f32.mrb[0].mxu0
      %v2085 = vpop.f32.mrb[0].mxu0
      %v2086 = vadd.f32 0.0, %v2085
      %v2087 = vpop.f32.mrb[0].mxu0
      %2088 = vmatprep.mubr.bf16.mxu0 0
      %2089 = vmatmul.mubr.bf16.gmra.mrb[0].mxu0 %v1358
      %v2090 = vpop.f32.mrb[0].mxu0
      %v2091 = vadd.f32 0.0, %v2090
      %v2092 = vpop.f32.mrb[0].mxu0
      %v2093 = vpop.f32.mrb[0].mxu0
      %v2094 = vadd.f32 0.0, %v2093
      %v2095 = vpop.f32.mrb[0].mxu0
      %2096 = vmatprep.mubr.bf16.mxu0 0
      %2097 = vmatmul.mubr.bf16.gmra.mrb[0].mxu0 %v1361
      %v2098 = vpop.f32.mrb[0].mxu0
      %v2099 = vadd.f32 0.0, %v2098
      %v2100 = vpop.f32.mrb[0].mxu0
      %v2101 = vpop.f32.mrb[0].mxu0
      %v2102 = vadd.f32 0.0, %v2101
      %v2103 = vpop.f32.mrb[0].mxu0
      %2104 = vmatprep.mubr.bf16.mxu0 0
      %2105 = vmatmul.mubr.bf16.gmra.mrb[0].mxu0 %v1364
      %v2106 = vpop.f32.mrb[0].mxu0
      %v2107 = vadd.f32 0.0, %v2106
      %v2108 = vpop.f32.mrb[0].mxu0
      %v2109 = vpop.f32.mrb[0].mxu0
      %v2110 = vadd.f32 0.0, %v2109
      %v2111 = vpop.f32.mrb[0].mxu0
      %2112 = vmatprep.mubr.bf16.mxu0 0
      %2113 = vmatmul.mubr.bf16.gmra.mrb[0].mxu0 %v1367
      %v2114 = vpop.f32.mrb[0].mxu0
      %v2115 = vadd.f32 0.0, %v2114
      %v2116 = vpop.f32.mrb[0].mxu0
      %v2117 = vpop.f32.mrb[0].mxu0
      %v2118 = vadd.f32 0.0, %v2117
      %v2119 = vpop.f32.mrb[0].mxu0
      %2120 = vmatprep.mubr.bf16.mxu0 0
      %2121 = vmatmul.mubr.bf16.gmra.mrb[0].mxu0 %v1370
      %v2122 = vpop.f32.mrb[0].mxu0
      %v2123 = vadd.f32 0.0, %v2122
      %v2124 = vpop.f32.mrb[0].mxu0
      %v2125 = vpop.f32.mrb[0].mxu0
      %v2126 = vadd.f32 0.0, %v2125
      %v2127 = vpop.f32.mrb[0].mxu0
      %2128 = vmatprep.mubr.bf16.mxu0 0
      %2129 = vmatmul.mubr.bf16.gmra.mrb[0].mxu0 %v1373
      %v2130 = vpop.f32.mrb[0].mxu0
      %v2131 = vadd.f32 0.0, %v2130
      %v2132 = vpop.f32.mrb[0].mxu0
      %v2133 = vpop.f32.mrb[0].mxu0
      %v2134 = vadd.f32 0.0, %v2133
      %v2135 = vpop.f32.mrb[0].mxu0
      %2136 = vmatprep.mubr.bf16.mxu0 0
      %2137 = vmatmul.mubr.bf16.gmra.mrb[0].mxu0 %v1376
      %v2138 = vpop.f32.mrb[0].mxu0
      %v2139 = vadd.f32 0.0, %v2138
      %v2140 = vpop.f32.mrb[0].mxu0
      %v2141 = vpop.f32.mrb[0].mxu0
      %v2142 = vadd.f32 0.0, %v2141
      %v2143 = vpop.f32.mrb[0].mxu0
      %2144 = vmatprep.mubr.bf16.mxu0 0
      %2145 = vmatmul.mubr.bf16.gmra.mrb[0].mxu0 %v1379
      %v2146 = vpop.f32.mrb[0].mxu0
      %v2147 = vadd.f32 0.0, %v2146
      %v2148 = vpop.f32.mrb[0].mxu0
      %v2149 = vpop.f32.mrb[0].mxu0
      %v2150 = vadd.f32 0.0, %v2149
      %v2151 = vpop.f32.mrb[0].mxu0
      %2152 = vmatprep.mubr.bf16.mxu0 0
      %2153 = vmatmul.mubr.bf16.gmra.mrb[0].mxu0 %v1382
      %v2154 = vpop.f32.mrb[0].mxu0
      %v2155 = vadd.f32 0.0, %v2154
      %v2156 = vpop.f32.mrb[0].mxu0
      %v2157 = vpop.f32.mrb[0].mxu0
      %v2158 = vadd.f32 0.0, %v2157
      %v2159 = vpop.f32.mrb[0].mxu0
      %2160 = vmatprep.mubr.bf16.mxu0 0
      %2161 = vmatmul.mubr.bf16.gmra.mrb[0].mxu0 %v1385
      %v2162 = vpop.f32.mrb[0].mxu0
      %v2163 = vadd.f32 0.0, %v2162
      %v2164 = vpop.f32.mrb[0].mxu0
      %v2165 = vpop.f32.mrb[0].mxu0
      %v2166 = vadd.f32 0.0, %v2165
      %v2167 = vpop.f32.mrb[0].mxu0
      %2168 = vmatprep.mubr.bf16.mxu0 0
      %2169 = vmatmul.mubr.bf16.gmra.mrb[0].mxu0 %v1388
      %v2170 = vpop.f32.mrb[0].mxu0
      %v2171 = vadd.f32 0.0, %v2170
      %v2172 = vpop.f32.mrb[0].mxu0
      %v2173 = vpop.f32.mrb[0].mxu0
      %v2174 = vadd.f32 0.0, %v2173
      %v2175 = vpop.f32.mrb[0].mxu0
      %2176 = vmatprep.mubr.bf16.mxu0 0
      %2177 = vmatmul.mubr.bf16.gmra.mrb[0].mxu0 %v1391
      %v2178 = vpop.f32.mrb[0].mxu0
      %v2179 = vadd.f32 0.0, %v2178
      %v2180 = vpop.f32.mrb[0].mxu0
      %v2181 = vpop.f32.mrb[0].mxu0
      %v2182 = vadd.f32 0.0, %v2181
      %v2183 = vpop.f32.mrb[0].mxu0
      %2184 = vmatprep.mubr.bf16.mxu0 0
      %2185 = vmatmul.mubr.bf16.gmra.mrb[0].mxu0 %v1394
      %v2186 = vpop.f32.mrb[0].mxu0
      %v2187 = vadd.f32 0.0, %v2186
      %v2188 = vpop.f32.mrb[0].mxu0
      %v2189 = vpop.f32.mrb[0].mxu0
      %v2190 = vadd.f32 0.0, %v2189
      %v2191 = vpop.f32.mrb[0].mxu0
      %2192 = vmatprep.mubr.bf16.mxu0 0
      %2193 = vmatmul.mubr.bf16.gmra.mrb[0].mxu0 %v1397
      %v2194 = vpop.f32.mrb[0].mxu0
      %v2195 = vadd.f32 0.0, %v2194
      %v2196 = vpop.f32.mrb[0].mxu0
      %v2197 = vpop.f32.mrb[0].mxu0
      %v2198 = vadd.f32 0.0, %v2197
      %v2199 = vpop.f32.mrb[0].mxu0
      %2200 = vmatprep.mubr.bf16.mxu0 0
      %2201 = vmatmul.mubr.bf16.gmra.mrb[0].mxu0 %v2043
      %v2202 = vpop.f32.mrb[0].mxu0
      %v2203 = vadd.f32 0.0, %v2202
      %v2204 = vpop.f32.mrb[0].mxu0
      %v2205 = vpop.f32.mrb[0].mxu0
      %v2206 = vadd.f32 0.0, %v2205
      %v2207 = vpop.f32.mrb[0].mxu0
      %2208 = vdwg.mxu0
      %v2209 = vadd.f32 %v1997, %v2083
      %v2210 = vadd.f32 %v1998, %v2086
      %v2211 = vadd.f32 %v1999, %v2091
      %v2212 = vadd.f32 %v2000, %v2094
      %v2213 = vadd.f32 %v2001, %v2099
      %v2214 = vadd.f32 %v2002, %v2102
      %v2215 = vadd.f32 %v2003, %v2107
      %v2216 = vadd.f32 %v2004, %v2110
      %v2217 = vadd.f32 %v2005, %v2115
      %v2218 = vadd.f32 %v2006, %v2118
      %v2219 = vadd.f32 %v2007, %v2123
      %v2220 = vadd.f32 %v2008, %v2126
      %v2221 = vadd.f32 %v2009, %v2131
      %v2222 = vadd.f32 %v2010, %v2134
      %v2223 = vadd.f32 %v2011, %v2139
      %v2224 = vadd.f32 %v2012, %v2142
      %v2225 = vadd.f32 %v2013, %v2147
      %v2226 = vadd.f32 %v2014, %v2150
      %v2227 = vadd.f32 %v2015, %v2155
      %v2228 = vadd.f32 %v2016, %v2158
      %v2229 = vadd.f32 %v2017, %v2163
      %v2230 = vadd.f32 %v2018, %v2166
      %v2231 = vadd.f32 %v2019, %v2171
      %v2232 = vadd.f32 %v2020, %v2174
      %v2233 = vadd.f32 %v2021, %v2179
      %v2234 = vadd.f32 %v2022, %v2182
      %v2235 = vadd.f32 %v2023, %v2187
      %v2236 = vadd.f32 %v2024, %v2190
      %v2237 = vadd.f32 %v2025, %v2195
      %v2238 = vadd.f32 %v2026, %v2198
      %v2239 = vadd.f32 %v2027, %v2203
      %v2240 = vadd.f32 %v2028, %v2206
      %s2241 = scalar_lea.vmem %s1, 24
      %v2242 = vld [vmem:[%s2241] sm:$0xf]
      %v2245 = vunpack.c.l.b16 %v223
      %v2246 = vunpack.c.l.b16 %v224
      %v2247 = vpack.c.b16 %v2246, %v2245
      %v2249 = vsel %vm664, %v2247, 0
      %v2252 = vsel %vm713, %v2242, 0
      %2254 = vmatprep.subr.bf16.mxu0 0
      %2255 = vmatpush1.bf16.msra.mxu0 %v2252
      %2256 = vmatprep.subr.bf16.mxu0 0
      %2257 = vmatpush1.bf16.msra.mxu0 0
      %2258 = vmatprep.subr.bf16.mxu0 0
      %2259 = vmatpush1.bf16.msra.mxu0 0
      %2260 = vmatprep.subr.bf16.mxu0 0
      %2261 = vmatpush1.bf16.msra.mxu0 0
      %2262 = vmatprep.subr.bf16.mxu0 0
      %2263 = vmatpush1.bf16.msra.mxu0 0
      %2264 = vmatprep.subr.bf16.mxu0 0
      %2265 = vmatpush1.bf16.msra.mxu0 0
      %2266 = vmatprep.subr.bf16.mxu0 0
      %2267 = vmatpush1.bf16.msra.mxu0 0
      %2268 = vmatprep.subr.bf16.mxu0 0
      %2269 = vmatpush1.bf16.msra.mxu0 0
      %2270 = vmatprep.subr.bf16.mxu0 0
      %2271 = vmatpush1.bf16.msra.mxu0 0
      %2272 = vmatprep.subr.bf16.mxu0 0
      %2273 = vmatpush1.bf16.msra.mxu0 0
      %2274 = vmatprep.subr.bf16.mxu0 0
      %2275 = vmatpush1.bf16.msra.mxu0 0
      %2276 = vmatprep.subr.bf16.mxu0 0
      %2277 = vmatpush1.bf16.msra.mxu0 0
      %2278 = vmatprep.subr.bf16.mxu0 0
      %2279 = vmatpush1.bf16.msra.mxu0 0
      %2280 = vmatprep.subr.bf16.mxu0 0
      %2281 = vmatpush1.bf16.msra.mxu0 0
      %2282 = vmatprep.subr.bf16.mxu0 0
      %2283 = vmatpush1.bf16.msra.mxu0 0
      %2284 = vmatprep.subr.bf16.mxu0 0
      %2285 = vmatpush1.bf16.msra.mxu0 0
      %2286 = vmatprep.mubr.bf16.mxu0 0
      %2287 = vmatmul.mubr.bf16.gmra.mrb[0].mxu0 %v965
      %v2288 = vpop.f32.mrb[0].mxu0
      %v2289 = vadd.f32 0.0, %v2288
      %v2290 = vpop.f32.mrb[0].mxu0
      %v2291 = vpop.f32.mrb[0].mxu0
      %v2292 = vadd.f32 0.0, %v2291
      %v2293 = vpop.f32.mrb[0].mxu0
      %2294 = vmatprep.mubr.bf16.mxu0 0
      %2295 = vmatmul.mubr.bf16.gmra.mrb[0].mxu0 %v968
      %v2296 = vpop.f32.mrb[0].mxu0
      %v2297 = vadd.f32 0.0, %v2296
      %v2298 = vpop.f32.mrb[0].mxu0
      %v2299 = vpop.f32.mrb[0].mxu0
      %v2300 = vadd.f32 0.0, %v2299
      %v2301 = vpop.f32.mrb[0].mxu0
      %2302 = vmatprep.mubr.bf16.mxu0 0
      %2303 = vmatmul.mubr.bf16.gmra.mrb[0].mxu0 %v971
      %v2304 = vpop.f32.mrb[0].mxu0
      %v2305 = vadd.f32 0.0, %v2304
      %v2306 = vpop.f32.mrb[0].mxu0
      %v2307 = vpop.f32.mrb[0].mxu0
      %v2308 = vadd.f32 0.0, %v2307
      %v2309 = vpop.f32.mrb[0].mxu0
      %2310 = vmatprep.mubr.bf16.mxu0 0
      %2311 = vmatmul.mubr.bf16.gmra.mrb[0].mxu0 %v974
      %v2312 = vpop.f32.mrb[0].mxu0
      %v2313 = vadd.f32 0.0, %v2312
      %v2314 = vpop.f32.mrb[0].mxu0
      %v2315 = vpop.f32.mrb[0].mxu0
      %v2316 = vadd.f32 0.0, %v2315
      %v2317 = vpop.f32.mrb[0].mxu0
      %2318 = vmatprep.mubr.bf16.mxu0 0
      %2319 = vmatmul.mubr.bf16.gmra.mrb[0].mxu0 %v977
      %v2320 = vpop.f32.mrb[0].mxu0
      %v2321 = vadd.f32 0.0, %v2320
      %v2322 = vpop.f32.mrb[0].mxu0
      %v2323 = vpop.f32.mrb[0].mxu0
      %v2324 = vadd.f32 0.0, %v2323
      %v2325 = vpop.f32.mrb[0].mxu0
      %2326 = vmatprep.mubr.bf16.mxu0 0
      %2327 = vmatmul.mubr.bf16.gmra.mrb[0].mxu0 %v980
      %v2328 = vpop.f32.mrb[0].mxu0
      %v2329 = vadd.f32 0.0, %v2328
      %v2330 = vpop.f32.mrb[0].mxu0
      %v2331 = vpop.f32.mrb[0].mxu0
      %v2332 = vadd.f32 0.0, %v2331
      %v2333 = vpop.f32.mrb[0].mxu0
      %2334 = vmatprep.mubr.bf16.mxu0 0
      %2335 = vmatmul.mubr.bf16.gmra.mrb[0].mxu0 %v983
      %v2336 = vpop.f32.mrb[0].mxu0
      %v2337 = vadd.f32 0.0, %v2336
      %v2338 = vpop.f32.mrb[0].mxu0
      %v2339 = vpop.f32.mrb[0].mxu0
      %v2340 = vadd.f32 0.0, %v2339
      %v2341 = vpop.f32.mrb[0].mxu0
      %2342 = vmatprep.mubr.bf16.mxu0 0
      %2343 = vmatmul.mubr.bf16.gmra.mrb[0].mxu0 %v986
      %v2344 = vpop.f32.mrb[0].mxu0
      %v2345 = vadd.f32 0.0, %v2344
      %v2346 = vpop.f32.mrb[0].mxu0
      %v2347 = vpop.f32.mrb[0].mxu0
      %v2348 = vadd.f32 0.0, %v2347
      %v2349 = vpop.f32.mrb[0].mxu0
      %2350 = vmatprep.mubr.bf16.mxu0 0
      %2351 = vmatmul.mubr.bf16.gmra.mrb[0].mxu0 %v989
      %v2352 = vpop.f32.mrb[0].mxu0
      %v2353 = vadd.f32 0.0, %v2352
      %v2354 = vpop.f32.mrb[0].mxu0
      %v2355 = vpop.f32.mrb[0].mxu0
      %v2356 = vadd.f32 0.0, %v2355
      %v2357 = vpop.f32.mrb[0].mxu0
      %2358 = vmatprep.mubr.bf16.mxu0 0
      %2359 = vmatmul.mubr.bf16.gmra.mrb[0].mxu0 %v992
      %v2360 = vpop.f32.mrb[0].mxu0
      %v2361 = vadd.f32 0.0, %v2360
      %v2362 = vpop.f32.mrb[0].mxu0
      %v2363 = vpop.f32.mrb[0].mxu0
      %v2364 = vadd.f32 0.0, %v2363
      %v2365 = vpop.f32.mrb[0].mxu0
      %2366 = vmatprep.mubr.bf16.mxu0 0
      %2367 = vmatmul.mubr.bf16.gmra.mrb[0].mxu0 %v995
      %v2368 = vpop.f32.mrb[0].mxu0
      %v2369 = vadd.f32 0.0, %v2368
      %v2370 = vpop.f32.mrb[0].mxu0
      %v2371 = vpop.f32.mrb[0].mxu0
      %v2372 = vadd.f32 0.0, %v2371
      %v2373 = vpop.f32.mrb[0].mxu0
      %2374 = vmatprep.mubr.bf16.mxu0 0
      %2375 = vmatmul.mubr.bf16.gmra.mrb[0].mxu0 %v998
      %v2376 = vpop.f32.mrb[0].mxu0
      %v2377 = vadd.f32 0.0, %v2376
      %v2378 = vpop.f32.mrb[0].mxu0
      %v2379 = vpop.f32.mrb[0].mxu0
      %v2380 = vadd.f32 0.0, %v2379
      %v2381 = vpop.f32.mrb[0].mxu0
      %2382 = vmatprep.mubr.bf16.mxu0 0
      %2383 = vmatmul.mubr.bf16.gmra.mrb[0].mxu0 %v1001
      %v2384 = vpop.f32.mrb[0].mxu0
      %v2385 = vadd.f32 0.0, %v2384
      %v2386 = vpop.f32.mrb[0].mxu0
      %v2387 = vpop.f32.mrb[0].mxu0
      %v2388 = vadd.f32 0.0, %v2387
      %v2389 = vpop.f32.mrb[0].mxu0
      %2390 = vmatprep.mubr.bf16.mxu0 0
      %2391 = vmatmul.mubr.bf16.gmra.mrb[0].mxu0 %v1004
      %v2392 = vpop.f32.mrb[0].mxu0
      %v2393 = vadd.f32 0.0, %v2392
      %v2394 = vpop.f32.mrb[0].mxu0
      %v2395 = vpop.f32.mrb[0].mxu0
      %v2396 = vadd.f32 0.0, %v2395
      %v2397 = vpop.f32.mrb[0].mxu0
      %2398 = vmatprep.mubr.bf16.mxu0 0
      %2399 = vmatmul.mubr.bf16.gmra.mrb[0].mxu0 %v1603
      %v2400 = vpop.f32.mrb[0].mxu0
      %v2401 = vadd.f32 0.0, %v2400
      %v2402 = vpop.f32.mrb[0].mxu0
      %v2403 = vpop.f32.mrb[0].mxu0
      %v2404 = vadd.f32 0.0, %v2403
      %v2405 = vpop.f32.mrb[0].mxu0
      %2406 = vmatprep.mubr.bf16.mxu0 0
      %2407 = vmatmul.mubr.bf16.gmra.mrb[0].mxu0 %v2249
      %v2408 = vpop.f32.mrb[0].mxu0
      %v2409 = vadd.f32 0.0, %v2408
      %v2410 = vpop.f32.mrb[0].mxu0
      %v2411 = vpop.f32.mrb[0].mxu0
      %v2412 = vadd.f32 0.0, %v2411
      %v2413 = vpop.f32.mrb[0].mxu0
      %2414 = vdwg.mxu0
      %v2415 = vadd.f32 %v2209, %v2289
      %v2416 = vadd.f32 %v2210, %v2292
      %v2417 = vadd.f32 %v2211, %v2297
      %v2418 = vadd.f32 %v2212, %v2300
      %v2419 = vadd.f32 %v2213, %v2305
      %v2420 = vadd.f32 %v2214, %v2308
      %v2421 = vadd.f32 %v2215, %v2313
      %v2422 = vadd.f32 %v2216, %v2316
      %v2423 = vadd.f32 %v2217, %v2321
      %v2424 = vadd.f32 %v2218, %v2324
      %v2425 = vadd.f32 %v2219, %v2329
      %v2426 = vadd.f32 %v2220, %v2332
      %v2427 = vadd.f32 %v2221, %v2337
      %v2428 = vadd.f32 %v2222, %v2340
      %v2429 = vadd.f32 %v2223, %v2345
      %v2430 = vadd.f32 %v2224, %v2348
      %v2431 = vadd.f32 %v2225, %v2353
      %v2432 = vadd.f32 %v2226, %v2356
      %v2433 = vadd.f32 %v2227, %v2361
      %v2434 = vadd.f32 %v2228, %v2364
      %v2435 = vadd.f32 %v2229, %v2369
      %v2436 = vadd.f32 %v2230, %v2372
      %v2437 = vadd.f32 %v2231, %v2377
      %v2438 = vadd.f32 %v2232, %v2380
      %v2439 = vadd.f32 %v2233, %v2385
      %v2440 = vadd.f32 %v2234, %v2388
      %v2441 = vadd.f32 %v2235, %v2393
      %v2442 = vadd.f32 %v2236, %v2396
      %v2443 = vadd.f32 %v2237, %v2401
      %v2444 = vadd.f32 %v2238, %v2404
      %v2445 = vadd.f32 %v2239, %v2409
      %v2446 = vadd.f32 %v2240, %v2412
      %v2448 = vshrl.u32 %v223, 16
      %v2450 = vrot.slane %v2448, 4
      %v2451 = vshll.u32 %v223, 16
      %v2453 = vrot.slane %v2451, 5
      %v2454 = vor.u32 %v2450, %v2453
      %v2455 = vrot.slane %v2454, 4
      %v2457 = vshll.u32 %v224, 16
      %v2459 = vrot.slane %v2457, 5
      %v2460 = vsel %vm229, %v2455, %v2459
      %v2461 = vshrl.u32 %v224, 16
      %v2463 = vrot.slane %v2461, 4
      %v2464 = vor.u32 %v2463, %v2459
      %v2465 = vrot.slane %v2464, 4
      %v2467 = vshll.u32 %v225, 16
      %v2469 = vrot.slane %v2467, 5
      %v2470 = vsel %vm229, %v2465, %v2469
      %s2471 = scalar_lea.vmem %s1, 28
      %v2472 = vld [vmem:[%s2471] sm:$0xf]
      %v2473 = vunpack.c.l.b16 %v2460
      %v2474 = vunpack.c.l.b16 %v2470
      %v2475 = vpack.c.b16 %v2474, %v2473
      %v2477 = vsel %vm664, %v2475, 0
      %v2480 = vsel %vm713, %v2472, 0
      %2482 = vmatprep.subr.bf16.mxu0 0
      %2483 = vmatpush1.bf16.msra.mxu0 %v2480
      %2484 = vmatprep.subr.bf16.mxu0 0
      %2485 = vmatpush1.bf16.msra.mxu0 0
      %2486 = vmatprep.subr.bf16.mxu0 0
      %2487 = vmatpush1.bf16.msra.mxu0 0
      %2488 = vmatprep.subr.bf16.mxu0 0
      %2489 = vmatpush1.bf16.msra.mxu0 0
      %2490 = vmatprep.subr.bf16.mxu0 0
      %2491 = vmatpush1.bf16.msra.mxu0 0
      %2492 = vmatprep.subr.bf16.mxu0 0
      %2493 = vmatpush1.bf16.msra.mxu0 0
      %2494 = vmatprep.subr.bf16.mxu0 0
      %2495 = vmatpush1.bf16.msra.mxu0 0
      %2496 = vmatprep.subr.bf16.mxu0 0
      %2497 = vmatpush1.bf16.msra.mxu0 0
      %2498 = vmatprep.subr.bf16.mxu0 0
      %2499 = vmatpush1.bf16.msra.mxu0 0
      %2500 = vmatprep.subr.bf16.mxu0 0
      %2501 = vmatpush1.bf16.msra.mxu0 0
      %2502 = vmatprep.subr.bf16.mxu0 0
      %2503 = vmatpush1.bf16.msra.mxu0 0
      %2504 = vmatprep.subr.bf16.mxu0 0
      %2505 = vmatpush1.bf16.msra.mxu0 0
      %2506 = vmatprep.subr.bf16.mxu0 0
      %2507 = vmatpush1.bf16.msra.mxu0 0
      %2508 = vmatprep.subr.bf16.mxu0 0
      %2509 = vmatpush1.bf16.msra.mxu0 0
      %2510 = vmatprep.subr.bf16.mxu0 0
      %2511 = vmatpush1.bf16.msra.mxu0 0
      %2512 = vmatprep.subr.bf16.mxu0 0
      %2513 = vmatpush1.bf16.msra.mxu0 0
      %2514 = vmatprep.mubr.bf16.mxu0 0
      %2515 = vmatmul.mubr.bf16.gmra.mrb[0].mxu0 %v672
      %v2516 = vpop.f32.mrb[0].mxu0
      %v2517 = vadd.f32 0.0, %v2516
      %v2518 = vpop.f32.mrb[0].mxu0
      %v2519 = vpop.f32.mrb[0].mxu0
      %v2520 = vadd.f32 0.0, %v2519
      %v2521 = vpop.f32.mrb[0].mxu0
      %2522 = vmatprep.mubr.bf16.mxu0 0
      %2523 = vmatmul.mubr.bf16.gmra.mrb[0].mxu0 %v675
      %v2524 = vpop.f32.mrb[0].mxu0
      %v2525 = vadd.f32 0.0, %v2524
      %v2526 = vpop.f32.mrb[0].mxu0
      %v2527 = vpop.f32.mrb[0].mxu0
      %v2528 = vadd.f32 0.0, %v2527
      %v2529 = vpop.f32.mrb[0].mxu0
      %2530 = vmatprep.mubr.bf16.mxu0 0
      %2531 = vmatmul.mubr.bf16.gmra.mrb[0].mxu0 %v678
      %v2532 = vpop.f32.mrb[0].mxu0
      %v2533 = vadd.f32 0.0, %v2532
      %v2534 = vpop.f32.mrb[0].mxu0
      %v2535 = vpop.f32.mrb[0].mxu0
      %v2536 = vadd.f32 0.0, %v2535
      %v2537 = vpop.f32.mrb[0].mxu0
      %2538 = vmatprep.mubr.bf16.mxu0 0
      %2539 = vmatmul.mubr.bf16.gmra.mrb[0].mxu0 %v681
      %v2540 = vpop.f32.mrb[0].mxu0
      %v2541 = vadd.f32 0.0, %v2540
      %v2542 = vpop.f32.mrb[0].mxu0
      %v2543 = vpop.f32.mrb[0].mxu0
      %v2544 = vadd.f32 0.0, %v2543
      %v2545 = vpop.f32.mrb[0].mxu0
      %2546 = vmatprep.mubr.bf16.mxu0 0
      %2547 = vmatmul.mubr.bf16.gmra.mrb[0].mxu0 %v684
      %v2548 = vpop.f32.mrb[0].mxu0
      %v2549 = vadd.f32 0.0, %v2548
      %v2550 = vpop.f32.mrb[0].mxu0
      %v2551 = vpop.f32.mrb[0].mxu0
      %v2552 = vadd.f32 0.0, %v2551
      %v2553 = vpop.f32.mrb[0].mxu0
      %2554 = vmatprep.mubr.bf16.mxu0 0
      %2555 = vmatmul.mubr.bf16.gmra.mrb[0].mxu0 %v687
      %v2556 = vpop.f32.mrb[0].mxu0
      %v2557 = vadd.f32 0.0, %v2556
      %v2558 = vpop.f32.mrb[0].mxu0
      %v2559 = vpop.f32.mrb[0].mxu0
      %v2560 = vadd.f32 0.0, %v2559
      %v2561 = vpop.f32.mrb[0].mxu0
      %2562 = vmatprep.mubr.bf16.mxu0 0
      %2563 = vmatmul.mubr.bf16.gmra.mrb[0].mxu0 %v690
      %v2564 = vpop.f32.mrb[0].mxu0
      %v2565 = vadd.f32 0.0, %v2564
      %v2566 = vpop.f32.mrb[0].mxu0
      %v2567 = vpop.f32.mrb[0].mxu0
      %v2568 = vadd.f32 0.0, %v2567
      %v2569 = vpop.f32.mrb[0].mxu0
      %2570 = vmatprep.mubr.bf16.mxu0 0
      %2571 = vmatmul.mubr.bf16.gmra.mrb[0].mxu0 %v693
      %v2572 = vpop.f32.mrb[0].mxu0
      %v2573 = vadd.f32 0.0, %v2572
      %v2574 = vpop.f32.mrb[0].mxu0
      %v2575 = vpop.f32.mrb[0].mxu0
      %v2576 = vadd.f32 0.0, %v2575
      %v2577 = vpop.f32.mrb[0].mxu0
      %2578 = vmatprep.mubr.bf16.mxu0 0
      %2579 = vmatmul.mubr.bf16.gmra.mrb[0].mxu0 %v696
      %v2580 = vpop.f32.mrb[0].mxu0
      %v2581 = vadd.f32 0.0, %v2580
      %v2582 = vpop.f32.mrb[0].mxu0
      %v2583 = vpop.f32.mrb[0].mxu0
      %v2584 = vadd.f32 0.0, %v2583
      %v2585 = vpop.f32.mrb[0].mxu0
      %2586 = vmatprep.mubr.bf16.mxu0 0
      %2587 = vmatmul.mubr.bf16.gmra.mrb[0].mxu0 %v699
      %v2588 = vpop.f32.mrb[0].mxu0
      %v2589 = vadd.f32 0.0, %v2588
      %v2590 = vpop.f32.mrb[0].mxu0
      %v2591 = vpop.f32.mrb[0].mxu0
      %v2592 = vadd.f32 0.0, %v2591
      %v2593 = vpop.f32.mrb[0].mxu0
      %2594 = vmatprep.mubr.bf16.mxu0 0
      %2595 = vmatmul.mubr.bf16.gmra.mrb[0].mxu0 %v702
      %v2596 = vpop.f32.mrb[0].mxu0
      %v2597 = vadd.f32 0.0, %v2596
      %v2598 = vpop.f32.mrb[0].mxu0
      %v2599 = vpop.f32.mrb[0].mxu0
      %v2600 = vadd.f32 0.0, %v2599
      %v2601 = vpop.f32.mrb[0].mxu0
      %2602 = vmatprep.mubr.bf16.mxu0 0
      %2603 = vmatmul.mubr.bf16.gmra.mrb[0].mxu0 %v705
      %v2604 = vpop.f32.mrb[0].mxu0
      %v2605 = vadd.f32 0.0, %v2604
      %v2606 = vpop.f32.mrb[0].mxu0
      %v2607 = vpop.f32.mrb[0].mxu0
      %v2608 = vadd.f32 0.0, %v2607
      %v2609 = vpop.f32.mrb[0].mxu0
      %2610 = vmatprep.mubr.bf16.mxu0 0
      %2611 = vmatmul.mubr.bf16.gmra.mrb[0].mxu0 %v708
      %v2612 = vpop.f32.mrb[0].mxu0
      %v2613 = vadd.f32 0.0, %v2612
      %v2614 = vpop.f32.mrb[0].mxu0
      %v2615 = vpop.f32.mrb[0].mxu0
      %v2616 = vadd.f32 0.0, %v2615
      %v2617 = vpop.f32.mrb[0].mxu0
      %2618 = vmatprep.mubr.bf16.mxu0 0
      %2619 = vmatmul.mubr.bf16.gmra.mrb[0].mxu0 %v711
      %v2620 = vpop.f32.mrb[0].mxu0
      %v2621 = vadd.f32 0.0, %v2620
      %v2622 = vpop.f32.mrb[0].mxu0
      %v2623 = vpop.f32.mrb[0].mxu0
      %v2624 = vadd.f32 0.0, %v2623
      %v2625 = vpop.f32.mrb[0].mxu0
      %2626 = vmatprep.mubr.bf16.mxu0 0
      %2627 = vmatmul.mubr.bf16.gmra.mrb[0].mxu0 %v1831
      %v2628 = vpop.f32.mrb[0].mxu0
      %v2629 = vadd.f32 0.0, %v2628
      %v2630 = vpop.f32.mrb[0].mxu0
      %v2631 = vpop.f32.mrb[0].mxu0
      %v2632 = vadd.f32 0.0, %v2631
      %v2633 = vpop.f32.mrb[0].mxu0
      %2634 = vmatprep.mubr.bf16.mxu0 0
      %2635 = vmatmul.mubr.bf16.gmra.mrb[0].mxu0 %v2477
      %v2636 = vpop.f32.mrb[0].mxu0
      %v2637 = vadd.f32 0.0, %v2636
      %v2638 = vpop.f32.mrb[0].mxu0
      %v2639 = vpop.f32.mrb[0].mxu0
      %v2640 = vadd.f32 0.0, %v2639
      %v2641 = vpop.f32.mrb[0].mxu0
      %2642 = vdwg.mxu0
      %v2643 = vadd.f32 %v2415, %v2517
      %v2644 = vadd.f32 %v2416, %v2520
      %v2645 = vadd.f32 %v2417, %v2525
      %v2646 = vadd.f32 %v2418, %v2528
      %v2647 = vadd.f32 %v2419, %v2533
      %v2648 = vadd.f32 %v2420, %v2536
      %v2649 = vadd.f32 %v2421, %v2541
      %v2650 = vadd.f32 %v2422, %v2544
      %v2651 = vadd.f32 %v2423, %v2549
      %v2652 = vadd.f32 %v2424, %v2552
      %v2653 = vadd.f32 %v2425, %v2557
      %v2654 = vadd.f32 %v2426, %v2560
      %v2655 = vadd.f32 %v2427, %v2565
      %v2656 = vadd.f32 %v2428, %v2568
      %v2657 = vadd.f32 %v2429, %v2573
      %v2658 = vadd.f32 %v2430, %v2576
      %v2659 = vadd.f32 %v2431, %v2581
      %v2660 = vadd.f32 %v2432, %v2584
      %v2661 = vadd.f32 %v2433, %v2589
      %v2662 = vadd.f32 %v2434, %v2592
      %v2663 = vadd.f32 %v2435, %v2597
      %v2664 = vadd.f32 %v2436, %v2600
      %v2665 = vadd.f32 %v2437, %v2605
      %v2666 = vadd.f32 %v2438, %v2608
      %v2667 = vadd.f32 %v2439, %v2613
      %v2668 = vadd.f32 %v2440, %v2616
      %v2669 = vadd.f32 %v2441, %v2621
      %v2670 = vadd.f32 %v2442, %v2624
      %v2671 = vadd.f32 %v2443, %v2629
      %v2672 = vadd.f32 %v2444, %v2632
      %v2673 = vadd.f32 %v2445, %v2637
      %v2674 = vadd.f32 %v2446, %v2640
      %v2676 = vrot.slane %v223, 5
      %v2677 = vrot.slane %v2676, 4
      %v2678 = vrot.slane %v224, 5
      %v2679 = vsel %vm1188, %v2677, %v2678
      %v2680 = vrot.slane %v2678, 4
      %v2681 = vrot.slane %v225, 5
      %v2682 = vsel %vm1188, %v2680, %v2681
      %s2683 = scalar_lea.vmem %s1, 32
      %v2684 = vld [vmem:[%s2683] sm:$0xf]
      %v2685 = vunpack.c.l.b16 %v2679
      %v2686 = vunpack.c.l.b16 %v2682
      %v2687 = vpack.c.b16 %v2686, %v2685
      %v2689 = vsel %vm664, %v2687, 0
      %v2692 = vsel %vm713, %v2684, 0
      %2694 = vmatprep.subr.bf16.mxu0 0
      %2695 = vmatpush1.bf16.msra.mxu0 %v2692
      %2696 = vmatprep.subr.bf16.mxu0 0
      %2697 = vmatpush1.bf16.msra.mxu0 0
      %2698 = vmatprep.subr.bf16.mxu0 0
      %2699 = vmatpush1.bf16.msra.mxu0 0
      %2700 = vmatprep.subr.bf16.mxu0 0
      %2701 = vmatpush1.bf16.msra.mxu0 0
      %2702 = vmatprep.subr.bf16.mxu0 0
      %2703 = vmatpush1.bf16.msra.mxu0 0
      %2704 = vmatprep.subr.bf16.mxu0 0
      %2705 = vmatpush1.bf16.msra.mxu0 0
      %2706 = vmatprep.subr.bf16.mxu0 0
      %2707 = vmatpush1.bf16.msra.mxu0 0
      %2708 = vmatprep.subr.bf16.mxu0 0
      %2709 = vmatpush1.bf16.msra.mxu0 0
      %2710 = vmatprep.subr.bf16.mxu0 0
      %2711 = vmatpush1.bf16.msra.mxu0 0
      %2712 = vmatprep.subr.bf16.mxu0 0
      %2713 = vmatpush1.bf16.msra.mxu0 0
      %2714 = vmatprep.subr.bf16.mxu0 0
      %2715 = vmatpush1.bf16.msra.mxu0 0
      %2716 = vmatprep.subr.bf16.mxu0 0
      %2717 = vmatpush1.bf16.msra.mxu0 0
      %2718 = vmatprep.subr.bf16.mxu0 0
      %2719 = vmatpush1.bf16.msra.mxu0 0
      %2720 = vmatprep.subr.bf16.mxu0 0
      %2721 = vmatpush1.bf16.msra.mxu0 0
      %2722 = vmatprep.subr.bf16.mxu0 0
      %2723 = vmatpush1.bf16.msra.mxu0 0
      %2724 = vmatprep.subr.bf16.mxu0 0
      %2725 = vmatpush1.bf16.msra.mxu0 0
      %2726 = vmatprep.mubr.bf16.mxu0 0
      %2727 = vmatmul.mubr.bf16.gmra.mrb[0].mxu0 %v1358
      %v2728 = vpop.f32.mrb[0].mxu0
      %v2729 = vadd.f32 0.0, %v2728
      %v2730 = vpop.f32.mrb[0].mxu0
      %v2731 = vpop.f32.mrb[0].mxu0
      %v2732 = vadd.f32 0.0, %v2731
      %v2733 = vpop.f32.mrb[0].mxu0
      %2734 = vmatprep.mubr.bf16.mxu0 0
      %2735 = vmatmul.mubr.bf16.gmra.mrb[0].mxu0 %v1361
      %v2736 = vpop.f32.mrb[0].mxu0
      %v2737 = vadd.f32 0.0, %v2736
      %v2738 = vpop.f32.mrb[0].mxu0
      %v2739 = vpop.f32.mrb[0].mxu0
      %v2740 = vadd.f32 0.0, %v2739
      %v2741 = vpop.f32.mrb[0].mxu0
      %2742 = vmatprep.mubr.bf16.mxu0 0
      %2743 = vmatmul.mubr.bf16.gmra.mrb[0].mxu0 %v1364
      %v2744 = vpop.f32.mrb[0].mxu0
      %v2745 = vadd.f32 0.0, %v2744
      %v2746 = vpop.f32.mrb[0].mxu0
      %v2747 = vpop.f32.mrb[0].mxu0
      %v2748 = vadd.f32 0.0, %v2747
      %v2749 = vpop.f32.mrb[0].mxu0
      %2750 = vmatprep.mubr.bf16.mxu0 0
      %2751 = vmatmul.mubr.bf16.gmra.mrb[0].mxu0 %v1367
      %v2752 = vpop.f32.mrb[0].mxu0
      %v2753 = vadd.f32 0.0, %v2752
      %v2754 = vpop.f32.mrb[0].mxu0
      %v2755 = vpop.f32.mrb[0].mxu0
      %v2756 = vadd.f32 0.0, %v2755
      %v2757 = vpop.f32.mrb[0].mxu0
      %2758 = vmatprep.mubr.bf16.mxu0 0
      %2759 = vmatmul.mubr.bf16.gmra.mrb[0].mxu0 %v1370
      %v2760 = vpop.f32.mrb[0].mxu0
      %v2761 = vadd.f32 0.0, %v2760
      %v2762 = vpop.f32.mrb[0].mxu0
      %v2763 = vpop.f32.mrb[0].mxu0
      %v2764 = vadd.f32 0.0, %v2763
      %v2765 = vpop.f32.mrb[0].mxu0
      %2766 = vmatprep.mubr.bf16.mxu0 0
      %2767 = vmatmul.mubr.bf16.gmra.mrb[0].mxu0 %v1373
      %v2768 = vpop.f32.mrb[0].mxu0
      %v2769 = vadd.f32 0.0, %v2768
      %v2770 = vpop.f32.mrb[0].mxu0
      %v2771 = vpop.f32.mrb[0].mxu0
      %v2772 = vadd.f32 0.0, %v2771
      %v2773 = vpop.f32.mrb[0].mxu0
      %2774 = vmatprep.mubr.bf16.mxu0 0
      %2775 = vmatmul.mubr.bf16.gmra.mrb[0].mxu0 %v1376
      %v2776 = vpop.f32.mrb[0].mxu0
      %v2777 = vadd.f32 0.0, %v2776
      %v2778 = vpop.f32.mrb[0].mxu0
      %v2779 = vpop.f32.mrb[0].mxu0
      %v2780 = vadd.f32 0.0, %v2779
      %v2781 = vpop.f32.mrb[0].mxu0
      %2782 = vmatprep.mubr.bf16.mxu0 0
      %2783 = vmatmul.mubr.bf16.gmra.mrb[0].mxu0 %v1379
      %v2784 = vpop.f32.mrb[0].mxu0
      %v2785 = vadd.f32 0.0, %v2784
      %v2786 = vpop.f32.mrb[0].mxu0
      %v2787 = vpop.f32.mrb[0].mxu0
      %v2788 = vadd.f32 0.0, %v2787
      %v2789 = vpop.f32.mrb[0].mxu0
      %2790 = vmatprep.mubr.bf16.mxu0 0
      %2791 = vmatmul.mubr.bf16.gmra.mrb[0].mxu0 %v1382
      %v2792 = vpop.f32.mrb[0].mxu0
      %v2793 = vadd.f32 0.0, %v2792
      %v2794 = vpop.f32.mrb[0].mxu0
      %v2795 = vpop.f32.mrb[0].mxu0
      %v2796 = vadd.f32 0.0, %v2795
      %v2797 = vpop.f32.mrb[0].mxu0
      %2798 = vmatprep.mubr.bf16.mxu0 0
      %2799 = vmatmul.mubr.bf16.gmra.mrb[0].mxu0 %v1385
      %v2800 = vpop.f32.mrb[0].mxu0
      %v2801 = vadd.f32 0.0, %v2800
      %v2802 = vpop.f32.mrb[0].mxu0
      %v2803 = vpop.f32.mrb[0].mxu0
      %v2804 = vadd.f32 0.0, %v2803
      %v2805 = vpop.f32.mrb[0].mxu0
      %2806 = vmatprep.mubr.bf16.mxu0 0
      %2807 = vmatmul.mubr.bf16.gmra.mrb[0].mxu0 %v1388
      %v2808 = vpop.f32.mrb[0].mxu0
      %v2809 = vadd.f32 0.0, %v2808
      %v2810 = vpop.f32.mrb[0].mxu0
      %v2811 = vpop.f32.mrb[0].mxu0
      %v2812 = vadd.f32 0.0, %v2811
      %v2813 = vpop.f32.mrb[0].mxu0
      %2814 = vmatprep.mubr.bf16.mxu0 0
      %2815 = vmatmul.mubr.bf16.gmra.mrb[0].mxu0 %v1391
      %v2816 = vpop.f32.mrb[0].mxu0
      %v2817 = vadd.f32 0.0, %v2816
      %v2818 = vpop.f32.mrb[0].mxu0
      %v2819 = vpop.f32.mrb[0].mxu0
      %v2820 = vadd.f32 0.0, %v2819
      %v2821 = vpop.f32.mrb[0].mxu0
      %2822 = vmatprep.mubr.bf16.mxu0 0
      %2823 = vmatmul.mubr.bf16.gmra.mrb[0].mxu0 %v1394
      %v2824 = vpop.f32.mrb[0].mxu0
      %v2825 = vadd.f32 0.0, %v2824
      %v2826 = vpop.f32.mrb[0].mxu0
      %v2827 = vpop.f32.mrb[0].mxu0
      %v2828 = vadd.f32 0.0, %v2827
      %v2829 = vpop.f32.mrb[0].mxu0
      %2830 = vmatprep.mubr.bf16.mxu0 0
      %2831 = vmatmul.mubr.bf16.gmra.mrb[0].mxu0 %v1397
      %v2832 = vpop.f32.mrb[0].mxu0
      %v2833 = vadd.f32 0.0, %v2832
      %v2834 = vpop.f32.mrb[0].mxu0
      %v2835 = vpop.f32.mrb[0].mxu0
      %v2836 = vadd.f32 0.0, %v2835
      %v2837 = vpop.f32.mrb[0].mxu0
      %2838 = vmatprep.mubr.bf16.mxu0 0
      %2839 = vmatmul.mubr.bf16.gmra.mrb[0].mxu0 %v2043
      %v2840 = vpop.f32.mrb[0].mxu0
      %v2841 = vadd.f32 0.0, %v2840
      %v2842 = vpop.f32.mrb[0].mxu0
      %v2843 = vpop.f32.mrb[0].mxu0
      %v2844 = vadd.f32 0.0, %v2843
      %v2845 = vpop.f32.mrb[0].mxu0
      %2846 = vmatprep.mubr.bf16.mxu0 0
      %2847 = vmatmul.mubr.bf16.gmra.mrb[0].mxu0 %v2689
      %v2848 = vpop.f32.mrb[0].mxu0
      %v2849 = vadd.f32 0.0, %v2848
      %v2850 = vpop.f32.mrb[0].mxu0
      %v2851 = vpop.f32.mrb[0].mxu0
      %v2852 = vadd.f32 0.0, %v2851
      %v2853 = vpop.f32.mrb[0].mxu0
      %2854 = vdwg.mxu0
      %v2855 = vadd.f32 %v2643, %v2729
      %v2856 = vadd.f32 %v2644, %v2732
      %v2857 = vadd.f32 %v2645, %v2737
      %v2858 = vadd.f32 %v2646, %v2740
      %v2859 = vadd.f32 %v2647, %v2745
      %v2860 = vadd.f32 %v2648, %v2748
      %v2861 = vadd.f32 %v2649, %v2753
      %v2862 = vadd.f32 %v2650, %v2756
      %v2863 = vadd.f32 %v2651, %v2761
      %v2864 = vadd.f32 %v2652, %v2764
      %v2865 = vadd.f32 %v2653, %v2769
      %v2866 = vadd.f32 %v2654, %v2772
      %v2867 = vadd.f32 %v2655, %v2777
      %v2868 = vadd.f32 %v2656, %v2780
      %v2869 = vadd.f32 %v2657, %v2785
      %v2870 = vadd.f32 %v2658, %v2788
      %v2871 = vadd.f32 %v2659, %v2793
      %v2872 = vadd.f32 %v2660, %v2796
      %v2873 = vadd.f32 %v2661, %v2801
      %v2874 = vadd.f32 %v2662, %v2804
      %v2875 = vadd.f32 %v2663, %v2809
      %v2876 = vadd.f32 %v2664, %v2812
      %v2877 = vadd.f32 %v2665, %v2817
      %v2878 = vadd.f32 %v2666, %v2820
      %v2879 = vadd.f32 %v2667, %v2825
      %v2880 = vadd.f32 %v2668, %v2828
      %v2881 = vadd.f32 %v2669, %v2833
      %v2882 = vadd.f32 %v2670, %v2836
      %v2883 = vadd.f32 %v2671, %v2841
      %v2884 = vadd.f32 %v2672, %v2844
      %v2885 = vadd.f32 %v2673, %v2849
      %v2886 = vadd.f32 %v2674, %v2852
      %v2887 = vld [vmem:[%s2] sm:$0x1]
      %v2889 = vlaneseq
      %v2890 = vshrl.u32 %v2889, 7
      %v2891 = vsub.s32 0, %v2890
      %v2892 = vrot.slane %v2887, %v2891
      %v2894 = vadd.f32 %v2855, %v2892
      %v2895 = vadd.f32 %v2856, %v2892
      %v2896 = vadd.f32 %v2857, %v2892
      %v2897 = vadd.f32 %v2858, %v2892
      %v2898 = vadd.f32 %v2859, %v2892
      %v2899 = vadd.f32 %v2860, %v2892
      %v2900 = vadd.f32 %v2861, %v2892
      %v2901 = vadd.f32 %v2862, %v2892
      %v2902 = vadd.f32 %v2863, %v2892
      %v2903 = vadd.f32 %v2864, %v2892
      %v2904 = vadd.f32 %v2865, %v2892
      %v2905 = vadd.f32 %v2866, %v2892
      %v2906 = vadd.f32 %v2867, %v2892
      %v2907 = vadd.f32 %v2868, %v2892
      %v2908 = vadd.f32 %v2869, %v2892
      %v2909 = vadd.f32 %v2870, %v2892
      %v2910 = vadd.f32 %v2871, %v2892
      %v2911 = vadd.f32 %v2872, %v2892
      %v2912 = vadd.f32 %v2873, %v2892
      %v2913 = vadd.f32 %v2874, %v2892
      %v2914 = vadd.f32 %v2875, %v2892
      %v2915 = vadd.f32 %v2876, %v2892
      %v2916 = vadd.f32 %v2877, %v2892
      %v2917 = vadd.f32 %v2878, %v2892
      %v2918 = vadd.f32 %v2879, %v2892
      %v2919 = vadd.f32 %v2880, %v2892
      %v2920 = vadd.f32 %v2881, %v2892
      %v2921 = vadd.f32 %v2882, %v2892
      %v2922 = vadd.f32 %v2883, %v2892
      %v2923 = vadd.f32 %v2884, %v2892
      %v2924 = vadd.f32 %v2885, %v2892
      %v2925 = vadd.f32 %v2886, %v2892
      %v2926 = vmax.f32 %v2894, 0.0
      %v2927 = vmax.f32 %v2895, 0.0
      %v2928 = vmax.f32 %v2896, 0.0
      %v2929 = vmax.f32 %v2897, 0.0
      %v2930 = vmax.f32 %v2898, 0.0
      %v2931 = vmax.f32 %v2899, 0.0
      %v2932 = vmax.f32 %v2900, 0.0
      %v2933 = vmax.f32 %v2901, 0.0
      %v2934 = vmax.f32 %v2902, 0.0
      %v2935 = vmax.f32 %v2903, 0.0
      %v2936 = vmax.f32 %v2904, 0.0
      %v2937 = vmax.f32 %v2905, 0.0
      %v2938 = vmax.f32 %v2906, 0.0
      %v2939 = vmax.f32 %v2907, 0.0
      %v2940 = vmax.f32 %v2908, 0.0
      %v2941 = vmax.f32 %v2909, 0.0
      %v2942 = vmax.f32 %v2910, 0.0
      %v2943 = vmax.f32 %v2911, 0.0
      %v2944 = vmax.f32 %v2912, 0.0
      %v2945 = vmax.f32 %v2913, 0.0
      %v2946 = vmax.f32 %v2914, 0.0
      %v2947 = vmax.f32 %v2915, 0.0
      %v2948 = vmax.f32 %v2916, 0.0
      %v2949 = vmax.f32 %v2917, 0.0
      %v2950 = vmax.f32 %v2918, 0.0
      %v2951 = vmax.f32 %v2919, 0.0
      %v2952 = vmax.f32 %v2920, 0.0
      %v2953 = vmax.f32 %v2921, 0.0
      %v2954 = vmax.f32 %v2922, 0.0
      %v2955 = vmax.f32 %v2923, 0.0
      %v2956 = vmax.f32 %v2924, 0.0
      %v2957 = vmax.f32 %v2925, 0.0
      %v2958 = vpack.c.bf16 %v2927, %v2926
      %v2959 = vpack.c.bf16 %v2929, %v2928
      %v2960 = vpack.c.bf16 %v2931, %v2930
      %v2961 = vpack.c.bf16 %v2933, %v2932
      %v2962 = vpack.c.bf16 %v2935, %v2934
      %v2963 = vpack.c.bf16 %v2937, %v2936
      %v2964 = vpack.c.bf16 %v2939, %v2938
      %v2965 = vpack.c.bf16 %v2941, %v2940
      %v2966 = vpack.c.bf16 %v2943, %v2942
      %v2967 = vpack.c.bf16 %v2945, %v2944
      %v2968 = vpack.c.bf16 %v2947, %v2946
      %v2969 = vpack.c.bf16 %v2949, %v2948
      %v2970 = vpack.c.bf16 %v2951, %v2950
      %v2971 = vpack.c.bf16 %v2953, %v2952
      %v2972 = vpack.c.bf16 %v2955, %v2954
      %v2973 = vpack.c.bf16 %v2957, %v2956
      %v2990 = vunpack.c.l.b16 %v2958
      %v2991 = vunpack.c.h.b16 %v2958
      %v2992 = vunpack.c.l.b16 %v2959
      %v2993 = vunpack.c.h.b16 %v2959
      %v2994 = vunpack.c.l.b16 %v2960
      %v2995 = vunpack.c.h.b16 %v2960
      %v2996 = vunpack.c.l.b16 %v2961
      %v2997 = vunpack.c.h.b16 %v2961
      %v2998 = vunpack.c.l.b16 %v2962
      %v2999 = vunpack.c.h.b16 %v2962
      %v3000 = vunpack.c.l.b16 %v2963
      %v3001 = vunpack.c.h.b16 %v2963
      %v3002 = vunpack.c.l.b16 %v2964
      %v3003 = vunpack.c.h.b16 %v2964
      %v3004 = vunpack.c.l.b16 %v2965
      %v3005 = vunpack.c.h.b16 %v2965
      %v3006 = vunpack.c.l.b16 %v2966
      %v3007 = vunpack.c.h.b16 %v2966
      %v3008 = vunpack.c.l.b16 %v2967
      %v3009 = vunpack.c.h.b16 %v2967
      %v3010 = vunpack.c.l.b16 %v2968
      %v3011 = vunpack.c.h.b16 %v2968
      %v3012 = vunpack.c.l.b16 %v2969
      %v3013 = vunpack.c.h.b16 %v2969
      %v3014 = vunpack.c.l.b16 %v2970
      %v3015 = vunpack.c.h.b16 %v2970
      %v3016 = vunpack.c.l.b16 %v2971
      %v3017 = vunpack.c.h.b16 %v2971
      %v3018 = vunpack.c.l.b16 %v2972
      %v3019 = vunpack.c.h.b16 %v2972
      %v3020 = vunpack.c.l.b16 %v2973
      %v3021 = vunpack.c.h.b16 %v2973
      %v3022 = vpack.c.b16 %v2990, %v2990
      %v3023 = vpack.c.b16 %v2991, %v2991
      %v3024 = vpack.c.b16 %v2992, %v2992
      %v3025 = vpack.c.b16 %v2993, %v2993
      %v3026 = vpack.c.b16 %v2994, %v2994
      %v3027 = vpack.c.b16 %v2995, %v2995
      %v3028 = vpack.c.b16 %v2996, %v2996
      %v3029 = vpack.c.b16 %v2997, %v2997
      %v3030 = vpack.c.b16 %v2998, %v2998
      %v3031 = vpack.c.b16 %v2999, %v2999
      %v3032 = vpack.c.b16 %v3000, %v3000
      %v3033 = vpack.c.b16 %v3001, %v3001
      %v3034 = vpack.c.b16 %v3002, %v3002
      %v3035 = vpack.c.b16 %v3003, %v3003
      %v3036 = vpack.c.b16 %v3004, %v3004
      %v3037 = vpack.c.b16 %v3005, %v3005
      %v3038 = vpack.c.b16 %v3006, %v3006
      %v3039 = vpack.c.b16 %v3007, %v3007
      %v3040 = vpack.c.b16 %v3008, %v3008
      %v3041 = vpack.c.b16 %v3009, %v3009
      %v3042 = vpack.c.b16 %v3010, %v3010
      %v3043 = vpack.c.b16 %v3011, %v3011
      %v3044 = vpack.c.b16 %v3012, %v3012
      %v3045 = vpack.c.b16 %v3013, %v3013
      %v3046 = vpack.c.b16 %v3014, %v3014
      %v3047 = vpack.c.b16 %v3015, %v3015
      %v3048 = vpack.c.b16 %v3016, %v3016
      %v3049 = vpack.c.b16 %v3017, %v3017
      %v3050 = vpack.c.b16 %v3018, %v3018
      %v3051 = vpack.c.b16 %v3019, %v3019
      %v3052 = vpack.c.b16 %v3020, %v3020
      %v3053 = vpack.c.b16 %v3021, %v3021
      %vm3086 = vcmask 257024
      %3087 = vst.msk [vmem:[%s170] sm:$0xf] %vm3086, %v3022
      %3088 = vst.msk [vmem:[%s170 + $0x4] sm:$0xf] %vm3086, %v3023
      %3089 = vst.msk [vmem:[%s170 + $0x8] sm:$0xf] %vm3086, %v3024
      %3090 = vst.msk [vmem:[%s170 + $0xc] sm:$0xf] %vm3086, %v3025
      %3091 = vst.msk [vmem:[%s170 + $0x10] sm:$0xf] %vm3086, %v3026
      %3092 = vst.msk [vmem:[%s170 + $0x14] sm:$0xf] %vm3086, %v3027
      %3093 = vst.msk [vmem:[%s170 + $0x18] sm:$0xf] %vm3086, %v3028
      %3094 = vst.msk [vmem:[%s170 + $0x1c] sm:$0xf] %vm3086, %v3029
      %3095 = vst.msk [vmem:[%s170 + $0x20] sm:$0xf] %vm3086, %v3030
      %3096 = vst.msk [vmem:[%s170 + $0x24] sm:$0xf] %vm3086, %v3031
      %3097 = vst.msk [vmem:[%s170 + $0x28] sm:$0xf] %vm3086, %v3032
      %3098 = vst.msk [vmem:[%s170 + $0x2c] sm:$0xf] %vm3086, %v3033
      %3099 = vst.msk [vmem:[%s170 + $0x30] sm:$0xf] %vm3086, %v3034
      %3100 = vst.msk [vmem:[%s170 + $0x34] sm:$0xf] %vm3086, %v3035
      %3101 = vst.msk [vmem:[%s170 + $0x38] sm:$0xf] %vm3086, %v3036
      %3102 = vst.msk [vmem:[%s170 + $0x3c] sm:$0xf] %vm3086, %v3037
      %3103 = vst.msk [vmem:[%s170 + $0x40] sm:$0xf] %vm3086, %v3038
      %3104 = vst.msk [vmem:[%s170 + $0x44] sm:$0xf] %vm3086, %v3039
      %3105 = vst.msk [vmem:[%s170 + $0x48] sm:$0xf] %vm3086, %v3040
      %3106 = vst.msk [vmem:[%s170 + $0x4c] sm:$0xf] %vm3086, %v3041
      %3107 = vst.msk [vmem:[%s170 + $0x50] sm:$0xf] %vm3086, %v3042
      %3108 = vst.msk [vmem:[%s170 + $0x54] sm:$0xf] %vm3086, %v3043
      %3109 = vst.msk [vmem:[%s170 + $0x58] sm:$0xf] %vm3086, %v3044
      %3110 = vst.msk [vmem:[%s170 + $0x5c] sm:$0xf] %vm3086, %v3045
      %3111 = vst.msk [vmem:[%s170 + $0x60] sm:$0xf] %vm3086, %v3046
      %3112 = vst.msk [vmem:[%s170 + $0x64] sm:$0xf] %vm3086, %v3047
      %3113 = vst.msk [vmem:[%s170 + $0x68] sm:$0xf] %vm3086, %v3048
      %3114 = vst.msk [vmem:[%s170 + $0x6c] sm:$0xf] %vm3086, %v3049
      %3115 = vst.msk [vmem:[%s170 + $0x70] sm:$0xf] %vm3086, %v3050
      %3116 = vst.msk [vmem:[%s170 + $0x74] sm:$0xf] %vm3086, %v3051
      %3117 = vst.msk [vmem:[%s170 + $0x78] sm:$0xf] %vm3086, %v3052
      %3118 = vst.msk [vmem:[%s170 + $0x7c] sm:$0xf] %vm3086, %v3053
      %p3119 = scmp.lt.s32.totalorder %s14, 3
      %s3120 = scalar_select %p3119, %s14, 3
      %s3121 = smul.addr %s3120, 32
      %s3122 = smul.addr %s3121, 4
      %s3123 = scalar_lea.vmem %s3, %s3122
      // Predicated region
      $region33: #{img_backbone_forward.4} parent=31 // pred_check
        %p3124 = pneg %p100
      $region34: #{img_backbone_forward.4} parent=31 // pred_check_branch
        %3126 = sbr.rel (%p3124) target = $region36
      $region35: #{img_backbone_forward.4} parent=31 // pred_region
        _
      $region36: #{img_backbone_forward.4} parent=31 // pred_fallthru
        _
    $region32: #{img_backbone_forward.4} parent=5 // pred_fallthru
      _
    %p3127 = scmp.le.s32.totalorder 2, %s9
    // Predicated region
    $region37: #{img_backbone_forward.4} parent=5 // pred_check
      %p3128 = pneg %p3127
    $region38: #{img_backbone_forward.4} parent=5 // pred_check_branch
      %3130 = sbr.rel (%p3128) target = $region40
    $region39: #{img_backbone_forward.4} parent=5 // pred_region
      %s3131 = ssub.s32 %s9, 2
      // Predicated region
      $region41: #{img_backbone_forward.4} parent=39 // pred_check
        %p3132 = pneg %p106
      $region42: #{img_backbone_forward.4} parent=39 // pred_check_branch
        %3134 = sbr.rel (%p3132) target = $region44
      $region43: #{img_backbone_forward.4} parent=39 // pred_region
        %p3135 = scmp.lt.s32.totalorder %s15, 3
        %s3136 = scalar_select %p3135, %s15, 3
        %s3137 = smul.addr %s3136, 32
        %s3138 = smul.addr %s3137, 4
        %s3139 = scalar_lea.vmem %s3, %s3138
      $region44: #{img_backbone_forward.4} parent=39 // pred_fallthru
        _
    $region40: #{img_backbone_forward.4} parent=5 // pred_fallthru
      _
  $region6: #{img_backbone_forward.4} parent=0 // loop_footer
    %s13 = sadd.s32 1, %s9
  $region7: #{img_backbone_forward.4} parent=0 // loop_footer_branch
    %8 = sbr.rel target = $region3
  $region8: #{img_backbone_forward.4} parent=0 // loop_exit
    _

// kernel: img_backbone_forward.6
$region0: #{img_backbone_forward.6}
  #allocation0 [shape = 'u32[]', space=smem, size = 0x4, offset = 0x4, fixed_abs, tag = 'smem constant byte address 0x4 - core index']
  #allocation1 [shape = 'u32[144,128]{1,0:T(1,128)}', space=vmem, size = 0x12000, scoped, tag = 'internal scratch']
  %s0 = inlined_call_operand.vmem [shape: bf16[64,576], index: 0, kind: input, shape index: {}]
  %s1 = inlined_call_operand.vmem [shape: bf16[576,128], index: 1, kind: input, shape index: {}]
  %s2 = inlined_call_operand.vmem [shape: f32[1,128], index: 2, kind: input, shape index: {}]
  %s3 = inlined_call_operand.vmem [shape: bf16[128,128], index: 3, kind: input, shape index: {}]
  %s4 = inlined_call_operand.vmem [shape: f32[1,128], index: 4, kind: input, shape index: {}]
  %s5 = inlined_call_operand.vmem [shape: bf16[64,128], index: 5, kind: output, shape index: {}]
  %s6 = sld [smem:[#allocation0]]
  $region53: #{img_backbone_forward.6} parent=0
    _
  %s8 = ssub.s32 1, %s6
  %s9 = scalar_select 0, %s8, %s6
  loop: start=0, step=1, limit=4
  $region2: #{img_backbone_forward.6} parent=0 // loop_pre_header
    _
  $region3: #{img_backbone_forward.6} parent=0 // loop_header
    %s11 = sphi 0, %s15
    %p12 = scmp.ge.s32.totalorder %s11, 4
    %s21 = sphi 0, %s23
    %s24 = sphi 0, %s21
    %s25 = sphi 0, %s24
    %s41 = sphi 0, %s25
    %s45 = sphi 0, %s45
    %s47 = sphi 0, %s45
    %s48 = sphi 0, %s47
    %s62 = sphi 0, %s48
    %s66 = sphi 0, %s66
    %s68 = sphi 0, %s66
    %s69 = sphi 0, %s68
    %s83 = sphi 0, %s69
    %s87 = sphi 0, %s87
    %s89 = sphi 0, %s87
    %s90 = sphi 0, %s89
    %s104 = sphi 0, %s90
    %s108 = sphi 0, %s108
    %s110 = sphi 0, %s108
    %s111 = sphi 0, %s110
    %s125 = sphi 0, %s111
    %s131 = sphi 0, %s133
    %s134 = sphi 0, %s131
    %s135 = sphi 0, %s134
    %s151 = sphi 0, %s135
  $region4: #{img_backbone_forward.6} parent=0 // loop_header_branch
    %14 = sbr.rel (%p12) target = $region8
  $region5: #{img_backbone_forward.6} parent=0 // loop_body
    %s16 = ssub.s32 %s11, 1
    %s17 = ssub.s32 %s11, 2
    %s18 = sadd.s32 %s11, 1
    %s19 = ssub.s32 %s11, %s18
    %p20 = scmp.eq.s32.totalorder %s19, 0
    %s22 = sadd.s32 %s21, 1
    %s23 = scalar_select %p20, %s21, %s22
    %p26 = pneg %p20
    %p27 = scmp.eq.s32.totalorder %s11, 1
    %p28 = por %p26, %p27
    %p29 = scmp.ne.s32.totalorder %s21, %s24
    %p30 = scmp.eq.s32.totalorder %s11, 0
    %p31 = por %p29, %p30
    %p32 = scmp.ne.s32.totalorder %s21, %s24
    %p33 = scmp.eq.s32.totalorder %s16, 1
    %p34 = por %p32, %p33
    %p35 = scmp.ne.s32.totalorder %s24, %s25
    %p36 = scmp.eq.s32.totalorder %s16, 0
    %p37 = por %p35, %p36
    %p38 = scmp.ne.s32.totalorder %s24, %s25
    %p39 = scmp.eq.s32.totalorder %s17, 1
    %p40 = por %p38, %p39
    %p42 = scmp.ne.s32.totalorder %s25, %s41
    %p43 = scmp.eq.s32.totalorder %s17, 0
    %p44 = por %p42, %p43
    %s46 = sadd.s32 %s45, 1
    %p49 = scmp.eq.s32.totalorder %s11, 1
    %p50 = scmp.ne.s32.totalorder %s45, %s47
    %p51 = scmp.eq.s32.totalorder %s11, 0
    %p52 = por %p50, %p51
    %p53 = scmp.ne.s32.totalorder %s45, %s47
    %p54 = scmp.eq.s32.totalorder %s16, 1
    %p55 = por %p53, %p54
    %p56 = scmp.ne.s32.totalorder %s47, %s48
    %p57 = scmp.eq.s32.totalorder %s16, 0
    %p58 = por %p56, %p57
    %p59 = scmp.ne.s32.totalorder %s47, %s48
    %p60 = scmp.eq.s32.totalorder %s17, 1
    %p61 = por %p59, %p60
    %p63 = scmp.ne.s32.totalorder %s48, %s62
    %p64 = scmp.eq.s32.totalorder %s17, 0
    %p65 = por %p63, %p64
    %s67 = sadd.s32 %s66, 1
    %p70 = scmp.eq.s32.totalorder %s11, 1
    %p71 = scmp.ne.s32.totalorder %s66, %s68
    %p72 = scmp.eq.s32.totalorder %s11, 0
    %p73 = por %p71, %p72
    %p74 = scmp.ne.s32.totalorder %s66, %s68
    %p75 = scmp.eq.s32.totalorder %s16, 1
    %p76 = por %p74, %p75
    %p77 = scmp.ne.s32.totalorder %s68, %s69
    %p78 = scmp.eq.s32.totalorder %s16, 0
    %p79 = por %p77, %p78
    %p80 = scmp.ne.s32.totalorder %s68, %s69
    %p81 = scmp.eq.s32.totalorder %s17, 1
    %p82 = por %p80, %p81
    %p84 = scmp.ne.s32.totalorder %s69, %s83
    %p85 = scmp.eq.s32.totalorder %s17, 0
    %p86 = por %p84, %p85
    %s88 = sadd.s32 %s87, 1
    %p91 = scmp.eq.s32.totalorder %s11, 1
    %p92 = scmp.ne.s32.totalorder %s87, %s89
    %p93 = scmp.eq.s32.totalorder %s11, 0
    %p94 = por %p92, %p93
    %p95 = scmp.ne.s32.totalorder %s87, %s89
    %p96 = scmp.eq.s32.totalorder %s16, 1
    %p97 = por %p95, %p96
    %p98 = scmp.ne.s32.totalorder %s89, %s90
    %p99 = scmp.eq.s32.totalorder %s16, 0
    %p100 = por %p98, %p99
    %p101 = scmp.ne.s32.totalorder %s89, %s90
    %p102 = scmp.eq.s32.totalorder %s17, 1
    %p103 = por %p101, %p102
    %p105 = scmp.ne.s32.totalorder %s90, %s104
    %p106 = scmp.eq.s32.totalorder %s17, 0
    %p107 = por %p105, %p106
    %s109 = sadd.s32 %s108, 1
    %p112 = scmp.eq.s32.totalorder %s11, 1
    %p113 = scmp.ne.s32.totalorder %s108, %s110
    %p114 = scmp.eq.s32.totalorder %s11, 0
    %p115 = por %p113, %p114
    %p116 = scmp.ne.s32.totalorder %s108, %s110
    %p117 = scmp.eq.s32.totalorder %s16, 1
    %p118 = por %p116, %p117
    %p119 = scmp.ne.s32.totalorder %s110, %s111
    %p120 = scmp.eq.s32.totalorder %s16, 0
    %p121 = por %p119, %p120
    %p122 = scmp.ne.s32.totalorder %s110, %s111
    %p123 = scmp.eq.s32.totalorder %s17, 1
    %p124 = por %p122, %p123
    %p126 = scmp.ne.s32.totalorder %s111, %s125
    %p127 = scmp.eq.s32.totalorder %s17, 0
    %p128 = por %p126, %p127
    %s129 = ssub.s32 %s11, %s18
    %p130 = scmp.eq.s32.totalorder %s129, 0
    %s132 = sadd.s32 %s131, 1
    %s133 = scalar_select %p130, %s131, %s132
    %p136 = pneg %p130
    %p137 = scmp.eq.s32.totalorder %s11, 1
    %p138 = por %p136, %p137
    %p139 = scmp.ne.s32.totalorder %s131, %s134
    %p140 = scmp.eq.s32.totalorder %s11, 0
    %p141 = por %p139, %p140
    %p142 = scmp.ne.s32.totalorder %s131, %s134
    %p143 = scmp.eq.s32.totalorder %s16, 1
    %p144 = por %p142, %p143
    %p145 = scmp.ne.s32.totalorder %s134, %s135
    %p146 = scmp.eq.s32.totalorder %s16, 0
    %p147 = por %p145, %p146
    %p148 = scmp.ne.s32.totalorder %s134, %s135
    %p149 = scmp.eq.s32.totalorder %s17, 1
    %p150 = por %p148, %p149
    %p152 = scmp.ne.s32.totalorder %s135, %s151
    %p153 = scmp.eq.s32.totalorder %s17, 0
    %p154 = por %p152, %p153
    %p155 = scmp.le.s32.totalorder 1, %s11
    %p156 = scmp.lt.s32.totalorder %s11, 3
    %p157 = pnand %p155, %p156
    %p158 = pneg %p157
    // Predicated region
    $region9: #{img_backbone_forward.6} parent=5 // pred_check
      _
    $region10: #{img_backbone_forward.6} parent=5 // pred_check_branch
      %160 = sbr.rel (%p157) target = $region12
    $region11: #{img_backbone_forward.6} parent=5 // pred_region
      %s161 = ssub.s32 %s11, 1
      // Predicated region
      $region13: #{img_backbone_forward.6} parent=11 // pred_check
        %p162 = pneg %p58
      $region14: #{img_backbone_forward.6} parent=11 // pred_check_branch
        %164 = sbr.rel (%p162) target = $region16
      $region15: #{img_backbone_forward.6} parent=11 // pred_region
        _
      $region16: #{img_backbone_forward.6} parent=11 // pred_fallthru
        _
      // Predicated region
      $region17: #{img_backbone_forward.6} parent=11 // pred_check
        %p165 = pneg %p79
      $region18: #{img_backbone_forward.6} parent=11 // pred_check_branch
        %167 = sbr.rel (%p165) target = $region20
      $region19: #{img_backbone_forward.6} parent=11 // pred_region
        _
      $region20: #{img_backbone_forward.6} parent=11 // pred_fallthru
        _
      // Predicated region
      $region21: #{img_backbone_forward.6} parent=11 // pred_check
        %p168 = pneg %p100
      $region22: #{img_backbone_forward.6} parent=11 // pred_check_branch
        %170 = sbr.rel (%p168) target = $region24
      $region23: #{img_backbone_forward.6} parent=11 // pred_region
        _
      $region24: #{img_backbone_forward.6} parent=11 // pred_fallthru
        _
      // Predicated region
      $region25: #{img_backbone_forward.6} parent=11 // pred_check
        %p171 = pneg %p121
      $region26: #{img_backbone_forward.6} parent=11 // pred_check_branch
        %173 = sbr.rel (%p171) target = $region28
      $region27: #{img_backbone_forward.6} parent=11 // pred_region
        _
      $region28: #{img_backbone_forward.6} parent=11 // pred_fallthru
        _
    $region12: #{img_backbone_forward.6} parent=5 // pred_fallthru
      _
    %p174 = scmp.lt.s32.totalorder %s11, 2
    // Predicated region
    $region29: #{img_backbone_forward.6} parent=5 // pred_check
      %p175 = pneg %p174
    $region30: #{img_backbone_forward.6} parent=5 // pred_check_branch
      %177 = sbr.rel (%p175) target = $region32
    $region31: #{img_backbone_forward.6} parent=5 // pred_region
      // Predicated region
      $region33: #{img_backbone_forward.6} parent=31 // pred_check
        %p178 = pneg %p31
      $region34: #{img_backbone_forward.6} parent=31 // pred_check_branch
        %180 = sbr.rel (%p178) target = $region36
      $region35: #{img_backbone_forward.6} parent=31 // pred_region
        %s181 = smul.u32 4, %s11
        %p182 = scmp.lt.s32.totalorder %s181, 7
        %s183 = scalar_select %p182, %s181, 7
        %s184 = smul.addr %s183, 5
        %s185 = smul.addr %s184, 4
        %s186 = scalar_lea.vmem %s0, %s185
        %s187 = smul.u32 4, %s11
      $region36: #{img_backbone_forward.6} parent=31 // pred_fallthru
        _
    $region32: #{img_backbone_forward.6} parent=5 // pred_fallthru
      _
    %p188 = scmp.le.s32.totalorder 1, %s11
    %p189 = scmp.lt.s32.totalorder %s11, 3
    %p190 = pnand %p188, %p189
    %p191 = pneg %p190
    // Predicated region
    $region37: #{img_backbone_forward.6} parent=5 // pred_check
      _
    $region38: #{img_backbone_forward.6} parent=5 // pred_check_branch
      %193 = sbr.rel (%p190) target = $region40
    $region39: #{img_backbone_forward.6} parent=5 // pred_region
      %s194 = ssub.s32 %s11, 1
      %s195 = smul.u32 4, %s16
      %p196 = scmp.lt.s32.totalorder %s195, 7
      %s197 = scalar_select %p196, %s195, 7
      %s198 = smul.addr %s197, 5
      %s199 = smul.addr %s198, 4
      %s200 = scalar_lea.vmem %s0, %s199
      %p201 = pneg %p37
      %p202 = pneg %p34
      %p203 = pneg %p58
      %p204 = pneg %p55
      %p205 = pneg %p79
      %p206 = pneg %p76
      %p207 = pneg %p100
      %p208 = pneg %p97
      %p209 = pneg %p121
      %p210 = pneg %p118
      %p211 = pneg %p147
      %p212 = pneg %p144
      %s213 = smul.u32 4, %s16
      %p214 = scmp.lt.s32.totalorder %s213, 7
      %s215 = scalar_select %p214, %s213, 7
      %s216 = smul.addr %s215, 4
      %s217 = scalar_lea.vmem %s5, %s216
      %s218 = smul.u32 4, %s16
      %p219 = scmp.lt.s32.totalorder %s218, 7
      %s220 = scalar_select %p219, %s218, 7
      %s221 = smul.addr %s220, 5
      %s222 = smul.addr %s221, 4
      %s223 = scalar_lea.vmem %s0, %s222
      %s224 = smul.u32 4, %s16
      %s225 = smul.u32 4, %s16
      %p226 = scmp.lt.s32.totalorder %s225, 7
      %s227 = scalar_select %p226, %s225, 7
      %s228 = smul.addr %s227, 4
      %s229 = scalar_lea.vmem %s5, %s228
      %s230 = smul.u32 4, %s16
      %v232 = vld [vmem:[%s223] sm:$0xff]
      %v233 = vld [vmem:[%s223 + $0x8] sm:$0xff]
      %v234 = vld [vmem:[%s223 + $0x10] sm:$0xf]
      %v235 = vld [vmem:[%s223 + $0x14] sm:$0xff]
      %v236 = vld [vmem:[%s223 + $0x1c] sm:$0xff]
      %v237 = vld [vmem:[%s223 + $0x24] sm:$0xf]
      %v238 = vld [vmem:[%s223 + $0x28] sm:$0xff]
      %v239 = vld [vmem:[%s223 + $0x30] sm:$0xff]
      %v240 = vld [vmem:[%s223 + $0x38] sm:$0xf]
      %v241 = vld [vmem:[%s223 + $0x3c] sm:$0xff]
      %v242 = vld [vmem:[%s223 + $0x44] sm:$0xff]
      %v243 = vld [vmem:[%s223 + $0x4c] sm:$0xf]
      %v244 = vld [vmem:[%s1] sm:$0xf]
      %v245 = vld [vmem:[%s1 + $0x4] sm:$0xf]
      %v246 = vld [vmem:[%s1 + $0x8] sm:$0xf]
      %v247 = vld [vmem:[%s1 + $0xc] sm:$0xf]
      %v248 = vld [vmem:[%s1 + $0x10] sm:$0xf]
      %v249 = vld [vmem:[%s1 + $0x14] sm:$0xf]
      %v250 = vld [vmem:[%s1 + $0x18] sm:$0xf]
      %v251 = vld [vmem:[%s1 + $0x1c] sm:$0xf]
      %v252 = vld [vmem:[%s1 + $0x20] sm:$0xf]
      %v253 = vld [vmem:[%s1 + $0x24] sm:$0xf]
      %v254 = vld [vmem:[%s1 + $0x28] sm:$0xf]
      %v255 = vld [vmem:[%s1 + $0x2c] sm:$0xf]
      %v256 = vld [vmem:[%s1 + $0x30] sm:$0xf]
      %v257 = vld [vmem:[%s1 + $0x34] sm:$0xf]
      %v258 = vld [vmem:[%s1 + $0x38] sm:$0xf]
      %v259 = vld [vmem:[%s1 + $0x3c] sm:$0xf]
      %v260 = vld [vmem:[%s1 + $0x40] sm:$0xf]
      %v261 = vld [vmem:[%s1 + $0x44] sm:$0xf]
      %v262 = vld [vmem:[%s1 + $0x48] sm:$0xf]
      %v263 = vld [vmem:[%s1 + $0x4c] sm:$0xf]
      %v264 = vld [vmem:[%s1 + $0x50] sm:$0xf]
      %v265 = vld [vmem:[%s1 + $0x54] sm:$0xf]
      %v266 = vld [vmem:[%s1 + $0x58] sm:$0xf]
      %v267 = vld [vmem:[%s1 + $0x5c] sm:$0xf]
      %v268 = vld [vmem:[%s1 + $0x60] sm:$0xf]
      %v269 = vld [vmem:[%s1 + $0x64] sm:$0xf]
      %v270 = vld [vmem:[%s1 + $0x68] sm:$0xf]
      %v271 = vld [vmem:[%s1 + $0x6c] sm:$0xf]
      %v272 = vld [vmem:[%s1 + $0x70] sm:$0xf]
      %v273 = vld [vmem:[%s1 + $0x74] sm:$0xf]
      %v274 = vld [vmem:[%s1 + $0x78] sm:$0xf]
      %v275 = vld [vmem:[%s1 + $0x7c] sm:$0xf]
      %v276 = vld [vmem:[%s1 + $0x80] sm:$0xf]
      %v277 = vld [vmem:[%s1 + $0x84] sm:$0xf]
      %v278 = vld [vmem:[%s1 + $0x88] sm:$0xf]
      %v279 = vld [vmem:[%s1 + $0x8c] sm:$0xf]
      %v280 = vld [vmem:[%s1 + $0x90] sm:$0xf]
      %v281 = vld [vmem:[%s1 + $0x94] sm:$0xf]
      %v282 = vld [vmem:[%s1 + $0x98] sm:$0xf]
      %v283 = vld [vmem:[%s1 + $0x9c] sm:$0xf]
      %v284 = vld [vmem:[%s1 + $0xa0] sm:$0xf]
      %v285 = vld [vmem:[%s1 + $0xa4] sm:$0xf]
      %v286 = vld [vmem:[%s1 + $0xa8] sm:$0xf]
      %v287 = vld [vmem:[%s1 + $0xac] sm:$0xf]
      %v288 = vld [vmem:[%s1 + $0xb0] sm:$0xf]
      %v289 = vld [vmem:[%s1 + $0xb4] sm:$0xf]
      %v290 = vld [vmem:[%s1 + $0xb8] sm:$0xf]
      %v291 = vld [vmem:[%s1 + $0xbc] sm:$0xf]
      %v292 = vld [vmem:[%s1 + $0xc0] sm:$0xf]
      %v293 = vld [vmem:[%s1 + $0xc4] sm:$0xf]
      %v294 = vld [vmem:[%s1 + $0xc8] sm:$0xf]
      %v295 = vld [vmem:[%s1 + $0xcc] sm:$0xf]
      %v296 = vld [vmem:[%s1 + $0xd0] sm:$0xf]
      %v297 = vld [vmem:[%s1 + $0xd4] sm:$0xf]
      %v298 = vld [vmem:[%s1 + $0xd8] sm:$0xf]
      %v299 = vld [vmem:[%s1 + $0xdc] sm:$0xf]
      %v300 = vld [vmem:[%s1 + $0xe0] sm:$0xf]
      %v301 = vld [vmem:[%s1 + $0xe4] sm:$0xf]
      %v302 = vld [vmem:[%s1 + $0xe8] sm:$0xf]
      %v303 = vld [vmem:[%s1 + $0xec] sm:$0xf]
      %v304 = vld [vmem:[%s1 + $0xf0] sm:$0xf]
      %v305 = vld [vmem:[%s1 + $0xf4] sm:$0xf]
      %v306 = vld [vmem:[%s1 + $0xf8] sm:$0xf]
      %v307 = vld [vmem:[%s1 + $0xfc] sm:$0xf]
      %v308 = vld [vmem:[%s1 + $0x100] sm:$0xf]
      %v309 = vld [vmem:[%s1 + $0x104] sm:$0xf]
      %v310 = vld [vmem:[%s1 + $0x108] sm:$0xf]
      %v311 = vld [vmem:[%s1 + $0x10c] sm:$0xf]
      %v312 = vld [vmem:[%s1 + $0x110] sm:$0xf]
      %v313 = vld [vmem:[%s1 + $0x114] sm:$0xf]
      %v314 = vld [vmem:[%s1 + $0x118] sm:$0xf]
      %v315 = vld [vmem:[%s1 + $0x11c] sm:$0xf]
      %v316 = vld [vmem:[%s2] sm:$0x1]
      %v318 = vlaneseq
      %v319 = vshrl.u32 %v318, 7
      %v320 = vsub.s32 0, %v319
      %v321 = vrot.slane %v316, %v320
      %v335 = vunpack.c.l.b16 %v232
      %v336 = vunpack.c.h.b16 %v232
      %v337 = vunpack.c.l.b16 %v233
      %v338 = vunpack.c.h.b16 %v233
      %v339 = vunpack.c.l.b16 %v234
      %v340 = vunpack.c.l.b16 %v235
      %v341 = vunpack.c.h.b16 %v235
      %v342 = vunpack.c.l.b16 %v236
      %v343 = vunpack.c.h.b16 %v236
      %v344 = vunpack.c.l.b16 %v237
      %v345 = vunpack.c.l.b16 %v238
      %v346 = vunpack.c.h.b16 %v238
      %v347 = vunpack.c.l.b16 %v239
      %v348 = vunpack.c.h.b16 %v239
      %v349 = vunpack.c.l.b16 %v240
      %v350 = vunpack.c.l.b16 %v241
      %v351 = vunpack.c.h.b16 %v241
      %v352 = vunpack.c.l.b16 %v242
      %v353 = vunpack.c.h.b16 %v242
      %v354 = vunpack.c.l.b16 %v243
      %v355 = vpack.c.b16 %v340, %v335
      %v356 = vpack.c.b16 %v341, %v336
      %v357 = vpack.c.b16 %v342, %v337
      %v358 = vpack.c.b16 %v343, %v338
      %v359 = vpack.c.b16 %v344, %v339
      %v360 = vpack.c.b16 %v350, %v345
      %v361 = vpack.c.b16 %v351, %v346
      %v362 = vpack.c.b16 %v352, %v347
      %v363 = vpack.c.b16 %v353, %v348
      %v364 = vpack.c.b16 %v354, %v349
      %v445 = vunpack.c.l.b16 %v244
      %v446 = vunpack.c.l.b16 %v245
      %v447 = vunpack.c.l.b16 %v246
      %v448 = vunpack.c.l.b16 %v247
      %v449 = vunpack.c.l.b16 %v248
      %v450 = vunpack.c.l.b16 %v249
      %v451 = vunpack.c.l.b16 %v250
      %v452 = vunpack.c.l.b16 %v251
      %v453 = vunpack.c.l.b16 %v252
      %v454 = vunpack.c.l.b16 %v253
      %v455 = vunpack.c.l.b16 %v254
      %v456 = vunpack.c.l.b16 %v255
      %v457 = vunpack.c.l.b16 %v256
      %v458 = vunpack.c.l.b16 %v257
      %v459 = vunpack.c.l.b16 %v258
      %v460 = vunpack.c.l.b16 %v259
      %v461 = vunpack.c.l.b16 %v260
      %v462 = vunpack.c.l.b16 %v261
      %v463 = vunpack.c.l.b16 %v262
      %v464 = vunpack.c.l.b16 %v263
      %v465 = vunpack.c.l.b16 %v264
      %v466 = vunpack.c.l.b16 %v265
      %v467 = vunpack.c.l.b16 %v266
      %v468 = vunpack.c.l.b16 %v267
      %v469 = vunpack.c.l.b16 %v268
      %v470 = vunpack.c.l.b16 %v269
      %v471 = vunpack.c.l.b16 %v270
      %v472 = vunpack.c.l.b16 %v271
      %v473 = vunpack.c.l.b16 %v272
      %v474 = vunpack.c.l.b16 %v273
      %v475 = vunpack.c.l.b16 %v274
      %v476 = vunpack.c.l.b16 %v275
      %v477 = vunpack.c.l.b16 %v276
      %v478 = vunpack.c.l.b16 %v277
      %v479 = vunpack.c.l.b16 %v278
      %v480 = vunpack.c.l.b16 %v279
      %v481 = vunpack.c.l.b16 %v280
      %v482 = vunpack.c.l.b16 %v281
      %v483 = vunpack.c.l.b16 %v282
      %v484 = vunpack.c.l.b16 %v283
      %v485 = vunpack.c.l.b16 %v284
      %v486 = vunpack.c.l.b16 %v285
      %v487 = vunpack.c.l.b16 %v286
      %v488 = vunpack.c.l.b16 %v287
      %v489 = vunpack.c.l.b16 %v288
      %v490 = vunpack.c.l.b16 %v289
      %v491 = vunpack.c.l.b16 %v290
      %v492 = vunpack.c.l.b16 %v291
      %v493 = vunpack.c.l.b16 %v292
      %v494 = vunpack.c.l.b16 %v293
      %v495 = vunpack.c.l.b16 %v294
      %v496 = vunpack.c.l.b16 %v295
      %v497 = vunpack.c.l.b16 %v296
      %v498 = vunpack.c.l.b16 %v297
      %v499 = vunpack.c.l.b16 %v298
      %v500 = vunpack.c.l.b16 %v299
      %v501 = vunpack.c.l.b16 %v300
      %v502 = vunpack.c.l.b16 %v301
      %v503 = vunpack.c.l.b16 %v302
      %v504 = vunpack.c.l.b16 %v303
      %v505 = vunpack.c.l.b16 %v304
      %v506 = vunpack.c.l.b16 %v305
      %v507 = vunpack.c.l.b16 %v306
      %v508 = vunpack.c.l.b16 %v307
      %v509 = vunpack.c.l.b16 %v308
      %v510 = vunpack.c.l.b16 %v309
      %v511 = vunpack.c.l.b16 %v310
      %v512 = vunpack.c.l.b16 %v311
      %v513 = vunpack.c.l.b16 %v312
      %v514 = vunpack.c.l.b16 %v313
      %v515 = vunpack.c.l.b16 %v314
      %v516 = vunpack.c.l.b16 %v315
      %v517 = vpack.c.b16 %v446, %v445
      %v518 = vpack.c.b16 %v448, %v447
      %v519 = vpack.c.b16 %v450, %v449
      %v520 = vpack.c.b16 %v452, %v451
      %v521 = vpack.c.b16 %v454, %v453
      %v522 = vpack.c.b16 %v456, %v455
      %v523 = vpack.c.b16 %v458, %v457
      %v524 = vpack.c.b16 %v460, %v459
      %v525 = vpack.c.b16 %v462, %v461
      %v526 = vpack.c.b16 %v464, %v463
      %v527 = vpack.c.b16 %v466, %v465
      %v528 = vpack.c.b16 %v468, %v467
      %v529 = vpack.c.b16 %v470, %v469
      %v530 = vpack.c.b16 %v472, %v471
      %v531 = vpack.c.b16 %v474, %v473
      %v532 = vpack.c.b16 %v476, %v475
      %v533 = vpack.c.b16 %v478, %v477
      %v534 = vpack.c.b16 %v480, %v479
      %v535 = vpack.c.b16 %v482, %v481
      %v536 = vpack.c.b16 %v484, %v483
      %v537 = vpack.c.b16 %v486, %v485
      %v538 = vpack.c.b16 %v488, %v487
      %v539 = vpack.c.b16 %v490, %v489
      %v540 = vpack.c.b16 %v492, %v491
      %v541 = vpack.c.b16 %v494, %v493
      %v542 = vpack.c.b16 %v496, %v495
      %v543 = vpack.c.b16 %v498, %v497
      %v544 = vpack.c.b16 %v500, %v499
      %v545 = vpack.c.b16 %v502, %v501
      %v546 = vpack.c.b16 %v504, %v503
      %v547 = vpack.c.b16 %v506, %v505
      %v548 = vpack.c.b16 %v508, %v507
      %v549 = vpack.c.b16 %v510, %v509
      %v550 = vpack.c.b16 %v512, %v511
      %v551 = vpack.c.b16 %v514, %v513
      %v552 = vpack.c.b16 %v516, %v515
      %vm589 = vcmask 523264
      %v591 = vsel %vm589, %v359, 0
      %v594 = vsel %vm589, %v364, 0
      %596 = vmatprep.subr.bf16.mxu0 0
      %597 = vmatpush1.bf16.msra.mxu0 %v517
      %598 = vmatprep.subr.bf16.mxu0 0
      %599 = vmatpush1.bf16.msra.mxu0 %v518
      %600 = vmatprep.subr.bf16.mxu0 0
      %601 = vmatpush1.bf16.msra.mxu0 %v519
      %602 = vmatprep.subr.bf16.mxu0 0
      %603 = vmatpush1.bf16.msra.mxu0 %v520
      %604 = vmatprep.subr.bf16.mxu0 0
      %605 = vmatpush1.bf16.msra.mxu0 %v521
      %606 = vmatprep.subr.bf16.mxu0 0
      %607 = vmatpush1.bf16.msra.mxu0 %v522
      %608 = vmatprep.subr.bf16.mxu0 0
      %609 = vmatpush1.bf16.msra.mxu0 %v523
      %610 = vmatprep.subr.bf16.mxu0 0
      %611 = vmatpush1.bf16.msra.mxu0 %v524
      %612 = vmatprep.subr.bf16.mxu0 0
      %613 = vmatpush1.bf16.msra.mxu0 %v525
      %614 = vmatprep.subr.bf16.mxu0 0
      %615 = vmatpush1.bf16.msra.mxu0 %v526
      %616 = vmatprep.subr.bf16.mxu0 0
      %617 = vmatpush1.bf16.msra.mxu0 %v527
      %618 = vmatprep.subr.bf16.mxu0 0
      %619 = vmatpush1.bf16.msra.mxu0 %v528
      %620 = vmatprep.subr.bf16.mxu0 0
      %621 = vmatpush1.bf16.msra.mxu0 %v529
      %622 = vmatprep.subr.bf16.mxu0 0
      %623 = vmatpush1.bf16.msra.mxu0 %v530
      %624 = vmatprep.subr.bf16.mxu0 0
      %625 = vmatpush1.bf16.msra.mxu0 %v531
      %626 = vmatprep.subr.bf16.mxu0 0
      %627 = vmatpush1.bf16.msra.mxu0 %v532
      %628 = vmatprep.mubr.bf16.mxu0 %v356
      %629 = vmatmul.mubr.bf16.gmra.mrb[0].mxu0 %v355
      %v630 = vpop.f32.mrb[0].mxu0
      %v631 = vadd.f32 %v321, %v630
      %v632 = vpop.f32.mrb[0].mxu0
      %v633 = vpop.f32.mrb[0].mxu0
      %v634 = vadd.f32 %v321, %v633
      %v635 = vpop.f32.mrb[0].mxu0
      %636 = vmatprep.mubr.bf16.mxu0 %v361
      %637 = vmatmul.mubr.bf16.gmra.mrb[0].mxu0 %v360
      %v638 = vpop.f32.mrb[0].mxu0
      %v639 = vadd.f32 %v321, %v638
      %v640 = vpop.f32.mrb[0].mxu0
      %v641 = vpop.f32.mrb[0].mxu0
      %v642 = vadd.f32 %v321, %v641
      %v643 = vpop.f32.mrb[0].mxu0
      %644 = vdwg.mxu0
      %645 = vmatprep.subr.bf16.mxu0 0
      %646 = vmatpush1.bf16.msra.mxu0 %v533
      %647 = vmatprep.subr.bf16.mxu0 0
      %648 = vmatpush1.bf16.msra.mxu0 %v534
      %649 = vmatprep.subr.bf16.mxu0 0
      %650 = vmatpush1.bf16.msra.mxu0 %v535
      %651 = vmatprep.subr.bf16.mxu0 0
      %652 = vmatpush1.bf16.msra.mxu0 %v536
      %653 = vmatprep.subr.bf16.mxu0 0
      %654 = vmatpush1.bf16.msra.mxu0 %v537
      %655 = vmatprep.subr.bf16.mxu0 0
      %656 = vmatpush1.bf16.msra.mxu0 %v538
      %657 = vmatprep.subr.bf16.mxu0 0
      %658 = vmatpush1.bf16.msra.mxu0 %v539
      %659 = vmatprep.subr.bf16.mxu0 0
      %660 = vmatpush1.bf16.msra.mxu0 %v540
      %661 = vmatprep.subr.bf16.mxu0 0
      %662 = vmatpush1.bf16.msra.mxu0 %v541
      %663 = vmatprep.subr.bf16.mxu0 0
      %664 = vmatpush1.bf16.msra.mxu0 %v542
      %665 = vmatprep.subr.bf16.mxu0 0
      %666 = vmatpush1.bf16.msra.mxu0 %v543
      %667 = vmatprep.subr.bf16.mxu0 0
      %668 = vmatpush1.bf16.msra.mxu0 %v544
      %669 = vmatprep.subr.bf16.mxu0 0
      %670 = vmatpush1.bf16.msra.mxu0 %v545
      %671 = vmatprep.subr.bf16.mxu0 0
      %672 = vmatpush1.bf16.msra.mxu0 %v546
      %673 = vmatprep.subr.bf16.mxu0 0
      %674 = vmatpush1.bf16.msra.mxu0 %v547
      %675 = vmatprep.subr.bf16.mxu0 0
      %676 = vmatpush1.bf16.msra.mxu0 %v548
      %677 = vmatprep.mubr.bf16.mxu0 %v358
      %678 = vmatmul.mubr.bf16.gmra.mrb[0].mxu0 %v357
      %v679 = vpop.f32.mrb[0].mxu0
      %v680 = vadd.f32 %v631, %v679
      %v681 = vpop.f32.mrb[0].mxu0
      %v682 = vpop.f32.mrb[0].mxu0
      %v683 = vadd.f32 %v634, %v682
      %v684 = vpop.f32.mrb[0].mxu0
      %685 = vmatprep.mubr.bf16.mxu0 %v363
      %686 = vmatmul.mubr.bf16.gmra.mrb[0].mxu0 %v362
      %v687 = vpop.f32.mrb[0].mxu0
      %v688 = vadd.f32 %v639, %v687
      %v689 = vpop.f32.mrb[0].mxu0
      %v690 = vpop.f32.mrb[0].mxu0
      %v691 = vadd.f32 %v642, %v690
      %v692 = vpop.f32.mrb[0].mxu0
      %693 = vdwg.mxu0
      %694 = vmatprep.subr.bf16.mxu0 0
      %695 = vmatpush1.bf16.msra.mxu0 %v549
      %696 = vmatprep.subr.bf16.mxu0 0
      %697 = vmatpush1.bf16.msra.mxu0 %v550
      %698 = vmatprep.subr.bf16.mxu0 0
      %699 = vmatpush1.bf16.msra.mxu0 %v551
      %700 = vmatprep.subr.bf16.mxu0 0
      %701 = vmatpush1.bf16.msra.mxu0 %v552
      %702 = vmatprep.subr.bf16.mxu0 0
      %703 = vmatpush1.bf16.msra.mxu0 0
      %704 = vmatprep.subr.bf16.mxu0 0
      %705 = vmatpush1.bf16.msra.mxu0 0
      %706 = vmatprep.subr.bf16.mxu0 0
      %707 = vmatpush1.bf16.msra.mxu0 0
      %708 = vmatprep.subr.bf16.mxu0 0
      %709 = vmatpush1.bf16.msra.mxu0 0
      %710 = vmatprep.subr.bf16.mxu0 0
      %711 = vmatpush1.bf16.msra.mxu0 0
      %712 = vmatprep.subr.bf16.mxu0 0
      %713 = vmatpush1.bf16.msra.mxu0 0
      %714 = vmatprep.subr.bf16.mxu0 0
      %715 = vmatpush1.bf16.msra.mxu0 0
      %716 = vmatprep.subr.bf16.mxu0 0
      %717 = vmatpush1.bf16.msra.mxu0 0
      %718 = vmatprep.subr.bf16.mxu0 0
      %719 = vmatpush1.bf16.msra.mxu0 0
      %720 = vmatprep.subr.bf16.mxu0 0
      %721 = vmatpush1.bf16.msra.mxu0 0
      %722 = vmatprep.subr.bf16.mxu0 0
      %723 = vmatpush1.bf16.msra.mxu0 0
      %724 = vmatprep.subr.bf16.mxu0 0
      %725 = vmatpush1.bf16.msra.mxu0 0
      %726 = vmatprep.mubr.bf16.mxu0 0
      %727 = vmatmul.mubr.bf16.gmra.mrb[0].mxu0 %v591
      %v728 = vpop.f32.mrb[0].mxu0
      %v729 = vadd.f32 %v680, %v728
      %v730 = vpop.f32.mrb[0].mxu0
      %v731 = vpop.f32.mrb[0].mxu0
      %v732 = vadd.f32 %v683, %v731
      %v733 = vpop.f32.mrb[0].mxu0
      %734 = vmatprep.mubr.bf16.mxu0 0
      %735 = vmatmul.mubr.bf16.gmra.mrb[0].mxu0 %v594
      %v736 = vpop.f32.mrb[0].mxu0
      %v737 = vadd.f32 %v688, %v736
      %v738 = vpop.f32.mrb[0].mxu0
      %v739 = vpop.f32.mrb[0].mxu0
      %v740 = vadd.f32 %v691, %v739
      %v741 = vpop.f32.mrb[0].mxu0
      %742 = vdwg.mxu0
      %v743 = vmax.f32 %v729, 0.0
      %v744 = vmax.f32 %v732, 0.0
      %v745 = vmax.f32 %v737, 0.0
      %v746 = vmax.f32 %v740, 0.0
      %v747 = vpack.c.bf16 %v744, %v743
      %v748 = vpack.c.bf16 %v746, %v745
      %v749 = vld [vmem:[%s3] sm:$0xf]
      %v750 = vld [vmem:[%s3 + $0x4] sm:$0xf]
      %v751 = vld [vmem:[%s3 + $0x8] sm:$0xf]
      %v752 = vld [vmem:[%s3 + $0xc] sm:$0xf]
      %v753 = vld [vmem:[%s3 + $0x10] sm:$0xf]
      %v754 = vld [vmem:[%s3 + $0x14] sm:$0xf]
      %v755 = vld [vmem:[%s3 + $0x18] sm:$0xf]
      %v756 = vld [vmem:[%s3 + $0x1c] sm:$0xf]
      %v757 = vld [vmem:[%s3 + $0x20] sm:$0xf]
      %v758 = vld [vmem:[%s3 + $0x24] sm:$0xf]
      %v759 = vld [vmem:[%s3 + $0x28] sm:$0xf]
      %v760 = vld [vmem:[%s3 + $0x2c] sm:$0xf]
      %v761 = vld [vmem:[%s3 + $0x30] sm:$0xf]
      %v762 = vld [vmem:[%s3 + $0x34] sm:$0xf]
      %v763 = vld [vmem:[%s3 + $0x38] sm:$0xf]
      %v764 = vld [vmem:[%s3 + $0x3c] sm:$0xf]
      %v765 = vld [vmem:[%s4] sm:$0x1]
      %v767 = vlaneseq
      %v768 = vshrl.u32 %v767, 7
      %v769 = vsub.s32 0, %v768
      %v770 = vrot.slane %v765, %v769
      %v788 = vunpack.c.l.b16 %v749
      %v789 = vunpack.c.l.b16 %v750
      %v790 = vunpack.c.l.b16 %v751
      %v791 = vunpack.c.l.b16 %v752
      %v792 = vunpack.c.l.b16 %v753
      %v793 = vunpack.c.l.b16 %v754
      %v794 = vunpack.c.l.b16 %v755
      %v795 = vunpack.c.l.b16 %v756
      %v796 = vunpack.c.l.b16 %v757
      %v797 = vunpack.c.l.b16 %v758
      %v798 = vunpack.c.l.b16 %v759
      %v799 = vunpack.c.l.b16 %v760
      %v800 = vunpack.c.l.b16 %v761
      %v801 = vunpack.c.l.b16 %v762
      %v802 = vunpack.c.l.b16 %v763
      %v803 = vunpack.c.l.b16 %v764
      %v804 = vpack.c.b16 %v789, %v788
      %v805 = vpack.c.b16 %v791, %v790
      %v806 = vpack.c.b16 %v793, %v792
      %v807 = vpack.c.b16 %v795, %v794
      %v808 = vpack.c.b16 %v797, %v796
      %v809 = vpack.c.b16 %v799, %v798
      %v810 = vpack.c.b16 %v801, %v800
      %v811 = vpack.c.b16 %v803, %v802
      %820 = vmatprep.subr.bf16.mxu0 0
      %821 = vmatpush1.bf16.msra.mxu0 %v804
      %822 = vmatprep.subr.bf16.mxu0 0
      %823 = vmatpush1.bf16.msra.mxu0 %v805
      %824 = vmatprep.subr.bf16.mxu0 0
      %825 = vmatpush1.bf16.msra.mxu0 %v806
      %826 = vmatprep.subr.bf16.mxu0 0
      %827 = vmatpush1.bf16.msra.mxu0 %v807
      %828 = vmatprep.subr.bf16.mxu0 0
      %829 = vmatpush1.bf16.msra.mxu0 %v808
      %830 = vmatprep.subr.bf16.mxu0 0
      %831 = vmatpush1.bf16.msra.mxu0 %v809
      %832 = vmatprep.subr.bf16.mxu0 0
      %833 = vmatpush1.bf16.msra.mxu0 %v810
      %834 = vmatprep.subr.bf16.mxu0 0
      %835 = vmatpush1.bf16.msra.mxu0 %v811
      %836 = vmatprep.subr.bf16.mxu0 0
      %837 = vmatpush1.bf16.msra.mxu0 0
      %838 = vmatprep.subr.bf16.mxu0 0
      %839 = vmatpush1.bf16.msra.mxu0 0
      %840 = vmatprep.subr.bf16.mxu0 0
      %841 = vmatpush1.bf16.msra.mxu0 0
      %842 = vmatprep.subr.bf16.mxu0 0
      %843 = vmatpush1.bf16.msra.mxu0 0
      %844 = vmatprep.subr.bf16.mxu0 0
      %845 = vmatpush1.bf16.msra.mxu0 0
      %846 = vmatprep.subr.bf16.mxu0 0
      %847 = vmatpush1.bf16.msra.mxu0 0
      %848 = vmatprep.subr.bf16.mxu0 0
      %849 = vmatpush1.bf16.msra.mxu0 0
      %850 = vmatprep.subr.bf16.mxu0 0
      %851 = vmatpush1.bf16.msra.mxu0 0
      %852 = vmatprep.mubr.bf16.mxu0 0
      %853 = vmatmul.mubr.bf16.gmra.mrb[0].mxu0 %v747
      %v854 = vpop.f32.mrb[0].mxu0
      %v855 = vadd.f32 %v770, %v854
      %v856 = vpop.f32.mrb[0].mxu0
      %v857 = vpop.f32.mrb[0].mxu0
      %v858 = vadd.f32 %v770, %v857
      %v859 = vpop.f32.mrb[0].mxu0
      %860 = vmatprep.mubr.bf16.mxu0 0
      %861 = vmatmul.mubr.bf16.gmra.mrb[0].mxu0 %v748
      %v862 = vpop.f32.mrb[0].mxu0
      %v863 = vadd.f32 %v770, %v862
      %v864 = vpop.f32.mrb[0].mxu0
      %v865 = vpop.f32.mrb[0].mxu0
      %v866 = vadd.f32 %v770, %v865
      %v867 = vpop.f32.mrb[0].mxu0
      %868 = vdwg.mxu0
      %v869 = vpack.c.bf16 %v858, %v855
      %v870 = vpack.c.bf16 %v866, %v863
      %v873 = vunpack.c.l.b16 %v869
      %v874 = vunpack.c.h.b16 %v869
      %v875 = vunpack.c.l.b16 %v870
      %v876 = vunpack.c.h.b16 %v870
      %v877 = vpack.c.b16 %v873, %v873
      %v878 = vpack.c.b16 %v874, %v874
      %v879 = vpack.c.b16 %v875, %v875
      %v880 = vpack.c.b16 %v876, %v876
      %885 = vst [vmem:[%s229] sm:$0xf] %v877
      %886 = vst [vmem:[%s229 + $0x4] sm:$0xf] %v878
      %887 = vst [vmem:[%s229 + $0x8] sm:$0xf] %v879
      %888 = vst [vmem:[%s229 + $0xc] sm:$0xf] %v880
      %s889 = smul.u32 4, %s16
      %p890 = scmp.lt.s32.totalorder %s889, 7
      %s891 = scalar_select %p890, %s889, 7
      %s892 = smul.addr %s891, 4
      %s893 = scalar_lea.vmem %s5, %s892
      // Predicated region
      $region41: #{img_backbone_forward.6} parent=39 // pred_check
        %p894 = pneg %p144
      $region42: #{img_backbone_forward.6} parent=39 // pred_check_branch
        %896 = sbr.rel (%p894) target = $region44
      $region43: #{img_backbone_forward.6} parent=39 // pred_region
        %s897 = smul.u32 4, %s16
      $region44: #{img_backbone_forward.6} parent=39 // pred_fallthru
        _
    $region40: #{img_backbone_forward.6} parent=5 // pred_fallthru
      _
    %p898 = scmp.le.s32.totalorder 2, %s11
    // Predicated region
    $region45: #{img_backbone_forward.6} parent=5 // pred_check
      %p899 = pneg %p898
    $region46: #{img_backbone_forward.6} parent=5 // pred_check_branch
      %901 = sbr.rel (%p899) target = $region48
    $region47: #{img_backbone_forward.6} parent=5 // pred_region
      %s902 = ssub.s32 %s11, 2
      // Predicated region
      $region49: #{img_backbone_forward.6} parent=47 // pred_check
        %p903 = pneg %p150
      $region50: #{img_backbone_forward.6} parent=47 // pred_check_branch
        %905 = sbr.rel (%p903) target = $region52
      $region51: #{img_backbone_forward.6} parent=47 // pred_region
        %s906 = smul.u32 4, %s17
        %p907 = scmp.lt.s32.totalorder %s906, 7
        %s908 = scalar_select %p907, %s906, 7
        %s909 = smul.addr %s908, 4
        %s910 = scalar_lea.vmem %s5, %s909
      $region52: #{img_backbone_forward.6} parent=47 // pred_fallthru
        _
    $region48: #{img_backbone_forward.6} parent=5 // pred_fallthru
      _
  $region6: #{img_backbone_forward.6} parent=0 // loop_footer
    %s15 = sadd.s32 1, %s11
  $region7: #{img_backbone_forward.6} parent=0 // loop_footer_branch
    %10 = sbr.rel target = $region3
  $region8: #{img_backbone_forward.6} parent=0 // loop_exit
    _

// kernel: img_backbone_forward.7
$region0: #{img_backbone_forward.7}
  #allocation0 [shape = 'u32[]', space=smem, size = 0x4, offset = 0x4, fixed_abs, tag = 'smem constant byte address 0x4 - core index']
  #allocation1 [shape = 'u32[144,128]{1,0:T(1,128)}', space=vmem, size = 0x12000, scoped, tag = 'internal scratch']
  %s0 = inlined_call_operand.vmem [shape: bf16[4,10,10,128], index: 0, kind: input, shape index: {}]
  %s1 = inlined_call_operand.vmem [shape: bf16[4,10,10,128], index: 1, kind: input, shape index: {}]
  %s2 = inlined_call_operand.vmem [shape: bf16[9,128,128], index: 2, kind: input, shape index: {}]
  %s3 = inlined_call_operand.vmem [shape: f32[1,128], index: 3, kind: input, shape index: {}]
  %s4 = inlined_call_operand.hbm [shape: f32[4,8,8,128], index: 4, kind: output, shape index: {}]
  %s5 = sld [smem:[#allocation0]]
  $region49: #{img_backbone_forward.7} parent=0
    _
  %s7 = ssub.s32 1, %s5
  %s8 = scalar_select 0, %s7, %s5
  $region1: #{img_backbone_forward.7} parent=0
    #allocation2 [shape = 'u8[65536]{0}', space=vmem, size = 0x10000, scoped, tag = 'output window, operand 0']
    #allocation3 [shape = 's32[2]{0}', space=sflag, size = 0x8, scoped, tag = 'scoped memory for img_backbone_forward.7']
    %9 = vsyncpa [#allocation3], 0
    %s10 = scalar_lea.sflag [#allocation3], 1
    %11 = vsyncpa %s10, 0
    loop: start=0, step=1, limit=6
    $region2: #{img_backbone_forward.7} parent=1 // loop_pre_header
      _
    $region3: #{img_backbone_forward.7} parent=1 // loop_header
      %s13 = sphi 0, %s17
      %p14 = scmp.ge.s32.totalorder %s13, 6
      %s23 = sphi 0, %s25
      %s26 = sphi 0, %s23
      %s27 = sphi 0, %s26
      %s43 = sphi 0, %s27
      %s49 = sphi 0, %s51
      %s52 = sphi 0, %s49
      %s53 = sphi 0, %s52
      %s69 = sphi 0, %s53
      %s73 = sphi 0, %s73
      %s75 = sphi 0, %s73
      %s76 = sphi 0, %s75
      %s90 = sphi 0, %s76
      %s94 = sphi 0, %s94
      %s96 = sphi 0, %s94
      %s97 = sphi 0, %s96
      %s111 = sphi 0, %s97
      %s117 = sphi 0, %s119
      %s120 = sphi 0, %s117
      %s121 = sphi 0, %s120
      %s137 = sphi 0, %s121
    $region4: #{img_backbone_forward.7} parent=1 // loop_header_branch
      %16 = sbr.rel (%p14) target = $region8
    $region5: #{img_backbone_forward.7} parent=1 // loop_body
      %s18 = ssub.s32 %s13, 1
      %s19 = ssub.s32 %s13, 2
      %s20 = sadd.s32 %s13, 1
      %s21 = ssub.s32 %s13, %s20
      %p22 = scmp.eq.s32.totalorder %s21, 0
      %s24 = sadd.s32 %s23, 1
      %s25 = scalar_select %p22, %s23, %s24
      %p28 = pneg %p22
      %p29 = scmp.eq.s32.totalorder %s13, 3
      %p30 = por %p28, %p29
      %p31 = scmp.ne.s32.totalorder %s23, %s26
      %p32 = scmp.eq.s32.totalorder %s13, 0
      %p33 = por %p31, %p32
      %p34 = scmp.ne.s32.totalorder %s23, %s26
      %p35 = scmp.eq.s32.totalorder %s18, 3
      %p36 = por %p34, %p35
      %p37 = scmp.ne.s32.totalorder %s26, %s27
      %p38 = scmp.eq.s32.totalorder %s18, 0
      %p39 = por %p37, %p38
      %p40 = scmp.ne.s32.totalorder %s26, %s27
      %p41 = scmp.eq.s32.totalorder %s19, 3
      %p42 = por %p40, %p41
      %p44 = scmp.ne.s32.totalorder %s27, %s43
      %p45 = scmp.eq.s32.totalorder %s19, 0
      %p46 = por %p44, %p45
      %s47 = ssub.s32 %s13, %s20
      %p48 = scmp.eq.s32.totalorder %s47, 0
      %s50 = sadd.s32 %s49, 1
      %s51 = scalar_select %p48, %s49, %s50
      %p54 = pneg %p48
      %p55 = scmp.eq.s32.totalorder %s13, 3
      %p56 = por %p54, %p55
      %p57 = scmp.ne.s32.totalorder %s49, %s52
      %p58 = scmp.eq.s32.totalorder %s13, 0
      %p59 = por %p57, %p58
      %p60 = scmp.ne.s32.totalorder %s49, %s52
      %p61 = scmp.eq.s32.totalorder %s18, 3
      %p62 = por %p60, %p61
      %p63 = scmp.ne.s32.totalorder %s52, %s53
      %p64 = scmp.eq.s32.totalorder %s18, 0
      %p65 = por %p63, %p64
      %p66 = scmp.ne.s32.totalorder %s52, %s53
      %p67 = scmp.eq.s32.totalorder %s19, 3
      %p68 = por %p66, %p67
      %p70 = scmp.ne.s32.totalorder %s53, %s69
      %p71 = scmp.eq.s32.totalorder %s19, 0
      %p72 = por %p70, %p71
      %s74 = sadd.s32 %s73, 1
      %p77 = scmp.eq.s32.totalorder %s13, 3
      %p78 = scmp.ne.s32.totalorder %s73, %s75
      %p79 = scmp.eq.s32.totalorder %s13, 0
      %p80 = por %p78, %p79
      %p81 = scmp.ne.s32.totalorder %s73, %s75
      %p82 = scmp.eq.s32.totalorder %s18, 3
      %p83 = por %p81, %p82
      %p84 = scmp.ne.s32.totalorder %s75, %s76
      %p85 = scmp.eq.s32.totalorder %s18, 0
      %p86 = por %p84, %p85
      %p87 = scmp.ne.s32.totalorder %s75, %s76
      %p88 = scmp.eq.s32.totalorder %s19, 3
      %p89 = por %p87, %p88
      %p91 = scmp.ne.s32.totalorder %s76, %s90
      %p92 = scmp.eq.s32.totalorder %s19, 0
      %p93 = por %p91, %p92
      %s95 = sadd.s32 %s94, 1
      %p98 = scmp.eq.s32.totalorder %s13, 3
      %p99 = scmp.ne.s32.totalorder %s94, %s96
      %p100 = scmp.eq.s32.totalorder %s13, 0
      %p101 = por %p99, %p100
      %p102 = scmp.ne.s32.totalorder %s94, %s96
      %p103 = scmp.eq.s32.totalorder %s18, 3
      %p104 = por %p102, %p103
      %p105 = scmp.ne.s32.totalorder %s96, %s97
      %p106 = scmp.eq.s32.totalorder %s18, 0
      %p107 = por %p105, %p106
      %p108 = scmp.ne.s32.totalorder %s96, %s97
      %p109 = scmp.eq.s32.totalorder %s19, 3
      %p110 = por %p108, %p109
      %p112 = scmp.ne.s32.totalorder %s97, %s111
      %p113 = scmp.eq.s32.totalorder %s19, 0
      %p114 = por %p112, %p113
      %s115 = ssub.s32 %s13, %s20
      %p116 = scmp.eq.s32.totalorder %s115, 0
      %s118 = sadd.s32 %s117, 1
      %s119 = scalar_select %p116, %s117, %s118
      %p122 = pneg %p116
      %p123 = scmp.eq.s32.totalorder %s13, 3
      %p124 = por %p122, %p123
      %p125 = scmp.ne.s32.totalorder %s117, %s120
      %p126 = scmp.eq.s32.totalorder %s13, 0
      %p127 = por %p125, %p126
      %p128 = scmp.ne.s32.totalorder %s117, %s120
      %p129 = scmp.eq.s32.totalorder %s18, 3
      %p130 = por %p128, %p129
      %p131 = scmp.ne.s32.totalorder %s120, %s121
      %p132 = scmp.eq.s32.totalorder %s18, 0
      %p133 = por %p131, %p132
      %p134 = scmp.ne.s32.totalorder %s120, %s121
      %p135 = scmp.eq.s32.totalorder %s19, 3
      %p136 = por %p134, %p135
      %p138 = scmp.ne.s32.totalorder %s121, %s137
      %p139 = scmp.eq.s32.totalorder %s19, 0
      %p140 = por %p138, %p139
      %p141 = scmp.le.s32.totalorder 1, %s13
      %p142 = scmp.lt.s32.totalorder %s13, 5
      %p143 = pnand %p141, %p142
      %p144 = pneg %p143
      // Predicated region
      $region9: #{img_backbone_forward.7} parent=5 // pred_check
        _
      $region10: #{img_backbone_forward.7} parent=5 // pred_check_branch
        %146 = sbr.rel (%p143) target = $region12
      $region11: #{img_backbone_forward.7} parent=5 // pred_region
        %s147 = ssub.s32 %s13, 1
        // Predicated region
        $region13: #{img_backbone_forward.7} parent=11 // pred_check
          %p148 = pneg %p86
        $region14: #{img_backbone_forward.7} parent=11 // pred_check_branch
          %150 = sbr.rel (%p148) target = $region16
        $region15: #{img_backbone_forward.7} parent=11 // pred_region
          _
        $region16: #{img_backbone_forward.7} parent=11 // pred_fallthru
          _
        // Predicated region
        $region17: #{img_backbone_forward.7} parent=11 // pred_check
          %p151 = pneg %p107
        $region18: #{img_backbone_forward.7} parent=11 // pred_check_branch
          %153 = sbr.rel (%p151) target = $region20
        $region19: #{img_backbone_forward.7} parent=11 // pred_region
          _
        $region20: #{img_backbone_forward.7} parent=11 // pred_fallthru
          _
      $region12: #{img_backbone_forward.7} parent=5 // pred_fallthru
        _
      %p154 = scmp.lt.s32.totalorder %s13, 4
      // Predicated region
      $region21: #{img_backbone_forward.7} parent=5 // pred_check
        %p155 = pneg %p154
      $region22: #{img_backbone_forward.7} parent=5 // pred_check_branch
        %157 = sbr.rel (%p155) target = $region24
      $region23: #{img_backbone_forward.7} parent=5 // pred_region
        // Predicated region
        $region25: #{img_backbone_forward.7} parent=23 // pred_check
          %p158 = pneg %p33
        $region26: #{img_backbone_forward.7} parent=23 // pred_check_branch
          %160 = sbr.rel (%p158) target = $region28
        $region27: #{img_backbone_forward.7} parent=23 // pred_region
          %p161 = scmp.lt.s32.totalorder %s13, 3
          %s162 = scalar_select %p161, %s13, 3
          %s163 = smul.addr %s162, 20
          %s164 = smul.addr %s163, 4
          %s165 = scalar_lea.vmem %s0, %s164
        $region28: #{img_backbone_forward.7} parent=23 // pred_fallthru
          _
        // Predicated region
        $region29: #{img_backbone_forward.7} parent=23 // pred_check
          %p166 = pneg %p59
        $region30: #{img_backbone_forward.7} parent=23 // pred_check_branch
          %168 = sbr.rel (%p166) target = $region32
        $region31: #{img_backbone_forward.7} parent=23 // pred_region
          %p169 = scmp.lt.s32.totalorder %s13, 3
          %s170 = scalar_select %p169, %s13, 3
          %s171 = smul.addr %s170, 20
          %s172 = smul.addr %s171, 4
          %s173 = scalar_lea.vmem %s1, %s172
        $region32: #{img_backbone_forward.7} parent=23 // pred_fallthru
          _
      $region24: #{img_backbone_forward.7} parent=5 // pred_fallthru
        _
      %p174 = scmp.le.s32.totalorder 1, %s13
      %p175 = scmp.lt.s32.totalorder %s13, 5
      %p176 = pnand %p174, %p175
      %p177 = pneg %p176
      // Predicated region
      $region33: #{img_backbone_forward.7} parent=5 // pred_check
        _
      $region34: #{img_backbone_forward.7} parent=5 // pred_check_branch
        %179 = sbr.rel (%p176) target = $region36
      $region35: #{img_backbone_forward.7} parent=5 // pred_region
        %s180 = ssub.s32 %s13, 1
        %p181 = scmp.lt.s32.totalorder %s18, 3
        %s182 = scalar_select %p181, %s18, 3
        %s183 = smul.addr %s182, 20
        %s184 = smul.addr %s183, 4
        %s185 = scalar_lea.vmem %s0, %s184
        %p186 = pneg %p39
        %p187 = pneg %p36
        %p188 = scmp.lt.s32.totalorder %s18, 3
        %s189 = scalar_select %p188, %s18, 3
        %s190 = smul.addr %s189, 20
        %s191 = smul.addr %s190, 4
        %s192 = scalar_lea.vmem %s1, %s191
        %p193 = pneg %p65
        %p194 = pneg %p62
        %p195 = pneg %p86
        %p196 = pneg %p83
        %p197 = pneg %p107
        %p198 = pneg %p104
        %p199 = pneg %p133
        %p200 = pneg %p130
        %s201 = sand.u32 %s120, 1
        %s202 = scalar_lea.sflag [#allocation3], %s201
        %s203 = sand.u32 %s120, 1
        %s204 = smul.addr %s203, 64
        %s205 = scalar_lea.vmem [#allocation2], %s204
        %p206 = scmp.lt.s32.totalorder %s18, 3
        %s207 = scalar_select %p206, %s18, 3
        %s208 = smul.addr %s207, 20
        %s209 = smul.addr %s208, 4
        %s210 = scalar_lea.vmem %s0, %s209
        %p211 = scmp.lt.s32.totalorder %s18, 3
        %s212 = scalar_select %p211, %s18, 3
        %s213 = smul.addr %s212, 20
        %s214 = smul.addr %s213, 4
        %s215 = scalar_lea.vmem %s1, %s214
        %v217 = vld [vmem:[%s210] sm:$0xf]
        %v218 = vld [vmem:[%s210 + $0x4] sm:$0x1]
        %v219 = vld [vmem:[%s210 + $0x8] sm:$0xf]
        %v220 = vld [vmem:[%s210 + $0xc] sm:$0x1]
        %v221 = vld [vmem:[%s210 + $0x10] sm:$0xf]
        %v222 = vld [vmem:[%s210 + $0x14] sm:$0x1]
        %v223 = vld [vmem:[%s210 + $0x18] sm:$0xf]
        %v224 = vld [vmem:[%s210 + $0x1c] sm:$0x1]
        %v225 = vld [vmem:[%s210 + $0x20] sm:$0xf]
        %v226 = vld [vmem:[%s210 + $0x24] sm:$0x1]
        %v227 = vld [vmem:[%s210 + $0x28] sm:$0xf]
        %v228 = vld [vmem:[%s210 + $0x2c] sm:$0x1]
        %v229 = vld [vmem:[%s210 + $0x30] sm:$0xf]
        %v230 = vld [vmem:[%s210 + $0x34] sm:$0x1]
        %v231 = vld [vmem:[%s210 + $0x38] sm:$0xf]
        %v232 = vld [vmem:[%s210 + $0x3c] sm:$0x1]
        %v233 = vld [vmem:[%s210 + $0x40] sm:$0xf]
        %v234 = vld [vmem:[%s210 + $0x44] sm:$0x1]
        %v235 = vld [vmem:[%s210 + $0x48] sm:$0xf]
        %v236 = vld [vmem:[%s210 + $0x4c] sm:$0x1]
        %v237 = vld [vmem:[%s215] sm:$0xf]
        %v238 = vld [vmem:[%s215 + $0x4] sm:$0x1]
        %v239 = vld [vmem:[%s215 + $0x8] sm:$0xf]
        %v240 = vld [vmem:[%s215 + $0xc] sm:$0x1]
        %v241 = vld [vmem:[%s215 + $0x10] sm:$0xf]
        %v242 = vld [vmem:[%s215 + $0x14] sm:$0x1]
        %v243 = vld [vmem:[%s215 + $0x18] sm:$0xf]
        %v244 = vld [vmem:[%s215 + $0x1c] sm:$0x1]
        %v245 = vld [vmem:[%s215 + $0x20] sm:$0xf]
        %v246 = vld [vmem:[%s215 + $0x24] sm:$0x1]
        %v247 = vld [vmem:[%s215 + $0x28] sm:$0xf]
        %v248 = vld [vmem:[%s215 + $0x2c] sm:$0x1]
        %v249 = vld [vmem:[%s215 + $0x30] sm:$0xf]
        %v250 = vld [vmem:[%s215 + $0x34] sm:$0x1]
        %v251 = vld [vmem:[%s215 + $0x38] sm:$0xf]
        %v252 = vld [vmem:[%s215 + $0x3c] sm:$0x1]
        %v253 = vld [vmem:[%s215 + $0x40] sm:$0xf]
        %v254 = vld [vmem:[%s215 + $0x44] sm:$0x1]
        %v255 = vld [vmem:[%s215 + $0x48] sm:$0xf]
        %v256 = vld [vmem:[%s215 + $0x4c] sm:$0x1]
        %v257 = vadd.bf16 %v217, %v237
        %v258 = vadd.bf16 %v218, %v238
        %v259 = vadd.bf16 %v219, %v239
        %v260 = vadd.bf16 %v220, %v240
        %v261 = vadd.bf16 %v221, %v241
        %v262 = vadd.bf16 %v222, %v242
        %v263 = vadd.bf16 %v223, %v243
        %v264 = vadd.bf16 %v224, %v244
        %v265 = vadd.bf16 %v225, %v245
        %v266 = vadd.bf16 %v226, %v246
        %v267 = vadd.bf16 %v227, %v247
        %v268 = vadd.bf16 %v228, %v248
        %v269 = vadd.bf16 %v229, %v249
        %v270 = vadd.bf16 %v230, %v250
        %v271 = vadd.bf16 %v231, %v251
        %v272 = vadd.bf16 %v232, %v252
        %v273 = vadd.bf16 %v233, %v253
        %v274 = vadd.bf16 %v234, %v254
        %v275 = vadd.bf16 %v235, %v255
        %v276 = vadd.bf16 %v236, %v256
        %v277 = vld [vmem:[%s2] sm:$0xf]
        %v278 = vld [vmem:[%s2 + $0x4] sm:$0xf]
        %v279 = vld [vmem:[%s2 + $0x8] sm:$0xf]
        %v280 = vld [vmem:[%s2 + $0xc] sm:$0xf]
        %v281 = vld [vmem:[%s2 + $0x10] sm:$0xf]
        %v282 = vld [vmem:[%s2 + $0x14] sm:$0xf]
        %v283 = vld [vmem:[%s2 + $0x18] sm:$0xf]
        %v284 = vld [vmem:[%s2 + $0x1c] sm:$0xf]
        %v285 = vld [vmem:[%s2 + $0x20] sm:$0xf]
        %v286 = vld [vmem:[%s2 + $0x24] sm:$0xf]
        %v287 = vld [vmem:[%s2 + $0x28] sm:$0xf]
        %v288 = vld [vmem:[%s2 + $0x2c] sm:$0xf]
        %v289 = vld [vmem:[%s2 + $0x30] sm:$0xf]
        %v290 = vld [vmem:[%s2 + $0x34] sm:$0xf]
        %v291 = vld [vmem:[%s2 + $0x38] sm:$0xf]
        %v292 = vld [vmem:[%s2 + $0x3c] sm:$0xf]
        %vm293 = vsmask.f32 3328
        %vm294 = vsmask.f32 7440
        %vm295 = vmor %vm293, %vm294
        %v297 = vshrl.u32 %v257, 16
        %v299 = vrot.slane %v297, 4
        %v300 = vshll.u32 %v257, 16
        %v302 = vrot.slane %v300, 5
        %v303 = vor.u32 %v299, %v302
        %v304 = vrot.slane %v303, 4
        %v306 = vshll.u32 %v258, 16
        %v308 = vrot.slane %v306, 5
        %v309 = vsel %vm295, %v304, %v308
        %v311 = vshrl.u32 %v259, 16
        %v313 = vrot.slane %v311, 4
        %v314 = vshll.u32 %v259, 16
        %v316 = vrot.slane %v314, 5
        %v317 = vor.u32 %v313, %v316
        %v318 = vrot.slane %v317, 4
        %v320 = vshll.u32 %v260, 16
        %v322 = vrot.slane %v320, 5
        %v323 = vsel %vm295, %v318, %v322
        %v325 = vshrl.u32 %v261, 16
        %v327 = vrot.slane %v325, 4
        %v328 = vshll.u32 %v261, 16
        %v330 = vrot.slane %v328, 5
        %v331 = vor.u32 %v327, %v330
        %v332 = vrot.slane %v331, 4
        %v334 = vshll.u32 %v262, 16
        %v336 = vrot.slane %v334, 5
        %v337 = vsel %vm295, %v332, %v336
        %v339 = vshrl.u32 %v263, 16
        %v341 = vrot.slane %v339, 4
        %v342 = vshll.u32 %v263, 16
        %v344 = vrot.slane %v342, 5
        %v345 = vor.u32 %v341, %v344
        %v346 = vrot.slane %v345, 4
        %v348 = vshll.u32 %v264, 16
        %v350 = vrot.slane %v348, 5
        %v351 = vsel %vm295, %v346, %v350
        %v353 = vshrl.u32 %v265, 16
        %v355 = vrot.slane %v353, 4
        %v356 = vshll.u32 %v265, 16
        %v358 = vrot.slane %v356, 5
        %v359 = vor.u32 %v355, %v358
        %v360 = vrot.slane %v359, 4
        %v362 = vshll.u32 %v266, 16
        %v364 = vrot.slane %v362, 5
        %v365 = vsel %vm295, %v360, %v364
        %v367 = vshrl.u32 %v267, 16
        %v369 = vrot.slane %v367, 4
        %v370 = vshll.u32 %v267, 16
        %v372 = vrot.slane %v370, 5
        %v373 = vor.u32 %v369, %v372
        %v374 = vrot.slane %v373, 4
        %v376 = vshll.u32 %v268, 16
        %v378 = vrot.slane %v376, 5
        %v379 = vsel %vm295, %v374, %v378
        %v381 = vshrl.u32 %v269, 16
        %v383 = vrot.slane %v381, 4
        %v384 = vshll.u32 %v269, 16
        %v386 = vrot.slane %v384, 5
        %v387 = vor.u32 %v383, %v386
        %v388 = vrot.slane %v387, 4
        %v390 = vshll.u32 %v270, 16
        %v392 = vrot.slane %v390, 5
        %v393 = vsel %vm295, %v388, %v392
        %v395 = vshrl.u32 %v271, 16
        %v397 = vrot.slane %v395, 4
        %v398 = vshll.u32 %v271, 16
        %v400 = vrot.slane %v398, 5
        %v401 = vor.u32 %v397, %v400
        %v402 = vrot.slane %v401, 4
        %v404 = vshll.u32 %v272, 16
        %v406 = vrot.slane %v404, 5
        %v407 = vsel %vm295, %v402, %v406
        %s408 = scalar_lea.vmem %s2, 64
        %v409 = vld [vmem:[%s408] sm:$0xf]
        %v410 = vld [vmem:[%s408 + $0x4] sm:$0xf]
        %v411 = vld [vmem:[%s408 + $0x8] sm:$0xf]
        %v412 = vld [vmem:[%s408 + $0xc] sm:$0xf]
        %v413 = vld [vmem:[%s408 + $0x10] sm:$0xf]
        %v414 = vld [vmem:[%s408 + $0x14] sm:$0xf]
        %v415 = vld [vmem:[%s408 + $0x18] sm:$0xf]
        %v416 = vld [vmem:[%s408 + $0x1c] sm:$0xf]
        %v417 = vld [vmem:[%s408 + $0x20] sm:$0xf]
        %v418 = vld [vmem:[%s408 + $0x24] sm:$0xf]
        %v419 = vld [vmem:[%s408 + $0x28] sm:$0xf]
        %v420 = vld [vmem:[%s408 + $0x2c] sm:$0xf]
        %v421 = vld [vmem:[%s408 + $0x30] sm:$0xf]
        %v422 = vld [vmem:[%s408 + $0x34] sm:$0xf]
        %v423 = vld [vmem:[%s408 + $0x38] sm:$0xf]
        %v424 = vld [vmem:[%s408 + $0x3c] sm:$0xf]
        %v425 = vunpack.c.l.b16 %v309
        %v426 = vunpack.c.l.b16 %v323
        %v427 = vunpack.c.l.b16 %v337
        %v428 = vunpack.c.l.b16 %v351
        %v429 = vunpack.c.l.b16 %v365
        %v430 = vunpack.c.l.b16 %v379
        %v431 = vunpack.c.l.b16 %v393
        %v432 = vunpack.c.l.b16 %v407
        %v433 = vpack.c.b16 %v426, %v425
        %v434 = vpack.c.b16 %v428, %v427
        %v435 = vpack.c.b16 %v430, %v429
        %v436 = vpack.c.b16 %v432, %v431
        %v457 = vunpack.c.l.b16 %v409
        %v458 = vunpack.c.l.b16 %v410
        %v459 = vunpack.c.l.b16 %v411
        %v460 = vunpack.c.l.b16 %v412
        %v461 = vunpack.c.l.b16 %v413
        %v462 = vunpack.c.l.b16 %v414
        %v463 = vunpack.c.l.b16 %v415
        %v464 = vunpack.c.l.b16 %v416
        %v465 = vunpack.c.l.b16 %v417
        %v466 = vunpack.c.l.b16 %v418
        %v467 = vunpack.c.l.b16 %v419
        %v468 = vunpack.c.l.b16 %v420
        %v469 = vunpack.c.l.b16 %v421
        %v470 = vunpack.c.l.b16 %v422
        %v471 = vunpack.c.l.b16 %v423
        %v472 = vunpack.c.l.b16 %v424
        %v473 = vpack.c.b16 %v458, %v457
        %v474 = vpack.c.b16 %v460, %v459
        %v475 = vpack.c.b16 %v462, %v461
        %v476 = vpack.c.b16 %v464, %v463
        %v477 = vpack.c.b16 %v466, %v465
        %v478 = vpack.c.b16 %v468, %v467
        %v479 = vpack.c.b16 %v470, %v469
        %v480 = vpack.c.b16 %v472, %v471
        %489 = vmatprep.subr.bf16.mxu0 0
        %490 = vmatpush1.bf16.msra.mxu0 %v473
        %491 = vmatprep.subr.bf16.mxu0 0
        %492 = vmatpush1.bf16.msra.mxu0 %v474
        %493 = vmatprep.subr.bf16.mxu0 0
        %494 = vmatpush1.bf16.msra.mxu0 %v475
        %495 = vmatprep.subr.bf16.mxu0 0
        %496 = vmatpush1.bf16.msra.mxu0 %v476
        %497 = vmatprep.subr.bf16.mxu0 0
        %498 = vmatpush1.bf16.msra.mxu0 %v477
        %499 = vmatprep.subr.bf16.mxu0 0
        %500 = vmatpush1.bf16.msra.mxu0 %v478
        %501 = vmatprep.subr.bf16.mxu0 0
        %502 = vmatpush1.bf16.msra.mxu0 %v479
        %503 = vmatprep.subr.bf16.mxu0 0
        %504 = vmatpush1.bf16.msra.mxu0 %v480
        %505 = vmatprep.subr.bf16.mxu0 0
        %506 = vmatpush1.bf16.msra.mxu0 0
        %507 = vmatprep.subr.bf16.mxu0 0
        %508 = vmatpush1.bf16.msra.mxu0 0
        %509 = vmatprep.subr.bf16.mxu0 0
        %510 = vmatpush1.bf16.msra.mxu0 0
        %511 = vmatprep.subr.bf16.mxu0 0
        %512 = vmatpush1.bf16.msra.mxu0 0
        %513 = vmatprep.subr.bf16.mxu0 0
        %514 = vmatpush1.bf16.msra.mxu0 0
        %515 = vmatprep.subr.bf16.mxu0 0
        %516 = vmatpush1.bf16.msra.mxu0 0
        %517 = vmatprep.subr.bf16.mxu0 0
        %518 = vmatpush1.bf16.msra.mxu0 0
        %519 = vmatprep.subr.bf16.mxu0 0
        %520 = vmatpush1.bf16.msra.mxu0 0
        %521 = vmatprep.mubr.bf16.mxu0 0
        %522 = vmatmul.mubr.bf16.gmra.mrb[0].mxu0 %v433
        %v523 = vpop.f32.mrb[0].mxu0
        %v524 = vadd.f32 0.0, %v523
        %v525 = vpop.f32.mrb[0].mxu0
        %v526 = vpop.f32.mrb[0].mxu0
        %v527 = vadd.f32 0.0, %v526
        %v528 = vpop.f32.mrb[0].mxu0
        %529 = vmatprep.mubr.bf16.mxu0 0
        %530 = vmatmul.mubr.bf16.gmra.mrb[0].mxu0 %v434
        %v531 = vpop.f32.mrb[0].mxu0
        %v532 = vadd.f32 0.0, %v531
        %v533 = vpop.f32.mrb[0].mxu0
        %v534 = vpop.f32.mrb[0].mxu0
        %v535 = vadd.f32 0.0, %v534
        %v536 = vpop.f32.mrb[0].mxu0
        %537 = vmatprep.mubr.bf16.mxu0 0
        %538 = vmatmul.mubr.bf16.gmra.mrb[0].mxu0 %v435
        %v539 = vpop.f32.mrb[0].mxu0
        %v540 = vadd.f32 0.0, %v539
        %v541 = vpop.f32.mrb[0].mxu0
        %v542 = vpop.f32.mrb[0].mxu0
        %v543 = vadd.f32 0.0, %v542
        %v544 = vpop.f32.mrb[0].mxu0
        %545 = vmatprep.mubr.bf16.mxu0 0
        %546 = vmatmul.mubr.bf16.gmra.mrb[0].mxu0 %v436
        %v547 = vpop.f32.mrb[0].mxu0
        %v548 = vadd.f32 0.0, %v547
        %v549 = vpop.f32.mrb[0].mxu0
        %v550 = vpop.f32.mrb[0].mxu0
        %v551 = vadd.f32 0.0, %v550
        %v552 = vpop.f32.mrb[0].mxu0
        %553 = vdwg.mxu0
        %v562 = vunpack.c.l.b16 %v257
        %v563 = vunpack.c.l.b16 %v259
        %v564 = vunpack.c.l.b16 %v261
        %v565 = vunpack.c.l.b16 %v263
        %v566 = vunpack.c.l.b16 %v265
        %v567 = vunpack.c.l.b16 %v267
        %v568 = vunpack.c.l.b16 %v269
        %v569 = vunpack.c.l.b16 %v271
        %v570 = vpack.c.b16 %v563, %v562
        %v571 = vpack.c.b16 %v565, %v564
        %v572 = vpack.c.b16 %v567, %v566
        %v573 = vpack.c.b16 %v569, %v568
        %v594 = vunpack.c.l.b16 %v277
        %v595 = vunpack.c.l.b16 %v278
        %v596 = vunpack.c.l.b16 %v279
        %v597 = vunpack.c.l.b16 %v280
        %v598 = vunpack.c.l.b16 %v281
        %v599 = vunpack.c.l.b16 %v282
        %v600 = vunpack.c.l.b16 %v283
        %v601 = vunpack.c.l.b16 %v284
        %v602 = vunpack.c.l.b16 %v285
        %v603 = vunpack.c.l.b16 %v286
        %v604 = vunpack.c.l.b16 %v287
        %v605 = vunpack.c.l.b16 %v288
        %v606 = vunpack.c.l.b16 %v289
        %v607 = vunpack.c.l.b16 %v290
        %v608 = vunpack.c.l.b16 %v291
        %v609 = vunpack.c.l.b16 %v292
        %v610 = vpack.c.b16 %v595, %v594
        %v611 = vpack.c.b16 %v597, %v596
        %v612 = vpack.c.b16 %v599, %v598
        %v613 = vpack.c.b16 %v601, %v600
        %v614 = vpack.c.b16 %v603, %v602
        %v615 = vpack.c.b16 %v605, %v604
        %v616 = vpack.c.b16 %v607, %v606
        %v617 = vpack.c.b16 %v609, %v608
        %626 = vmatprep.subr.bf16.mxu0 0
        %627 = vmatpush1.bf16.msra.mxu0 %v610
        %628 = vmatprep.subr.bf16.mxu0 0
        %629 = vmatpush1.bf16.msra.mxu0 %v611
        %630 = vmatprep.subr.bf16.mxu0 0
        %631 = vmatpush1.bf16.msra.mxu0 %v612
        %632 = vmatprep.subr.bf16.mxu0 0
        %633 = vmatpush1.bf16.msra.mxu0 %v613
        %634 = vmatprep.subr.bf16.mxu0 0
        %635 = vmatpush1.bf16.msra.mxu0 %v614
        %636 = vmatprep.subr.bf16.mxu0 0
        %637 = vmatpush1.bf16.msra.mxu0 %v615
        %638 = vmatprep.subr.bf16.mxu0 0
        %639 = vmatpush1.bf16.msra.mxu0 %v616
        %640 = vmatprep.subr.bf16.mxu0 0
        %641 = vmatpush1.bf16.msra.mxu0 %v617
        %642 = vmatprep.subr.bf16.mxu0 0
        %643 = vmatpush1.bf16.msra.mxu0 0
        %644 = vmatprep.subr.bf16.mxu0 0
        %645 = vmatpush1.bf16.msra.mxu0 0
        %646 = vmatprep.subr.bf16.mxu0 0
        %647 = vmatpush1.bf16.msra.mxu0 0
        %648 = vmatprep.subr.bf16.mxu0 0
        %649 = vmatpush1.bf16.msra.mxu0 0
        %650 = vmatprep.subr.bf16.mxu0 0
        %651 = vmatpush1.bf16.msra.mxu0 0
        %652 = vmatprep.subr.bf16.mxu0 0
        %653 = vmatpush1.bf16.msra.mxu0 0
        %654 = vmatprep.subr.bf16.mxu0 0
        %655 = vmatpush1.bf16.msra.mxu0 0
        %656 = vmatprep.subr.bf16.mxu0 0
        %657 = vmatpush1.bf16.msra.mxu0 0
        %658 = vmatprep.mubr.bf16.mxu0 0
        %659 = vmatmul.mubr.bf16.gmra.mrb[0].mxu0 %v570
        %v660 = vpop.f32.mrb[0].mxu0
        %v661 = vadd.f32 %v524, %v660
        %v662 = vpop.f32.mrb[0].mxu0
        %v663 = vpop.f32.mrb[0].mxu0
        %v664 = vadd.f32 %v527, %v663
        %v665 = vpop.f32.mrb[0].mxu0
        %666 = vmatprep.mubr.bf16.mxu0 0
        %667 = vmatmul.mubr.bf16.gmra.mrb[0].mxu0 %v571
        %v668 = vpop.f32.mrb[0].mxu0
        %v669 = vadd.f32 %v532, %v668
        %v670 = vpop.f32.mrb[0].mxu0
        %v671 = vpop.f32.mrb[0].mxu0
        %v672 = vadd.f32 %v535, %v671
        %v673 = vpop.f32.mrb[0].mxu0
        %674 = vmatprep.mubr.bf16.mxu0 0
        %675 = vmatmul.mubr.bf16.gmra.mrb[0].mxu0 %v572
        %v676 = vpop.f32.mrb[0].mxu0
        %v677 = vadd.f32 %v540, %v676
        %v678 = vpop.f32.mrb[0].mxu0
        %v679 = vpop.f32.mrb[0].mxu0
        %v680 = vadd.f32 %v543, %v679
        %v681 = vpop.f32.mrb[0].mxu0
        %682 = vmatprep.mubr.bf16.mxu0 0
        %683 = vmatmul.mubr.bf16.gmra.mrb[0].mxu0 %v573
        %v684 = vpop.f32.mrb[0].mxu0
        %v685 = vadd.f32 %v548, %v684
        %v686 = vpop.f32.mrb[0].mxu0
        %v687 = vpop.f32.mrb[0].mxu0
        %v688 = vadd.f32 %v551, %v687
        %v689 = vpop.f32.mrb[0].mxu0
        %690 = vdwg.mxu0
        %vm699 = vcmask 1042432
        %vm700 = vcmask 1046532
        %vm701 = vmor %vm699, %vm700
        %v702 = vrot.slane %v257, 5
        %v703 = vrot.slane %v702, 4
        %v704 = vrot.slane %v258, 5
        %v705 = vsel %vm701, %v703, %v704
        %v706 = vrot.slane %v259, 5
        %v707 = vrot.slane %v706, 4
        %v708 = vrot.slane %v260, 5
        %v709 = vsel %vm701, %v707, %v708
        %v710 = vrot.slane %v261, 5
        %v711 = vrot.slane %v710, 4
        %v712 = vrot.slane %v262, 5
        %v713 = vsel %vm701, %v711, %v712
        %v714 = vrot.slane %v263, 5
        %v715 = vrot.slane %v714, 4
        %v716 = vrot.slane %v264, 5
        %v717 = vsel %vm701, %v715, %v716
        %v718 = vrot.slane %v265, 5
        %v719 = vrot.slane %v718, 4
        %v720 = vrot.slane %v266, 5
        %v721 = vsel %vm701, %v719, %v720
        %v722 = vrot.slane %v267, 5
        %v723 = vrot.slane %v722, 4
        %v724 = vrot.slane %v268, 5
        %v725 = vsel %vm701, %v723, %v724
        %v726 = vrot.slane %v269, 5
        %v727 = vrot.slane %v726, 4
        %v728 = vrot.slane %v270, 5
        %v729 = vsel %vm701, %v727, %v728
        %v730 = vrot.slane %v271, 5
        %v731 = vrot.slane %v730, 4
        %v732 = vrot.slane %v272, 5
        %v733 = vsel %vm701, %v731, %v732
        %s734 = scalar_lea.vmem %s2, 128
        %v735 = vld [vmem:[%s734] sm:$0xf]
        %v736 = vld [vmem:[%s734 + $0x4] sm:$0xf]
        %v737 = vld [vmem:[%s734 + $0x8] sm:$0xf]
        %v738 = vld [vmem:[%s734 + $0xc] sm:$0xf]
        %v739 = vld [vmem:[%s734 + $0x10] sm:$0xf]
        %v740 = vld [vmem:[%s734 + $0x14] sm:$0xf]
        %v741 = vld [vmem:[%s734 + $0x18] sm:$0xf]
        %v742 = vld [vmem:[%s734 + $0x1c] sm:$0xf]
        %v743 = vld [vmem:[%s734 + $0x20] sm:$0xf]
        %v744 = vld [vmem:[%s734 + $0x24] sm:$0xf]
        %v745 = vld [vmem:[%s734 + $0x28] sm:$0xf]
        %v746 = vld [vmem:[%s734 + $0x2c] sm:$0xf]
        %v747 = vld [vmem:[%s734 + $0x30] sm:$0xf]
        %v748 = vld [vmem:[%s734 + $0x34] sm:$0xf]
        %v749 = vld [vmem:[%s734 + $0x38] sm:$0xf]
        %v750 = vld [vmem:[%s734 + $0x3c] sm:$0xf]
        %v751 = vunpack.c.l.b16 %v705
        %v752 = vunpack.c.l.b16 %v709
        %v753 = vunpack.c.l.b16 %v713
        %v754 = vunpack.c.l.b16 %v717
        %v755 = vunpack.c.l.b16 %v721
        %v756 = vunpack.c.l.b16 %v725
        %v757 = vunpack.c.l.b16 %v729
        %v758 = vunpack.c.l.b16 %v733
        %v759 = vpack.c.b16 %v752, %v751
        %v760 = vpack.c.b16 %v754, %v753
        %v761 = vpack.c.b16 %v756, %v755
        %v762 = vpack.c.b16 %v758, %v757
        %v783 = vunpack.c.l.b16 %v735
        %v784 = vunpack.c.l.b16 %v736
        %v785 = vunpack.c.l.b16 %v737
        %v786 = vunpack.c.l.b16 %v738
        %v787 = vunpack.c.l.b16 %v739
        %v788 = vunpack.c.l.b16 %v740
        %v789 = vunpack.c.l.b16 %v741
        %v790 = vunpack.c.l.b16 %v742
        %v791 = vunpack.c.l.b16 %v743
        %v792 = vunpack.c.l.b16 %v744
        %v793 = vunpack.c.l.b16 %v745
        %v794 = vunpack.c.l.b16 %v746
        %v795 = vunpack.c.l.b16 %v747
        %v796 = vunpack.c.l.b16 %v748
        %v797 = vunpack.c.l.b16 %v749
        %v798 = vunpack.c.l.b16 %v750
        %v799 = vpack.c.b16 %v784, %v783
        %v800 = vpack.c.b16 %v786, %v785
        %v801 = vpack.c.b16 %v788, %v787
        %v802 = vpack.c.b16 %v790, %v789
        %v803 = vpack.c.b16 %v792, %v791
        %v804 = vpack.c.b16 %v794, %v793
        %v805 = vpack.c.b16 %v796, %v795
        %v806 = vpack.c.b16 %v798, %v797
        %815 = vmatprep.subr.bf16.mxu0 0
        %816 = vmatpush1.bf16.msra.mxu0 %v799
        %817 = vmatprep.subr.bf16.mxu0 0
        %818 = vmatpush1.bf16.msra.mxu0 %v800
        %819 = vmatprep.subr.bf16.mxu0 0
        %820 = vmatpush1.bf16.msra.mxu0 %v801
        %821 = vmatprep.subr.bf16.mxu0 0
        %822 = vmatpush1.bf16.msra.mxu0 %v802
        %823 = vmatprep.subr.bf16.mxu0 0
        %824 = vmatpush1.bf16.msra.mxu0 %v803
        %825 = vmatprep.subr.bf16.mxu0 0
        %826 = vmatpush1.bf16.msra.mxu0 %v804
        %827 = vmatprep.subr.bf16.mxu0 0
        %828 = vmatpush1.bf16.msra.mxu0 %v805
        %829 = vmatprep.subr.bf16.mxu0 0
        %830 = vmatpush1.bf16.msra.mxu0 %v806
        %831 = vmatprep.subr.bf16.mxu0 0
        %832 = vmatpush1.bf16.msra.mxu0 0
        %833 = vmatprep.subr.bf16.mxu0 0
        %834 = vmatpush1.bf16.msra.mxu0 0
        %835 = vmatprep.subr.bf16.mxu0 0
        %836 = vmatpush1.bf16.msra.mxu0 0
        %837 = vmatprep.subr.bf16.mxu0 0
        %838 = vmatpush1.bf16.msra.mxu0 0
        %839 = vmatprep.subr.bf16.mxu0 0
        %840 = vmatpush1.bf16.msra.mxu0 0
        %841 = vmatprep.subr.bf16.mxu0 0
        %842 = vmatpush1.bf16.msra.mxu0 0
        %843 = vmatprep.subr.bf16.mxu0 0
        %844 = vmatpush1.bf16.msra.mxu0 0
        %845 = vmatprep.subr.bf16.mxu0 0
        %846 = vmatpush1.bf16.msra.mxu0 0
        %847 = vmatprep.mubr.bf16.mxu0 0
        %848 = vmatmul.mubr.bf16.gmra.mrb[0].mxu0 %v759
        %v849 = vpop.f32.mrb[0].mxu0
        %v850 = vadd.f32 0.0, %v849
        %v851 = vpop.f32.mrb[0].mxu0
        %v852 = vpop.f32.mrb[0].mxu0
        %v853 = vadd.f32 0.0, %v852
        %v854 = vpop.f32.mrb[0].mxu0
        %855 = vmatprep.mubr.bf16.mxu0 0
        %856 = vmatmul.mubr.bf16.gmra.mrb[0].mxu0 %v760
        %v857 = vpop.f32.mrb[0].mxu0
        %v858 = vadd.f32 0.0, %v857
        %v859 = vpop.f32.mrb[0].mxu0
        %v860 = vpop.f32.mrb[0].mxu0
        %v861 = vadd.f32 0.0, %v860
        %v862 = vpop.f32.mrb[0].mxu0
        %863 = vmatprep.mubr.bf16.mxu0 0
        %864 = vmatmul.mubr.bf16.gmra.mrb[0].mxu0 %v761
        %v865 = vpop.f32.mrb[0].mxu0
        %v866 = vadd.f32 0.0, %v865
        %v867 = vpop.f32.mrb[0].mxu0
        %v868 = vpop.f32.mrb[0].mxu0
        %v869 = vadd.f32 0.0, %v868
        %v870 = vpop.f32.mrb[0].mxu0
        %871 = vmatprep.mubr.bf16.mxu0 0
        %872 = vmatmul.mubr.bf16.gmra.mrb[0].mxu0 %v762
        %v873 = vpop.f32.mrb[0].mxu0
        %v874 = vadd.f32 0.0, %v873
        %v875 = vpop.f32.mrb[0].mxu0
        %v876 = vpop.f32.mrb[0].mxu0
        %v877 = vadd.f32 0.0, %v876
        %v878 = vpop.f32.mrb[0].mxu0
        %879 = vdwg.mxu0
        %v880 = vadd.f32 %v661, %v850
        %v881 = vadd.f32 %v664, %v853
        %v882 = vadd.f32 %v669, %v858
        %v883 = vadd.f32 %v672, %v861
        %v884 = vadd.f32 %v677, %v866
        %v885 = vadd.f32 %v680, %v869
        %v886 = vadd.f32 %v685, %v874
        %v887 = vadd.f32 %v688, %v877
        %s888 = scalar_lea.vmem %s2, 192
        %v889 = vld [vmem:[%s888] sm:$0xf]
        %v890 = vld [vmem:[%s888 + $0x4] sm:$0xf]
        %v891 = vld [vmem:[%s888 + $0x8] sm:$0xf]
        %v892 = vld [vmem:[%s888 + $0xc] sm:$0xf]
        %v893 = vld [vmem:[%s888 + $0x10] sm:$0xf]
        %v894 = vld [vmem:[%s888 + $0x14] sm:$0xf]
        %v895 = vld [vmem:[%s888 + $0x18] sm:$0xf]
        %v896 = vld [vmem:[%s888 + $0x1c] sm:$0xf]
        %v897 = vld [vmem:[%s888 + $0x20] sm:$0xf]
        %v898 = vld [vmem:[%s888 + $0x24] sm:$0xf]
        %v899 = vld [vmem:[%s888 + $0x28] sm:$0xf]
        %v900 = vld [vmem:[%s888 + $0x2c] sm:$0xf]
        %v901 = vld [vmem:[%s888 + $0x30] sm:$0xf]
        %v902 = vld [vmem:[%s888 + $0x34] sm:$0xf]
        %v903 = vld [vmem:[%s888 + $0x38] sm:$0xf]
        %v904 = vld [vmem:[%s888 + $0x3c] sm:$0xf]
        %v906 = vunpack.c.l.b16 %v273
        %v907 = vpack.c.b16 %v564, %v563
        %v908 = vpack.c.b16 %v566, %v565
        %v909 = vpack.c.b16 %v568, %v567
        %v910 = vpack.c.b16 %v906, %v569
        %v931 = vunpack.c.l.b16 %v889
        %v932 = vunpack.c.l.b16 %v890
        %v933 = vunpack.c.l.b16 %v891
        %v934 = vunpack.c.l.b16 %v892
        %v935 = vunpack.c.l.b16 %v893
        %v936 = vunpack.c.l.b16 %v894
        %v937 = vunpack.c.l.b16 %v895
        %v938 = vunpack.c.l.b16 %v896
        %v939 = vunpack.c.l.b16 %v897
        %v940 = vunpack.c.l.b16 %v898
        %v941 = vunpack.c.l.b16 %v899
        %v942 = vunpack.c.l.b16 %v900
        %v943 = vunpack.c.l.b16 %v901
        %v944 = vunpack.c.l.b16 %v902
        %v945 = vunpack.c.l.b16 %v903
        %v946 = vunpack.c.l.b16 %v904
        %v947 = vpack.c.b16 %v932, %v931
        %v948 = vpack.c.b16 %v934, %v933
        %v949 = vpack.c.b16 %v936, %v935
        %v950 = vpack.c.b16 %v938, %v937
        %v951 = vpack.c.b16 %v940, %v939
        %v952 = vpack.c.b16 %v942, %v941
        %v953 = vpack.c.b16 %v944, %v943
        %v954 = vpack.c.b16 %v946, %v945
        %963 = vmatprep.subr.bf16.mxu0 0
        %964 = vmatpush1.bf16.msra.mxu0 %v947
        %965 = vmatprep.subr.bf16.mxu0 0
        %966 = vmatpush1.bf16.msra.mxu0 %v948
        %967 = vmatprep.subr.bf16.mxu0 0
        %968 = vmatpush1.bf16.msra.mxu0 %v949
        %969 = vmatprep.subr.bf16.mxu0 0
        %970 = vmatpush1.bf16.msra.mxu0 %v950
        %971 = vmatprep.subr.bf16.mxu0 0
        %972 = vmatpush1.bf16.msra.mxu0 %v951
        %973 = vmatprep.subr.bf16.mxu0 0
        %974 = vmatpush1.bf16.msra.mxu0 %v952
        %975 = vmatprep.subr.bf16.mxu0 0
        %976 = vmatpush1.bf16.msra.mxu0 %v953
        %977 = vmatprep.subr.bf16.mxu0 0
        %978 = vmatpush1.bf16.msra.mxu0 %v954
        %979 = vmatprep.subr.bf16.mxu0 0
        %980 = vmatpush1.bf16.msra.mxu0 0
        %981 = vmatprep.subr.bf16.mxu0 0
        %982 = vmatpush1.bf16.msra.mxu0 0
        %983 = vmatprep.subr.bf16.mxu0 0
        %984 = vmatpush1.bf16.msra.mxu0 0
        %985 = vmatprep.subr.bf16.mxu0 0
        %986 = vmatpush1.bf16.msra.mxu0 0
        %987 = vmatprep.subr.bf16.mxu0 0
        %988 = vmatpush1.bf16.msra.mxu0 0
        %989 = vmatprep.subr.bf16.mxu0 0
        %990 = vmatpush1.bf16.msra.mxu0 0
        %991 = vmatprep.subr.bf16.mxu0 0
        %992 = vmatpush1.bf16.msra.mxu0 0
        %993 = vmatprep.subr.bf16.mxu0 0
        %994 = vmatpush1.bf16.msra.mxu0 0
        %995 = vmatprep.mubr.bf16.mxu0 0
        %996 = vmatmul.mubr.bf16.gmra.mrb[0].mxu0 %v907
        %v997 = vpop.f32.mrb[0].mxu0
        %v998 = vadd.f32 0.0, %v997
        %v999 = vpop.f32.mrb[0].mxu0
        %v1000 = vpop.f32.mrb[0].mxu0
        %v1001 = vadd.f32 0.0, %v1000
        %v1002 = vpop.f32.mrb[0].mxu0
        %1003 = vmatprep.mubr.bf16.mxu0 0
        %1004 = vmatmul.mubr.bf16.gmra.mrb[0].mxu0 %v908
        %v1005 = vpop.f32.mrb[0].mxu0
        %v1006 = vadd.f32 0.0, %v1005
        %v1007 = vpop.f32.mrb[0].mxu0
        %v1008 = vpop.f32.mrb[0].mxu0
        %v1009 = vadd.f32 0.0, %v1008
        %v1010 = vpop.f32.mrb[0].mxu0
        %1011 = vmatprep.mubr.bf16.mxu0 0
        %1012 = vmatmul.mubr.bf16.gmra.mrb[0].mxu0 %v909
        %v1013 = vpop.f32.mrb[0].mxu0
        %v1014 = vadd.f32 0.0, %v1013
        %v1015 = vpop.f32.mrb[0].mxu0
        %v1016 = vpop.f32.mrb[0].mxu0
        %v1017 = vadd.f32 0.0, %v1016
        %v1018 = vpop.f32.mrb[0].mxu0
        %1019 = vmatprep.mubr.bf16.mxu0 0
        %1020 = vmatmul.mubr.bf16.gmra.mrb[0].mxu0 %v910
        %v1021 = vpop.f32.mrb[0].mxu0
        %v1022 = vadd.f32 0.0, %v1021
        %v1023 = vpop.f32.mrb[0].mxu0
        %v1024 = vpop.f32.mrb[0].mxu0
        %v1025 = vadd.f32 0.0, %v1024
        %v1026 = vpop.f32.mrb[0].mxu0
        %1027 = vdwg.mxu0
        %v1028 = vadd.f32 %v880, %v998
        %v1029 = vadd.f32 %v881, %v1001
        %v1030 = vadd.f32 %v882, %v1006
        %v1031 = vadd.f32 %v883, %v1009
        %v1032 = vadd.f32 %v884, %v1014
        %v1033 = vadd.f32 %v885, %v1017
        %v1034 = vadd.f32 %v886, %v1022
        %v1035 = vadd.f32 %v887, %v1025
        %v1037 = vshrl.u32 %v273, 16
        %v1039 = vrot.slane %v1037, 4
        %v1040 = vshll.u32 %v273, 16
        %v1042 = vrot.slane %v1040, 5
        %v1043 = vor.u32 %v1039, %v1042
        %v1044 = vrot.slane %v1043, 4
        %v1046 = vshll.u32 %v274, 16
        %v1048 = vrot.slane %v1046, 5
        %v1049 = vsel %vm295, %v1044, %v1048
        %s1050 = scalar_lea.vmem %s2, 256
        %v1051 = vld [vmem:[%s1050] sm:$0xf]
        %v1052 = vld [vmem:[%s1050 + $0x4] sm:$0xf]
        %v1053 = vld [vmem:[%s1050 + $0x8] sm:$0xf]
        %v1054 = vld [vmem:[%s1050 + $0xc] sm:$0xf]
        %v1055 = vld [vmem:[%s1050 + $0x10] sm:$0xf]
        %v1056 = vld [vmem:[%s1050 + $0x14] sm:$0xf]
        %v1057 = vld [vmem:[%s1050 + $0x18] sm:$0xf]
        %v1058 = vld [vmem:[%s1050 + $0x1c] sm:$0xf]
        %v1059 = vld [vmem:[%s1050 + $0x20] sm:$0xf]
        %v1060 = vld [vmem:[%s1050 + $0x24] sm:$0xf]
        %v1061 = vld [vmem:[%s1050 + $0x28] sm:$0xf]
        %v1062 = vld [vmem:[%s1050 + $0x2c] sm:$0xf]
        %v1063 = vld [vmem:[%s1050 + $0x30] sm:$0xf]
        %v1064 = vld [vmem:[%s1050 + $0x34] sm:$0xf]
        %v1065 = vld [vmem:[%s1050 + $0x38] sm:$0xf]
        %v1066 = vld [vmem:[%s1050 + $0x3c] sm:$0xf]
        %v1067 = vunpack.c.l.b16 %v1049
        %v1068 = vpack.c.b16 %v427, %v426
        %v1069 = vpack.c.b16 %v429, %v428
        %v1070 = vpack.c.b16 %v431, %v430
        %v1071 = vpack.c.b16 %v1067, %v432
        %v1092 = vunpack.c.l.b16 %v1051
        %v1093 = vunpack.c.l.b16 %v1052
        %v1094 = vunpack.c.l.b16 %v1053
        %v1095 = vunpack.c.l.b16 %v1054
        %v1096 = vunpack.c.l.b16 %v1055
        %v1097 = vunpack.c.l.b16 %v1056
        %v1098 = vunpack.c.l.b16 %v1057
        %v1099 = vunpack.c.l.b16 %v1058
        %v1100 = vunpack.c.l.b16 %v1059
        %v1101 = vunpack.c.l.b16 %v1060
        %v1102 = vunpack.c.l.b16 %v1061
        %v1103 = vunpack.c.l.b16 %v1062
        %v1104 = vunpack.c.l.b16 %v1063
        %v1105 = vunpack.c.l.b16 %v1064
        %v1106 = vunpack.c.l.b16 %v1065
        %v1107 = vunpack.c.l.b16 %v1066
        %v1108 = vpack.c.b16 %v1093, %v1092
        %v1109 = vpack.c.b16 %v1095, %v1094
        %v1110 = vpack.c.b16 %v1097, %v1096
        %v1111 = vpack.c.b16 %v1099, %v1098
        %v1112 = vpack.c.b16 %v1101, %v1100
        %v1113 = vpack.c.b16 %v1103, %v1102
        %v1114 = vpack.c.b16 %v1105, %v1104
        %v1115 = vpack.c.b16 %v1107, %v1106
        %1124 = vmatprep.subr.bf16.mxu0 0
        %1125 = vmatpush1.bf16.msra.mxu0 %v1108
        %1126 = vmatprep.subr.bf16.mxu0 0
        %1127 = vmatpush1.bf16.msra.mxu0 %v1109
        %1128 = vmatprep.subr.bf16.mxu0 0
        %1129 = vmatpush1.bf16.msra.mxu0 %v1110
        %1130 = vmatprep.subr.bf16.mxu0 0
        %1131 = vmatpush1.bf16.msra.mxu0 %v1111
        %1132 = vmatprep.subr.bf16.mxu0 0
        %1133 = vmatpush1.bf16.msra.mxu0 %v1112
        %1134 = vmatprep.subr.bf16.mxu0 0
        %1135 = vmatpush1.bf16.msra.mxu0 %v1113
        %1136 = vmatprep.subr.bf16.mxu0 0
        %1137 = vmatpush1.bf16.msra.mxu0 %v1114
        %1138 = vmatprep.subr.bf16.mxu0 0
        %1139 = vmatpush1.bf16.msra.mxu0 %v1115
        %1140 = vmatprep.subr.bf16.mxu0 0
        %1141 = vmatpush1.bf16.msra.mxu0 0
        %1142 = vmatprep.subr.bf16.mxu0 0
        %1143 = vmatpush1.bf16.msra.mxu0 0
        %1144 = vmatprep.subr.bf16.mxu0 0
        %1145 = vmatpush1.bf16.msra.mxu0 0
        %1146 = vmatprep.subr.bf16.mxu0 0
        %1147 = vmatpush1.bf16.msra.mxu0 0
        %1148 = vmatprep.subr.bf16.mxu0 0
        %1149 = vmatpush1.bf16.msra.mxu0 0
        %1150 = vmatprep.subr.bf16.mxu0 0
        %1151 = vmatpush1.bf16.msra.mxu0 0
        %1152 = vmatprep.subr.bf16.mxu0 0
        %1153 = vmatpush1.bf16.msra.mxu0 0
        %1154 = vmatprep.subr.bf16.mxu0 0
        %1155 = vmatpush1.bf16.msra.mxu0 0
        %1156 = vmatprep.mubr.bf16.mxu0 0
        %1157 = vmatmul.mubr.bf16.gmra.mrb[0].mxu0 %v1068
        %v1158 = vpop.f32.mrb[0].mxu0
        %v1159 = vadd.f32 0.0, %v1158
        %v1160 = vpop.f32.mrb[0].mxu0
        %v1161 = vpop.f32.mrb[0].mxu0
        %v1162 = vadd.f32 0.0, %v1161
        %v1163 = vpop.f32.mrb[0].mxu0
        %1164 = vmatprep.mubr.bf16.mxu0 0
        %1165 = vmatmul.mubr.bf16.gmra.mrb[0].mxu0 %v1069
        %v1166 = vpop.f32.mrb[0].mxu0
        %v1167 = vadd.f32 0.0, %v1166
        %v1168 = vpop.f32.mrb[0].mxu0
        %v1169 = vpop.f32.mrb[0].mxu0
        %v1170 = vadd.f32 0.0, %v1169
        %v1171 = vpop.f32.mrb[0].mxu0
        %1172 = vmatprep.mubr.bf16.mxu0 0
        %1173 = vmatmul.mubr.bf16.gmra.mrb[0].mxu0 %v1070
        %v1174 = vpop.f32.mrb[0].mxu0
        %v1175 = vadd.f32 0.0, %v1174
        %v1176 = vpop.f32.mrb[0].mxu0
        %v1177 = vpop.f32.mrb[0].mxu0
        %v1178 = vadd.f32 0.0, %v1177
        %v1179 = vpop.f32.mrb[0].mxu0
        %1180 = vmatprep.mubr.bf16.mxu0 0
        %1181 = vmatmul.mubr.bf16.gmra.mrb[0].mxu0 %v1071
        %v1182 = vpop.f32.mrb[0].mxu0
        %v1183 = vadd.f32 0.0, %v1182
        %v1184 = vpop.f32.mrb[0].mxu0
        %v1185 = vpop.f32.mrb[0].mxu0
        %v1186 = vadd.f32 0.0, %v1185
        %v1187 = vpop.f32.mrb[0].mxu0
        %1188 = vdwg.mxu0
        %v1189 = vadd.f32 %v1028, %v1159
        %v1190 = vadd.f32 %v1029, %v1162
        %v1191 = vadd.f32 %v1030, %v1167
        %v1192 = vadd.f32 %v1031, %v1170
        %v1193 = vadd.f32 %v1032, %v1175
        %v1194 = vadd.f32 %v1033, %v1178
        %v1195 = vadd.f32 %v1034, %v1183
        %v1196 = vadd.f32 %v1035, %v1186
        %v1198 = vrot.slane %v273, 5
        %v1199 = vrot.slane %v1198, 4
        %v1200 = vrot.slane %v274, 5
        %v1201 = vsel %vm701, %v1199, %v1200
        %s1202 = scalar_lea.vmem %s2, 320
        %v1203 = vld [vmem:[%s1202] sm:$0xf]
        %v1204 = vld [vmem:[%s1202 + $0x4] sm:$0xf]
        %v1205 = vld [vmem:[%s1202 + $0x8] sm:$0xf]
        %v1206 = vld [vmem:[%s1202 + $0xc] sm:$0xf]
        %v1207 = vld [vmem:[%s1202 + $0x10] sm:$0xf]
        %v1208 = vld [vmem:[%s1202 + $0x14] sm:$0xf]
        %v1209 = vld [vmem:[%s1202 + $0x18] sm:$0xf]
        %v1210 = vld [vmem:[%s1202 + $0x1c] sm:$0xf]
        %v1211 = vld [vmem:[%s1202 + $0x20] sm:$0xf]
        %v1212 = vld [vmem:[%s1202 + $0x24] sm:$0xf]
        %v1213 = vld [vmem:[%s1202 + $0x28] sm:$0xf]
        %v1214 = vld [vmem:[%s1202 + $0x2c] sm:$0xf]
        %v1215 = vld [vmem:[%s1202 + $0x30] sm:$0xf]
        %v1216 = vld [vmem:[%s1202 + $0x34] sm:$0xf]
        %v1217 = vld [vmem:[%s1202 + $0x38] sm:$0xf]
        %v1218 = vld [vmem:[%s1202 + $0x3c] sm:$0xf]
        %v1219 = vunpack.c.l.b16 %v1201
        %v1220 = vpack.c.b16 %v753, %v752
        %v1221 = vpack.c.b16 %v755, %v754
        %v1222 = vpack.c.b16 %v757, %v756
        %v1223 = vpack.c.b16 %v1219, %v758
        %v1244 = vunpack.c.l.b16 %v1203
        %v1245 = vunpack.c.l.b16 %v1204
        %v1246 = vunpack.c.l.b16 %v1205
        %v1247 = vunpack.c.l.b16 %v1206
        %v1248 = vunpack.c.l.b16 %v1207
        %v1249 = vunpack.c.l.b16 %v1208
        %v1250 = vunpack.c.l.b16 %v1209
        %v1251 = vunpack.c.l.b16 %v1210
        %v1252 = vunpack.c.l.b16 %v1211
        %v1253 = vunpack.c.l.b16 %v1212
        %v1254 = vunpack.c.l.b16 %v1213
        %v1255 = vunpack.c.l.b16 %v1214
        %v1256 = vunpack.c.l.b16 %v1215
        %v1257 = vunpack.c.l.b16 %v1216
        %v1258 = vunpack.c.l.b16 %v1217
        %v1259 = vunpack.c.l.b16 %v1218
        %v1260 = vpack.c.b16 %v1245, %v1244
        %v1261 = vpack.c.b16 %v1247, %v1246
        %v1262 = vpack.c.b16 %v1249, %v1248
        %v1263 = vpack.c.b16 %v1251, %v1250
        %v1264 = vpack.c.b16 %v1253, %v1252
        %v1265 = vpack.c.b16 %v1255, %v1254
        %v1266 = vpack.c.b16 %v1257, %v1256
        %v1267 = vpack.c.b16 %v1259, %v1258
        %1276 = vmatprep.subr.bf16.mxu0 0
        %1277 = vmatpush1.bf16.msra.mxu0 %v1260
        %1278 = vmatprep.subr.bf16.mxu0 0
        %1279 = vmatpush1.bf16.msra.mxu0 %v1261
        %1280 = vmatprep.subr.bf16.mxu0 0
        %1281 = vmatpush1.bf16.msra.mxu0 %v1262
        %1282 = vmatprep.subr.bf16.mxu0 0
        %1283 = vmatpush1.bf16.msra.mxu0 %v1263
        %1284 = vmatprep.subr.bf16.mxu0 0
        %1285 = vmatpush1.bf16.msra.mxu0 %v1264
        %1286 = vmatprep.subr.bf16.mxu0 0
        %1287 = vmatpush1.bf16.msra.mxu0 %v1265
        %1288 = vmatprep.subr.bf16.mxu0 0
        %1289 = vmatpush1.bf16.msra.mxu0 %v1266
        %1290 = vmatprep.subr.bf16.mxu0 0
        %1291 = vmatpush1.bf16.msra.mxu0 %v1267
        %1292 = vmatprep.subr.bf16.mxu0 0
        %1293 = vmatpush1.bf16.msra.mxu0 0
        %1294 = vmatprep.subr.bf16.mxu0 0
        %1295 = vmatpush1.bf16.msra.mxu0 0
        %1296 = vmatprep.subr.bf16.mxu0 0
        %1297 = vmatpush1.bf16.msra.mxu0 0
        %1298 = vmatprep.subr.bf16.mxu0 0
        %1299 = vmatpush1.bf16.msra.mxu0 0
        %1300 = vmatprep.subr.bf16.mxu0 0
        %1301 = vmatpush1.bf16.msra.mxu0 0
        %1302 = vmatprep.subr.bf16.mxu0 0
        %1303 = vmatpush1.bf16.msra.mxu0 0
        %1304 = vmatprep.subr.bf16.mxu0 0
        %1305 = vmatpush1.bf16.msra.mxu0 0
        %1306 = vmatprep.subr.bf16.mxu0 0
        %1307 = vmatpush1.bf16.msra.mxu0 0
        %1308 = vmatprep.mubr.bf16.mxu0 0
        %1309 = vmatmul.mubr.bf16.gmra.mrb[0].mxu0 %v1220
        %v1310 = vpop.f32.mrb[0].mxu0
        %v1311 = vadd.f32 0.0, %v1310
        %v1312 = vpop.f32.mrb[0].mxu0
        %v1313 = vpop.f32.mrb[0].mxu0
        %v1314 = vadd.f32 0.0, %v1313
        %v1315 = vpop.f32.mrb[0].mxu0
        %1316 = vmatprep.mubr.bf16.mxu0 0
        %1317 = vmatmul.mubr.bf16.gmra.mrb[0].mxu0 %v1221
        %v1318 = vpop.f32.mrb[0].mxu0
        %v1319 = vadd.f32 0.0, %v1318
        %v1320 = vpop.f32.mrb[0].mxu0
        %v1321 = vpop.f32.mrb[0].mxu0
        %v1322 = vadd.f32 0.0, %v1321
        %v1323 = vpop.f32.mrb[0].mxu0
        %1324 = vmatprep.mubr.bf16.mxu0 0
        %1325 = vmatmul.mubr.bf16.gmra.mrb[0].mxu0 %v1222
        %v1326 = vpop.f32.mrb[0].mxu0
        %v1327 = vadd.f32 0.0, %v1326
        %v1328 = vpop.f32.mrb[0].mxu0
        %v1329 = vpop.f32.mrb[0].mxu0
        %v1330 = vadd.f32 0.0, %v1329
        %v1331 = vpop.f32.mrb[0].mxu0
        %1332 = vmatprep.mubr.bf16.mxu0 0
        %1333 = vmatmul.mubr.bf16.gmra.mrb[0].mxu0 %v1223
        %v1334 = vpop.f32.mrb[0].mxu0
        %v1335 = vadd.f32 0.0, %v1334
        %v1336 = vpop.f32.mrb[0].mxu0
        %v1337 = vpop.f32.mrb[0].mxu0
        %v1338 = vadd.f32 0.0, %v1337
        %v1339 = vpop.f32.mrb[0].mxu0
        %1340 = vdwg.mxu0
        %v1341 = vadd.f32 %v1189, %v1311
        %v1342 = vadd.f32 %v1190, %v1314
        %v1343 = vadd.f32 %v1191, %v1319
        %v1344 = vadd.f32 %v1192, %v1322
        %v1345 = vadd.f32 %v1193, %v1327
        %v1346 = vadd.f32 %v1194, %v1330
        %v1347 = vadd.f32 %v1195, %v1335
        %v1348 = vadd.f32 %v1196, %v1338
        %s1349 = scalar_lea.vmem %s2, 384
        %v1350 = vld [vmem:[%s1349] sm:$0xf]
        %v1351 = vld [vmem:[%s1349 + $0x4] sm:$0xf]
        %v1352 = vld [vmem:[%s1349 + $0x8] sm:$0xf]
        %v1353 = vld [vmem:[%s1349 + $0xc] sm:$0xf]
        %v1354 = vld [vmem:[%s1349 + $0x10] sm:$0xf]
        %v1355 = vld [vmem:[%s1349 + $0x14] sm:$0xf]
        %v1356 = vld [vmem:[%s1349 + $0x18] sm:$0xf]
        %v1357 = vld [vmem:[%s1349 + $0x1c] sm:$0xf]
        %v1358 = vld [vmem:[%s1349 + $0x20] sm:$0xf]
        %v1359 = vld [vmem:[%s1349 + $0x24] sm:$0xf]
        %v1360 = vld [vmem:[%s1349 + $0x28] sm:$0xf]
        %v1361 = vld [vmem:[%s1349 + $0x2c] sm:$0xf]
        %v1362 = vld [vmem:[%s1349 + $0x30] sm:$0xf]
        %v1363 = vld [vmem:[%s1349 + $0x34] sm:$0xf]
        %v1364 = vld [vmem:[%s1349 + $0x38] sm:$0xf]
        %v1365 = vld [vmem:[%s1349 + $0x3c] sm:$0xf]
        %v1367 = vunpack.c.l.b16 %v275
        %v1368 = vpack.c.b16 %v1367, %v906
        %v1386 = vunpack.c.l.b16 %v1350
        %v1387 = vunpack.c.l.b16 %v1351
        %v1388 = vunpack.c.l.b16 %v1352
        %v1389 = vunpack.c.l.b16 %v1353
        %v1390 = vunpack.c.l.b16 %v1354
        %v1391 = vunpack.c.l.b16 %v1355
        %v1392 = vunpack.c.l.b16 %v1356
        %v1393 = vunpack.c.l.b16 %v1357
        %v1394 = vunpack.c.l.b16 %v1358
        %v1395 = vunpack.c.l.b16 %v1359
        %v1396 = vunpack.c.l.b16 %v1360
        %v1397 = vunpack.c.l.b16 %v1361
        %v1398 = vunpack.c.l.b16 %v1362
        %v1399 = vunpack.c.l.b16 %v1363
        %v1400 = vunpack.c.l.b16 %v1364
        %v1401 = vunpack.c.l.b16 %v1365
        %v1402 = vpack.c.b16 %v1387, %v1386
        %v1403 = vpack.c.b16 %v1389, %v1388
        %v1404 = vpack.c.b16 %v1391, %v1390
        %v1405 = vpack.c.b16 %v1393, %v1392
        %v1406 = vpack.c.b16 %v1395, %v1394
        %v1407 = vpack.c.b16 %v1397, %v1396
        %v1408 = vpack.c.b16 %v1399, %v1398
        %v1409 = vpack.c.b16 %v1401, %v1400
        %1418 = vmatprep.subr.bf16.mxu0 0
        %1419 = vmatpush1.bf16.msra.mxu0 %v1402
        %1420 = vmatprep.subr.bf16.mxu0 0
        %1421 = vmatpush1.bf16.msra.mxu0 %v1403
        %1422 = vmatprep.subr.bf16.mxu0 0
        %1423 = vmatpush1.bf16.msra.mxu0 %v1404
        %1424 = vmatprep.subr.bf16.mxu0 0
        %1425 = vmatpush1.bf16.msra.mxu0 %v1405
        %1426 = vmatprep.subr.bf16.mxu0 0
        %1427 = vmatpush1.bf16.msra.mxu0 %v1406
        %1428 = vmatprep.subr.bf16.mxu0 0
        %1429 = vmatpush1.bf16.msra.mxu0 %v1407
        %1430 = vmatprep.subr.bf16.mxu0 0
        %1431 = vmatpush1.bf16.msra.mxu0 %v1408
        %1432 = vmatprep.subr.bf16.mxu0 0
        %1433 = vmatpush1.bf16.msra.mxu0 %v1409
        %1434 = vmatprep.subr.bf16.mxu0 0
        %1435 = vmatpush1.bf16.msra.mxu0 0
        %1436 = vmatprep.subr.bf16.mxu0 0
        %1437 = vmatpush1.bf16.msra.mxu0 0
        %1438 = vmatprep.subr.bf16.mxu0 0
        %1439 = vmatpush1.bf16.msra.mxu0 0
        %1440 = vmatprep.subr.bf16.mxu0 0
        %1441 = vmatpush1.bf16.msra.mxu0 0
        %1442 = vmatprep.subr.bf16.mxu0 0
        %1443 = vmatpush1.bf16.msra.mxu0 0
        %1444 = vmatprep.subr.bf16.mxu0 0
        %1445 = vmatpush1.bf16.msra.mxu0 0
        %1446 = vmatprep.subr.bf16.mxu0 0
        %1447 = vmatpush1.bf16.msra.mxu0 0
        %1448 = vmatprep.subr.bf16.mxu0 0
        %1449 = vmatpush1.bf16.msra.mxu0 0
        %1450 = vmatprep.mubr.bf16.mxu0 0
        %1451 = vmatmul.mubr.bf16.gmra.mrb[0].mxu0 %v571
        %v1452 = vpop.f32.mrb[0].mxu0
        %v1453 = vadd.f32 0.0, %v1452
        %v1454 = vpop.f32.mrb[0].mxu0
        %v1455 = vpop.f32.mrb[0].mxu0
        %v1456 = vadd.f32 0.0, %v1455
        %v1457 = vpop.f32.mrb[0].mxu0
        %1458 = vmatprep.mubr.bf16.mxu0 0
        %1459 = vmatmul.mubr.bf16.gmra.mrb[0].mxu0 %v572
        %v1460 = vpop.f32.mrb[0].mxu0
        %v1461 = vadd.f32 0.0, %v1460
        %v1462 = vpop.f32.mrb[0].mxu0
        %v1463 = vpop.f32.mrb[0].mxu0
        %v1464 = vadd.f32 0.0, %v1463
        %v1465 = vpop.f32.mrb[0].mxu0
        %1466 = vmatprep.mubr.bf16.mxu0 0
        %1467 = vmatmul.mubr.bf16.gmra.mrb[0].mxu0 %v573
        %v1468 = vpop.f32.mrb[0].mxu0
        %v1469 = vadd.f32 0.0, %v1468
        %v1470 = vpop.f32.mrb[0].mxu0
        %v1471 = vpop.f32.mrb[0].mxu0
        %v1472 = vadd.f32 0.0, %v1471
        %v1473 = vpop.f32.mrb[0].mxu0
        %1474 = vmatprep.mubr.bf16.mxu0 0
        %1475 = vmatmul.mubr.bf16.gmra.mrb[0].mxu0 %v1368
        %v1476 = vpop.f32.mrb[0].mxu0
        %v1477 = vadd.f32 0.0, %v1476
        %v1478 = vpop.f32.mrb[0].mxu0
        %v1479 = vpop.f32.mrb[0].mxu0
        %v1480 = vadd.f32 0.0, %v1479
        %v1481 = vpop.f32.mrb[0].mxu0
        %1482 = vdwg.mxu0
        %v1483 = vadd.f32 %v1341, %v1453
        %v1484 = vadd.f32 %v1342, %v1456
        %v1485 = vadd.f32 %v1343, %v1461
        %v1486 = vadd.f32 %v1344, %v1464
        %v1487 = vadd.f32 %v1345, %v1469
        %v1488 = vadd.f32 %v1346, %v1472
        %v1489 = vadd.f32 %v1347, %v1477
        %v1490 = vadd.f32 %v1348, %v1480
        %v1492 = vshrl.u32 %v275, 16
        %v1494 = vrot.slane %v1492, 4
        %v1495 = vshll.u32 %v275, 16
        %v1497 = vrot.slane %v1495, 5
        %v1498 = vor.u32 %v1494, %v1497
        %v1499 = vrot.slane %v1498, 4
        %v1501 = vshll.u32 %v276, 16
        %v1503 = vrot.slane %v1501, 5
        %v1504 = vsel %vm295, %v1499, %v1503
        %s1505 = scalar_lea.vmem %s2, 448
        %v1506 = vld [vmem:[%s1505] sm:$0xf]
        %v1507 = vld [vmem:[%s1505 + $0x4] sm:$0xf]
        %v1508 = vld [vmem:[%s1505 + $0x8] sm:$0xf]
        %v1509 = vld [vmem:[%s1505 + $0xc] sm:$0xf]
        %v1510 = vld [vmem:[%s1505 + $0x10] sm:$0xf]
        %v1511 = vld [vmem:[%s1505 + $0x14] sm:$0xf]
        %v1512 = vld [vmem:[%s1505 + $0x18] sm:$0xf]
        %v1513 = vld [vmem:[%s1505 + $0x1c] sm:$0xf]
        %v1514 = vld [vmem:[%s1505 + $0x20] sm:$0xf]
        %v1515 = vld [vmem:[%s1505 + $0x24] sm:$0xf]
        %v1516 = vld [vmem:[%s1505 + $0x28] sm:$0xf]
        %v1517 = vld [vmem:[%s1505 + $0x2c] sm:$0xf]
        %v1518 = vld [vmem:[%s1505 + $0x30] sm:$0xf]
        %v1519 = vld [vmem:[%s1505 + $0x34] sm:$0xf]
        %v1520 = vld [vmem:[%s1505 + $0x38] sm:$0xf]
        %v1521 = vld [vmem:[%s1505 + $0x3c] sm:$0xf]
        %v1522 = vunpack.c.l.b16 %v1504
        %v1523 = vpack.c.b16 %v1522, %v1067
        %v1541 = vunpack.c.l.b16 %v1506
        %v1542 = vunpack.c.l.b16 %v1507
        %v1543 = vunpack.c.l.b16 %v1508
        %v1544 = vunpack.c.l.b16 %v1509
        %v1545 = vunpack.c.l.b16 %v1510
        %v1546 = vunpack.c.l.b16 %v1511
        %v1547 = vunpack.c.l.b16 %v1512
        %v1548 = vunpack.c.l.b16 %v1513
        %v1549 = vunpack.c.l.b16 %v1514
        %v1550 = vunpack.c.l.b16 %v1515
        %v1551 = vunpack.c.l.b16 %v1516
        %v1552 = vunpack.c.l.b16 %v1517
        %v1553 = vunpack.c.l.b16 %v1518
        %v1554 = vunpack.c.l.b16 %v1519
        %v1555 = vunpack.c.l.b16 %v1520
        %v1556 = vunpack.c.l.b16 %v1521
        %v1557 = vpack.c.b16 %v1542, %v1541
        %v1558 = vpack.c.b16 %v1544, %v1543
        %v1559 = vpack.c.b16 %v1546, %v1545
        %v1560 = vpack.c.b16 %v1548, %v1547
        %v1561 = vpack.c.b16 %v1550, %v1549
        %v1562 = vpack.c.b16 %v1552, %v1551
        %v1563 = vpack.c.b16 %v1554, %v1553
        %v1564 = vpack.c.b16 %v1556, %v1555
        %1573 = vmatprep.subr.bf16.mxu0 0
        %1574 = vmatpush1.bf16.msra.mxu0 %v1557
        %1575 = vmatprep.subr.bf16.mxu0 0
        %1576 = vmatpush1.bf16.msra.mxu0 %v1558
        %1577 = vmatprep.subr.bf16.mxu0 0
        %1578 = vmatpush1.bf16.msra.mxu0 %v1559
        %1579 = vmatprep.subr.bf16.mxu0 0
        %1580 = vmatpush1.bf16.msra.mxu0 %v1560
        %1581 = vmatprep.subr.bf16.mxu0 0
        %1582 = vmatpush1.bf16.msra.mxu0 %v1561
        %1583 = vmatprep.subr.bf16.mxu0 0
        %1584 = vmatpush1.bf16.msra.mxu0 %v1562
        %1585 = vmatprep.subr.bf16.mxu0 0
        %1586 = vmatpush1.bf16.msra.mxu0 %v1563
        %1587 = vmatprep.subr.bf16.mxu0 0
        %1588 = vmatpush1.bf16.msra.mxu0 %v1564
        %1589 = vmatprep.subr.bf16.mxu0 0
        %1590 = vmatpush1.bf16.msra.mxu0 0
        %1591 = vmatprep.subr.bf16.mxu0 0
        %1592 = vmatpush1.bf16.msra.mxu0 0
        %1593 = vmatprep.subr.bf16.mxu0 0
        %1594 = vmatpush1.bf16.msra.mxu0 0
        %1595 = vmatprep.subr.bf16.mxu0 0
        %1596 = vmatpush1.bf16.msra.mxu0 0
        %1597 = vmatprep.subr.bf16.mxu0 0
        %1598 = vmatpush1.bf16.msra.mxu0 0
        %1599 = vmatprep.subr.bf16.mxu0 0
        %1600 = vmatpush1.bf16.msra.mxu0 0
        %1601 = vmatprep.subr.bf16.mxu0 0
        %1602 = vmatpush1.bf16.msra.mxu0 0
        %1603 = vmatprep.subr.bf16.mxu0 0
        %1604 = vmatpush1.bf16.msra.mxu0 0
        %1605 = vmatprep.mubr.bf16.mxu0 0
        %1606 = vmatmul.mubr.bf16.gmra.mrb[0].mxu0 %v434
        %v1607 = vpop.f32.mrb[0].mxu0
        %v1608 = vadd.f32 0.0, %v1607
        %v1609 = vpop.f32.mrb[0].mxu0
        %v1610 = vpop.f32.mrb[0].mxu0
        %v1611 = vadd.f32 0.0, %v1610
        %v1612 = vpop.f32.mrb[0].mxu0
        %1613 = vmatprep.mubr.bf16.mxu0 0
        %1614 = vmatmul.mubr.bf16.gmra.mrb[0].mxu0 %v435
        %v1615 = vpop.f32.mrb[0].mxu0
        %v1616 = vadd.f32 0.0, %v1615
        %v1617 = vpop.f32.mrb[0].mxu0
        %v1618 = vpop.f32.mrb[0].mxu0
        %v1619 = vadd.f32 0.0, %v1618
        %v1620 = vpop.f32.mrb[0].mxu0
        %1621 = vmatprep.mubr.bf16.mxu0 0
        %1622 = vmatmul.mubr.bf16.gmra.mrb[0].mxu0 %v436
        %v1623 = vpop.f32.mrb[0].mxu0
        %v1624 = vadd.f32 0.0, %v1623
        %v1625 = vpop.f32.mrb[0].mxu0
        %v1626 = vpop.f32.mrb[0].mxu0
        %v1627 = vadd.f32 0.0, %v1626
        %v1628 = vpop.f32.mrb[0].mxu0
        %1629 = vmatprep.mubr.bf16.mxu0 0
        %1630 = vmatmul.mubr.bf16.gmra.mrb[0].mxu0 %v1523
        %v1631 = vpop.f32.mrb[0].mxu0
        %v1632 = vadd.f32 0.0, %v1631
        %v1633 = vpop.f32.mrb[0].mxu0
        %v1634 = vpop.f32.mrb[0].mxu0
        %v1635 = vadd.f32 0.0, %v1634
        %v1636 = vpop.f32.mrb[0].mxu0
        %1637 = vdwg.mxu0
        %v1638 = vadd.f32 %v1483, %v1608
        %v1639 = vadd.f32 %v1484, %v1611
        %v1640 = vadd.f32 %v1485, %v1616
        %v1641 = vadd.f32 %v1486, %v1619
        %v1642 = vadd.f32 %v1487, %v1624
        %v1643 = vadd.f32 %v1488, %v1627
        %v1644 = vadd.f32 %v1489, %v1632
        %v1645 = vadd.f32 %v1490, %v1635
        %v1647 = vrot.slane %v275, 5
        %v1648 = vrot.slane %v1647, 4
        %v1649 = vrot.slane %v276, 5
        %v1650 = vsel %vm701, %v1648, %v1649
        %s1651 = scalar_lea.vmem %s2, 512
        %v1652 = vld [vmem:[%s1651] sm:$0xf]
        %v1653 = vld [vmem:[%s1651 + $0x4] sm:$0xf]
        %v1654 = vld [vmem:[%s1651 + $0x8] sm:$0xf]
        %v1655 = vld [vmem:[%s1651 + $0xc] sm:$0xf]
        %v1656 = vld [vmem:[%s1651 + $0x10] sm:$0xf]
        %v1657 = vld [vmem:[%s1651 + $0x14] sm:$0xf]
        %v1658 = vld [vmem:[%s1651 + $0x18] sm:$0xf]
        %v1659 = vld [vmem:[%s1651 + $0x1c] sm:$0xf]
        %v1660 = vld [vmem:[%s1651 + $0x20] sm:$0xf]
        %v1661 = vld [vmem:[%s1651 + $0x24] sm:$0xf]
        %v1662 = vld [vmem:[%s1651 + $0x28] sm:$0xf]
        %v1663 = vld [vmem:[%s1651 + $0x2c] sm:$0xf]
        %v1664 = vld [vmem:[%s1651 + $0x30] sm:$0xf]
        %v1665 = vld [vmem:[%s1651 + $0x34] sm:$0xf]
        %v1666 = vld [vmem:[%s1651 + $0x38] sm:$0xf]
        %v1667 = vld [vmem:[%s1651 + $0x3c] sm:$0xf]
        %v1668 = vunpack.c.l.b16 %v1650
        %v1669 = vpack.c.b16 %v1668, %v1219
        %v1687 = vunpack.c.l.b16 %v1652
        %v1688 = vunpack.c.l.b16 %v1653
        %v1689 = vunpack.c.l.b16 %v1654
        %v1690 = vunpack.c.l.b16 %v1655
        %v1691 = vunpack.c.l.b16 %v1656
        %v1692 = vunpack.c.l.b16 %v1657
        %v1693 = vunpack.c.l.b16 %v1658
        %v1694 = vunpack.c.l.b16 %v1659
        %v1695 = vunpack.c.l.b16 %v1660
        %v1696 = vunpack.c.l.b16 %v1661
        %v1697 = vunpack.c.l.b16 %v1662
        %v1698 = vunpack.c.l.b16 %v1663
        %v1699 = vunpack.c.l.b16 %v1664
        %v1700 = vunpack.c.l.b16 %v1665
        %v1701 = vunpack.c.l.b16 %v1666
        %v1702 = vunpack.c.l.b16 %v1667
        %v1703 = vpack.c.b16 %v1688, %v1687
        %v1704 = vpack.c.b16 %v1690, %v1689
        %v1705 = vpack.c.b16 %v1692, %v1691
        %v1706 = vpack.c.b16 %v1694, %v1693
        %v1707 = vpack.c.b16 %v1696, %v1695
        %v1708 = vpack.c.b16 %v1698, %v1697
        %v1709 = vpack.c.b16 %v1700, %v1699
        %v1710 = vpack.c.b16 %v1702, %v1701
        %1719 = vmatprep.subr.bf16.mxu0 0
        %1720 = vmatpush1.bf16.msra.mxu0 %v1703
        %1721 = vmatprep.subr.bf16.mxu0 0
        %1722 = vmatpush1.bf16.msra.mxu0 %v1704
        %1723 = vmatprep.subr.bf16.mxu0 0
        %1724 = vmatpush1.bf16.msra.mxu0 %v1705
        %1725 = vmatprep.subr.bf16.mxu0 0
        %1726 = vmatpush1.bf16.msra.mxu0 %v1706
        %1727 = vmatprep.subr.bf16.mxu0 0
        %1728 = vmatpush1.bf16.msra.mxu0 %v1707
        %1729 = vmatprep.subr.bf16.mxu0 0
        %1730 = vmatpush1.bf16.msra.mxu0 %v1708
        %1731 = vmatprep.subr.bf16.mxu0 0
        %1732 = vmatpush1.bf16.msra.mxu0 %v1709
        %1733 = vmatprep.subr.bf16.mxu0 0
        %1734 = vmatpush1.bf16.msra.mxu0 %v1710
        %1735 = vmatprep.subr.bf16.mxu0 0
        %1736 = vmatpush1.bf16.msra.mxu0 0
        %1737 = vmatprep.subr.bf16.mxu0 0
        %1738 = vmatpush1.bf16.msra.mxu0 0
        %1739 = vmatprep.subr.bf16.mxu0 0
        %1740 = vmatpush1.bf16.msra.mxu0 0
        %1741 = vmatprep.subr.bf16.mxu0 0
        %1742 = vmatpush1.bf16.msra.mxu0 0
        %1743 = vmatprep.subr.bf16.mxu0 0
        %1744 = vmatpush1.bf16.msra.mxu0 0
        %1745 = vmatprep.subr.bf16.mxu0 0
        %1746 = vmatpush1.bf16.msra.mxu0 0
        %1747 = vmatprep.subr.bf16.mxu0 0
        %1748 = vmatpush1.bf16.msra.mxu0 0
        %1749 = vmatprep.subr.bf16.mxu0 0
        %1750 = vmatpush1.bf16.msra.mxu0 0
        %1751 = vmatprep.mubr.bf16.mxu0 0
        %1752 = vmatmul.mubr.bf16.gmra.mrb[0].mxu0 %v760
        %v1753 = vpop.f32.mrb[0].mxu0
        %v1754 = vadd.f32 0.0, %v1753
        %v1755 = vpop.f32.mrb[0].mxu0
        %v1756 = vpop.f32.mrb[0].mxu0
        %v1757 = vadd.f32 0.0, %v1756
        %v1758 = vpop.f32.mrb[0].mxu0
        %1759 = vmatprep.mubr.bf16.mxu0 0
        %1760 = vmatmul.mubr.bf16.gmra.mrb[0].mxu0 %v761
        %v1761 = vpop.f32.mrb[0].mxu0
        %v1762 = vadd.f32 0.0, %v1761
        %v1763 = vpop.f32.mrb[0].mxu0
        %v1764 = vpop.f32.mrb[0].mxu0
        %v1765 = vadd.f32 0.0, %v1764
        %v1766 = vpop.f32.mrb[0].mxu0
        %1767 = vmatprep.mubr.bf16.mxu0 0
        %1768 = vmatmul.mubr.bf16.gmra.mrb[0].mxu0 %v762
        %v1769 = vpop.f32.mrb[0].mxu0
        %v1770 = vadd.f32 0.0, %v1769
        %v1771 = vpop.f32.mrb[0].mxu0
        %v1772 = vpop.f32.mrb[0].mxu0
        %v1773 = vadd.f32 0.0, %v1772
        %v1774 = vpop.f32.mrb[0].mxu0
        %1775 = vmatprep.mubr.bf16.mxu0 0
        %1776 = vmatmul.mubr.bf16.gmra.mrb[0].mxu0 %v1669
        %v1777 = vpop.f32.mrb[0].mxu0
        %v1778 = vadd.f32 0.0, %v1777
        %v1779 = vpop.f32.mrb[0].mxu0
        %v1780 = vpop.f32.mrb[0].mxu0
        %v1781 = vadd.f32 0.0, %v1780
        %v1782 = vpop.f32.mrb[0].mxu0
        %1783 = vdwg.mxu0
        %v1784 = vadd.f32 %v1638, %v1754
        %v1785 = vadd.f32 %v1639, %v1757
        %v1786 = vadd.f32 %v1640, %v1762
        %v1787 = vadd.f32 %v1641, %v1765
        %v1788 = vadd.f32 %v1642, %v1770
        %v1789 = vadd.f32 %v1643, %v1773
        %v1790 = vadd.f32 %v1644, %v1778
        %v1791 = vadd.f32 %v1645, %v1781
        %v1792 = vld [vmem:[%s3] sm:$0x1]
        %v1794 = vlaneseq
        %v1795 = vshrl.u32 %v1794, 7
        %v1796 = vsub.s32 0, %v1795
        %v1797 = vrot.slane %v1792, %v1796
        %v1799 = vadd.f32 %v1784, %v1797
        %v1800 = vadd.f32 %v1785, %v1797
        %v1801 = vadd.f32 %v1786, %v1797
        %v1802 = vadd.f32 %v1787, %v1797
        %v1803 = vadd.f32 %v1788, %v1797
        %v1804 = vadd.f32 %v1789, %v1797
        %v1805 = vadd.f32 %v1790, %v1797
        %v1806 = vadd.f32 %v1791, %v1797
        %1807 = vst [vmem:[%s205] sm:$0xff] %v1799
        %1808 = vst [vmem:[%s205 + $0x8] sm:$0xff] %v1800
        %1809 = vst [vmem:[%s205 + $0x10] sm:$0xff] %v1801
        %1810 = vst [vmem:[%s205 + $0x18] sm:$0xff] %v1802
        %1811 = vst [vmem:[%s205 + $0x20] sm:$0xff] %v1803
        %1812 = vst [vmem:[%s205 + $0x28] sm:$0xff] %v1804
        %1813 = vst [vmem:[%s205 + $0x30] sm:$0xff] %v1805
        %1814 = vst [vmem:[%s205 + $0x38] sm:$0xff] %v1806
        %s1815 = sand.u32 %s120, 1
        %s1816 = scalar_lea.sflag [#allocation3], %s1815
        %s1817 = sand.u32 %s120, 1
        %s1818 = smul.addr %s1817, 64
        %s1819 = scalar_lea.vmem [#allocation2], %s1818
        // Predicated region
        $region37: #{img_backbone_forward.7} parent=35 // pred_check
          %p1820 = pneg %p130
        $region38: #{img_backbone_forward.7} parent=35 // pred_check_branch
          %1822 = sbr.rel (%p1820) target = $region40
        $region39: #{img_backbone_forward.7} parent=35 // pred_region
          %s1824 = ssub.s32 1024, 1024
          %1825 = vsyncadd %s1816, %s1824
          %s1826 = smul.addr %s18, 8
          %s1827 = smul.addr %s1826, 128
          %s1828 = scalar_lea.hbm %s4, %s1827
          %s1829 = sshll.u32 %s1819, 4
          %s1830 = int_to_ptr.vmem [resolvable:$true] %s1829
          %1835 = dma.vmem_to_hbm [thread:$0]  %s1830, 1024, %s1828, %s1816, 128, 128, 8
        $region40: #{img_backbone_forward.7} parent=35 // pred_fallthru
          _
      $region36: #{img_backbone_forward.7} parent=5 // pred_fallthru
        _
      %p1836 = scmp.le.s32.totalorder 2, %s13
      // Predicated region
      $region41: #{img_backbone_forward.7} parent=5 // pred_check
        %p1837 = pneg %p1836
      $region42: #{img_backbone_forward.7} parent=5 // pred_check_branch
        %1839 = sbr.rel (%p1837) target = $region44
      $region43: #{img_backbone_forward.7} parent=5 // pred_region
        %s1840 = ssub.s32 %s13, 2
        // Predicated region
        $region45: #{img_backbone_forward.7} parent=43 // pred_check
          %p1841 = pneg %p136
        $region46: #{img_backbone_forward.7} parent=43 // pred_check_branch
          %1843 = sbr.rel (%p1841) target = $region48
        $region47: #{img_backbone_forward.7} parent=43 // pred_region
          %s1844 = sand.u32 %s121, 1
          %s1845 = scalar_lea.sflag [#allocation3], %s1844
          %s1846 = sand.u32 %s121, 1
          %s1847 = smul.addr %s1846, 64
          %s1848 = scalar_lea.vmem [#allocation2], %s1847
          %1849 = dma.done %s1845, 1024
        $region48: #{img_backbone_forward.7} parent=43 // pred_fallthru
          _
      $region44: #{img_backbone_forward.7} parent=5 // pred_fallthru
        _
    $region6: #{img_backbone_forward.7} parent=1 // loop_footer
      %s17 = sadd.s32 1, %s13
    $region7: #{img_backbone_forward.7} parent=1 // loop_footer_branch
      %12 = sbr.rel target = $region3
    $region8: #{img_backbone_forward.7} parent=1 // loop_exit
      _
    %1850 = vsyncpa [#allocation3], 1
    %s1851 = scalar_lea.sflag [#allocation3], 1
    %1852 = vsyncpa %s1851, 1

</llo_original>
